<compile_context>
chip_gen: v7x
topology: tpu7x:2x2x1
jax: 0.10.0
libtpu: 0.0.40
codegen_flags: <defaults>
</compile_context>

<pallas_src>
import functools

import jax
import jax.numpy as jnp
import numpy as np
from jax import lax
from jax.experimental import pallas as pl
from jax.experimental.pallas import tpu as pltpu


def _round_up(x, m):
    return (x + m - 1) // m * m


def _hint(x, m):
    # Alignment hint; skip for Python ints (already static).
    return x if isinstance(x, int) else pl.multiple_of(x, m)


# ----------------------------------------------------------------------------
# Fused kernel: all LSTM layers + fc2 + sigmoid, grid over batch tiles.
# ----------------------------------------------------------------------------
def _fused_lstm_kernel(x_ref, len_ref, *refs, num_layers, hidden_size,
                       seq_pad, time_chunk, batch_tile):
    H, Tp, TC, BT = hidden_size, seq_pad, time_chunk, batch_tile
    n_chunks = Tp // TC

    n_w = 3 * num_layers + 2
    w_refs = refs[:n_w]
    y_ref = refs[n_w]                 # (O, Tp*BT) f32 (transposed, lane-dense)
    hc_ref = refs[n_w + 1]            # (L, BT, 2H) f32, packed (h | c)
    gi_ref = refs[n_w + 2]            # (2*TC*BT, 4H) f32, double-buffered
    act_ref = refs[n_w + 3]           # (Tp*BT, H) bf16, full-T activations

    lengths = len_ref[...]            # (BT, 1) int32

    for layer in range(num_layers):
        w_ih = w_refs[3 * layer][...]          # (IN_l, 4H) bf16
        w_hh = w_refs[3 * layer + 1][...]      # (H, 4H)    bf16
        bias = w_refs[3 * layer + 2][...]      # (1, 4H)    f32 (b_ih + b_hh)
        in_ref = x_ref if layer == 0 else act_ref

        def project(ck, slot, in_ref=in_ref, w_ih=w_ih, bias=bias):
            # Time-parallel input projection for one chunk: one big MXU matmul
            # hoisted off the serial recurrence dependency chain.
            r_in = _hint(ck * (TC * BT), TC * BT)
            r_gi = _hint(slot * (TC * BT), TC * BT)
            xin = in_ref[pl.ds(r_in, TC * BT), :]                 # bf16
            gi_ref[pl.ds(r_gi, TC * BT), :] = (
                jnp.dot(xin, w_ih, preferred_element_type=jnp.float32) + bias)

        project(0, 0)                  # prologue: chunk 0 into slot 0

        def chunk_body(ck, carry, w_hh=w_hh, project=project):
            h, c = carry
            slot = ck % 2

            # Issue next chunk's projection into the other slot; independent
            # of the recurrence so the scheduler can overlap it on the MXU.
            if n_chunks > 1:
                @pl.when(ck + 1 < n_chunks)
                def _():
                    project(ck + 1, 1 - slot)

            t0 = ck * TC
            gi_base = slot * (TC * BT)

            def step(s, hc):
                h, c = hc
                row = _hint(gi_base + s * BT, BT)
                gates = gi_ref[pl.ds(row, BT), :] + jnp.dot(
                    h.astype(jnp.bfloat16), w_hh,
                    preferred_element_type=jnp.float32)

                i_g = jax.nn.sigmoid(gates[:, 0 * H:1 * H])
                f_g = jax.nn.sigmoid(gates[:, 1 * H:2 * H])
                g_g = jnp.tanh(gates[:, 2 * H:3 * H])
                o_g = jax.nn.sigmoid(gates[:, 3 * H:4 * H])

                c_new = f_g * c + i_g * g_g
                h_new = o_g * jnp.tanh(c_new)

                valid = (t0 + s) < lengths          # (BT, 1) bool
                out_row = _hint((t0 + s) * BT, BT)
                # pad_packed_sequence zero-fills padded output positions.
                act_ref[pl.ds(out_row, BT), :] = jnp.where(
                    valid, h_new, 0.0).astype(act_ref.dtype)
                return (jnp.where(valid, h_new, h),
                        jnp.where(valid, c_new, c))

            # Bounded unroll keeps LLO visibility without exploding live ranges.
            return lax.fori_loop(0, TC, step, (h, c), unroll=min(4, TC))

        h0 = jnp.zeros((BT, H), jnp.float32)
        c0 = jnp.zeros((BT, H), jnp.float32)
        h_last, c_last = lax.fori_loop(0, n_chunks, chunk_body, (h0, c0))

        # Last *valid* hidden/cell states, packed (h | c) into one wider store.
        hc_ref[layer, :, 0:H] = h_last
        hc_ref[layer, :, H:2 * H] = c_last

    # fc2 + sigmoid epilogue, computed transposed (O, Tp*BT) so the y store is
    # lane-dense (last dim a big multiple of 128) instead of O=2 masked stores.
    fc_w = w_refs[3 * num_layers][...]        # (O, H) bf16
    fc_b = w_refs[3 * num_layers + 1][...]    # (O, 1) f32
    act = act_ref[...]                        # (Tp*BT, H) bf16
    y_t = jnp.einsum('oh,nh->on', fc_w, act,
                     preferred_element_type=jnp.float32)
    y_ref[...] = jax.nn.sigmoid(y_t + fc_b)


# ----------------------------------------------------------------------------
# Wrapper (layout glue in plain JAX).
# ----------------------------------------------------------------------------
def vanilla_lstm_forward(x, lengths, params, hidden_size, num_layers,
                         output_size, *, batch_tile=128, time_chunk=8):
    """x: (B, S, input_size) batch-first, lengths: (B,) int (descending)."""
    B, _, input_size = x.shape
    lengths = np.asarray(lengths, np.int32)
    t_max = int(lengths.max())              # pad_packed truncates to max len
    x = x[:, :t_max, :]

    H, O = hidden_size, output_size
    BT = batch_tile
    TC = time_chunk
    Tp = _round_up(t_max, TC)
    n_tiles = (B + BT - 1) // BT
    Bp = n_tiles * BT

    # Pad batch and time; padded rows get length 0 so they stay zero.
    x_p = jnp.pad(x, ((0, Bp - B), (0, Tp - t_max), (0, 0)))
    # Group rows per batch tile, time-major within the tile:
    # row = (g*Tp + t)*BT + j  <->  (batch g*BT + j, time t).
    x_g = x_p.reshape(n_tiles, BT, Tp, input_size).transpose(0, 2, 1, 3)
    x_g = x_g.reshape(n_tiles * Tp * BT, input_size).astype(jnp.bfloat16)

    len_p = np.zeros((Bp, 1), np.int32)
    len_p[:B, 0] = lengths
    len_p = jnp.asarray(len_p)

    weight_args = []
    in_specs = [
        pl.BlockSpec((Tp * BT, input_size), lambda bi: (bi, 0)),
        pl.BlockSpec((BT, 1), lambda bi: (bi, 0)),
    ]
    for l in range(num_layers):
        w_ih_t, w_hh_t, b_ih, b_hh = params[f"lstm_l{l}"]
        w_ih_b = jnp.asarray(w_ih_t, jnp.bfloat16)
        w_hh_b = jnp.asarray(w_hh_t, jnp.bfloat16)
        b = (b_ih + b_hh).astype(jnp.float32)        # combined bias, added once
        weight_args += [w_ih_b, w_hh_b, b]
        in_specs += [
            pl.BlockSpec(w_ih_b.shape, lambda bi: (0, 0)),
            pl.BlockSpec(w_hh_b.shape, lambda bi: (0, 0)),
            pl.BlockSpec(b.shape, lambda bi: (0, 0)),
        ]
    fc_w_t, fc_b = params["fc2"]                     # (H, O), (1, O)
    fc_w_oh = jnp.asarray(fc_w_t.T, jnp.bfloat16)    # (O, H) for transposed fc2
    fc_b_o1 = jnp.asarray(fc_b.reshape(O, 1), jnp.float32)
    weight_args += [fc_w_oh, fc_b_o1]
    in_specs += [
        pl.BlockSpec(fc_w_oh.shape, lambda bi: (0, 0)),
        pl.BlockSpec(fc_b_o1.shape, lambda bi: (0, 0)),
    ]

    # VMEM budget: double-buffered I/O blocks + scratch, with headroom.
    # TODO(synk): make this a per-generation constant (v7x has 64 MiB / core).
    est = 2 * Tp * BT * input_size * 2 + 2 * BT * 4
    for l in range(num_layers):
        in_l = input_size if l == 0 else H
        est += 2 * (in_l * 4 * H * 2 + H * 4 * H * 2 + 4 * H * 4)
    est += 2 * (O * H * 2 + O * 4)
    est += 2 * O * Tp * BT * 4 + 2 * num_layers * BT * 2 * H * 4
    est += 2 * TC * BT * 4 * H * 4 + Tp * BT * H * 2
    vmem_limit = int(min(max(2 * est, 32 << 20), 64 << 20))

    kernel = functools.partial(
        _fused_lstm_kernel, num_layers=num_layers, hidden_size=H,
        seq_pad=Tp, time_chunk=TC, batch_tile=BT)

    y_t, hc = pl.pallas_call(
        kernel,
        out_shape=(
            jax.ShapeDtypeStruct((O, n_tiles * Tp * BT), jnp.float32),
            jax.ShapeDtypeStruct((num_layers, Bp, 2 * H), jnp.float32),
        ),
        grid_spec=pltpu.PrefetchScalarGridSpec(
            num_scalar_prefetch=0,
            grid=(n_tiles,),
            in_specs=in_specs,
            out_specs=(
                pl.BlockSpec((O, Tp * BT), lambda bi: (0, bi)),
                pl.BlockSpec((num_layers, BT, 2 * H), lambda bi: (0, bi, 0)),
            ),
            scratch_shapes=[
                pltpu.VMEM((2 * TC * BT, 4 * H), jnp.float32),   # gi (2 slots)
                pltpu.VMEM((Tp * BT, H), jnp.bfloat16),          # activations
            ]),
        compiler_params=pltpu.CompilerParams(
            dimension_semantics=("parallel",),
            vmem_limit_bytes=vmem_limit),
    )(x_g, len_p, *weight_args)

    # Back to PyTorch's batch-first flattened layout; drop padding.
    y = y_t.reshape(O, n_tiles, Tp, BT).transpose(1, 3, 2, 0)   # (g, BT, Tp, O)
    y = y.reshape(Bp, Tp, O)[:B, :t_max].reshape(B * t_max, O)
    hc = hc[:, :B, :]
    h_n = hc[:, :, :H]
    c_n = hc[:, :, H:]
    return y, (h_n, c_n)


# ----------------------------------------------------------------------------
# Pure-JAX reference mirroring the kernel's numerics (bf16 MXU operands,
# f32 accumulation, f32 gate math and h/c carries, bf16 inter-layer acts).
# ----------------------------------------------------------------------------
def reference_forward(x, lengths, params, hidden_size, num_layers, output_size):
    B = x.shape[0]
    lengths = np.asarray(lengths, np.int32)
    t_max = int(lengths.max())
    x = x[:, :t_max, :]
    H = hidden_size
    t_idx = jnp.arange(t_max)[:, None]
    mask = (t_idx < jnp.asarray(lengths)[None, :])[:, :, None]   # (T, B, 1)

    layer_in = jnp.transpose(x, (1, 0, 2))                       # (T, B, IN)
    h_ns, c_ns = [], []
    for l in range(num_layers):
        w_ih_t, w_hh_t, b_ih, b_hh = params[f"lstm_l{l}"]
        w_ih_b = w_ih_t.astype(jnp.bfloat16)
        w_hh_b = w_hh_t.astype(jnp.bfloat16)
        bias = (b_ih + b_hh).astype(jnp.float32)
        gi = jnp.dot(layer_in.astype(jnp.bfloat16), w_ih_b,
                     preferred_element_type=jnp.float32) + bias   # (T, B, 4H)

        def step(carry, inp, w_hh_b=w_hh_b):
            h, c = carry
            gi_t, m = inp
            gates = gi_t + jnp.dot(h.astype(jnp.bfloat16), w_hh_b,
                                   preferred_element_type=jnp.float32)
            i = jax.nn.sigmoid(gates[:, :H])
            f = jax.nn.sigmoid(gates[:, H:2 * H])
            g = jnp.tanh(gates[:, 2 * H:3 * H])
            o = jax.nn.sigmoid(gates[:, 3 * H:])
            c_new = f * c + i * g
            h_new = o * jnp.tanh(c_new)
            return ((jnp.where(m, h_new, h), jnp.where(m, c_new, c)),
                    jnp.where(m, h_new, 0.0))

        init = (jnp.zeros((B, H), jnp.float32), jnp.zeros((B, H), jnp.float32))
        (h_last, c_last), ys = lax.scan(step, init, (gi, mask))
        layer_in = ys
        h_ns.append(h_last)
        c_ns.append(c_last)

    h_n = jnp.stack(h_ns, 0)
    c_n = jnp.stack(c_ns, 0)
    fc_w_t, fc_b = params["fc2"]
    out_bf = jnp.transpose(layer_in, (1, 0, 2)).reshape(-1, H)
    y = jax.nn.sigmoid(
        jnp.dot(out_bf.astype(jnp.bfloat16), fc_w_t.astype(jnp.bfloat16),
                preferred_element_type=jnp.float32) + fc_b)
    return y.reshape(-1, output_size), (h_n, c_n)


if __name__ == "__main__":
    # Small shapes consistent with the module's forward.
    input_size, hidden_size, num_layers = 8, 32, 2
    batch_size, output_size, seq_len = 4, 2, 8

    key = jax.random.PRNGKey(0)
    keys = jax.random.split(key, 4 * num_layers + 3)
    k = 1.0 / np.sqrt(hidden_size)

    params = {}
    ki = 0
    for l in range(num_layers):
        in_dim = input_size if l == 0 else hidden_size
        # Stored transposed for right-multiplication: x @ W_ih^T == x @ w_ih_t.
        # PyTorch LSTM gate order (i, f, g, o) along the 4H axis.
        w_ih_t = jax.random.uniform(keys[ki], (in_dim, 4 * hidden_size),
                                    jnp.float32, -k, k); ki += 1
        w_hh_t = jax.random.uniform(keys[ki], (hidden_size, 4 * hidden_size),
                                    jnp.float32, -k, k); ki += 1
        b_ih = jax.random.uniform(keys[ki], (1, 4 * hidden_size),
                                  jnp.float32, -k, k); ki += 1
        b_hh = jax.random.uniform(keys[ki], (1, 4 * hidden_size),
                                  jnp.float32, -k, k); ki += 1
        params[f"lstm_l{l}"] = (w_ih_t, w_hh_t, b_ih, b_hh)

    fc_w_t = jax.random.uniform(keys[ki], (hidden_size, output_size),
                                jnp.float32, -k, k); ki += 1
    fc_b = jax.random.uniform(keys[ki], (1, output_size),
                              jnp.float32, -k, k); ki += 1
    params["fc2"] = (fc_w_t, fc_b)

    x = jax.random.normal(keys[ki], (batch_size, seq_len, input_size),
                          jnp.float32)
    lengths = np.array([8, 7, 5, 3], dtype=np.int32)  # descending (pack_padded)

    # time_chunk=4 -> 2 time chunks, exercising the double-buffered gi path.
    y, (h_n, c_n) = vanilla_lstm_forward(
        x, lengths, params, hidden_size, num_layers, output_size,
        batch_tile=128, time_chunk=4)
    y = jax.block_until_ready(y)
    h_n = jax.block_until_ready(h_n)
    c_n = jax.block_until_ready(c_n)

    y_ref, (h_ref, c_ref) = reference_forward(x, lengths, params, hidden_size,
                                              num_layers, output_size)
    np.testing.assert_allclose(np.asarray(y), np.asarray(y_ref),
                               atol=2e-3, rtol=2e-3)
    np.testing.assert_allclose(np.asarray(h_n), np.asarray(h_ref),
                               atol=2e-3, rtol=2e-3)
    np.testing.assert_allclose(np.asarray(c_n), np.asarray(c_ref),
                               atol=2e-3, rtol=2e-3)

    assert y.shape == (batch_size * seq_len, output_size)
    assert h_n.shape == (num_layers, batch_size, hidden_size)
    assert c_n.shape == (num_layers, batch_size, hidden_size)
    print("KERNEL_OK")
</pallas_src>

<mosaic_0001>
module attributes {stable_mosaic.version = 11 : i64} {
  func.func @_fused_lstm_kernel(%arg0: i32, %arg1: memref<1024x8xbf16, #tpu.memory_space<vmem>>, %arg2: memref<128x1xi32, #tpu.memory_space<vmem>>, %arg3: memref<8x128xbf16, #tpu.memory_space<vmem>>, %arg4: memref<32x128xbf16, #tpu.memory_space<vmem>>, %arg5: memref<1x128xf32, #tpu.memory_space<vmem>>, %arg6: memref<32x128xbf16, #tpu.memory_space<vmem>>, %arg7: memref<32x128xbf16, #tpu.memory_space<vmem>>, %arg8: memref<1x128xf32, #tpu.memory_space<vmem>>, %arg9: memref<2x32xbf16, #tpu.memory_space<vmem>>, %arg10: memref<2x1xf32, #tpu.memory_space<vmem>>, %arg11: memref<2x1024xf32, #tpu.memory_space<vmem>>, %arg12: memref<2x128x64xf32, #tpu.memory_space<vmem>>, %arg13: memref<1024x128xf32, #tpu.memory_space<vmem>>, %arg14: memref<1024x32xbf16, #tpu.memory_space<vmem>>) attributes {dimension_semantics = [#tpu.dimension_semantics<parallel>], iteration_bounds = array<i64: 1>, scalar_prefetch = 0 : i64, scratch_operands = 2 : i64, tpu.core_type = #tpu.core_type<tc>, window_params = [{transform_indices = @transform_0, window_bounds = array<i64: 1024, 8>}, {transform_indices = @transform_1, window_bounds = array<i64: 128, 1>}, {pipeline_mode = #tpu.pipeline_mode<synchronous>, transform_indices = @transform_2, window_bounds = array<i64: 8, 128>}, {pipeline_mode = #tpu.pipeline_mode<synchronous>, transform_indices = @transform_3, window_bounds = array<i64: 32, 128>}, {pipeline_mode = #tpu.pipeline_mode<synchronous>, transform_indices = @transform_4, window_bounds = array<i64: 1, 128>}, {pipeline_mode = #tpu.pipeline_mode<synchronous>, transform_indices = @transform_5, window_bounds = array<i64: 32, 128>}, {pipeline_mode = #tpu.pipeline_mode<synchronous>, transform_indices = @transform_6, window_bounds = array<i64: 32, 128>}, {pipeline_mode = #tpu.pipeline_mode<synchronous>, transform_indices = @transform_7, window_bounds = array<i64: 1, 128>}, {pipeline_mode = #tpu.pipeline_mode<synchronous>, transform_indices = @transform_8, window_bounds = array<i64: 2, 32>}, {pipeline_mode = #tpu.pipeline_mode<synchronous>, transform_indices = @transform_9, window_bounds = array<i64: 2, 1>}, {transform_indices = @transform_10, window_bounds = array<i64: 2, 1024>}, {transform_indices = @transform_11, window_bounds = array<i64: 2, 128, 64>}]} {
    %c0 = arith.constant 0 : index
    %c0_0 = arith.constant 0 : index
    %0 = vector.load %arg2[%c0, %c0_0] : memref<128x1xi32, #tpu.memory_space<vmem>>, vector<128x1xi32>
    %c0_1 = arith.constant 0 : index
    %c0_2 = arith.constant 0 : index
    %1 = vector.load %arg3[%c0_1, %c0_2] : memref<8x128xbf16, #tpu.memory_space<vmem>>, vector<8x128xbf16>
    %c0_3 = arith.constant 0 : index
    %c0_4 = arith.constant 0 : index
    %2 = vector.load %arg4[%c0_3, %c0_4] : memref<32x128xbf16, #tpu.memory_space<vmem>>, vector<32x128xbf16>
    %c0_5 = arith.constant 0 : index
    %c0_6 = arith.constant 0 : index
    %3 = vector.load %arg5[%c0_5, %c0_6] : memref<1x128xf32, #tpu.memory_space<vmem>>, vector<1x128xf32>
    %c0_7 = arith.constant 0 : index
    %c0_8 = arith.constant 0 : index
    %4 = vector.load %arg1[%c0_7, %c0_8] : memref<1024x8xbf16, #tpu.memory_space<vmem>>, vector<512x8xbf16>
    %cst = arith.constant dense<0.000000e+00> : vector<512x128xf32>
    %5 = tpu.matmul %4, %1, %cst {dimension_numbers = #tpu.dot_dimension_numbers<[1], [0], [0], [1], [0, 0, 1, 1], [], []>} : vector<512x8xbf16>, vector<8x128xbf16>, vector<512x128xf32> -> vector<512x128xf32>
    %6 = vector.broadcast %3 : vector<1x128xf32> to vector<512x128xf32>
    %7 = arith.addf %5, %6 : vector<512x128xf32>
    %c0_9 = arith.constant 0 : index
    %c0_10 = arith.constant 0 : index
    %8 = vector.load %arg13[%c0_9, %c0_10] : memref<1024x128xf32, #tpu.memory_space<vmem>>, vector<512x128xf32>
    tpu.vector_store %arg13[%c0_9, %c0_10], %7 {strides = array<i32>} : memref<1024x128xf32, #tpu.memory_space<vmem>>, vector<512x128xf32>,
    %cst_11 = arith.constant 0.000000e+00 : f32
    %9 = vector.broadcast %cst_11 : f32 to vector<128x32xf32>
    %cst_12 = arith.constant 0.000000e+00 : f32
    %10 = vector.broadcast %cst_12 : f32 to vector<128x32xf32>
    %c0_i32 = arith.constant 0 : i32
    %c2_i32 = arith.constant 2 : i32
    %11 = arith.addi %c0_i32, %c2_i32 : i32
    %c1_i32 = arith.constant 1 : i32
    %12:2 = scf.for %arg15 = %c0_i32 to %11 step %c1_i32 iter_args(%arg16 = %9, %arg17 = %10) -> (vector<128x32xf32>, vector<128x32xf32>)  : i32 {
      %c2_i32_51 = arith.constant 2 : i32
      %c0_i32_52 = arith.constant 0 : i32
      %49 = arith.cmpi eq, %c2_i32_51, %c0_i32_52 : i32
      %c1_i32_53 = arith.constant 1 : i32
      %50 = arith.select %49, %c1_i32_53, %c2_i32_51 : i32
      %51 = arith.remsi %arg15, %50 : i32
      %c0_i32_54 = arith.constant 0 : i32
      %52 = arith.cmpi ne, %51, %c0_i32_54 : i32
      %c0_i32_55 = arith.constant 0 : i32
      %53 = arith.cmpi slt, %51, %c0_i32_55 : i32
      %c0_i32_56 = arith.constant 0 : i32
      %54 = arith.cmpi slt, %50, %c0_i32_56 : i32
      %55 = arith.xori %53, %54 : i1
      %56 = arith.andi %55, %52 : i1
      %57 = arith.addi %51, %50 : i32
      %58 = arith.select %56, %57, %51 : i32
      %c1_i32_57 = arith.constant 1 : i32
      %59 = arith.addi %arg15, %c1_i32_57 : i32
      %c2_i32_58 = arith.constant 2 : i32
      %60 = arith.cmpi slt, %59, %c2_i32_58 : i32
      %61 = arith.extui %60 : i1 to i32
      %c0_i32_59 = arith.constant 0 : i32
      %62 = arith.cmpi ne, %61, %c0_i32_59 : i32
      scf.if %62 {
        %c1_i32_99 = arith.constant 1 : i32
        %273 = arith.addi %arg15, %c1_i32_99 : i32
        %c1_i32_100 = arith.constant 1 : i32
        %274 = arith.subi %c1_i32_100, %58 : i32
        %c512_i32_101 = arith.constant 512 : i32
        %275 = arith.muli %273, %c512_i32_101 : i32
        %276 = tpu.assume_multiple %275, 512 : i32
        %c512_i32_102 = arith.constant 512 : i32
        %277 = arith.muli %274, %c512_i32_102 : i32
        %278 = tpu.assume_multiple %277, 512 : i32
        %279 = arith.index_cast %276 : i32 to index
        %c0_103 = arith.constant 0 : index
        %280 = vector.load %arg1[%279, %c0_103] : memref<1024x8xbf16, #tpu.memory_space<vmem>>, vector<512x8xbf16>
        %cst_104 = arith.constant dense<0.000000e+00> : vector<512x128xf32>
        %281 = tpu.matmul %280, %1, %cst_104 {dimension_numbers = #tpu.dot_dimension_numbers<[1], [0], [0], [1], [0, 0, 1, 1], [], []>} : vector<512x8xbf16>, vector<8x128xbf16>, vector<512x128xf32> -> vector<512x128xf32>
        %282 = vector.broadcast %3 : vector<1x128xf32> to vector<512x128xf32>
        %283 = arith.addf %281, %282 : vector<512x128xf32>
        %284 = arith.index_cast %278 : i32 to index
        %c0_105 = arith.constant 0 : index
        %285 = vector.load %arg13[%284, %c0_105] : memref<1024x128xf32, #tpu.memory_space<vmem>>, vector<512x128xf32>
        tpu.vector_store %arg13[%284, %c0_105], %283 {strides = array<i32>} : memref<1024x128xf32, #tpu.memory_space<vmem>>, vector<512x128xf32>,
      } else {
      }
      %c4_i32 = arith.constant 4 : i32
      %63 = arith.muli %arg15, %c4_i32 : i32
      %c512_i32 = arith.constant 512 : i32
      %64 = arith.muli %58, %c512_i32 : i32
      %c0_i32_60 = arith.constant 0 : i32
      %c128_i32 = arith.constant 128 : i32
      %65 = arith.muli %c0_i32_60, %c128_i32 : i32
      %66 = arith.addi %64, %65 : i32
      %67 = tpu.assume_multiple %66, 128 : i32
      %68 = arith.index_cast %67 : i32 to index
      %c0_61 = arith.constant 0 : index
      %69 = vector.load %arg13[%68, %c0_61] : memref<1024x128xf32, #tpu.memory_space<vmem>>, vector<128x128xf32>
      %70 = arith.truncf %arg16 : vector<128x32xf32> to vector<128x32xbf16>
      %cst_62 = arith.constant dense<0.000000e+00> : vector<128x128xf32>
      %71 = tpu.matmul %70, %2, %cst_62 {dimension_numbers = #tpu.dot_dimension_numbers<[1], [0], [0], [1], [0, 0, 1, 1], [], []>} : vector<128x32xbf16>, vector<32x128xbf16>, vector<128x128xf32> -> vector<128x128xf32>
      %72 = arith.addf %69, %71 : vector<128x128xf32>
      %73 = vector.extract_strided_slice %72 {offsets = [0, 0], sizes = [128, 32], strides = [1, 1]} : vector<128x128xf32> to vector<128x32xf32>
      %74 = arith.negf %73 : vector<128x32xf32>
      %75 = math.exp %74 : vector<128x32xf32>
      %cst_63 = arith.constant 1.000000e+00 : f32
      %76 = vector.broadcast %cst_63 : f32 to vector<128x32xf32>
      %77 = arith.addf %76, %75 : vector<128x32xf32>
      %78 = arith.divf %76, %77 : vector<128x32xf32>
      %79 = vector.extract_strided_slice %72 {offsets = [0, 32], sizes = [128, 32], strides = [1, 1]} : vector<128x128xf32> to vector<128x32xf32>
      %80 = arith.negf %79 : vector<128x32xf32>
      %81 = math.exp %80 : vector<128x32xf32>
      %cst_64 = arith.constant 1.000000e+00 : f32
      %82 = vector.broadcast %cst_64 : f32 to vector<128x32xf32>
      %83 = arith.addf %82, %81 : vector<128x32xf32>
      %84 = arith.divf %82, %83 : vector<128x32xf32>
      %85 = vector.extract_strided_slice %72 {offsets = [0, 64], sizes = [128, 32], strides = [1, 1]} : vector<128x128xf32> to vector<128x32xf32>
      %86 = math.tanh %85 : vector<128x32xf32>
      %87 = vector.extract_strided_slice %72 {offsets = [0, 96], sizes = [128, 32], strides = [1, 1]} : vector<128x128xf32> to vector<128x32xf32>
      %88 = arith.negf %87 : vector<128x32xf32>
      %89 = math.exp %88 : vector<128x32xf32>
      %cst_65 = arith.constant 1.000000e+00 : f32
      %90 = vector.broadcast %cst_65 : f32 to vector<128x32xf32>
      %91 = arith.addf %90, %89 : vector<128x32xf32>
      %92 = arith.divf %90, %91 : vector<128x32xf32>
      %93 = arith.mulf %84, %arg17 : vector<128x32xf32>
      %94 = arith.mulf %78, %86 : vector<128x32xf32>
      %95 = arith.addf %93, %94 : vector<128x32xf32>
      %96 = math.tanh %95 : vector<128x32xf32>
      %97 = arith.mulf %92, %96 : vector<128x32xf32>
      %98 = arith.addi %63, %c0_i32_60 : i32
      %99 = vector.broadcast %98 : i32 to vector<128x1xi32>
      %100 = arith.cmpi slt, %99, %0 : vector<128x1xi32>
      %101 = arith.addi %63, %c0_i32_60 : i32
      %c128_i32_66 = arith.constant 128 : i32
      %102 = arith.muli %101, %c128_i32_66 : i32
      %103 = tpu.assume_multiple %102, 128 : i32
      %cst_67 = arith.constant 0.000000e+00 : f32
      %104 = vector.shape_cast %100 : vector<128x1xi1> to vector<128x1xi1>
      %105 = vector.broadcast %104 : vector<128x1xi1> to vector<128x32xi1>
      %106 = vector.broadcast %cst_67 : f32 to vector<128x32xf32>
      %107 = arith.select %105, %97, %106 : vector<128x32xi1>, vector<128x32xf32>
      %108 = arith.truncf %107 : vector<128x32xf32> to vector<128x32xbf16>
      %109 = arith.index_cast %103 : i32 to index
      %c0_68 = arith.constant 0 : index
      %110 = vector.load %arg14[%109, %c0_68] : memref<1024x32xbf16, #tpu.memory_space<vmem>>, vector<128x32xbf16>
      tpu.vector_store %arg14[%109, %c0_68], %108 {strides = array<i32>} : memref<1024x32xbf16, #tpu.memory_space<vmem>>, vector<128x32xbf16>,
      %111 = vector.shape_cast %100 : vector<128x1xi1> to vector<128x1xi1>
      %112 = vector.broadcast %111 : vector<128x1xi1> to vector<128x32xi1>
      %113 = arith.select %112, %97, %arg16 : vector<128x32xi1>, vector<128x32xf32>
      %114 = vector.shape_cast %100 : vector<128x1xi1> to vector<128x1xi1>
      %115 = vector.broadcast %114 : vector<128x1xi1> to vector<128x32xi1>
      %116 = arith.select %115, %95, %arg17 : vector<128x32xi1>, vector<128x32xf32>
      %c1_i32_69 = arith.constant 1 : i32
      %c128_i32_70 = arith.constant 128 : i32
      %117 = arith.muli %c1_i32_69, %c128_i32_70 : i32
      %118 = arith.addi %64, %117 : i32
      %119 = tpu.assume_multiple %118, 128 : i32
      %120 = arith.index_cast %119 : i32 to index
      %c0_71 = arith.constant 0 : index
      %121 = vector.load %arg13[%120, %c0_71] : memref<1024x128xf32, #tpu.memory_space<vmem>>, vector<128x128xf32>
      %122 = arith.truncf %113 : vector<128x32xf32> to vector<128x32xbf16>
      %cst_72 = arith.constant dense<0.000000e+00> : vector<128x128xf32>
      %123 = tpu.matmul %122, %2, %cst_72 {dimension_numbers = #tpu.dot_dimension_numbers<[1], [0], [0], [1], [0, 0, 1, 1], [], []>} : vector<128x32xbf16>, vector<32x128xbf16>, vector<128x128xf32> -> vector<128x128xf32>
      %124 = arith.addf %121, %123 : vector<128x128xf32>
      %125 = vector.extract_strided_slice %124 {offsets = [0, 0], sizes = [128, 32], strides = [1, 1]} : vector<128x128xf32> to vector<128x32xf32>
      %126 = arith.negf %125 : vector<128x32xf32>
      %127 = math.exp %126 : vector<128x32xf32>
      %cst_73 = arith.constant 1.000000e+00 : f32
      %128 = vector.broadcast %cst_73 : f32 to vector<128x32xf32>
      %129 = arith.addf %128, %127 : vector<128x32xf32>
      %130 = arith.divf %128, %129 : vector<128x32xf32>
      %131 = vector.extract_strided_slice %124 {offsets = [0, 32], sizes = [128, 32], strides = [1, 1]} : vector<128x128xf32> to vector<128x32xf32>
      %132 = arith.negf %131 : vector<128x32xf32>
      %133 = math.exp %132 : vector<128x32xf32>
      %cst_74 = arith.constant 1.000000e+00 : f32
      %134 = vector.broadcast %cst_74 : f32 to vector<128x32xf32>
      %135 = arith.addf %134, %133 : vector<128x32xf32>
      %136 = arith.divf %134, %135 : vector<128x32xf32>
      %137 = vector.extract_strided_slice %124 {offsets = [0, 64], sizes = [128, 32], strides = [1, 1]} : vector<128x128xf32> to vector<128x32xf32>
      %138 = math.tanh %137 : vector<128x32xf32>
      %139 = vector.extract_strided_slice %124 {offsets = [0, 96], sizes = [128, 32], strides = [1, 1]} : vector<128x128xf32> to vector<128x32xf32>
      %140 = arith.negf %139 : vector<128x32xf32>
      %141 = math.exp %140 : vector<128x32xf32>
      %cst_75 = arith.constant 1.000000e+00 : f32
      %142 = vector.broadcast %cst_75 : f32 to vector<128x32xf32>
      %143 = arith.addf %142, %141 : vector<128x32xf32>
      %144 = arith.divf %142, %143 : vector<128x32xf32>
      %145 = arith.mulf %136, %116 : vector<128x32xf32>
      %146 = arith.mulf %130, %138 : vector<128x32xf32>
      %147 = arith.addf %145, %146 : vector<128x32xf32>
      %148 = math.tanh %147 : vector<128x32xf32>
      %149 = arith.mulf %144, %148 : vector<128x32xf32>
      %150 = arith.addi %63, %c1_i32_69 : i32
      %151 = vector.broadcast %150 : i32 to vector<128x1xi32>
      %152 = arith.cmpi slt, %151, %0 : vector<128x1xi32>
      %153 = arith.addi %63, %c1_i32_69 : i32
      %c128_i32_76 = arith.constant 128 : i32
      %154 = arith.muli %153, %c128_i32_76 : i32
      %155 = tpu.assume_multiple %154, 128 : i32
      %cst_77 = arith.constant 0.000000e+00 : f32
      %156 = vector.shape_cast %152 : vector<128x1xi1> to vector<128x1xi1>
      %157 = vector.broadcast %156 : vector<128x1xi1> to vector<128x32xi1>
      %158 = vector.broadcast %cst_77 : f32 to vector<128x32xf32>
      %159 = arith.select %157, %149, %158 : vector<128x32xi1>, vector<128x32xf32>
      %160 = arith.truncf %159 : vector<128x32xf32> to vector<128x32xbf16>
      %161 = arith.index_cast %155 : i32 to index
      %c0_78 = arith.constant 0 : index
      %162 = vector.load %arg14[%161, %c0_78] : memref<1024x32xbf16, #tpu.memory_space<vmem>>, vector<128x32xbf16>
      tpu.vector_store %arg14[%161, %c0_78], %160 {strides = array<i32>} : memref<1024x32xbf16, #tpu.memory_space<vmem>>, vector<128x32xbf16>,
      %163 = vector.shape_cast %152 : vector<128x1xi1> to vector<128x1xi1>
      %164 = vector.broadcast %163 : vector<128x1xi1> to vector<128x32xi1>
      %165 = arith.select %164, %149, %113 : vector<128x32xi1>, vector<128x32xf32>
      %166 = vector.shape_cast %152 : vector<128x1xi1> to vector<128x1xi1>
      %167 = vector.broadcast %166 : vector<128x1xi1> to vector<128x32xi1>
      %168 = arith.select %167, %147, %116 : vector<128x32xi1>, vector<128x32xf32>
      %c2_i32_79 = arith.constant 2 : i32
      %c128_i32_80 = arith.constant 128 : i32
      %169 = arith.muli %c2_i32_79, %c128_i32_80 : i32
      %170 = arith.addi %64, %169 : i32
      %171 = tpu.assume_multiple %170, 128 : i32
      %172 = arith.index_cast %171 : i32 to index
      %c0_81 = arith.constant 0 : index
      %173 = vector.load %arg13[%172, %c0_81] : memref<1024x128xf32, #tpu.memory_space<vmem>>, vector<128x128xf32>
      %174 = arith.truncf %165 : vector<128x32xf32> to vector<128x32xbf16>
      %cst_82 = arith.constant dense<0.000000e+00> : vector<128x128xf32>
      %175 = tpu.matmul %174, %2, %cst_82 {dimension_numbers = #tpu.dot_dimension_numbers<[1], [0], [0], [1], [0, 0, 1, 1], [], []>} : vector<128x32xbf16>, vector<32x128xbf16>, vector<128x128xf32> -> vector<128x128xf32>
      %176 = arith.addf %173, %175 : vector<128x128xf32>
      %177 = vector.extract_strided_slice %176 {offsets = [0, 0], sizes = [128, 32], strides = [1, 1]} : vector<128x128xf32> to vector<128x32xf32>
      %178 = arith.negf %177 : vector<128x32xf32>
      %179 = math.exp %178 : vector<128x32xf32>
      %cst_83 = arith.constant 1.000000e+00 : f32
      %180 = vector.broadcast %cst_83 : f32 to vector<128x32xf32>
      %181 = arith.addf %180, %179 : vector<128x32xf32>
      %182 = arith.divf %180, %181 : vector<128x32xf32>
      %183 = vector.extract_strided_slice %176 {offsets = [0, 32], sizes = [128, 32], strides = [1, 1]} : vector<128x128xf32> to vector<128x32xf32>
      %184 = arith.negf %183 : vector<128x32xf32>
      %185 = math.exp %184 : vector<128x32xf32>
      %cst_84 = arith.constant 1.000000e+00 : f32
      %186 = vector.broadcast %cst_84 : f32 to vector<128x32xf32>
      %187 = arith.addf %186, %185 : vector<128x32xf32>
      %188 = arith.divf %186, %187 : vector<128x32xf32>
      %189 = vector.extract_strided_slice %176 {offsets = [0, 64], sizes = [128, 32], strides = [1, 1]} : vector<128x128xf32> to vector<128x32xf32>
      %190 = math.tanh %189 : vector<128x32xf32>
      %191 = vector.extract_strided_slice %176 {offsets = [0, 96], sizes = [128, 32], strides = [1, 1]} : vector<128x128xf32> to vector<128x32xf32>
      %192 = arith.negf %191 : vector<128x32xf32>
      %193 = math.exp %192 : vector<128x32xf32>
      %cst_85 = arith.constant 1.000000e+00 : f32
      %194 = vector.broadcast %cst_85 : f32 to vector<128x32xf32>
      %195 = arith.addf %194, %193 : vector<128x32xf32>
      %196 = arith.divf %194, %195 : vector<128x32xf32>
      %197 = arith.mulf %188, %168 : vector<128x32xf32>
      %198 = arith.mulf %182, %190 : vector<128x32xf32>
      %199 = arith.addf %197, %198 : vector<128x32xf32>
      %200 = math.tanh %199 : vector<128x32xf32>
      %201 = arith.mulf %196, %200 : vector<128x32xf32>
      %202 = arith.addi %63, %c2_i32_79 : i32
      %203 = vector.broadcast %202 : i32 to vector<128x1xi32>
      %204 = arith.cmpi slt, %203, %0 : vector<128x1xi32>
      %205 = arith.addi %63, %c2_i32_79 : i32
      %c128_i32_86 = arith.constant 128 : i32
      %206 = arith.muli %205, %c128_i32_86 : i32
      %207 = tpu.assume_multiple %206, 128 : i32
      %cst_87 = arith.constant 0.000000e+00 : f32
      %208 = vector.shape_cast %204 : vector<128x1xi1> to vector<128x1xi1>
      %209 = vector.broadcast %208 : vector<128x1xi1> to vector<128x32xi1>
      %210 = vector.broadcast %cst_87 : f32 to vector<128x32xf32>
      %211 = arith.select %209, %201, %210 : vector<128x32xi1>, vector<128x32xf32>
      %212 = arith.truncf %211 : vector<128x32xf32> to vector<128x32xbf16>
      %213 = arith.index_cast %207 : i32 to index
      %c0_88 = arith.constant 0 : index
      %214 = vector.load %arg14[%213, %c0_88] : memref<1024x32xbf16, #tpu.memory_space<vmem>>, vector<128x32xbf16>
      tpu.vector_store %arg14[%213, %c0_88], %212 {strides = array<i32>} : memref<1024x32xbf16, #tpu.memory_space<vmem>>, vector<128x32xbf16>,
      %215 = vector.shape_cast %204 : vector<128x1xi1> to vector<128x1xi1>
      %216 = vector.broadcast %215 : vector<128x1xi1> to vector<128x32xi1>
      %217 = arith.select %216, %201, %165 : vector<128x32xi1>, vector<128x32xf32>
      %218 = vector.shape_cast %204 : vector<128x1xi1> to vector<128x1xi1>
      %219 = vector.broadcast %218 : vector<128x1xi1> to vector<128x32xi1>
      %220 = arith.select %219, %199, %168 : vector<128x32xi1>, vector<128x32xf32>
      %c3_i32 = arith.constant 3 : i32
      %c128_i32_89 = arith.constant 128 : i32
      %221 = arith.muli %c3_i32, %c128_i32_89 : i32
      %222 = arith.addi %64, %221 : i32
      %223 = tpu.assume_multiple %222, 128 : i32
      %224 = arith.index_cast %223 : i32 to index
      %c0_90 = arith.constant 0 : index
      %225 = vector.load %arg13[%224, %c0_90] : memref<1024x128xf32, #tpu.memory_space<vmem>>, vector<128x128xf32>
      %226 = arith.truncf %217 : vector<128x32xf32> to vector<128x32xbf16>
      %cst_91 = arith.constant dense<0.000000e+00> : vector<128x128xf32>
      %227 = tpu.matmul %226, %2, %cst_91 {dimension_numbers = #tpu.dot_dimension_numbers<[1], [0], [0], [1], [0, 0, 1, 1], [], []>} : vector<128x32xbf16>, vector<32x128xbf16>, vector<128x128xf32> -> vector<128x128xf32>
      %228 = arith.addf %225, %227 : vector<128x128xf32>
      %229 = vector.extract_strided_slice %228 {offsets = [0, 0], sizes = [128, 32], strides = [1, 1]} : vector<128x128xf32> to vector<128x32xf32>
      %230 = arith.negf %229 : vector<128x32xf32>
      %231 = math.exp %230 : vector<128x32xf32>
      %cst_92 = arith.constant 1.000000e+00 : f32
      %232 = vector.broadcast %cst_92 : f32 to vector<128x32xf32>
      %233 = arith.addf %232, %231 : vector<128x32xf32>
      %234 = arith.divf %232, %233 : vector<128x32xf32>
      %235 = vector.extract_strided_slice %228 {offsets = [0, 32], sizes = [128, 32], strides = [1, 1]} : vector<128x128xf32> to vector<128x32xf32>
      %236 = arith.negf %235 : vector<128x32xf32>
      %237 = math.exp %236 : vector<128x32xf32>
      %cst_93 = arith.constant 1.000000e+00 : f32
      %238 = vector.broadcast %cst_93 : f32 to vector<128x32xf32>
      %239 = arith.addf %238, %237 : vector<128x32xf32>
      %240 = arith.divf %238, %239 : vector<128x32xf32>
      %241 = vector.extract_strided_slice %228 {offsets = [0, 64], sizes = [128, 32], strides = [1, 1]} : vector<128x128xf32> to vector<128x32xf32>
      %242 = math.tanh %241 : vector<128x32xf32>
      %243 = vector.extract_strided_slice %228 {offsets = [0, 96], sizes = [128, 32], strides = [1, 1]} : vector<128x128xf32> to vector<128x32xf32>
      %244 = arith.negf %243 : vector<128x32xf32>
      %245 = math.exp %244 : vector<128x32xf32>
      %cst_94 = arith.constant 1.000000e+00 : f32
      %246 = vector.broadcast %cst_94 : f32 to vector<128x32xf32>
      %247 = arith.addf %246, %245 : vector<128x32xf32>
      %248 = arith.divf %246, %247 : vector<128x32xf32>
      %249 = arith.mulf %240, %220 : vector<128x32xf32>
      %250 = arith.mulf %234, %242 : vector<128x32xf32>
      %251 = arith.addf %249, %250 : vector<128x32xf32>
      %252 = math.tanh %251 : vector<128x32xf32>
      %253 = arith.mulf %248, %252 : vector<128x32xf32>
      %254 = arith.addi %63, %c3_i32 : i32
      %255 = vector.broadcast %254 : i32 to vector<128x1xi32>
      %256 = arith.cmpi slt, %255, %0 : vector<128x1xi32>
      %257 = arith.addi %63, %c3_i32 : i32
      %c128_i32_95 = arith.constant 128 : i32
      %258 = arith.muli %257, %c128_i32_95 : i32
      %259 = tpu.assume_multiple %258, 128 : i32
      %cst_96 = arith.constant 0.000000e+00 : f32
      %260 = vector.shape_cast %256 : vector<128x1xi1> to vector<128x1xi1>
      %261 = vector.broadcast %260 : vector<128x1xi1> to vector<128x32xi1>
      %262 = vector.broadcast %cst_96 : f32 to vector<128x32xf32>
      %263 = arith.select %261, %253, %262 : vector<128x32xi1>, vector<128x32xf32>
      %264 = arith.truncf %263 : vector<128x32xf32> to vector<128x32xbf16>
      %265 = arith.index_cast %259 : i32 to index
      %c0_97 = arith.constant 0 : index
      %266 = vector.load %arg14[%265, %c0_97] : memref<1024x32xbf16, #tpu.memory_space<vmem>>, vector<128x32xbf16>
      tpu.vector_store %arg14[%265, %c0_97], %264 {strides = array<i32>} : memref<1024x32xbf16, #tpu.memory_space<vmem>>, vector<128x32xbf16>,
      %267 = vector.shape_cast %256 : vector<128x1xi1> to vector<128x1xi1>
      %268 = vector.broadcast %267 : vector<128x1xi1> to vector<128x32xi1>
      %269 = arith.select %268, %253, %217 : vector<128x32xi1>, vector<128x32xf32>
      %270 = vector.shape_cast %256 : vector<128x1xi1> to vector<128x1xi1>
      %271 = vector.broadcast %270 : vector<128x1xi1> to vector<128x32xi1>
      %272 = arith.select %271, %251, %220 : vector<128x32xi1>, vector<128x32xf32>
      %c4_i32_98 = arith.constant 4 : i32
      scf.yield %269, %272 : vector<128x32xf32>, vector<128x32xf32>
    }
    %c2_i32_13 = arith.constant 2 : i32
    %c0_14 = arith.constant 0 : index
    %c0_15 = arith.constant 0 : index
    %c0_16 = arith.constant 0 : index
    %13 = vector.load %arg12[%c0_14, %c0_15, %c0_16] : memref<2x128x64xf32, #tpu.memory_space<vmem>>, vector<1x128x32xf32>
    %14 = vector.shape_cast %13 : vector<1x128x32xf32> to vector<128x32xf32>
    %15 = vector.shape_cast %12#0 : vector<128x32xf32> to vector<1x128x32xf32>
    tpu.vector_store %arg12[%c0_14, %c0_15, %c0_16], %15 {strides = array<i32>} : memref<2x128x64xf32, #tpu.memory_space<vmem>>, vector<1x128x32xf32>,
    %c0_17 = arith.constant 0 : index
    %c0_18 = arith.constant 0 : index
    %c32 = arith.constant 32 : index
    %16 = vector.load %arg12[%c0_17, %c0_18, %c32] : memref<2x128x64xf32, #tpu.memory_space<vmem>>, vector<1x128x32xf32>
    %17 = vector.shape_cast %16 : vector<1x128x32xf32> to vector<128x32xf32>
    %18 = vector.shape_cast %12#1 : vector<128x32xf32> to vector<1x128x32xf32>
    tpu.vector_store %arg12[%c0_17, %c0_18, %c32], %18 {strides = array<i32>} : memref<2x128x64xf32, #tpu.memory_space<vmem>>, vector<1x128x32xf32>,
    %c0_19 = arith.constant 0 : index
    %c0_20 = arith.constant 0 : index
    %19 = vector.load %arg6[%c0_19, %c0_20] : memref<32x128xbf16, #tpu.memory_space<vmem>>, vector<32x128xbf16>
    %c0_21 = arith.constant 0 : index
    %c0_22 = arith.constant 0 : index
    %20 = vector.load %arg7[%c0_21, %c0_22] : memref<32x128xbf16, #tpu.memory_space<vmem>>, vector<32x128xbf16>
    %c0_23 = arith.constant 0 : index
    %c0_24 = arith.constant 0 : index
    %21 = vector.load %arg8[%c0_23, %c0_24] : memref<1x128xf32, #tpu.memory_space<vmem>>, vector<1x128xf32>
    %c0_25 = arith.constant 0 : index
    %c0_26 = arith.constant 0 : index
    %22 = vector.load %arg14[%c0_25, %c0_26] : memref<1024x32xbf16, #tpu.memory_space<vmem>>, vector<512x32xbf16>
    %cst_27 = arith.constant dense<0.000000e+00> : vector<512x128xf32>
    %23 = tpu.matmul %22, %19, %cst_27 {dimension_numbers = #tpu.dot_dimension_numbers<[1], [0], [0], [1], [0, 0, 1, 1], [], []>} : vector<512x32xbf16>, vector<32x128xbf16>, vector<512x128xf32> -> vector<512x128xf32>
    %24 = vector.broadcast %21 : vector<1x128xf32> to vector<512x128xf32>
    %25 = arith.addf %23, %24 : vector<512x128xf32>
    %c0_28 = arith.constant 0 : index
    %c0_29 = arith.constant 0 : index
    %26 = vector.load %arg13[%c0_28, %c0_29] : memref<1024x128xf32, #tpu.memory_space<vmem>>, vector<512x128xf32>
    tpu.vector_store %arg13[%c0_28, %c0_29], %25 {strides = array<i32>} : memref<1024x128xf32, #tpu.memory_space<vmem>>, vector<512x128xf32>,
    %cst_30 = arith.constant 0.000000e+00 : f32
    %27 = vector.broadcast %cst_30 : f32 to vector<128x32xf32>
    %cst_31 = arith.constant 0.000000e+00 : f32
    %28 = vector.broadcast %cst_31 : f32 to vector<128x32xf32>
    %c0_i32_32 = arith.constant 0 : i32
    %c2_i32_33 = arith.constant 2 : i32
    %29 = arith.addi %c0_i32_32, %c2_i32_33 : i32
    %c1_i32_34 = arith.constant 1 : i32
    %30:2 = scf.for %arg15 = %c0_i32_32 to %29 step %c1_i32_34 iter_args(%arg16 = %27, %arg17 = %28) -> (vector<128x32xf32>, vector<128x32xf32>)  : i32 {
      %c2_i32_51 = arith.constant 2 : i32
      %c0_i32_52 = arith.constant 0 : i32
      %49 = arith.cmpi eq, %c2_i32_51, %c0_i32_52 : i32
      %c1_i32_53 = arith.constant 1 : i32
      %50 = arith.select %49, %c1_i32_53, %c2_i32_51 : i32
      %51 = arith.remsi %arg15, %50 : i32
      %c0_i32_54 = arith.constant 0 : i32
      %52 = arith.cmpi ne, %51, %c0_i32_54 : i32
      %c0_i32_55 = arith.constant 0 : i32
      %53 = arith.cmpi slt, %51, %c0_i32_55 : i32
      %c0_i32_56 = arith.constant 0 : i32
      %54 = arith.cmpi slt, %50, %c0_i32_56 : i32
      %55 = arith.xori %53, %54 : i1
      %56 = arith.andi %55, %52 : i1
      %57 = arith.addi %51, %50 : i32
      %58 = arith.select %56, %57, %51 : i32
      %c1_i32_57 = arith.constant 1 : i32
      %59 = arith.addi %arg15, %c1_i32_57 : i32
      %c2_i32_58 = arith.constant 2 : i32
      %60 = arith.cmpi slt, %59, %c2_i32_58 : i32
      %61 = arith.extui %60 : i1 to i32
      %c0_i32_59 = arith.constant 0 : i32
      %62 = arith.cmpi ne, %61, %c0_i32_59 : i32
      scf.if %62 {
        %c1_i32_99 = arith.constant 1 : i32
        %273 = arith.addi %arg15, %c1_i32_99 : i32
        %c1_i32_100 = arith.constant 1 : i32
        %274 = arith.subi %c1_i32_100, %58 : i32
        %c512_i32_101 = arith.constant 512 : i32
        %275 = arith.muli %273, %c512_i32_101 : i32
        %276 = tpu.assume_multiple %275, 512 : i32
        %c512_i32_102 = arith.constant 512 : i32
        %277 = arith.muli %274, %c512_i32_102 : i32
        %278 = tpu.assume_multiple %277, 512 : i32
        %279 = arith.index_cast %276 : i32 to index
        %c0_103 = arith.constant 0 : index
        %280 = vector.load %arg14[%279, %c0_103] : memref<1024x32xbf16, #tpu.memory_space<vmem>>, vector<512x32xbf16>
        %cst_104 = arith.constant dense<0.000000e+00> : vector<512x128xf32>
        %281 = tpu.matmul %280, %19, %cst_104 {dimension_numbers = #tpu.dot_dimension_numbers<[1], [0], [0], [1], [0, 0, 1, 1], [], []>} : vector<512x32xbf16>, vector<32x128xbf16>, vector<512x128xf32> -> vector<512x128xf32>
        %282 = vector.broadcast %21 : vector<1x128xf32> to vector<512x128xf32>
        %283 = arith.addf %281, %282 : vector<512x128xf32>
        %284 = arith.index_cast %278 : i32 to index
        %c0_105 = arith.constant 0 : index
        %285 = vector.load %arg13[%284, %c0_105] : memref<1024x128xf32, #tpu.memory_space<vmem>>, vector<512x128xf32>
        tpu.vector_store %arg13[%284, %c0_105], %283 {strides = array<i32>} : memref<1024x128xf32, #tpu.memory_space<vmem>>, vector<512x128xf32>,
      } else {
      }
      %c4_i32 = arith.constant 4 : i32
      %63 = arith.muli %arg15, %c4_i32 : i32
      %c512_i32 = arith.constant 512 : i32
      %64 = arith.muli %58, %c512_i32 : i32
      %c0_i32_60 = arith.constant 0 : i32
      %c128_i32 = arith.constant 128 : i32
      %65 = arith.muli %c0_i32_60, %c128_i32 : i32
      %66 = arith.addi %64, %65 : i32
      %67 = tpu.assume_multiple %66, 128 : i32
      %68 = arith.index_cast %67 : i32 to index
      %c0_61 = arith.constant 0 : index
      %69 = vector.load %arg13[%68, %c0_61] : memref<1024x128xf32, #tpu.memory_space<vmem>>, vector<128x128xf32>
      %70 = arith.truncf %arg16 : vector<128x32xf32> to vector<128x32xbf16>
      %cst_62 = arith.constant dense<0.000000e+00> : vector<128x128xf32>
      %71 = tpu.matmul %70, %20, %cst_62 {dimension_numbers = #tpu.dot_dimension_numbers<[1], [0], [0], [1], [0, 0, 1, 1], [], []>} : vector<128x32xbf16>, vector<32x128xbf16>, vector<128x128xf32> -> vector<128x128xf32>
      %72 = arith.addf %69, %71 : vector<128x128xf32>
      %73 = vector.extract_strided_slice %72 {offsets = [0, 0], sizes = [128, 32], strides = [1, 1]} : vector<128x128xf32> to vector<128x32xf32>
      %74 = arith.negf %73 : vector<128x32xf32>
      %75 = math.exp %74 : vector<128x32xf32>
      %cst_63 = arith.constant 1.000000e+00 : f32
      %76 = vector.broadcast %cst_63 : f32 to vector<128x32xf32>
      %77 = arith.addf %76, %75 : vector<128x32xf32>
      %78 = arith.divf %76, %77 : vector<128x32xf32>
      %79 = vector.extract_strided_slice %72 {offsets = [0, 32], sizes = [128, 32], strides = [1, 1]} : vector<128x128xf32> to vector<128x32xf32>
      %80 = arith.negf %79 : vector<128x32xf32>
      %81 = math.exp %80 : vector<128x32xf32>
      %cst_64 = arith.constant 1.000000e+00 : f32
      %82 = vector.broadcast %cst_64 : f32 to vector<128x32xf32>
      %83 = arith.addf %82, %81 : vector<128x32xf32>
      %84 = arith.divf %82, %83 : vector<128x32xf32>
      %85 = vector.extract_strided_slice %72 {offsets = [0, 64], sizes = [128, 32], strides = [1, 1]} : vector<128x128xf32> to vector<128x32xf32>
      %86 = math.tanh %85 : vector<128x32xf32>
      %87 = vector.extract_strided_slice %72 {offsets = [0, 96], sizes = [128, 32], strides = [1, 1]} : vector<128x128xf32> to vector<128x32xf32>
      %88 = arith.negf %87 : vector<128x32xf32>
      %89 = math.exp %88 : vector<128x32xf32>
      %cst_65 = arith.constant 1.000000e+00 : f32
      %90 = vector.broadcast %cst_65 : f32 to vector<128x32xf32>
      %91 = arith.addf %90, %89 : vector<128x32xf32>
      %92 = arith.divf %90, %91 : vector<128x32xf32>
      %93 = arith.mulf %84, %arg17 : vector<128x32xf32>
      %94 = arith.mulf %78, %86 : vector<128x32xf32>
      %95 = arith.addf %93, %94 : vector<128x32xf32>
      %96 = math.tanh %95 : vector<128x32xf32>
      %97 = arith.mulf %92, %96 : vector<128x32xf32>
      %98 = arith.addi %63, %c0_i32_60 : i32
      %99 = vector.broadcast %98 : i32 to vector<128x1xi32>
      %100 = arith.cmpi slt, %99, %0 : vector<128x1xi32>
      %101 = arith.addi %63, %c0_i32_60 : i32
      %c128_i32_66 = arith.constant 128 : i32
      %102 = arith.muli %101, %c128_i32_66 : i32
      %103 = tpu.assume_multiple %102, 128 : i32
      %cst_67 = arith.constant 0.000000e+00 : f32
      %104 = vector.shape_cast %100 : vector<128x1xi1> to vector<128x1xi1>
      %105 = vector.broadcast %104 : vector<128x1xi1> to vector<128x32xi1>
      %106 = vector.broadcast %cst_67 : f32 to vector<128x32xf32>
      %107 = arith.select %105, %97, %106 : vector<128x32xi1>, vector<128x32xf32>
      %108 = arith.truncf %107 : vector<128x32xf32> to vector<128x32xbf16>
      %109 = arith.index_cast %103 : i32 to index
      %c0_68 = arith.constant 0 : index
      %110 = vector.load %arg14[%109, %c0_68] : memref<1024x32xbf16, #tpu.memory_space<vmem>>, vector<128x32xbf16>
      tpu.vector_store %arg14[%109, %c0_68], %108 {strides = array<i32>} : memref<1024x32xbf16, #tpu.memory_space<vmem>>, vector<128x32xbf16>,
      %111 = vector.shape_cast %100 : vector<128x1xi1> to vector<128x1xi1>
      %112 = vector.broadcast %111 : vector<128x1xi1> to vector<128x32xi1>
      %113 = arith.select %112, %97, %arg16 : vector<128x32xi1>, vector<128x32xf32>
      %114 = vector.shape_cast %100 : vector<128x1xi1> to vector<128x1xi1>
      %115 = vector.broadcast %114 : vector<128x1xi1> to vector<128x32xi1>
      %116 = arith.select %115, %95, %arg17 : vector<128x32xi1>, vector<128x32xf32>
      %c1_i32_69 = arith.constant 1 : i32
      %c128_i32_70 = arith.constant 128 : i32
      %117 = arith.muli %c1_i32_69, %c128_i32_70 : i32
      %118 = arith.addi %64, %117 : i32
      %119 = tpu.assume_multiple %118, 128 : i32
      %120 = arith.index_cast %119 : i32 to index
      %c0_71 = arith.constant 0 : index
      %121 = vector.load %arg13[%120, %c0_71] : memref<1024x128xf32, #tpu.memory_space<vmem>>, vector<128x128xf32>
      %122 = arith.truncf %113 : vector<128x32xf32> to vector<128x32xbf16>
      %cst_72 = arith.constant dense<0.000000e+00> : vector<128x128xf32>
      %123 = tpu.matmul %122, %20, %cst_72 {dimension_numbers = #tpu.dot_dimension_numbers<[1], [0], [0], [1], [0, 0, 1, 1], [], []>} : vector<128x32xbf16>, vector<32x128xbf16>, vector<128x128xf32> -> vector<128x128xf32>
      %124 = arith.addf %121, %123 : vector<128x128xf32>
      %125 = vector.extract_strided_slice %124 {offsets = [0, 0], sizes = [128, 32], strides = [1, 1]} : vector<128x128xf32> to vector<128x32xf32>
      %126 = arith.negf %125 : vector<128x32xf32>
      %127 = math.exp %126 : vector<128x32xf32>
      %cst_73 = arith.constant 1.000000e+00 : f32
      %128 = vector.broadcast %cst_73 : f32 to vector<128x32xf32>
      %129 = arith.addf %128, %127 : vector<128x32xf32>
      %130 = arith.divf %128, %129 : vector<128x32xf32>
      %131 = vector.extract_strided_slice %124 {offsets = [0, 32], sizes = [128, 32], strides = [1, 1]} : vector<128x128xf32> to vector<128x32xf32>
      %132 = arith.negf %131 : vector<128x32xf32>
      %133 = math.exp %132 : vector<128x32xf32>
      %cst_74 = arith.constant 1.000000e+00 : f32
      %134 = vector.broadcast %cst_74 : f32 to vector<128x32xf32>
      %135 = arith.addf %134, %133 : vector<128x32xf32>
      %136 = arith.divf %134, %135 : vector<128x32xf32>
      %137 = vector.extract_strided_slice %124 {offsets = [0, 64], sizes = [128, 32], strides = [1, 1]} : vector<128x128xf32> to vector<128x32xf32>
      %138 = math.tanh %137 : vector<128x32xf32>
      %139 = vector.extract_strided_slice %124 {offsets = [0, 96], sizes = [128, 32], strides = [1, 1]} : vector<128x128xf32> to vector<128x32xf32>
      %140 = arith.negf %139 : vector<128x32xf32>
      %141 = math.exp %140 : vector<128x32xf32>
      %cst_75 = arith.constant 1.000000e+00 : f32
      %142 = vector.broadcast %cst_75 : f32 to vector<128x32xf32>
      %143 = arith.addf %142, %141 : vector<128x32xf32>
      %144 = arith.divf %142, %143 : vector<128x32xf32>
      %145 = arith.mulf %136, %116 : vector<128x32xf32>
      %146 = arith.mulf %130, %138 : vector<128x32xf32>
      %147 = arith.addf %145, %146 : vector<128x32xf32>
      %148 = math.tanh %147 : vector<128x32xf32>
      %149 = arith.mulf %144, %148 : vector<128x32xf32>
      %150 = arith.addi %63, %c1_i32_69 : i32
      %151 = vector.broadcast %150 : i32 to vector<128x1xi32>
      %152 = arith.cmpi slt, %151, %0 : vector<128x1xi32>
      %153 = arith.addi %63, %c1_i32_69 : i32
      %c128_i32_76 = arith.constant 128 : i32
      %154 = arith.muli %153, %c128_i32_76 : i32
      %155 = tpu.assume_multiple %154, 128 : i32
      %cst_77 = arith.constant 0.000000e+00 : f32
      %156 = vector.shape_cast %152 : vector<128x1xi1> to vector<128x1xi1>
      %157 = vector.broadcast %156 : vector<128x1xi1> to vector<128x32xi1>
      %158 = vector.broadcast %cst_77 : f32 to vector<128x32xf32>
      %159 = arith.select %157, %149, %158 : vector<128x32xi1>, vector<128x32xf32>
      %160 = arith.truncf %159 : vector<128x32xf32> to vector<128x32xbf16>
      %161 = arith.index_cast %155 : i32 to index
      %c0_78 = arith.constant 0 : index
      %162 = vector.load %arg14[%161, %c0_78] : memref<1024x32xbf16, #tpu.memory_space<vmem>>, vector<128x32xbf16>
      tpu.vector_store %arg14[%161, %c0_78], %160 {strides = array<i32>} : memref<1024x32xbf16, #tpu.memory_space<vmem>>, vector<128x32xbf16>,
      %163 = vector.shape_cast %152 : vector<128x1xi1> to vector<128x1xi1>
      %164 = vector.broadcast %163 : vector<128x1xi1> to vector<128x32xi1>
      %165 = arith.select %164, %149, %113 : vector<128x32xi1>, vector<128x32xf32>
      %166 = vector.shape_cast %152 : vector<128x1xi1> to vector<128x1xi1>
      %167 = vector.broadcast %166 : vector<128x1xi1> to vector<128x32xi1>
      %168 = arith.select %167, %147, %116 : vector<128x32xi1>, vector<128x32xf32>
      %c2_i32_79 = arith.constant 2 : i32
      %c128_i32_80 = arith.constant 128 : i32
      %169 = arith.muli %c2_i32_79, %c128_i32_80 : i32
      %170 = arith.addi %64, %169 : i32
      %171 = tpu.assume_multiple %170, 128 : i32
      %172 = arith.index_cast %171 : i32 to index
      %c0_81 = arith.constant 0 : index
      %173 = vector.load %arg13[%172, %c0_81] : memref<1024x128xf32, #tpu.memory_space<vmem>>, vector<128x128xf32>
      %174 = arith.truncf %165 : vector<128x32xf32> to vector<128x32xbf16>
      %cst_82 = arith.constant dense<0.000000e+00> : vector<128x128xf32>
      %175 = tpu.matmul %174, %20, %cst_82 {dimension_numbers = #tpu.dot_dimension_numbers<[1], [0], [0], [1], [0, 0, 1, 1], [], []>} : vector<128x32xbf16>, vector<32x128xbf16>, vector<128x128xf32> -> vector<128x128xf32>
      %176 = arith.addf %173, %175 : vector<128x128xf32>
      %177 = vector.extract_strided_slice %176 {offsets = [0, 0], sizes = [128, 32], strides = [1, 1]} : vector<128x128xf32> to vector<128x32xf32>
      %178 = arith.negf %177 : vector<128x32xf32>
      %179 = math.exp %178 : vector<128x32xf32>
      %cst_83 = arith.constant 1.000000e+00 : f32
      %180 = vector.broadcast %cst_83 : f32 to vector<128x32xf32>
      %181 = arith.addf %180, %179 : vector<128x32xf32>
      %182 = arith.divf %180, %181 : vector<128x32xf32>
      %183 = vector.extract_strided_slice %176 {offsets = [0, 32], sizes = [128, 32], strides = [1, 1]} : vector<128x128xf32> to vector<128x32xf32>
      %184 = arith.negf %183 : vector<128x32xf32>
      %185 = math.exp %184 : vector<128x32xf32>
      %cst_84 = arith.constant 1.000000e+00 : f32
      %186 = vector.broadcast %cst_84 : f32 to vector<128x32xf32>
      %187 = arith.addf %186, %185 : vector<128x32xf32>
      %188 = arith.divf %186, %187 : vector<128x32xf32>
      %189 = vector.extract_strided_slice %176 {offsets = [0, 64], sizes = [128, 32], strides = [1, 1]} : vector<128x128xf32> to vector<128x32xf32>
      %190 = math.tanh %189 : vector<128x32xf32>
      %191 = vector.extract_strided_slice %176 {offsets = [0, 96], sizes = [128, 32], strides = [1, 1]} : vector<128x128xf32> to vector<128x32xf32>
      %192 = arith.negf %191 : vector<128x32xf32>
      %193 = math.exp %192 : vector<128x32xf32>
      %cst_85 = arith.constant 1.000000e+00 : f32
      %194 = vector.broadcast %cst_85 : f32 to vector<128x32xf32>
      %195 = arith.addf %194, %193 : vector<128x32xf32>
      %196 = arith.divf %194, %195 : vector<128x32xf32>
      %197 = arith.mulf %188, %168 : vector<128x32xf32>
      %198 = arith.mulf %182, %190 : vector<128x32xf32>
      %199 = arith.addf %197, %198 : vector<128x32xf32>
      %200 = math.tanh %199 : vector<128x32xf32>
      %201 = arith.mulf %196, %200 : vector<128x32xf32>
      %202 = arith.addi %63, %c2_i32_79 : i32
      %203 = vector.broadcast %202 : i32 to vector<128x1xi32>
      %204 = arith.cmpi slt, %203, %0 : vector<128x1xi32>
      %205 = arith.addi %63, %c2_i32_79 : i32
      %c128_i32_86 = arith.constant 128 : i32
      %206 = arith.muli %205, %c128_i32_86 : i32
      %207 = tpu.assume_multiple %206, 128 : i32
      %cst_87 = arith.constant 0.000000e+00 : f32
      %208 = vector.shape_cast %204 : vector<128x1xi1> to vector<128x1xi1>
      %209 = vector.broadcast %208 : vector<128x1xi1> to vector<128x32xi1>
      %210 = vector.broadcast %cst_87 : f32 to vector<128x32xf32>
      %211 = arith.select %209, %201, %210 : vector<128x32xi1>, vector<128x32xf32>
      %212 = arith.truncf %211 : vector<128x32xf32> to vector<128x32xbf16>
      %213 = arith.index_cast %207 : i32 to index
      %c0_88 = arith.constant 0 : index
      %214 = vector.load %arg14[%213, %c0_88] : memref<1024x32xbf16, #tpu.memory_space<vmem>>, vector<128x32xbf16>
      tpu.vector_store %arg14[%213, %c0_88], %212 {strides = array<i32>} : memref<1024x32xbf16, #tpu.memory_space<vmem>>, vector<128x32xbf16>,
      %215 = vector.shape_cast %204 : vector<128x1xi1> to vector<128x1xi1>
      %216 = vector.broadcast %215 : vector<128x1xi1> to vector<128x32xi1>
      %217 = arith.select %216, %201, %165 : vector<128x32xi1>, vector<128x32xf32>
      %218 = vector.shape_cast %204 : vector<128x1xi1> to vector<128x1xi1>
      %219 = vector.broadcast %218 : vector<128x1xi1> to vector<128x32xi1>
      %220 = arith.select %219, %199, %168 : vector<128x32xi1>, vector<128x32xf32>
      %c3_i32 = arith.constant 3 : i32
      %c128_i32_89 = arith.constant 128 : i32
      %221 = arith.muli %c3_i32, %c128_i32_89 : i32
      %222 = arith.addi %64, %221 : i32
      %223 = tpu.assume_multiple %222, 128 : i32
      %224 = arith.index_cast %223 : i32 to index
      %c0_90 = arith.constant 0 : index
      %225 = vector.load %arg13[%224, %c0_90] : memref<1024x128xf32, #tpu.memory_space<vmem>>, vector<128x128xf32>
      %226 = arith.truncf %217 : vector<128x32xf32> to vector<128x32xbf16>
      %cst_91 = arith.constant dense<0.000000e+00> : vector<128x128xf32>
      %227 = tpu.matmul %226, %20, %cst_91 {dimension_numbers = #tpu.dot_dimension_numbers<[1], [0], [0], [1], [0, 0, 1, 1], [], []>} : vector<128x32xbf16>, vector<32x128xbf16>, vector<128x128xf32> -> vector<128x128xf32>
      %228 = arith.addf %225, %227 : vector<128x128xf32>
      %229 = vector.extract_strided_slice %228 {offsets = [0, 0], sizes = [128, 32], strides = [1, 1]} : vector<128x128xf32> to vector<128x32xf32>
      %230 = arith.negf %229 : vector<128x32xf32>
      %231 = math.exp %230 : vector<128x32xf32>
      %cst_92 = arith.constant 1.000000e+00 : f32
      %232 = vector.broadcast %cst_92 : f32 to vector<128x32xf32>
      %233 = arith.addf %232, %231 : vector<128x32xf32>
      %234 = arith.divf %232, %233 : vector<128x32xf32>
      %235 = vector.extract_strided_slice %228 {offsets = [0, 32], sizes = [128, 32], strides = [1, 1]} : vector<128x128xf32> to vector<128x32xf32>
      %236 = arith.negf %235 : vector<128x32xf32>
      %237 = math.exp %236 : vector<128x32xf32>
      %cst_93 = arith.constant 1.000000e+00 : f32
      %238 = vector.broadcast %cst_93 : f32 to vector<128x32xf32>
      %239 = arith.addf %238, %237 : vector<128x32xf32>
      %240 = arith.divf %238, %239 : vector<128x32xf32>
      %241 = vector.extract_strided_slice %228 {offsets = [0, 64], sizes = [128, 32], strides = [1, 1]} : vector<128x128xf32> to vector<128x32xf32>
      %242 = math.tanh %241 : vector<128x32xf32>
      %243 = vector.extract_strided_slice %228 {offsets = [0, 96], sizes = [128, 32], strides = [1, 1]} : vector<128x128xf32> to vector<128x32xf32>
      %244 = arith.negf %243 : vector<128x32xf32>
      %245 = math.exp %244 : vector<128x32xf32>
      %cst_94 = arith.constant 1.000000e+00 : f32
      %246 = vector.broadcast %cst_94 : f32 to vector<128x32xf32>
      %247 = arith.addf %246, %245 : vector<128x32xf32>
      %248 = arith.divf %246, %247 : vector<128x32xf32>
      %249 = arith.mulf %240, %220 : vector<128x32xf32>
      %250 = arith.mulf %234, %242 : vector<128x32xf32>
      %251 = arith.addf %249, %250 : vector<128x32xf32>
      %252 = math.tanh %251 : vector<128x32xf32>
      %253 = arith.mulf %248, %252 : vector<128x32xf32>
      %254 = arith.addi %63, %c3_i32 : i32
      %255 = vector.broadcast %254 : i32 to vector<128x1xi32>
      %256 = arith.cmpi slt, %255, %0 : vector<128x1xi32>
      %257 = arith.addi %63, %c3_i32 : i32
      %c128_i32_95 = arith.constant 128 : i32
      %258 = arith.muli %257, %c128_i32_95 : i32
      %259 = tpu.assume_multiple %258, 128 : i32
      %cst_96 = arith.constant 0.000000e+00 : f32
      %260 = vector.shape_cast %256 : vector<128x1xi1> to vector<128x1xi1>
      %261 = vector.broadcast %260 : vector<128x1xi1> to vector<128x32xi1>
      %262 = vector.broadcast %cst_96 : f32 to vector<128x32xf32>
      %263 = arith.select %261, %253, %262 : vector<128x32xi1>, vector<128x32xf32>
      %264 = arith.truncf %263 : vector<128x32xf32> to vector<128x32xbf16>
      %265 = arith.index_cast %259 : i32 to index
      %c0_97 = arith.constant 0 : index
      %266 = vector.load %arg14[%265, %c0_97] : memref<1024x32xbf16, #tpu.memory_space<vmem>>, vector<128x32xbf16>
      tpu.vector_store %arg14[%265, %c0_97], %264 {strides = array<i32>} : memref<1024x32xbf16, #tpu.memory_space<vmem>>, vector<128x32xbf16>,
      %267 = vector.shape_cast %256 : vector<128x1xi1> to vector<128x1xi1>
      %268 = vector.broadcast %267 : vector<128x1xi1> to vector<128x32xi1>
      %269 = arith.select %268, %253, %217 : vector<128x32xi1>, vector<128x32xf32>
      %270 = vector.shape_cast %256 : vector<128x1xi1> to vector<128x1xi1>
      %271 = vector.broadcast %270 : vector<128x1xi1> to vector<128x32xi1>
      %272 = arith.select %271, %251, %220 : vector<128x32xi1>, vector<128x32xf32>
      %c4_i32_98 = arith.constant 4 : i32
      scf.yield %269, %272 : vector<128x32xf32>, vector<128x32xf32>
    }
    %c2_i32_35 = arith.constant 2 : i32
    %c1 = arith.constant 1 : index
    %c0_36 = arith.constant 0 : index
    %c0_37 = arith.constant 0 : index
    %31 = vector.load %arg12[%c1, %c0_36, %c0_37] : memref<2x128x64xf32, #tpu.memory_space<vmem>>, vector<1x128x32xf32>
    %32 = vector.shape_cast %31 : vector<1x128x32xf32> to vector<128x32xf32>
    %33 = vector.shape_cast %30#0 : vector<128x32xf32> to vector<1x128x32xf32>
    tpu.vector_store %arg12[%c1, %c0_36, %c0_37], %33 {strides = array<i32>} : memref<2x128x64xf32, #tpu.memory_space<vmem>>, vector<1x128x32xf32>,
    %c1_38 = arith.constant 1 : index
    %c0_39 = arith.constant 0 : index
    %c32_40 = arith.constant 32 : index
    %34 = vector.load %arg12[%c1_38, %c0_39, %c32_40] : memref<2x128x64xf32, #tpu.memory_space<vmem>>, vector<1x128x32xf32>
    %35 = vector.shape_cast %34 : vector<1x128x32xf32> to vector<128x32xf32>
    %36 = vector.shape_cast %30#1 : vector<128x32xf32> to vector<1x128x32xf32>
    tpu.vector_store %arg12[%c1_38, %c0_39, %c32_40], %36 {strides = array<i32>} : memref<2x128x64xf32, #tpu.memory_space<vmem>>, vector<1x128x32xf32>,
    %c0_41 = arith.constant 0 : index
    %c0_42 = arith.constant 0 : index
    %37 = vector.load %arg9[%c0_41, %c0_42] : memref<2x32xbf16, #tpu.memory_space<vmem>>, vector<2x32xbf16>
    %c0_43 = arith.constant 0 : index
    %c0_44 = arith.constant 0 : index
    %38 = vector.load %arg10[%c0_43, %c0_44] : memref<2x1xf32, #tpu.memory_space<vmem>>, vector<2x1xf32>
    %c0_45 = arith.constant 0 : index
    %c0_46 = arith.constant 0 : index
    %39 = vector.load %arg14[%c0_45, %c0_46] : memref<1024x32xbf16, #tpu.memory_space<vmem>>, vector<1024x32xbf16>
    "tpu.trace_start"() <{level = 10 : i32, message = "oh,nh->on"}> : () -> ()
    %cst_47 = arith.constant dense<0.000000e+00> : vector<2x1024xf32>
    %40 = tpu.matmul %37, %39, %cst_47 {dimension_numbers = #tpu.dot_dimension_numbers<[1], [1], [0], [0], [0, 0, 1, 0], [], []>} : vector<2x32xbf16>, vector<1024x32xbf16>, vector<2x1024xf32> -> vector<2x1024xf32>
    "tpu.trace_stop"() : () -> ()
    %41 = vector.broadcast %38 : vector<2x1xf32> to vector<2x1024xf32>
    %42 = arith.addf %40, %41 : vector<2x1024xf32>
    %43 = arith.negf %42 : vector<2x1024xf32>
    %44 = math.exp %43 : vector<2x1024xf32>
    %cst_48 = arith.constant 1.000000e+00 : f32
    %45 = vector.broadcast %cst_48 : f32 to vector<2x1024xf32>
    %46 = arith.addf %45, %44 : vector<2x1024xf32>
    %47 = arith.divf %45, %46 : vector<2x1024xf32>
    %c0_49 = arith.constant 0 : index
    %c0_50 = arith.constant 0 : index
    %48 = vector.load %arg11[%c0_49, %c0_50] : memref<2x1024xf32, #tpu.memory_space<vmem>>, vector<2x1024xf32>
    tpu.vector_store %arg11[%c0_49, %c0_50], %47 {strides = array<i32>} : memref<2x1024xf32, #tpu.memory_space<vmem>>, vector<2x1024xf32>,
    return
  }
  func.func @transform_0(%arg0: i32) -> (i32, i32) {
    %c0_i32 = arith.constant 0 : i32
    %c0_i32_0 = arith.constant 0 : i32
    return %arg0, %c0_i32 : i32, i32
  }
  func.func @transform_1(%arg0: i32) -> (i32, i32) {
    %c0_i32 = arith.constant 0 : i32
    %c0_i32_0 = arith.constant 0 : i32
    return %arg0, %c0_i32 : i32, i32
  }
  func.func @transform_2(%arg0: i32) -> (i32, i32) {
    %c0_i32 = arith.constant 0 : i32
    %c0_i32_0 = arith.constant 0 : i32
    %c0_i32_1 = arith.constant 0 : i32
    return %c0_i32, %c0_i32_0 : i32, i32
  }
  func.func @transform_3(%arg0: i32) -> (i32, i32) {
    %c0_i32 = arith.constant 0 : i32
    %c0_i32_0 = arith.constant 0 : i32
    %c0_i32_1 = arith.constant 0 : i32
    return %c0_i32, %c0_i32_0 : i32, i32
  }
  func.func @transform_4(%arg0: i32) -> (i32, i32) {
    %c0_i32 = arith.constant 0 : i32
    %c0_i32_0 = arith.constant 0 : i32
    %c0_i32_1 = arith.constant 0 : i32
    return %c0_i32, %c0_i32_0 : i32, i32
  }
  func.func @transform_5(%arg0: i32) -> (i32, i32) {
    %c0_i32 = arith.constant 0 : i32
    %c0_i32_0 = arith.constant 0 : i32
    %c0_i32_1 = arith.constant 0 : i32
    return %c0_i32, %c0_i32_0 : i32, i32
  }
  func.func @transform_6(%arg0: i32) -> (i32, i32) {
    %c0_i32 = arith.constant 0 : i32
    %c0_i32_0 = arith.constant 0 : i32
    %c0_i32_1 = arith.constant 0 : i32
    return %c0_i32, %c0_i32_0 : i32, i32
  }
  func.func @transform_7(%arg0: i32) -> (i32, i32) {
    %c0_i32 = arith.constant 0 : i32
    %c0_i32_0 = arith.constant 0 : i32
    %c0_i32_1 = arith.constant 0 : i32
    return %c0_i32, %c0_i32_0 : i32, i32
  }
  func.func @transform_8(%arg0: i32) -> (i32, i32) {
    %c0_i32 = arith.constant 0 : i32
    %c0_i32_0 = arith.constant 0 : i32
    %c0_i32_1 = arith.constant 0 : i32
    return %c0_i32, %c0_i32_0 : i32, i32
  }
  func.func @transform_9(%arg0: i32) -> (i32, i32) {
    %c0_i32 = arith.constant 0 : i32
    %c0_i32_0 = arith.constant 0 : i32
    %c0_i32_1 = arith.constant 0 : i32
    return %c0_i32, %c0_i32_0 : i32, i32
  }
  func.func @transform_10(%arg0: i32) -> (i32, i32) {
    %c0_i32 = arith.constant 0 : i32
    %c0_i32_0 = arith.constant 0 : i32
    return %c0_i32, %arg0 : i32, i32
  }
  func.func @transform_11(%arg0: i32) -> (i32, i32, i32) {
    %c0_i32 = arith.constant 0 : i32
    %c0_i32_0 = arith.constant 0 : i32
    %c0_i32_1 = arith.constant 0 : i32
    return %c0_i32, %arg0, %c0_i32_0 : i32, i32, i32
  }
}

</mosaic_0001>

<llo_original>
// kernel: tpu_custom_call.1
$region0: #{tpu_custom_call.1}
  #allocation0 [shape = 'u32[]', space=smem, size = 0x4, offset = 0x4, fixed_abs, tag = 'smem constant byte address 0x4 - core index']
  #allocation1 [shape = 'u32[144,128]{1,0:T(1,128)}', space=vmem, size = 0x12000, scoped, tag = 'internal scratch']
  #allocation2 [shape = 'f32[1024,128]{1,0:T(8,128)}', space=vmem, size = 0x80000, scoped, tag = 'scratch operand']
  #allocation3 [shape = 'bf16[1024,32]{1,0:T(16,128)(2,1)}', space=vmem, size = 0x40000, scoped, tag = 'scratch operand']
  %s0 = inlined_call_operand.vmem [shape: bf16[1024,8], index: 0, kind: input, shape index: {}]
  %s1 = inlined_call_operand.vmem [shape: s32[128,1], index: 1, kind: input, shape index: {}]
  %s2 = inlined_call_operand.vmem [shape: bf16[8,128], index: 2, kind: input, shape index: {}]
  %s3 = inlined_call_operand.vmem [shape: bf16[32,128], index: 3, kind: input, shape index: {}]
  %s4 = inlined_call_operand.vmem [shape: f32[1,128], index: 4, kind: input, shape index: {}]
  %s5 = inlined_call_operand.vmem [shape: bf16[32,128], index: 5, kind: input, shape index: {}]
  %s6 = inlined_call_operand.vmem [shape: bf16[32,128], index: 6, kind: input, shape index: {}]
  %s7 = inlined_call_operand.vmem [shape: f32[1,128], index: 7, kind: input, shape index: {}]
  %s8 = inlined_call_operand.vmem [shape: bf16[2,32], index: 8, kind: input, shape index: {}]
  %s9 = inlined_call_operand.vmem [shape: f32[2,1], index: 9, kind: input, shape index: {}]
  %s10 = inlined_call_operand.hbm [shape: f32[2,1024], index: 10, kind: output, shape index: {0}]
  %s11 = inlined_call_operand.vmem [shape: f32[2,128,64], index: 11, kind: output, shape index: {1}]
  %12 = xla_tuple %s10, %s11
  %s13 = sld [smem:[#allocation0]]
  $region80: #{tpu_custom_call.1} parent=0
    _
  %s15 = ssub.s32 1, %s13
  %s16 = scalar_select 0, %s15, %s13
  $region1: #{tpu_custom_call.1} parent=0
    #allocation4 [shape = 'u8[8192]{0}', space=vmem, size = 0x2000, scoped, tag = 'output window, operand 0, single buffered']
    #allocation5 [shape = 's32[1]{0}', space=sflag, size = 0x4, scoped, tag = 'scoped memory for tpu_custom_call.1']
    %17 = vsyncpa [#allocation5], 0
    // Predicated region
    $region2: #{tpu_custom_call.1} parent=1 // pred_check
      _
    $region3: #{tpu_custom_call.1} parent=1 // pred_check_branch
      %19 = sbr.rel (0) target = $region5
    $region4: #{tpu_custom_call.1} parent=1 // pred_region
      _
    $region5: #{tpu_custom_call.1} parent=1 // pred_fallthru
      _
    // Predicated region
    $region6: #{tpu_custom_call.1} parent=1 // pred_check
      _
    $region7: #{tpu_custom_call.1} parent=1 // pred_check_branch
      %21 = sbr.rel (0) target = $region9
    $region8: #{tpu_custom_call.1} parent=1 // pred_region
      _
    $region9: #{tpu_custom_call.1} parent=1 // pred_fallthru
      _
    // Predicated region
    $region10: #{tpu_custom_call.1} parent=1 // pred_check
      _
    $region11: #{tpu_custom_call.1} parent=1 // pred_check_branch
      %23 = sbr.rel (0) target = $region13
    $region12: #{tpu_custom_call.1} parent=1 // pred_region
      _
    $region13: #{tpu_custom_call.1} parent=1 // pred_fallthru
      _
    // Predicated region
    $region14: #{tpu_custom_call.1} parent=1 // pred_check
      _
    $region15: #{tpu_custom_call.1} parent=1 // pred_check_branch
      %25 = sbr.rel (0) target = $region17
    $region16: #{tpu_custom_call.1} parent=1 // pred_region
      _
    $region17: #{tpu_custom_call.1} parent=1 // pred_fallthru
      _
    // Predicated region
    $region18: #{tpu_custom_call.1} parent=1 // pred_check
      _
    $region19: #{tpu_custom_call.1} parent=1 // pred_check_branch
      %27 = sbr.rel (0) target = $region21
    $region20: #{tpu_custom_call.1} parent=1 // pred_region
      _
    $region21: #{tpu_custom_call.1} parent=1 // pred_fallthru
      _
    // Predicated region
    $region22: #{tpu_custom_call.1} parent=1 // pred_check
      _
    $region23: #{tpu_custom_call.1} parent=1 // pred_check_branch
      %29 = sbr.rel (0) target = $region25
    $region24: #{tpu_custom_call.1} parent=1 // pred_region
      _
    $region25: #{tpu_custom_call.1} parent=1 // pred_fallthru
      _
    // Predicated region
    $region26: #{tpu_custom_call.1} parent=1 // pred_check
      _
    $region27: #{tpu_custom_call.1} parent=1 // pred_check_branch
      %31 = sbr.rel (0) target = $region29
    $region28: #{tpu_custom_call.1} parent=1 // pred_region
      _
    $region29: #{tpu_custom_call.1} parent=1 // pred_fallthru
      _
    // Predicated region
    $region30: #{tpu_custom_call.1} parent=1 // pred_check
      _
    $region31: #{tpu_custom_call.1} parent=1 // pred_check_branch
      %33 = sbr.rel (0) target = $region33
    $region32: #{tpu_custom_call.1} parent=1 // pred_region
      _
    $region33: #{tpu_custom_call.1} parent=1 // pred_fallthru
      _
    // Predicated region
    $region34: #{tpu_custom_call.1} parent=1 // pred_check
      _
    $region35: #{tpu_custom_call.1} parent=1 // pred_check_branch
      %35 = sbr.rel (0) target = $region37
    $region36: #{tpu_custom_call.1} parent=1 // pred_region
      _
    $region37: #{tpu_custom_call.1} parent=1 // pred_fallthru
      _
    // Predicated region
    $region38: #{tpu_custom_call.1} parent=1 // pred_check
      _
    $region39: #{tpu_custom_call.1} parent=1 // pred_check_branch
      %37 = sbr.rel (0) target = $region41
    $region40: #{tpu_custom_call.1} parent=1 // pred_region
      _
    $region41: #{tpu_custom_call.1} parent=1 // pred_fallthru
      _
    %v39 = vld [vmem:[%s1] sm:$0xff]
    %v40 = vld [vmem:[%s1 + $0x8] sm:$0xff]
    %v41 = vld [vmem:[%s1 + $0x10] sm:$0xff]
    %v42 = vld [vmem:[%s1 + $0x18] sm:$0xff]
    %v43 = vld [vmem:[%s1 + $0x20] sm:$0xff]
    %v44 = vld [vmem:[%s1 + $0x28] sm:$0xff]
    %v45 = vld [vmem:[%s1 + $0x30] sm:$0xff]
    %v46 = vld [vmem:[%s1 + $0x38] sm:$0xff]
    %v47 = vld [vmem:[%s1 + $0x40] sm:$0xff]
    %v48 = vld [vmem:[%s1 + $0x48] sm:$0xff]
    %v49 = vld [vmem:[%s1 + $0x50] sm:$0xff]
    %v50 = vld [vmem:[%s1 + $0x58] sm:$0xff]
    %v51 = vld [vmem:[%s1 + $0x60] sm:$0xff]
    %v52 = vld [vmem:[%s1 + $0x68] sm:$0xff]
    %v53 = vld [vmem:[%s1 + $0x70] sm:$0xff]
    %v54 = vld [vmem:[%s1 + $0x78] sm:$0xff]
    %v55 = vld [vmem:[%s2] sm:$0xf]
    %v56 = vld [vmem:[%s3] sm:$0xf]
    %v57 = vld [vmem:[%s3 + $0x4] sm:$0xf]
    %v58 = vld [vmem:[%s3 + $0x8] sm:$0xf]
    %v59 = vld [vmem:[%s3 + $0xc] sm:$0xf]
    %v60 = vld [vmem:[%s4] sm:$0x1]
    %v61 = vld [vmem:[%s0] sm:$0xf]
    %v62 = vld [vmem:[%s0 + $0x4] sm:$0xf]
    %v63 = vld [vmem:[%s0 + $0x8] sm:$0xf]
    %v64 = vld [vmem:[%s0 + $0xc] sm:$0xf]
    %v65 = vld [vmem:[%s0 + $0x10] sm:$0xf]
    %v66 = vld [vmem:[%s0 + $0x14] sm:$0xf]
    %v67 = vld [vmem:[%s0 + $0x18] sm:$0xf]
    %v68 = vld [vmem:[%s0 + $0x1c] sm:$0xf]
    %v69 = vld [vmem:[%s0 + $0x20] sm:$0xf]
    %v70 = vld [vmem:[%s0 + $0x24] sm:$0xf]
    %v71 = vld [vmem:[%s0 + $0x28] sm:$0xf]
    %v72 = vld [vmem:[%s0 + $0x2c] sm:$0xf]
    %v73 = vld [vmem:[%s0 + $0x30] sm:$0xf]
    %v74 = vld [vmem:[%s0 + $0x34] sm:$0xf]
    %v75 = vld [vmem:[%s0 + $0x38] sm:$0xf]
    %v76 = vld [vmem:[%s0 + $0x3c] sm:$0xf]
    %v77 = vld [vmem:[%s0 + $0x40] sm:$0xf]
    %v78 = vld [vmem:[%s0 + $0x44] sm:$0xf]
    %v79 = vld [vmem:[%s0 + $0x48] sm:$0xf]
    %v80 = vld [vmem:[%s0 + $0x4c] sm:$0xf]
    %v81 = vld [vmem:[%s0 + $0x50] sm:$0xf]
    %v82 = vld [vmem:[%s0 + $0x54] sm:$0xf]
    %v83 = vld [vmem:[%s0 + $0x58] sm:$0xf]
    %v84 = vld [vmem:[%s0 + $0x5c] sm:$0xf]
    %v85 = vld [vmem:[%s0 + $0x60] sm:$0xf]
    %v86 = vld [vmem:[%s0 + $0x64] sm:$0xf]
    %v87 = vld [vmem:[%s0 + $0x68] sm:$0xf]
    %v88 = vld [vmem:[%s0 + $0x6c] sm:$0xf]
    %v89 = vld [vmem:[%s0 + $0x70] sm:$0xf]
    %v90 = vld [vmem:[%s0 + $0x74] sm:$0xf]
    %v91 = vld [vmem:[%s0 + $0x78] sm:$0xf]
    %v92 = vld [vmem:[%s0 + $0x7c] sm:$0xf]
    %v93 = vld [vmem:[%s0 + $0x80] sm:$0xf]
    %v94 = vld [vmem:[%s0 + $0x84] sm:$0xf]
    %v95 = vld [vmem:[%s0 + $0x88] sm:$0xf]
    %v96 = vld [vmem:[%s0 + $0x8c] sm:$0xf]
    %v97 = vld [vmem:[%s0 + $0x90] sm:$0xf]
    %v98 = vld [vmem:[%s0 + $0x94] sm:$0xf]
    %v99 = vld [vmem:[%s0 + $0x98] sm:$0xf]
    %v100 = vld [vmem:[%s0 + $0x9c] sm:$0xf]
    %v101 = vld [vmem:[%s0 + $0xa0] sm:$0xf]
    %v102 = vld [vmem:[%s0 + $0xa4] sm:$0xf]
    %v103 = vld [vmem:[%s0 + $0xa8] sm:$0xf]
    %v104 = vld [vmem:[%s0 + $0xac] sm:$0xf]
    %v105 = vld [vmem:[%s0 + $0xb0] sm:$0xf]
    %v106 = vld [vmem:[%s0 + $0xb4] sm:$0xf]
    %v107 = vld [vmem:[%s0 + $0xb8] sm:$0xf]
    %v108 = vld [vmem:[%s0 + $0xbc] sm:$0xf]
    %v109 = vld [vmem:[%s0 + $0xc0] sm:$0xf]
    %v110 = vld [vmem:[%s0 + $0xc4] sm:$0xf]
    %v111 = vld [vmem:[%s0 + $0xc8] sm:$0xf]
    %v112 = vld [vmem:[%s0 + $0xcc] sm:$0xf]
    %v113 = vld [vmem:[%s0 + $0xd0] sm:$0xf]
    %v114 = vld [vmem:[%s0 + $0xd4] sm:$0xf]
    %v115 = vld [vmem:[%s0 + $0xd8] sm:$0xf]
    %v116 = vld [vmem:[%s0 + $0xdc] sm:$0xf]
    %v117 = vld [vmem:[%s0 + $0xe0] sm:$0xf]
    %v118 = vld [vmem:[%s0 + $0xe4] sm:$0xf]
    %v119 = vld [vmem:[%s0 + $0xe8] sm:$0xf]
    %v120 = vld [vmem:[%s0 + $0xec] sm:$0xf]
    %v121 = vld [vmem:[%s0 + $0xf0] sm:$0xf]
    %v122 = vld [vmem:[%s0 + $0xf4] sm:$0xf]
    %v123 = vld [vmem:[%s0 + $0xf8] sm:$0xf]
    %v124 = vld [vmem:[%s0 + $0xfc] sm:$0xf]
    %v126 = vlaneseq
    %v127 = vshrl.u32 %v126, 7
    %v128 = vsub.s32 0, %v127
    %v129 = vrot.slane %v60, %v128
    %v195 = vunpack.c.l.b16 %v61
    %v196 = vunpack.c.l.b16 %v62
    %v197 = vunpack.c.l.b16 %v63
    %v198 = vunpack.c.l.b16 %v64
    %v199 = vunpack.c.l.b16 %v65
    %v200 = vunpack.c.l.b16 %v66
    %v201 = vunpack.c.l.b16 %v67
    %v202 = vunpack.c.l.b16 %v68
    %v203 = vunpack.c.l.b16 %v69
    %v204 = vunpack.c.l.b16 %v70
    %v205 = vunpack.c.l.b16 %v71
    %v206 = vunpack.c.l.b16 %v72
    %v207 = vunpack.c.l.b16 %v73
    %v208 = vunpack.c.l.b16 %v74
    %v209 = vunpack.c.l.b16 %v75
    %v210 = vunpack.c.l.b16 %v76
    %v211 = vunpack.c.l.b16 %v77
    %v212 = vunpack.c.l.b16 %v78
    %v213 = vunpack.c.l.b16 %v79
    %v214 = vunpack.c.l.b16 %v80
    %v215 = vunpack.c.l.b16 %v81
    %v216 = vunpack.c.l.b16 %v82
    %v217 = vunpack.c.l.b16 %v83
    %v218 = vunpack.c.l.b16 %v84
    %v219 = vunpack.c.l.b16 %v85
    %v220 = vunpack.c.l.b16 %v86
    %v221 = vunpack.c.l.b16 %v87
    %v222 = vunpack.c.l.b16 %v88
    %v223 = vunpack.c.l.b16 %v89
    %v224 = vunpack.c.l.b16 %v90
    %v225 = vunpack.c.l.b16 %v91
    %v226 = vunpack.c.l.b16 %v92
    %v227 = vunpack.c.l.b16 %v93
    %v228 = vunpack.c.l.b16 %v94
    %v229 = vunpack.c.l.b16 %v95
    %v230 = vunpack.c.l.b16 %v96
    %v231 = vunpack.c.l.b16 %v97
    %v232 = vunpack.c.l.b16 %v98
    %v233 = vunpack.c.l.b16 %v99
    %v234 = vunpack.c.l.b16 %v100
    %v235 = vunpack.c.l.b16 %v101
    %v236 = vunpack.c.l.b16 %v102
    %v237 = vunpack.c.l.b16 %v103
    %v238 = vunpack.c.l.b16 %v104
    %v239 = vunpack.c.l.b16 %v105
    %v240 = vunpack.c.l.b16 %v106
    %v241 = vunpack.c.l.b16 %v107
    %v242 = vunpack.c.l.b16 %v108
    %v243 = vunpack.c.l.b16 %v109
    %v244 = vunpack.c.l.b16 %v110
    %v245 = vunpack.c.l.b16 %v111
    %v246 = vunpack.c.l.b16 %v112
    %v247 = vunpack.c.l.b16 %v113
    %v248 = vunpack.c.l.b16 %v114
    %v249 = vunpack.c.l.b16 %v115
    %v250 = vunpack.c.l.b16 %v116
    %v251 = vunpack.c.l.b16 %v117
    %v252 = vunpack.c.l.b16 %v118
    %v253 = vunpack.c.l.b16 %v119
    %v254 = vunpack.c.l.b16 %v120
    %v255 = vunpack.c.l.b16 %v121
    %v256 = vunpack.c.l.b16 %v122
    %v257 = vunpack.c.l.b16 %v123
    %v258 = vunpack.c.l.b16 %v124
    %v259 = vpack.c.b16 %v196, %v195
    %v260 = vpack.c.b16 %v198, %v197
    %v261 = vpack.c.b16 %v200, %v199
    %v262 = vpack.c.b16 %v202, %v201
    %v263 = vpack.c.b16 %v204, %v203
    %v264 = vpack.c.b16 %v206, %v205
    %v265 = vpack.c.b16 %v208, %v207
    %v266 = vpack.c.b16 %v210, %v209
    %v267 = vpack.c.b16 %v212, %v211
    %v268 = vpack.c.b16 %v214, %v213
    %v269 = vpack.c.b16 %v216, %v215
    %v270 = vpack.c.b16 %v218, %v217
    %v271 = vpack.c.b16 %v220, %v219
    %v272 = vpack.c.b16 %v222, %v221
    %v273 = vpack.c.b16 %v224, %v223
    %v274 = vpack.c.b16 %v226, %v225
    %v275 = vpack.c.b16 %v228, %v227
    %v276 = vpack.c.b16 %v230, %v229
    %v277 = vpack.c.b16 %v232, %v231
    %v278 = vpack.c.b16 %v234, %v233
    %v279 = vpack.c.b16 %v236, %v235
    %v280 = vpack.c.b16 %v238, %v237
    %v281 = vpack.c.b16 %v240, %v239
    %v282 = vpack.c.b16 %v242, %v241
    %v283 = vpack.c.b16 %v244, %v243
    %v284 = vpack.c.b16 %v246, %v245
    %v285 = vpack.c.b16 %v248, %v247
    %v286 = vpack.c.b16 %v250, %v249
    %v287 = vpack.c.b16 %v252, %v251
    %v288 = vpack.c.b16 %v254, %v253
    %v289 = vpack.c.b16 %v256, %v255
    %v290 = vpack.c.b16 %v258, %v257
    %vm291 = vcmask 64512
    %v293 = vsel %vm291, %v259, 0
    %v296 = vsel %vm291, %v260, 0
    %v299 = vsel %vm291, %v261, 0
    %v302 = vsel %vm291, %v262, 0
    %v305 = vsel %vm291, %v263, 0
    %v308 = vsel %vm291, %v264, 0
    %v311 = vsel %vm291, %v265, 0
    %v314 = vsel %vm291, %v266, 0
    %v317 = vsel %vm291, %v267, 0
    %v320 = vsel %vm291, %v268, 0
    %v323 = vsel %vm291, %v269, 0
    %v326 = vsel %vm291, %v270, 0
    %v329 = vsel %vm291, %v271, 0
    %v332 = vsel %vm291, %v272, 0
    %v335 = vsel %vm291, %v273, 0
    %v338 = vsel %vm291, %v274, 0
    %v341 = vsel %vm291, %v275, 0
    %v344 = vsel %vm291, %v276, 0
    %v347 = vsel %vm291, %v277, 0
    %v350 = vsel %vm291, %v278, 0
    %v353 = vsel %vm291, %v279, 0
    %v356 = vsel %vm291, %v280, 0
    %v359 = vsel %vm291, %v281, 0
    %v362 = vsel %vm291, %v282, 0
    %v365 = vsel %vm291, %v283, 0
    %v368 = vsel %vm291, %v284, 0
    %v371 = vsel %vm291, %v285, 0
    %v374 = vsel %vm291, %v286, 0
    %v377 = vsel %vm291, %v287, 0
    %v380 = vsel %vm291, %v288, 0
    %v383 = vsel %vm291, %v289, 0
    %v386 = vsel %vm291, %v290, 0
    %vm388 = vcmask 1043456
    %v390 = vsel %vm388, %v55, 0
    %392 = vmatprep.subr.bf16.mxu0 0
    %393 = vmatpush1.bf16.msra.mxu0 %v390
    %394 = vmatprep.subr.bf16.mxu0 0
    %395 = vmatpush1.bf16.msra.mxu0 0
    %396 = vmatprep.subr.bf16.mxu0 0
    %397 = vmatpush1.bf16.msra.mxu0 0
    %398 = vmatprep.subr.bf16.mxu0 0
    %399 = vmatpush1.bf16.msra.mxu0 0
    %400 = vmatprep.subr.bf16.mxu0 0
    %401 = vmatpush1.bf16.msra.mxu0 0
    %402 = vmatprep.subr.bf16.mxu0 0
    %403 = vmatpush1.bf16.msra.mxu0 0
    %404 = vmatprep.subr.bf16.mxu0 0
    %405 = vmatpush1.bf16.msra.mxu0 0
    %406 = vmatprep.subr.bf16.mxu0 0
    %407 = vmatpush1.bf16.msra.mxu0 0
    %408 = vmatprep.subr.bf16.mxu0 0
    %409 = vmatpush1.bf16.msra.mxu0 0
    %410 = vmatprep.subr.bf16.mxu0 0
    %411 = vmatpush1.bf16.msra.mxu0 0
    %412 = vmatprep.subr.bf16.mxu0 0
    %413 = vmatpush1.bf16.msra.mxu0 0
    %414 = vmatprep.subr.bf16.mxu0 0
    %415 = vmatpush1.bf16.msra.mxu0 0
    %416 = vmatprep.subr.bf16.mxu0 0
    %417 = vmatpush1.bf16.msra.mxu0 0
    %418 = vmatprep.subr.bf16.mxu0 0
    %419 = vmatpush1.bf16.msra.mxu0 0
    %420 = vmatprep.subr.bf16.mxu0 0
    %421 = vmatpush1.bf16.msra.mxu0 0
    %422 = vmatprep.subr.bf16.mxu0 0
    %423 = vmatpush1.bf16.msra.mxu0 0
    %424 = vmatprep.mubr.bf16.mxu0 0
    %425 = vmatmul.mubr.bf16.gmra.mrb[0].mxu0 %v293
    %v426 = vpop.f32.mrb[0].mxu0
    %v427 = vadd.f32 %v129, %v426
    %v428 = vpop.f32.mrb[0].mxu0
    %v429 = vpop.f32.mrb[0].mxu0
    %v430 = vadd.f32 %v129, %v429
    %v431 = vpop.f32.mrb[0].mxu0
    %432 = vmatprep.mubr.bf16.mxu0 0
    %433 = vmatmul.mubr.bf16.gmra.mrb[0].mxu0 %v296
    %v434 = vpop.f32.mrb[0].mxu0
    %v435 = vadd.f32 %v129, %v434
    %v436 = vpop.f32.mrb[0].mxu0
    %v437 = vpop.f32.mrb[0].mxu0
    %v438 = vadd.f32 %v129, %v437
    %v439 = vpop.f32.mrb[0].mxu0
    %440 = vmatprep.mubr.bf16.mxu0 0
    %441 = vmatmul.mubr.bf16.gmra.mrb[0].mxu0 %v299
    %v442 = vpop.f32.mrb[0].mxu0
    %v443 = vadd.f32 %v129, %v442
    %v444 = vpop.f32.mrb[0].mxu0
    %v445 = vpop.f32.mrb[0].mxu0
    %v446 = vadd.f32 %v129, %v445
    %v447 = vpop.f32.mrb[0].mxu0
    %448 = vmatprep.mubr.bf16.mxu0 0
    %449 = vmatmul.mubr.bf16.gmra.mrb[0].mxu0 %v302
    %v450 = vpop.f32.mrb[0].mxu0
    %v451 = vadd.f32 %v129, %v450
    %v452 = vpop.f32.mrb[0].mxu0
    %v453 = vpop.f32.mrb[0].mxu0
    %v454 = vadd.f32 %v129, %v453
    %v455 = vpop.f32.mrb[0].mxu0
    %456 = vmatprep.mubr.bf16.mxu0 0
    %457 = vmatmul.mubr.bf16.gmra.mrb[0].mxu0 %v305
    %v458 = vpop.f32.mrb[0].mxu0
    %v459 = vadd.f32 %v129, %v458
    %v460 = vpop.f32.mrb[0].mxu0
    %v461 = vpop.f32.mrb[0].mxu0
    %v462 = vadd.f32 %v129, %v461
    %v463 = vpop.f32.mrb[0].mxu0
    %464 = vmatprep.mubr.bf16.mxu0 0
    %465 = vmatmul.mubr.bf16.gmra.mrb[0].mxu0 %v308
    %v466 = vpop.f32.mrb[0].mxu0
    %v467 = vadd.f32 %v129, %v466
    %v468 = vpop.f32.mrb[0].mxu0
    %v469 = vpop.f32.mrb[0].mxu0
    %v470 = vadd.f32 %v129, %v469
    %v471 = vpop.f32.mrb[0].mxu0
    %472 = vmatprep.mubr.bf16.mxu0 0
    %473 = vmatmul.mubr.bf16.gmra.mrb[0].mxu0 %v311
    %v474 = vpop.f32.mrb[0].mxu0
    %v475 = vadd.f32 %v129, %v474
    %v476 = vpop.f32.mrb[0].mxu0
    %v477 = vpop.f32.mrb[0].mxu0
    %v478 = vadd.f32 %v129, %v477
    %v479 = vpop.f32.mrb[0].mxu0
    %480 = vmatprep.mubr.bf16.mxu0 0
    %481 = vmatmul.mubr.bf16.gmra.mrb[0].mxu0 %v314
    %v482 = vpop.f32.mrb[0].mxu0
    %v483 = vadd.f32 %v129, %v482
    %v484 = vpop.f32.mrb[0].mxu0
    %v485 = vpop.f32.mrb[0].mxu0
    %v486 = vadd.f32 %v129, %v485
    %v487 = vpop.f32.mrb[0].mxu0
    %488 = vmatprep.mubr.bf16.mxu0 0
    %489 = vmatmul.mubr.bf16.gmra.mrb[0].mxu0 %v317
    %v490 = vpop.f32.mrb[0].mxu0
    %v491 = vadd.f32 %v129, %v490
    %v492 = vpop.f32.mrb[0].mxu0
    %v493 = vpop.f32.mrb[0].mxu0
    %v494 = vadd.f32 %v129, %v493
    %v495 = vpop.f32.mrb[0].mxu0
    %496 = vmatprep.mubr.bf16.mxu0 0
    %497 = vmatmul.mubr.bf16.gmra.mrb[0].mxu0 %v320
    %v498 = vpop.f32.mrb[0].mxu0
    %v499 = vadd.f32 %v129, %v498
    %v500 = vpop.f32.mrb[0].mxu0
    %v501 = vpop.f32.mrb[0].mxu0
    %v502 = vadd.f32 %v129, %v501
    %v503 = vpop.f32.mrb[0].mxu0
    %504 = vmatprep.mubr.bf16.mxu0 0
    %505 = vmatmul.mubr.bf16.gmra.mrb[0].mxu0 %v323
    %v506 = vpop.f32.mrb[0].mxu0
    %v507 = vadd.f32 %v129, %v506
    %v508 = vpop.f32.mrb[0].mxu0
    %v509 = vpop.f32.mrb[0].mxu0
    %v510 = vadd.f32 %v129, %v509
    %v511 = vpop.f32.mrb[0].mxu0
    %512 = vmatprep.mubr.bf16.mxu0 0
    %513 = vmatmul.mubr.bf16.gmra.mrb[0].mxu0 %v326
    %v514 = vpop.f32.mrb[0].mxu0
    %v515 = vadd.f32 %v129, %v514
    %v516 = vpop.f32.mrb[0].mxu0
    %v517 = vpop.f32.mrb[0].mxu0
    %v518 = vadd.f32 %v129, %v517
    %v519 = vpop.f32.mrb[0].mxu0
    %520 = vmatprep.mubr.bf16.mxu0 0
    %521 = vmatmul.mubr.bf16.gmra.mrb[0].mxu0 %v329
    %v522 = vpop.f32.mrb[0].mxu0
    %v523 = vadd.f32 %v129, %v522
    %v524 = vpop.f32.mrb[0].mxu0
    %v525 = vpop.f32.mrb[0].mxu0
    %v526 = vadd.f32 %v129, %v525
    %v527 = vpop.f32.mrb[0].mxu0
    %528 = vmatprep.mubr.bf16.mxu0 0
    %529 = vmatmul.mubr.bf16.gmra.mrb[0].mxu0 %v332
    %v530 = vpop.f32.mrb[0].mxu0
    %v531 = vadd.f32 %v129, %v530
    %v532 = vpop.f32.mrb[0].mxu0
    %v533 = vpop.f32.mrb[0].mxu0
    %v534 = vadd.f32 %v129, %v533
    %v535 = vpop.f32.mrb[0].mxu0
    %536 = vmatprep.mubr.bf16.mxu0 0
    %537 = vmatmul.mubr.bf16.gmra.mrb[0].mxu0 %v335
    %v538 = vpop.f32.mrb[0].mxu0
    %v539 = vadd.f32 %v129, %v538
    %v540 = vpop.f32.mrb[0].mxu0
    %v541 = vpop.f32.mrb[0].mxu0
    %v542 = vadd.f32 %v129, %v541
    %v543 = vpop.f32.mrb[0].mxu0
    %544 = vmatprep.mubr.bf16.mxu0 0
    %545 = vmatmul.mubr.bf16.gmra.mrb[0].mxu0 %v338
    %v546 = vpop.f32.mrb[0].mxu0
    %v547 = vadd.f32 %v129, %v546
    %v548 = vpop.f32.mrb[0].mxu0
    %v549 = vpop.f32.mrb[0].mxu0
    %v550 = vadd.f32 %v129, %v549
    %v551 = vpop.f32.mrb[0].mxu0
    %552 = vmatprep.mubr.bf16.mxu0 0
    %553 = vmatmul.mubr.bf16.gmra.mrb[0].mxu0 %v341
    %v554 = vpop.f32.mrb[0].mxu0
    %v555 = vadd.f32 %v129, %v554
    %v556 = vpop.f32.mrb[0].mxu0
    %v557 = vpop.f32.mrb[0].mxu0
    %v558 = vadd.f32 %v129, %v557
    %v559 = vpop.f32.mrb[0].mxu0
    %560 = vmatprep.mubr.bf16.mxu0 0
    %561 = vmatmul.mubr.bf16.gmra.mrb[0].mxu0 %v344
    %v562 = vpop.f32.mrb[0].mxu0
    %v563 = vadd.f32 %v129, %v562
    %v564 = vpop.f32.mrb[0].mxu0
    %v565 = vpop.f32.mrb[0].mxu0
    %v566 = vadd.f32 %v129, %v565
    %v567 = vpop.f32.mrb[0].mxu0
    %568 = vmatprep.mubr.bf16.mxu0 0
    %569 = vmatmul.mubr.bf16.gmra.mrb[0].mxu0 %v347
    %v570 = vpop.f32.mrb[0].mxu0
    %v571 = vadd.f32 %v129, %v570
    %v572 = vpop.f32.mrb[0].mxu0
    %v573 = vpop.f32.mrb[0].mxu0
    %v574 = vadd.f32 %v129, %v573
    %v575 = vpop.f32.mrb[0].mxu0
    %576 = vmatprep.mubr.bf16.mxu0 0
    %577 = vmatmul.mubr.bf16.gmra.mrb[0].mxu0 %v350
    %v578 = vpop.f32.mrb[0].mxu0
    %v579 = vadd.f32 %v129, %v578
    %v580 = vpop.f32.mrb[0].mxu0
    %v581 = vpop.f32.mrb[0].mxu0
    %v582 = vadd.f32 %v129, %v581
    %v583 = vpop.f32.mrb[0].mxu0
    %584 = vmatprep.mubr.bf16.mxu0 0
    %585 = vmatmul.mubr.bf16.gmra.mrb[0].mxu0 %v353
    %v586 = vpop.f32.mrb[0].mxu0
    %v587 = vadd.f32 %v129, %v586
    %v588 = vpop.f32.mrb[0].mxu0
    %v589 = vpop.f32.mrb[0].mxu0
    %v590 = vadd.f32 %v129, %v589
    %v591 = vpop.f32.mrb[0].mxu0
    %592 = vmatprep.mubr.bf16.mxu0 0
    %593 = vmatmul.mubr.bf16.gmra.mrb[0].mxu0 %v356
    %v594 = vpop.f32.mrb[0].mxu0
    %v595 = vadd.f32 %v129, %v594
    %v596 = vpop.f32.mrb[0].mxu0
    %v597 = vpop.f32.mrb[0].mxu0
    %v598 = vadd.f32 %v129, %v597
    %v599 = vpop.f32.mrb[0].mxu0
    %600 = vmatprep.mubr.bf16.mxu0 0
    %601 = vmatmul.mubr.bf16.gmra.mrb[0].mxu0 %v359
    %v602 = vpop.f32.mrb[0].mxu0
    %v603 = vadd.f32 %v129, %v602
    %v604 = vpop.f32.mrb[0].mxu0
    %v605 = vpop.f32.mrb[0].mxu0
    %v606 = vadd.f32 %v129, %v605
    %v607 = vpop.f32.mrb[0].mxu0
    %608 = vmatprep.mubr.bf16.mxu0 0
    %609 = vmatmul.mubr.bf16.gmra.mrb[0].mxu0 %v362
    %v610 = vpop.f32.mrb[0].mxu0
    %v611 = vadd.f32 %v129, %v610
    %v612 = vpop.f32.mrb[0].mxu0
    %v613 = vpop.f32.mrb[0].mxu0
    %v614 = vadd.f32 %v129, %v613
    %v615 = vpop.f32.mrb[0].mxu0
    %616 = vmatprep.mubr.bf16.mxu0 0
    %617 = vmatmul.mubr.bf16.gmra.mrb[0].mxu0 %v365
    %v618 = vpop.f32.mrb[0].mxu0
    %v619 = vadd.f32 %v129, %v618
    %v620 = vpop.f32.mrb[0].mxu0
    %v621 = vpop.f32.mrb[0].mxu0
    %v622 = vadd.f32 %v129, %v621
    %v623 = vpop.f32.mrb[0].mxu0
    %624 = vmatprep.mubr.bf16.mxu0 0
    %625 = vmatmul.mubr.bf16.gmra.mrb[0].mxu0 %v368
    %v626 = vpop.f32.mrb[0].mxu0
    %v627 = vadd.f32 %v129, %v626
    %v628 = vpop.f32.mrb[0].mxu0
    %v629 = vpop.f32.mrb[0].mxu0
    %v630 = vadd.f32 %v129, %v629
    %v631 = vpop.f32.mrb[0].mxu0
    %632 = vmatprep.mubr.bf16.mxu0 0
    %633 = vmatmul.mubr.bf16.gmra.mrb[0].mxu0 %v371
    %v634 = vpop.f32.mrb[0].mxu0
    %v635 = vadd.f32 %v129, %v634
    %v636 = vpop.f32.mrb[0].mxu0
    %v637 = vpop.f32.mrb[0].mxu0
    %v638 = vadd.f32 %v129, %v637
    %v639 = vpop.f32.mrb[0].mxu0
    %640 = vmatprep.mubr.bf16.mxu0 0
    %641 = vmatmul.mubr.bf16.gmra.mrb[0].mxu0 %v374
    %v642 = vpop.f32.mrb[0].mxu0
    %v643 = vadd.f32 %v129, %v642
    %v644 = vpop.f32.mrb[0].mxu0
    %v645 = vpop.f32.mrb[0].mxu0
    %v646 = vadd.f32 %v129, %v645
    %v647 = vpop.f32.mrb[0].mxu0
    %648 = vmatprep.mubr.bf16.mxu0 0
    %649 = vmatmul.mubr.bf16.gmra.mrb[0].mxu0 %v377
    %v650 = vpop.f32.mrb[0].mxu0
    %v651 = vadd.f32 %v129, %v650
    %v652 = vpop.f32.mrb[0].mxu0
    %v653 = vpop.f32.mrb[0].mxu0
    %v654 = vadd.f32 %v129, %v653
    %v655 = vpop.f32.mrb[0].mxu0
    %656 = vmatprep.mubr.bf16.mxu0 0
    %657 = vmatmul.mubr.bf16.gmra.mrb[0].mxu0 %v380
    %v658 = vpop.f32.mrb[0].mxu0
    %v659 = vadd.f32 %v129, %v658
    %v660 = vpop.f32.mrb[0].mxu0
    %v661 = vpop.f32.mrb[0].mxu0
    %v662 = vadd.f32 %v129, %v661
    %v663 = vpop.f32.mrb[0].mxu0
    %664 = vmatprep.mubr.bf16.mxu0 0
    %665 = vmatmul.mubr.bf16.gmra.mrb[0].mxu0 %v383
    %v666 = vpop.f32.mrb[0].mxu0
    %v667 = vadd.f32 %v129, %v666
    %v668 = vpop.f32.mrb[0].mxu0
    %v669 = vpop.f32.mrb[0].mxu0
    %v670 = vadd.f32 %v129, %v669
    %v671 = vpop.f32.mrb[0].mxu0
    %672 = vmatprep.mubr.bf16.mxu0 0
    %673 = vmatmul.mubr.bf16.gmra.mrb[0].mxu0 %v386
    %v674 = vpop.f32.mrb[0].mxu0
    %v675 = vadd.f32 %v129, %v674
    %v676 = vpop.f32.mrb[0].mxu0
    %v677 = vpop.f32.mrb[0].mxu0
    %v678 = vadd.f32 %v129, %v677
    %v679 = vpop.f32.mrb[0].mxu0
    %680 = vdwg.mxu0
    %681 = vst [vmem:[#allocation2] sm:$0xff] %v427
    %682 = vst [vmem:[#allocation2 + $0x8] sm:$0xff] %v430
    %683 = vst [vmem:[#allocation2 + $0x10] sm:$0xff] %v435
    %684 = vst [vmem:[#allocation2 + $0x18] sm:$0xff] %v438
    %685 = vst [vmem:[#allocation2 + $0x20] sm:$0xff] %v443
    %686 = vst [vmem:[#allocation2 + $0x28] sm:$0xff] %v446
    %687 = vst [vmem:[#allocation2 + $0x30] sm:$0xff] %v451
    %688 = vst [vmem:[#allocation2 + $0x38] sm:$0xff] %v454
    %689 = vst [vmem:[#allocation2 + $0x40] sm:$0xff] %v459
    %690 = vst [vmem:[#allocation2 + $0x48] sm:$0xff] %v462
    %691 = vst [vmem:[#allocation2 + $0x50] sm:$0xff] %v467
    %692 = vst [vmem:[#allocation2 + $0x58] sm:$0xff] %v470
    %693 = vst [vmem:[#allocation2 + $0x60] sm:$0xff] %v475
    %694 = vst [vmem:[#allocation2 + $0x68] sm:$0xff] %v478
    %695 = vst [vmem:[#allocation2 + $0x70] sm:$0xff] %v483
    %696 = vst [vmem:[#allocation2 + $0x78] sm:$0xff] %v486
    %697 = vst [vmem:[#allocation2 + $0x80] sm:$0xff] %v491
    %698 = vst [vmem:[#allocation2 + $0x88] sm:$0xff] %v494
    %699 = vst [vmem:[#allocation2 + $0x90] sm:$0xff] %v499
    %700 = vst [vmem:[#allocation2 + $0x98] sm:$0xff] %v502
    %701 = vst [vmem:[#allocation2 + $0xa0] sm:$0xff] %v507
    %702 = vst [vmem:[#allocation2 + $0xa8] sm:$0xff] %v510
    %703 = vst [vmem:[#allocation2 + $0xb0] sm:$0xff] %v515
    %704 = vst [vmem:[#allocation2 + $0xb8] sm:$0xff] %v518
    %705 = vst [vmem:[#allocation2 + $0xc0] sm:$0xff] %v523
    %706 = vst [vmem:[#allocation2 + $0xc8] sm:$0xff] %v526
    %707 = vst [vmem:[#allocation2 + $0xd0] sm:$0xff] %v531
    %708 = vst [vmem:[#allocation2 + $0xd8] sm:$0xff] %v534
    %709 = vst [vmem:[#allocation2 + $0xe0] sm:$0xff] %v539
    %710 = vst [vmem:[#allocation2 + $0xe8] sm:$0xff] %v542
    %711 = vst [vmem:[#allocation2 + $0xf0] sm:$0xff] %v547
    %712 = vst [vmem:[#allocation2 + $0xf8] sm:$0xff] %v550
    %713 = vst [vmem:[#allocation2 + $0x100] sm:$0xff] %v555
    %714 = vst [vmem:[#allocation2 + $0x108] sm:$0xff] %v558
    %715 = vst [vmem:[#allocation2 + $0x110] sm:$0xff] %v563
    %716 = vst [vmem:[#allocation2 + $0x118] sm:$0xff] %v566
    %717 = vst [vmem:[#allocation2 + $0x120] sm:$0xff] %v571
    %718 = vst [vmem:[#allocation2 + $0x128] sm:$0xff] %v574
    %719 = vst [vmem:[#allocation2 + $0x130] sm:$0xff] %v579
    %720 = vst [vmem:[#allocation2 + $0x138] sm:$0xff] %v582
    %721 = vst [vmem:[#allocation2 + $0x140] sm:$0xff] %v587
    %722 = vst [vmem:[#allocation2 + $0x148] sm:$0xff] %v590
    %723 = vst [vmem:[#allocation2 + $0x150] sm:$0xff] %v595
    %724 = vst [vmem:[#allocation2 + $0x158] sm:$0xff] %v598
    %725 = vst [vmem:[#allocation2 + $0x160] sm:$0xff] %v603
    %726 = vst [vmem:[#allocation2 + $0x168] sm:$0xff] %v606
    %727 = vst [vmem:[#allocation2 + $0x170] sm:$0xff] %v611
    %728 = vst [vmem:[#allocation2 + $0x178] sm:$0xff] %v614
    %729 = vst [vmem:[#allocation2 + $0x180] sm:$0xff] %v619
    %730 = vst [vmem:[#allocation2 + $0x188] sm:$0xff] %v622
    %731 = vst [vmem:[#allocation2 + $0x190] sm:$0xff] %v627
    %732 = vst [vmem:[#allocation2 + $0x198] sm:$0xff] %v630
    %733 = vst [vmem:[#allocation2 + $0x1a0] sm:$0xff] %v635
    %734 = vst [vmem:[#allocation2 + $0x1a8] sm:$0xff] %v638
    %735 = vst [vmem:[#allocation2 + $0x1b0] sm:$0xff] %v643
    %736 = vst [vmem:[#allocation2 + $0x1b8] sm:$0xff] %v646
    %737 = vst [vmem:[#allocation2 + $0x1c0] sm:$0xff] %v651
    %738 = vst [vmem:[#allocation2 + $0x1c8] sm:$0xff] %v654
    %739 = vst [vmem:[#allocation2 + $0x1d0] sm:$0xff] %v659
    %740 = vst [vmem:[#allocation2 + $0x1d8] sm:$0xff] %v662
    %741 = vst [vmem:[#allocation2 + $0x1e0] sm:$0xff] %v667
    %742 = vst [vmem:[#allocation2 + $0x1e8] sm:$0xff] %v670
    %743 = vst [vmem:[#allocation2 + $0x1f0] sm:$0xff] %v675
    %744 = vst [vmem:[#allocation2 + $0x1f8] sm:$0xff] %v678
    loop: start=0, step=1, limit=2
    $region42: #{tpu_custom_call.1} parent=1 // loop_pre_header
      _
    $region43: #{tpu_custom_call.1} parent=1 // loop_header
      %s746 = sphi 0, %s750
      %p747 = scmp.ge.s32.totalorder %s746, 2
      %v751 = vphi 0.0, %v4542
      %v752 = vphi 0.0, %v4543
      %v753 = vphi 0.0, %v4544
      %v754 = vphi 0.0, %v4545
      %v755 = vphi 0.0, %v4546
      %v756 = vphi 0.0, %v4547
      %v757 = vphi 0.0, %v4548
      %v758 = vphi 0.0, %v4549
      %v759 = vphi 0.0, %v4550
      %v760 = vphi 0.0, %v4551
      %v761 = vphi 0.0, %v4552
      %v762 = vphi 0.0, %v4553
      %v763 = vphi 0.0, %v4554
      %v764 = vphi 0.0, %v4555
      %v765 = vphi 0.0, %v4556
      %v766 = vphi 0.0, %v4557
      %v767 = vphi 0.0, %v4558
      %v768 = vphi 0.0, %v4559
      %v769 = vphi 0.0, %v4560
      %v770 = vphi 0.0, %v4561
      %v771 = vphi 0.0, %v4562
      %v772 = vphi 0.0, %v4563
      %v773 = vphi 0.0, %v4564
      %v774 = vphi 0.0, %v4565
      %v775 = vphi 0.0, %v4566
      %v776 = vphi 0.0, %v4567
      %v777 = vphi 0.0, %v4568
      %v778 = vphi 0.0, %v4569
      %v779 = vphi 0.0, %v4570
      %v780 = vphi 0.0, %v4571
      %v781 = vphi 0.0, %v4572
      %v782 = vphi 0.0, %v4573
    $region44: #{tpu_custom_call.1} parent=1 // loop_header_branch
      %749 = sbr.rel (%p747) target = $region48
    $region45: #{tpu_custom_call.1} parent=1 // loop_body
      %p783 = scmp.lt.s32.totalorder %s746, 0
      %s784 = ssub.s32 0, %s746
      %s785 = scalar_select %p783, %s784, %s746
      %s786 = sand.u32 %s785, 1
      %s787 = ssub.s32 0, %s786
      %s788 = scalar_select %p783, %s787, %s786
      %p789 = scmp.ne.s32.totalorder %s788, 0
      %p790 = scmp.lt.s32.totalorder %s788, 0
      %p791 = pnand %p790, %p789
      %p792 = pneg %p791
      %s793 = sadd.s32 %s788, 2
      %s794 = scalar_select %p792, %s793, %s788
      %s795 = sadd.s32 %s746, 1
      %p796 = scmp.lt.s32.totalorder %s795, 2
      // Predicated region
      $region49: #{tpu_custom_call.1} parent=45 // pred_check
        %p797 = pneg %p796
      $region50: #{tpu_custom_call.1} parent=45 // pred_check_branch
        %799 = sbr.rel (%p797) target = $region52
      $region51: #{tpu_custom_call.1} parent=45 // pred_region
        %s800 = ssub.s32 1, %s794
        %s801 = smul.u32 %s795, 512
        %s802 = smul.u32 %s800, 512
        %s803 = sshra.s32 %s801, 3
        %s804 = sand.u32 %s801, 7
        %s805 = smul.addr %s803, 4
        %s806 = scalar_lea.vmem %s0, %s805
        %v807 = vld [vmem:[%s806] sm:$0xf]
        %v808 = vld [vmem:[%s806 + $0x4] sm:$0xf]
        %v809 = vld [vmem:[%s806 + $0x8] sm:$0xf]
        %v810 = vld [vmem:[%s806 + $0xc] sm:$0xf]
        %v811 = vld [vmem:[%s806 + $0x10] sm:$0xf]
        %v812 = vld [vmem:[%s806 + $0x14] sm:$0xf]
        %v813 = vld [vmem:[%s806 + $0x18] sm:$0xf]
        %v814 = vld [vmem:[%s806 + $0x1c] sm:$0xf]
        %v815 = vld [vmem:[%s806 + $0x20] sm:$0xf]
        %v816 = vld [vmem:[%s806 + $0x24] sm:$0xf]
        %v817 = vld [vmem:[%s806 + $0x28] sm:$0xf]
        %v818 = vld [vmem:[%s806 + $0x2c] sm:$0xf]
        %v819 = vld [vmem:[%s806 + $0x30] sm:$0xf]
        %v820 = vld [vmem:[%s806 + $0x34] sm:$0xf]
        %v821 = vld [vmem:[%s806 + $0x38] sm:$0xf]
        %v822 = vld [vmem:[%s806 + $0x3c] sm:$0xf]
        %v823 = vld [vmem:[%s806 + $0x40] sm:$0xf]
        %v824 = vld [vmem:[%s806 + $0x44] sm:$0xf]
        %v825 = vld [vmem:[%s806 + $0x48] sm:$0xf]
        %v826 = vld [vmem:[%s806 + $0x4c] sm:$0xf]
        %v827 = vld [vmem:[%s806 + $0x50] sm:$0xf]
        %v828 = vld [vmem:[%s806 + $0x54] sm:$0xf]
        %v829 = vld [vmem:[%s806 + $0x58] sm:$0xf]
        %v830 = vld [vmem:[%s806 + $0x5c] sm:$0xf]
        %v831 = vld [vmem:[%s806 + $0x60] sm:$0xf]
        %v832 = vld [vmem:[%s806 + $0x64] sm:$0xf]
        %v833 = vld [vmem:[%s806 + $0x68] sm:$0xf]
        %v834 = vld [vmem:[%s806 + $0x6c] sm:$0xf]
        %v835 = vld [vmem:[%s806 + $0x70] sm:$0xf]
        %v836 = vld [vmem:[%s806 + $0x74] sm:$0xf]
        %v837 = vld [vmem:[%s806 + $0x78] sm:$0xf]
        %v838 = vld [vmem:[%s806 + $0x7c] sm:$0xf]
        %v839 = vld [vmem:[%s806 + $0x80] sm:$0xf]
        %v840 = vld [vmem:[%s806 + $0x84] sm:$0xf]
        %v841 = vld [vmem:[%s806 + $0x88] sm:$0xf]
        %v842 = vld [vmem:[%s806 + $0x8c] sm:$0xf]
        %v843 = vld [vmem:[%s806 + $0x90] sm:$0xf]
        %v844 = vld [vmem:[%s806 + $0x94] sm:$0xf]
        %v845 = vld [vmem:[%s806 + $0x98] sm:$0xf]
        %v846 = vld [vmem:[%s806 + $0x9c] sm:$0xf]
        %v847 = vld [vmem:[%s806 + $0xa0] sm:$0xf]
        %v848 = vld [vmem:[%s806 + $0xa4] sm:$0xf]
        %v849 = vld [vmem:[%s806 + $0xa8] sm:$0xf]
        %v850 = vld [vmem:[%s806 + $0xac] sm:$0xf]
        %v851 = vld [vmem:[%s806 + $0xb0] sm:$0xf]
        %v852 = vld [vmem:[%s806 + $0xb4] sm:$0xf]
        %v853 = vld [vmem:[%s806 + $0xb8] sm:$0xf]
        %v854 = vld [vmem:[%s806 + $0xbc] sm:$0xf]
        %v855 = vld [vmem:[%s806 + $0xc0] sm:$0xf]
        %v856 = vld [vmem:[%s806 + $0xc4] sm:$0xf]
        %v857 = vld [vmem:[%s806 + $0xc8] sm:$0xf]
        %v858 = vld [vmem:[%s806 + $0xcc] sm:$0xf]
        %v859 = vld [vmem:[%s806 + $0xd0] sm:$0xf]
        %v860 = vld [vmem:[%s806 + $0xd4] sm:$0xf]
        %v861 = vld [vmem:[%s806 + $0xd8] sm:$0xf]
        %v862 = vld [vmem:[%s806 + $0xdc] sm:$0xf]
        %v863 = vld [vmem:[%s806 + $0xe0] sm:$0xf]
        %v864 = vld [vmem:[%s806 + $0xe4] sm:$0xf]
        %v865 = vld [vmem:[%s806 + $0xe8] sm:$0xf]
        %v866 = vld [vmem:[%s806 + $0xec] sm:$0xf]
        %v867 = vld [vmem:[%s806 + $0xf0] sm:$0xf]
        %v868 = vld [vmem:[%s806 + $0xf4] sm:$0xf]
        %v869 = vld [vmem:[%s806 + $0xf8] sm:$0xf]
        %v870 = vld [vmem:[%s806 + $0xfc] sm:$0xf]
        %v935 = vunpack.c.l.b16 %v807
        %v936 = vunpack.c.l.b16 %v808
        %v937 = vunpack.c.l.b16 %v809
        %v938 = vunpack.c.l.b16 %v810
        %v939 = vunpack.c.l.b16 %v811
        %v940 = vunpack.c.l.b16 %v812
        %v941 = vunpack.c.l.b16 %v813
        %v942 = vunpack.c.l.b16 %v814
        %v943 = vunpack.c.l.b16 %v815
        %v944 = vunpack.c.l.b16 %v816
        %v945 = vunpack.c.l.b16 %v817
        %v946 = vunpack.c.l.b16 %v818
        %v947 = vunpack.c.l.b16 %v819
        %v948 = vunpack.c.l.b16 %v820
        %v949 = vunpack.c.l.b16 %v821
        %v950 = vunpack.c.l.b16 %v822
        %v951 = vunpack.c.l.b16 %v823
        %v952 = vunpack.c.l.b16 %v824
        %v953 = vunpack.c.l.b16 %v825
        %v954 = vunpack.c.l.b16 %v826
        %v955 = vunpack.c.l.b16 %v827
        %v956 = vunpack.c.l.b16 %v828
        %v957 = vunpack.c.l.b16 %v829
        %v958 = vunpack.c.l.b16 %v830
        %v959 = vunpack.c.l.b16 %v831
        %v960 = vunpack.c.l.b16 %v832
        %v961 = vunpack.c.l.b16 %v833
        %v962 = vunpack.c.l.b16 %v834
        %v963 = vunpack.c.l.b16 %v835
        %v964 = vunpack.c.l.b16 %v836
        %v965 = vunpack.c.l.b16 %v837
        %v966 = vunpack.c.l.b16 %v838
        %v967 = vunpack.c.l.b16 %v839
        %v968 = vunpack.c.l.b16 %v840
        %v969 = vunpack.c.l.b16 %v841
        %v970 = vunpack.c.l.b16 %v842
        %v971 = vunpack.c.l.b16 %v843
        %v972 = vunpack.c.l.b16 %v844
        %v973 = vunpack.c.l.b16 %v845
        %v974 = vunpack.c.l.b16 %v846
        %v975 = vunpack.c.l.b16 %v847
        %v976 = vunpack.c.l.b16 %v848
        %v977 = vunpack.c.l.b16 %v849
        %v978 = vunpack.c.l.b16 %v850
        %v979 = vunpack.c.l.b16 %v851
        %v980 = vunpack.c.l.b16 %v852
        %v981 = vunpack.c.l.b16 %v853
        %v982 = vunpack.c.l.b16 %v854
        %v983 = vunpack.c.l.b16 %v855
        %v984 = vunpack.c.l.b16 %v856
        %v985 = vunpack.c.l.b16 %v857
        %v986 = vunpack.c.l.b16 %v858
        %v987 = vunpack.c.l.b16 %v859
        %v988 = vunpack.c.l.b16 %v860
        %v989 = vunpack.c.l.b16 %v861
        %v990 = vunpack.c.l.b16 %v862
        %v991 = vunpack.c.l.b16 %v863
        %v992 = vunpack.c.l.b16 %v864
        %v993 = vunpack.c.l.b16 %v865
        %v994 = vunpack.c.l.b16 %v866
        %v995 = vunpack.c.l.b16 %v867
        %v996 = vunpack.c.l.b16 %v868
        %v997 = vunpack.c.l.b16 %v869
        %v998 = vunpack.c.l.b16 %v870
        %v999 = vpack.c.b16 %v936, %v935
        %v1000 = vpack.c.b16 %v938, %v937
        %v1001 = vpack.c.b16 %v940, %v939
        %v1002 = vpack.c.b16 %v942, %v941
        %v1003 = vpack.c.b16 %v944, %v943
        %v1004 = vpack.c.b16 %v946, %v945
        %v1005 = vpack.c.b16 %v948, %v947
        %v1006 = vpack.c.b16 %v950, %v949
        %v1007 = vpack.c.b16 %v952, %v951
        %v1008 = vpack.c.b16 %v954, %v953
        %v1009 = vpack.c.b16 %v956, %v955
        %v1010 = vpack.c.b16 %v958, %v957
        %v1011 = vpack.c.b16 %v960, %v959
        %v1012 = vpack.c.b16 %v962, %v961
        %v1013 = vpack.c.b16 %v964, %v963
        %v1014 = vpack.c.b16 %v966, %v965
        %v1015 = vpack.c.b16 %v968, %v967
        %v1016 = vpack.c.b16 %v970, %v969
        %v1017 = vpack.c.b16 %v972, %v971
        %v1018 = vpack.c.b16 %v974, %v973
        %v1019 = vpack.c.b16 %v976, %v975
        %v1020 = vpack.c.b16 %v978, %v977
        %v1021 = vpack.c.b16 %v980, %v979
        %v1022 = vpack.c.b16 %v982, %v981
        %v1023 = vpack.c.b16 %v984, %v983
        %v1024 = vpack.c.b16 %v986, %v985
        %v1025 = vpack.c.b16 %v988, %v987
        %v1026 = vpack.c.b16 %v990, %v989
        %v1027 = vpack.c.b16 %v992, %v991
        %v1028 = vpack.c.b16 %v994, %v993
        %v1029 = vpack.c.b16 %v996, %v995
        %v1030 = vpack.c.b16 %v998, %v997
        %v1032 = vsel %vm291, %v999, 0
        %v1035 = vsel %vm291, %v1000, 0
        %v1038 = vsel %vm291, %v1001, 0
        %v1041 = vsel %vm291, %v1002, 0
        %v1044 = vsel %vm291, %v1003, 0
        %v1047 = vsel %vm291, %v1004, 0
        %v1050 = vsel %vm291, %v1005, 0
        %v1053 = vsel %vm291, %v1006, 0
        %v1056 = vsel %vm291, %v1007, 0
        %v1059 = vsel %vm291, %v1008, 0
        %v1062 = vsel %vm291, %v1009, 0
        %v1065 = vsel %vm291, %v1010, 0
        %v1068 = vsel %vm291, %v1011, 0
        %v1071 = vsel %vm291, %v1012, 0
        %v1074 = vsel %vm291, %v1013, 0
        %v1077 = vsel %vm291, %v1014, 0
        %v1080 = vsel %vm291, %v1015, 0
        %v1083 = vsel %vm291, %v1016, 0
        %v1086 = vsel %vm291, %v1017, 0
        %v1089 = vsel %vm291, %v1018, 0
        %v1092 = vsel %vm291, %v1019, 0
        %v1095 = vsel %vm291, %v1020, 0
        %v1098 = vsel %vm291, %v1021, 0
        %v1101 = vsel %vm291, %v1022, 0
        %v1104 = vsel %vm291, %v1023, 0
        %v1107 = vsel %vm291, %v1024, 0
        %v1110 = vsel %vm291, %v1025, 0
        %v1113 = vsel %vm291, %v1026, 0
        %v1116 = vsel %vm291, %v1027, 0
        %v1119 = vsel %vm291, %v1028, 0
        %v1122 = vsel %vm291, %v1029, 0
        %v1125 = vsel %vm291, %v1030, 0
        %1127 = vmatprep.subr.bf16.mxu0 0
        %1128 = vmatpush1.bf16.msra.mxu0 %v390
        %1129 = vmatprep.subr.bf16.mxu0 0
        %1130 = vmatpush1.bf16.msra.mxu0 0
        %1131 = vmatprep.subr.bf16.mxu0 0
        %1132 = vmatpush1.bf16.msra.mxu0 0
        %1133 = vmatprep.subr.bf16.mxu0 0
        %1134 = vmatpush1.bf16.msra.mxu0 0
        %1135 = vmatprep.subr.bf16.mxu0 0
        %1136 = vmatpush1.bf16.msra.mxu0 0
        %1137 = vmatprep.subr.bf16.mxu0 0
        %1138 = vmatpush1.bf16.msra.mxu0 0
        %1139 = vmatprep.subr.bf16.mxu0 0
        %1140 = vmatpush1.bf16.msra.mxu0 0
        %1141 = vmatprep.subr.bf16.mxu0 0
        %1142 = vmatpush1.bf16.msra.mxu0 0
        %1143 = vmatprep.subr.bf16.mxu0 0
        %1144 = vmatpush1.bf16.msra.mxu0 0
        %1145 = vmatprep.subr.bf16.mxu0 0
        %1146 = vmatpush1.bf16.msra.mxu0 0
        %1147 = vmatprep.subr.bf16.mxu0 0
        %1148 = vmatpush1.bf16.msra.mxu0 0
        %1149 = vmatprep.subr.bf16.mxu0 0
        %1150 = vmatpush1.bf16.msra.mxu0 0
        %1151 = vmatprep.subr.bf16.mxu0 0
        %1152 = vmatpush1.bf16.msra.mxu0 0
        %1153 = vmatprep.subr.bf16.mxu0 0
        %1154 = vmatpush1.bf16.msra.mxu0 0
        %1155 = vmatprep.subr.bf16.mxu0 0
        %1156 = vmatpush1.bf16.msra.mxu0 0
        %1157 = vmatprep.subr.bf16.mxu0 0
        %1158 = vmatpush1.bf16.msra.mxu0 0
        %1159 = vmatprep.mubr.bf16.mxu0 0
        %1160 = vmatmul.mubr.bf16.gmra.mrb[0].mxu0 %v1032
        %v1161 = vpop.f32.mrb[0].mxu0
        %v1162 = vadd.f32 %v129, %v1161
        %v1163 = vpop.f32.mrb[0].mxu0
        %v1164 = vpop.f32.mrb[0].mxu0
        %v1165 = vadd.f32 %v129, %v1164
        %v1166 = vpop.f32.mrb[0].mxu0
        %1167 = vmatprep.mubr.bf16.mxu0 0
        %1168 = vmatmul.mubr.bf16.gmra.mrb[0].mxu0 %v1035
        %v1169 = vpop.f32.mrb[0].mxu0
        %v1170 = vadd.f32 %v129, %v1169
        %v1171 = vpop.f32.mrb[0].mxu0
        %v1172 = vpop.f32.mrb[0].mxu0
        %v1173 = vadd.f32 %v129, %v1172
        %v1174 = vpop.f32.mrb[0].mxu0
        %1175 = vmatprep.mubr.bf16.mxu0 0
        %1176 = vmatmul.mubr.bf16.gmra.mrb[0].mxu0 %v1038
        %v1177 = vpop.f32.mrb[0].mxu0
        %v1178 = vadd.f32 %v129, %v1177
        %v1179 = vpop.f32.mrb[0].mxu0
        %v1180 = vpop.f32.mrb[0].mxu0
        %v1181 = vadd.f32 %v129, %v1180
        %v1182 = vpop.f32.mrb[0].mxu0
        %1183 = vmatprep.mubr.bf16.mxu0 0
        %1184 = vmatmul.mubr.bf16.gmra.mrb[0].mxu0 %v1041
        %v1185 = vpop.f32.mrb[0].mxu0
        %v1186 = vadd.f32 %v129, %v1185
        %v1187 = vpop.f32.mrb[0].mxu0
        %v1188 = vpop.f32.mrb[0].mxu0
        %v1189 = vadd.f32 %v129, %v1188
        %v1190 = vpop.f32.mrb[0].mxu0
        %1191 = vmatprep.mubr.bf16.mxu0 0
        %1192 = vmatmul.mubr.bf16.gmra.mrb[0].mxu0 %v1044
        %v1193 = vpop.f32.mrb[0].mxu0
        %v1194 = vadd.f32 %v129, %v1193
        %v1195 = vpop.f32.mrb[0].mxu0
        %v1196 = vpop.f32.mrb[0].mxu0
        %v1197 = vadd.f32 %v129, %v1196
        %v1198 = vpop.f32.mrb[0].mxu0
        %1199 = vmatprep.mubr.bf16.mxu0 0
        %1200 = vmatmul.mubr.bf16.gmra.mrb[0].mxu0 %v1047
        %v1201 = vpop.f32.mrb[0].mxu0
        %v1202 = vadd.f32 %v129, %v1201
        %v1203 = vpop.f32.mrb[0].mxu0
        %v1204 = vpop.f32.mrb[0].mxu0
        %v1205 = vadd.f32 %v129, %v1204
        %v1206 = vpop.f32.mrb[0].mxu0
        %1207 = vmatprep.mubr.bf16.mxu0 0
        %1208 = vmatmul.mubr.bf16.gmra.mrb[0].mxu0 %v1050
        %v1209 = vpop.f32.mrb[0].mxu0
        %v1210 = vadd.f32 %v129, %v1209
        %v1211 = vpop.f32.mrb[0].mxu0
        %v1212 = vpop.f32.mrb[0].mxu0
        %v1213 = vadd.f32 %v129, %v1212
        %v1214 = vpop.f32.mrb[0].mxu0
        %1215 = vmatprep.mubr.bf16.mxu0 0
        %1216 = vmatmul.mubr.bf16.gmra.mrb[0].mxu0 %v1053
        %v1217 = vpop.f32.mrb[0].mxu0
        %v1218 = vadd.f32 %v129, %v1217
        %v1219 = vpop.f32.mrb[0].mxu0
        %v1220 = vpop.f32.mrb[0].mxu0
        %v1221 = vadd.f32 %v129, %v1220
        %v1222 = vpop.f32.mrb[0].mxu0
        %1223 = vmatprep.mubr.bf16.mxu0 0
        %1224 = vmatmul.mubr.bf16.gmra.mrb[0].mxu0 %v1056
        %v1225 = vpop.f32.mrb[0].mxu0
        %v1226 = vadd.f32 %v129, %v1225
        %v1227 = vpop.f32.mrb[0].mxu0
        %v1228 = vpop.f32.mrb[0].mxu0
        %v1229 = vadd.f32 %v129, %v1228
        %v1230 = vpop.f32.mrb[0].mxu0
        %1231 = vmatprep.mubr.bf16.mxu0 0
        %1232 = vmatmul.mubr.bf16.gmra.mrb[0].mxu0 %v1059
        %v1233 = vpop.f32.mrb[0].mxu0
        %v1234 = vadd.f32 %v129, %v1233
        %v1235 = vpop.f32.mrb[0].mxu0
        %v1236 = vpop.f32.mrb[0].mxu0
        %v1237 = vadd.f32 %v129, %v1236
        %v1238 = vpop.f32.mrb[0].mxu0
        %1239 = vmatprep.mubr.bf16.mxu0 0
        %1240 = vmatmul.mubr.bf16.gmra.mrb[0].mxu0 %v1062
        %v1241 = vpop.f32.mrb[0].mxu0
        %v1242 = vadd.f32 %v129, %v1241
        %v1243 = vpop.f32.mrb[0].mxu0
        %v1244 = vpop.f32.mrb[0].mxu0
        %v1245 = vadd.f32 %v129, %v1244
        %v1246 = vpop.f32.mrb[0].mxu0
        %1247 = vmatprep.mubr.bf16.mxu0 0
        %1248 = vmatmul.mubr.bf16.gmra.mrb[0].mxu0 %v1065
        %v1249 = vpop.f32.mrb[0].mxu0
        %v1250 = vadd.f32 %v129, %v1249
        %v1251 = vpop.f32.mrb[0].mxu0
        %v1252 = vpop.f32.mrb[0].mxu0
        %v1253 = vadd.f32 %v129, %v1252
        %v1254 = vpop.f32.mrb[0].mxu0
        %1255 = vmatprep.mubr.bf16.mxu0 0
        %1256 = vmatmul.mubr.bf16.gmra.mrb[0].mxu0 %v1068
        %v1257 = vpop.f32.mrb[0].mxu0
        %v1258 = vadd.f32 %v129, %v1257
        %v1259 = vpop.f32.mrb[0].mxu0
        %v1260 = vpop.f32.mrb[0].mxu0
        %v1261 = vadd.f32 %v129, %v1260
        %v1262 = vpop.f32.mrb[0].mxu0
        %1263 = vmatprep.mubr.bf16.mxu0 0
        %1264 = vmatmul.mubr.bf16.gmra.mrb[0].mxu0 %v1071
        %v1265 = vpop.f32.mrb[0].mxu0
        %v1266 = vadd.f32 %v129, %v1265
        %v1267 = vpop.f32.mrb[0].mxu0
        %v1268 = vpop.f32.mrb[0].mxu0
        %v1269 = vadd.f32 %v129, %v1268
        %v1270 = vpop.f32.mrb[0].mxu0
        %1271 = vmatprep.mubr.bf16.mxu0 0
        %1272 = vmatmul.mubr.bf16.gmra.mrb[0].mxu0 %v1074
        %v1273 = vpop.f32.mrb[0].mxu0
        %v1274 = vadd.f32 %v129, %v1273
        %v1275 = vpop.f32.mrb[0].mxu0
        %v1276 = vpop.f32.mrb[0].mxu0
        %v1277 = vadd.f32 %v129, %v1276
        %v1278 = vpop.f32.mrb[0].mxu0
        %1279 = vmatprep.mubr.bf16.mxu0 0
        %1280 = vmatmul.mubr.bf16.gmra.mrb[0].mxu0 %v1077
        %v1281 = vpop.f32.mrb[0].mxu0
        %v1282 = vadd.f32 %v129, %v1281
        %v1283 = vpop.f32.mrb[0].mxu0
        %v1284 = vpop.f32.mrb[0].mxu0
        %v1285 = vadd.f32 %v129, %v1284
        %v1286 = vpop.f32.mrb[0].mxu0
        %1287 = vmatprep.mubr.bf16.mxu0 0
        %1288 = vmatmul.mubr.bf16.gmra.mrb[0].mxu0 %v1080
        %v1289 = vpop.f32.mrb[0].mxu0
        %v1290 = vadd.f32 %v129, %v1289
        %v1291 = vpop.f32.mrb[0].mxu0
        %v1292 = vpop.f32.mrb[0].mxu0
        %v1293 = vadd.f32 %v129, %v1292
        %v1294 = vpop.f32.mrb[0].mxu0
        %1295 = vmatprep.mubr.bf16.mxu0 0
        %1296 = vmatmul.mubr.bf16.gmra.mrb[0].mxu0 %v1083
        %v1297 = vpop.f32.mrb[0].mxu0
        %v1298 = vadd.f32 %v129, %v1297
        %v1299 = vpop.f32.mrb[0].mxu0
        %v1300 = vpop.f32.mrb[0].mxu0
        %v1301 = vadd.f32 %v129, %v1300
        %v1302 = vpop.f32.mrb[0].mxu0
        %1303 = vmatprep.mubr.bf16.mxu0 0
        %1304 = vmatmul.mubr.bf16.gmra.mrb[0].mxu0 %v1086
        %v1305 = vpop.f32.mrb[0].mxu0
        %v1306 = vadd.f32 %v129, %v1305
        %v1307 = vpop.f32.mrb[0].mxu0
        %v1308 = vpop.f32.mrb[0].mxu0
        %v1309 = vadd.f32 %v129, %v1308
        %v1310 = vpop.f32.mrb[0].mxu0
        %1311 = vmatprep.mubr.bf16.mxu0 0
        %1312 = vmatmul.mubr.bf16.gmra.mrb[0].mxu0 %v1089
        %v1313 = vpop.f32.mrb[0].mxu0
        %v1314 = vadd.f32 %v129, %v1313
        %v1315 = vpop.f32.mrb[0].mxu0
        %v1316 = vpop.f32.mrb[0].mxu0
        %v1317 = vadd.f32 %v129, %v1316
        %v1318 = vpop.f32.mrb[0].mxu0
        %1319 = vmatprep.mubr.bf16.mxu0 0
        %1320 = vmatmul.mubr.bf16.gmra.mrb[0].mxu0 %v1092
        %v1321 = vpop.f32.mrb[0].mxu0
        %v1322 = vadd.f32 %v129, %v1321
        %v1323 = vpop.f32.mrb[0].mxu0
        %v1324 = vpop.f32.mrb[0].mxu0
        %v1325 = vadd.f32 %v129, %v1324
        %v1326 = vpop.f32.mrb[0].mxu0
        %1327 = vmatprep.mubr.bf16.mxu0 0
        %1328 = vmatmul.mubr.bf16.gmra.mrb[0].mxu0 %v1095
        %v1329 = vpop.f32.mrb[0].mxu0
        %v1330 = vadd.f32 %v129, %v1329
        %v1331 = vpop.f32.mrb[0].mxu0
        %v1332 = vpop.f32.mrb[0].mxu0
        %v1333 = vadd.f32 %v129, %v1332
        %v1334 = vpop.f32.mrb[0].mxu0
        %1335 = vmatprep.mubr.bf16.mxu0 0
        %1336 = vmatmul.mubr.bf16.gmra.mrb[0].mxu0 %v1098
        %v1337 = vpop.f32.mrb[0].mxu0
        %v1338 = vadd.f32 %v129, %v1337
        %v1339 = vpop.f32.mrb[0].mxu0
        %v1340 = vpop.f32.mrb[0].mxu0
        %v1341 = vadd.f32 %v129, %v1340
        %v1342 = vpop.f32.mrb[0].mxu0
        %1343 = vmatprep.mubr.bf16.mxu0 0
        %1344 = vmatmul.mubr.bf16.gmra.mrb[0].mxu0 %v1101
        %v1345 = vpop.f32.mrb[0].mxu0
        %v1346 = vadd.f32 %v129, %v1345
        %v1347 = vpop.f32.mrb[0].mxu0
        %v1348 = vpop.f32.mrb[0].mxu0
        %v1349 = vadd.f32 %v129, %v1348
        %v1350 = vpop.f32.mrb[0].mxu0
        %1351 = vmatprep.mubr.bf16.mxu0 0
        %1352 = vmatmul.mubr.bf16.gmra.mrb[0].mxu0 %v1104
        %v1353 = vpop.f32.mrb[0].mxu0
        %v1354 = vadd.f32 %v129, %v1353
        %v1355 = vpop.f32.mrb[0].mxu0
        %v1356 = vpop.f32.mrb[0].mxu0
        %v1357 = vadd.f32 %v129, %v1356
        %v1358 = vpop.f32.mrb[0].mxu0
        %1359 = vmatprep.mubr.bf16.mxu0 0
        %1360 = vmatmul.mubr.bf16.gmra.mrb[0].mxu0 %v1107
        %v1361 = vpop.f32.mrb[0].mxu0
        %v1362 = vadd.f32 %v129, %v1361
        %v1363 = vpop.f32.mrb[0].mxu0
        %v1364 = vpop.f32.mrb[0].mxu0
        %v1365 = vadd.f32 %v129, %v1364
        %v1366 = vpop.f32.mrb[0].mxu0
        %1367 = vmatprep.mubr.bf16.mxu0 0
        %1368 = vmatmul.mubr.bf16.gmra.mrb[0].mxu0 %v1110
        %v1369 = vpop.f32.mrb[0].mxu0
        %v1370 = vadd.f32 %v129, %v1369
        %v1371 = vpop.f32.mrb[0].mxu0
        %v1372 = vpop.f32.mrb[0].mxu0
        %v1373 = vadd.f32 %v129, %v1372
        %v1374 = vpop.f32.mrb[0].mxu0
        %1375 = vmatprep.mubr.bf16.mxu0 0
        %1376 = vmatmul.mubr.bf16.gmra.mrb[0].mxu0 %v1113
        %v1377 = vpop.f32.mrb[0].mxu0
        %v1378 = vadd.f32 %v129, %v1377
        %v1379 = vpop.f32.mrb[0].mxu0
        %v1380 = vpop.f32.mrb[0].mxu0
        %v1381 = vadd.f32 %v129, %v1380
        %v1382 = vpop.f32.mrb[0].mxu0
        %1383 = vmatprep.mubr.bf16.mxu0 0
        %1384 = vmatmul.mubr.bf16.gmra.mrb[0].mxu0 %v1116
        %v1385 = vpop.f32.mrb[0].mxu0
        %v1386 = vadd.f32 %v129, %v1385
        %v1387 = vpop.f32.mrb[0].mxu0
        %v1388 = vpop.f32.mrb[0].mxu0
        %v1389 = vadd.f32 %v129, %v1388
        %v1390 = vpop.f32.mrb[0].mxu0
        %1391 = vmatprep.mubr.bf16.mxu0 0
        %1392 = vmatmul.mubr.bf16.gmra.mrb[0].mxu0 %v1119
        %v1393 = vpop.f32.mrb[0].mxu0
        %v1394 = vadd.f32 %v129, %v1393
        %v1395 = vpop.f32.mrb[0].mxu0
        %v1396 = vpop.f32.mrb[0].mxu0
        %v1397 = vadd.f32 %v129, %v1396
        %v1398 = vpop.f32.mrb[0].mxu0
        %1399 = vmatprep.mubr.bf16.mxu0 0
        %1400 = vmatmul.mubr.bf16.gmra.mrb[0].mxu0 %v1122
        %v1401 = vpop.f32.mrb[0].mxu0
        %v1402 = vadd.f32 %v129, %v1401
        %v1403 = vpop.f32.mrb[0].mxu0
        %v1404 = vpop.f32.mrb[0].mxu0
        %v1405 = vadd.f32 %v129, %v1404
        %v1406 = vpop.f32.mrb[0].mxu0
        %1407 = vmatprep.mubr.bf16.mxu0 0
        %1408 = vmatmul.mubr.bf16.gmra.mrb[0].mxu0 %v1125
        %v1409 = vpop.f32.mrb[0].mxu0
        %v1410 = vadd.f32 %v129, %v1409
        %v1411 = vpop.f32.mrb[0].mxu0
        %v1412 = vpop.f32.mrb[0].mxu0
        %v1413 = vadd.f32 %v129, %v1412
        %v1414 = vpop.f32.mrb[0].mxu0
        %1415 = vdwg.mxu0
        %s1416 = scalar_lea.vmem [#allocation2], %s802
        %1417 = vst [vmem:[%s1416] sm:$0xff] %v1162
        %1418 = vst [vmem:[%s1416 + $0x8] sm:$0xff] %v1165
        %1419 = vst [vmem:[%s1416 + $0x10] sm:$0xff] %v1170
        %1420 = vst [vmem:[%s1416 + $0x18] sm:$0xff] %v1173
        %1421 = vst [vmem:[%s1416 + $0x20] sm:$0xff] %v1178
        %1422 = vst [vmem:[%s1416 + $0x28] sm:$0xff] %v1181
        %1423 = vst [vmem:[%s1416 + $0x30] sm:$0xff] %v1186
        %1424 = vst [vmem:[%s1416 + $0x38] sm:$0xff] %v1189
        %1425 = vst [vmem:[%s1416 + $0x40] sm:$0xff] %v1194
        %1426 = vst [vmem:[%s1416 + $0x48] sm:$0xff] %v1197
        %1427 = vst [vmem:[%s1416 + $0x50] sm:$0xff] %v1202
        %1428 = vst [vmem:[%s1416 + $0x58] sm:$0xff] %v1205
        %1429 = vst [vmem:[%s1416 + $0x60] sm:$0xff] %v1210
        %1430 = vst [vmem:[%s1416 + $0x68] sm:$0xff] %v1213
        %1431 = vst [vmem:[%s1416 + $0x70] sm:$0xff] %v1218
        %1432 = vst [vmem:[%s1416 + $0x78] sm:$0xff] %v1221
        %1433 = vst [vmem:[%s1416 + $0x80] sm:$0xff] %v1226
        %1434 = vst [vmem:[%s1416 + $0x88] sm:$0xff] %v1229
        %1435 = vst [vmem:[%s1416 + $0x90] sm:$0xff] %v1234
        %1436 = vst [vmem:[%s1416 + $0x98] sm:$0xff] %v1237
        %1437 = vst [vmem:[%s1416 + $0xa0] sm:$0xff] %v1242
        %1438 = vst [vmem:[%s1416 + $0xa8] sm:$0xff] %v1245
        %1439 = vst [vmem:[%s1416 + $0xb0] sm:$0xff] %v1250
        %1440 = vst [vmem:[%s1416 + $0xb8] sm:$0xff] %v1253
        %1441 = vst [vmem:[%s1416 + $0xc0] sm:$0xff] %v1258
        %1442 = vst [vmem:[%s1416 + $0xc8] sm:$0xff] %v1261
        %1443 = vst [vmem:[%s1416 + $0xd0] sm:$0xff] %v1266
        %1444 = vst [vmem:[%s1416 + $0xd8] sm:$0xff] %v1269
        %1445 = vst [vmem:[%s1416 + $0xe0] sm:$0xff] %v1274
        %1446 = vst [vmem:[%s1416 + $0xe8] sm:$0xff] %v1277
        %1447 = vst [vmem:[%s1416 + $0xf0] sm:$0xff] %v1282
        %1448 = vst [vmem:[%s1416 + $0xf8] sm:$0xff] %v1285
        %1449 = vst [vmem:[%s1416 + $0x100] sm:$0xff] %v1290
        %1450 = vst [vmem:[%s1416 + $0x108] sm:$0xff] %v1293
        %1451 = vst [vmem:[%s1416 + $0x110] sm:$0xff] %v1298
        %1452 = vst [vmem:[%s1416 + $0x118] sm:$0xff] %v1301
        %1453 = vst [vmem:[%s1416 + $0x120] sm:$0xff] %v1306
        %1454 = vst [vmem:[%s1416 + $0x128] sm:$0xff] %v1309
        %1455 = vst [vmem:[%s1416 + $0x130] sm:$0xff] %v1314
        %1456 = vst [vmem:[%s1416 + $0x138] sm:$0xff] %v1317
        %1457 = vst [vmem:[%s1416 + $0x140] sm:$0xff] %v1322
        %1458 = vst [vmem:[%s1416 + $0x148] sm:$0xff] %v1325
        %1459 = vst [vmem:[%s1416 + $0x150] sm:$0xff] %v1330
        %1460 = vst [vmem:[%s1416 + $0x158] sm:$0xff] %v1333
        %1461 = vst [vmem:[%s1416 + $0x160] sm:$0xff] %v1338
        %1462 = vst [vmem:[%s1416 + $0x168] sm:$0xff] %v1341
        %1463 = vst [vmem:[%s1416 + $0x170] sm:$0xff] %v1346
        %1464 = vst [vmem:[%s1416 + $0x178] sm:$0xff] %v1349
        %1465 = vst [vmem:[%s1416 + $0x180] sm:$0xff] %v1354
        %1466 = vst [vmem:[%s1416 + $0x188] sm:$0xff] %v1357
        %1467 = vst [vmem:[%s1416 + $0x190] sm:$0xff] %v1362
        %1468 = vst [vmem:[%s1416 + $0x198] sm:$0xff] %v1365
        %1469 = vst [vmem:[%s1416 + $0x1a0] sm:$0xff] %v1370
        %1470 = vst [vmem:[%s1416 + $0x1a8] sm:$0xff] %v1373
        %1471 = vst [vmem:[%s1416 + $0x1b0] sm:$0xff] %v1378
        %1472 = vst [vmem:[%s1416 + $0x1b8] sm:$0xff] %v1381
        %1473 = vst [vmem:[%s1416 + $0x1c0] sm:$0xff] %v1386
        %1474 = vst [vmem:[%s1416 + $0x1c8] sm:$0xff] %v1389
        %1475 = vst [vmem:[%s1416 + $0x1d0] sm:$0xff] %v1394
        %1476 = vst [vmem:[%s1416 + $0x1d8] sm:$0xff] %v1397
        %1477 = vst [vmem:[%s1416 + $0x1e0] sm:$0xff] %v1402
        %1478 = vst [vmem:[%s1416 + $0x1e8] sm:$0xff] %v1405
        %1479 = vst [vmem:[%s1416 + $0x1f0] sm:$0xff] %v1410
        %1480 = vst [vmem:[%s1416 + $0x1f8] sm:$0xff] %v1413
      $region52: #{tpu_custom_call.1} parent=45 // pred_fallthru
        _
      %s1481 = smul.u32 %s746, 4
      %s1482 = smul.u32 %s794, 512
      %s1483 = scalar_lea.vmem [#allocation2], %s1482
      %v1484 = vld [vmem:[%s1483] sm:$0xff]
      %v1485 = vld [vmem:[%s1483 + $0x8] sm:$0xff]
      %v1486 = vld [vmem:[%s1483 + $0x10] sm:$0xff]
      %v1487 = vld [vmem:[%s1483 + $0x18] sm:$0xff]
      %v1488 = vld [vmem:[%s1483 + $0x20] sm:$0xff]
      %v1489 = vld [vmem:[%s1483 + $0x28] sm:$0xff]
      %v1490 = vld [vmem:[%s1483 + $0x30] sm:$0xff]
      %v1491 = vld [vmem:[%s1483 + $0x38] sm:$0xff]
      %v1492 = vld [vmem:[%s1483 + $0x40] sm:$0xff]
      %v1493 = vld [vmem:[%s1483 + $0x48] sm:$0xff]
      %v1494 = vld [vmem:[%s1483 + $0x50] sm:$0xff]
      %v1495 = vld [vmem:[%s1483 + $0x58] sm:$0xff]
      %v1496 = vld [vmem:[%s1483 + $0x60] sm:$0xff]
      %v1497 = vld [vmem:[%s1483 + $0x68] sm:$0xff]
      %v1498 = vld [vmem:[%s1483 + $0x70] sm:$0xff]
      %v1499 = vld [vmem:[%s1483 + $0x78] sm:$0xff]
      %v1500 = vpack.c.bf16 %v752, %v751
      %v1501 = vpack.c.bf16 %v754, %v753
      %v1502 = vpack.c.bf16 %v756, %v755
      %v1503 = vpack.c.bf16 %v758, %v757
      %v1504 = vpack.c.bf16 %v760, %v759
      %v1505 = vpack.c.bf16 %v762, %v761
      %v1506 = vpack.c.bf16 %v764, %v763
      %v1507 = vpack.c.bf16 %v766, %v765
      %1516 = vrot.lane.b32.xlu0 %v1500, 32
      %v1517 = vpop.permute.xlu0 %1516
      %1518 = vrot.lane.b32.xlu0 %v1501, 32
      %v1519 = vpop.permute.xlu0 %1518
      %1520 = vrot.lane.b32.xlu0 %v1502, 32
      %v1521 = vpop.permute.xlu0 %1520
      %1522 = vrot.lane.b32.xlu0 %v1503, 32
      %v1523 = vpop.permute.xlu0 %1522
      %1524 = vrot.lane.b32.xlu0 %v1504, 32
      %v1525 = vpop.permute.xlu0 %1524
      %1526 = vrot.lane.b32.xlu0 %v1505, 32
      %v1527 = vpop.permute.xlu0 %1526
      %1528 = vrot.lane.b32.xlu0 %v1506, 32
      %v1529 = vpop.permute.xlu0 %1528
      %1530 = vrot.lane.b32.xlu0 %v1507, 32
      %v1531 = vpop.permute.xlu0 %1530
      %v1536 = vunpack.c.l.b16 %v56
      %v1537 = vunpack.c.l.b16 %v57
      %v1538 = vunpack.c.l.b16 %v58
      %v1539 = vunpack.c.l.b16 %v59
      %v1540 = vpack.c.b16 %v1537, %v1536
      %v1541 = vpack.c.b16 %v1539, %v1538
      %vm1544 = vcmask 261120
      %v1546 = vsel %vm1544, %v1517, 0
      %v1549 = vsel %vm1544, %v1519, 0
      %v1552 = vsel %vm1544, %v1521, 0
      %v1555 = vsel %vm1544, %v1523, 0
      %v1558 = vsel %vm1544, %v1525, 0
      %v1561 = vsel %vm1544, %v1527, 0
      %v1564 = vsel %vm1544, %v1529, 0
      %v1567 = vsel %vm1544, %v1531, 0
      %1569 = vmatprep.subr.bf16.mxu0 0
      %1570 = vmatpush1.bf16.msra.mxu0 %v1540
      %1571 = vmatprep.subr.bf16.mxu0 0
      %1572 = vmatpush1.bf16.msra.mxu0 %v1541
      %1573 = vmatprep.subr.bf16.mxu0 0
      %1574 = vmatpush1.bf16.msra.mxu0 0
      %1575 = vmatprep.subr.bf16.mxu0 0
      %1576 = vmatpush1.bf16.msra.mxu0 0
      %1577 = vmatprep.subr.bf16.mxu0 0
      %1578 = vmatpush1.bf16.msra.mxu0 0
      %1579 = vmatprep.subr.bf16.mxu0 0
      %1580 = vmatpush1.bf16.msra.mxu0 0
      %1581 = vmatprep.subr.bf16.mxu0 0
      %1582 = vmatpush1.bf16.msra.mxu0 0
      %1583 = vmatprep.subr.bf16.mxu0 0
      %1584 = vmatpush1.bf16.msra.mxu0 0
      %1585 = vmatprep.subr.bf16.mxu0 0
      %1586 = vmatpush1.bf16.msra.mxu0 0
      %1587 = vmatprep.subr.bf16.mxu0 0
      %1588 = vmatpush1.bf16.msra.mxu0 0
      %1589 = vmatprep.subr.bf16.mxu0 0
      %1590 = vmatpush1.bf16.msra.mxu0 0
      %1591 = vmatprep.subr.bf16.mxu0 0
      %1592 = vmatpush1.bf16.msra.mxu0 0
      %1593 = vmatprep.subr.bf16.mxu0 0
      %1594 = vmatpush1.bf16.msra.mxu0 0
      %1595 = vmatprep.subr.bf16.mxu0 0
      %1596 = vmatpush1.bf16.msra.mxu0 0
      %1597 = vmatprep.subr.bf16.mxu0 0
      %1598 = vmatpush1.bf16.msra.mxu0 0
      %1599 = vmatprep.subr.bf16.mxu0 0
      %1600 = vmatpush1.bf16.msra.mxu0 0
      %1601 = vmatprep.mubr.bf16.mxu0 0
      %1602 = vmatmul.mubr.bf16.gmra.mrb[0].mxu0 %v1546
      %v1603 = vpop.f32.mrb[0].mxu0
      %v1604 = vadd.f32 0.0, %v1603
      %v1605 = vpop.f32.mrb[0].mxu0
      %v1606 = vpop.f32.mrb[0].mxu0
      %v1607 = vadd.f32 0.0, %v1606
      %v1608 = vpop.f32.mrb[0].mxu0
      %1609 = vmatprep.mubr.bf16.mxu0 0
      %1610 = vmatmul.mubr.bf16.gmra.mrb[0].mxu0 %v1549
      %v1611 = vpop.f32.mrb[0].mxu0
      %v1612 = vadd.f32 0.0, %v1611
      %v1613 = vpop.f32.mrb[0].mxu0
      %v1614 = vpop.f32.mrb[0].mxu0
      %v1615 = vadd.f32 0.0, %v1614
      %v1616 = vpop.f32.mrb[0].mxu0
      %1617 = vmatprep.mubr.bf16.mxu0 0
      %1618 = vmatmul.mubr.bf16.gmra.mrb[0].mxu0 %v1552
      %v1619 = vpop.f32.mrb[0].mxu0
      %v1620 = vadd.f32 0.0, %v1619
      %v1621 = vpop.f32.mrb[0].mxu0
      %v1622 = vpop.f32.mrb[0].mxu0
      %v1623 = vadd.f32 0.0, %v1622
      %v1624 = vpop.f32.mrb[0].mxu0
      %1625 = vmatprep.mubr.bf16.mxu0 0
      %1626 = vmatmul.mubr.bf16.gmra.mrb[0].mxu0 %v1555
      %v1627 = vpop.f32.mrb[0].mxu0
      %v1628 = vadd.f32 0.0, %v1627
      %v1629 = vpop.f32.mrb[0].mxu0
      %v1630 = vpop.f32.mrb[0].mxu0
      %v1631 = vadd.f32 0.0, %v1630
      %v1632 = vpop.f32.mrb[0].mxu0
      %1633 = vmatprep.mubr.bf16.mxu0 0
      %1634 = vmatmul.mubr.bf16.gmra.mrb[0].mxu0 %v1558
      %v1635 = vpop.f32.mrb[0].mxu0
      %v1636 = vadd.f32 0.0, %v1635
      %v1637 = vpop.f32.mrb[0].mxu0
      %v1638 = vpop.f32.mrb[0].mxu0
      %v1639 = vadd.f32 0.0, %v1638
      %v1640 = vpop.f32.mrb[0].mxu0
      %1641 = vmatprep.mubr.bf16.mxu0 0
      %1642 = vmatmul.mubr.bf16.gmra.mrb[0].mxu0 %v1561
      %v1643 = vpop.f32.mrb[0].mxu0
      %v1644 = vadd.f32 0.0, %v1643
      %v1645 = vpop.f32.mrb[0].mxu0
      %v1646 = vpop.f32.mrb[0].mxu0
      %v1647 = vadd.f32 0.0, %v1646
      %v1648 = vpop.f32.mrb[0].mxu0
      %1649 = vmatprep.mubr.bf16.mxu0 0
      %1650 = vmatmul.mubr.bf16.gmra.mrb[0].mxu0 %v1564
      %v1651 = vpop.f32.mrb[0].mxu0
      %v1652 = vadd.f32 0.0, %v1651
      %v1653 = vpop.f32.mrb[0].mxu0
      %v1654 = vpop.f32.mrb[0].mxu0
      %v1655 = vadd.f32 0.0, %v1654
      %v1656 = vpop.f32.mrb[0].mxu0
      %1657 = vmatprep.mubr.bf16.mxu0 0
      %1658 = vmatmul.mubr.bf16.gmra.mrb[0].mxu0 %v1567
      %v1659 = vpop.f32.mrb[0].mxu0
      %v1660 = vadd.f32 0.0, %v1659
      %v1661 = vpop.f32.mrb[0].mxu0
      %v1662 = vpop.f32.mrb[0].mxu0
      %v1663 = vadd.f32 0.0, %v1662
      %v1664 = vpop.f32.mrb[0].mxu0
      %1665 = vdwg.mxu0
      %v1666 = vadd.f32 %v1484, %v1604
      %v1667 = vadd.f32 %v1485, %v1607
      %v1668 = vadd.f32 %v1486, %v1612
      %v1669 = vadd.f32 %v1487, %v1615
      %v1670 = vadd.f32 %v1488, %v1620
      %v1671 = vadd.f32 %v1489, %v1623
      %v1672 = vadd.f32 %v1490, %v1628
      %v1673 = vadd.f32 %v1491, %v1631
      %v1674 = vadd.f32 %v1492, %v1636
      %v1675 = vadd.f32 %v1493, %v1639
      %v1676 = vadd.f32 %v1494, %v1644
      %v1677 = vadd.f32 %v1495, %v1647
      %v1678 = vadd.f32 %v1496, %v1652
      %v1679 = vadd.f32 %v1497, %v1655
      %v1680 = vadd.f32 %v1498, %v1660
      %v1681 = vadd.f32 %v1499, %v1663
      %v1682 = vxor.u32 %v1666, 2147483648
      %v1683 = vxor.u32 %v1667, 2147483648
      %v1684 = vxor.u32 %v1668, 2147483648
      %v1685 = vxor.u32 %v1669, 2147483648
      %v1686 = vxor.u32 %v1670, 2147483648
      %v1687 = vxor.u32 %v1671, 2147483648
      %v1688 = vxor.u32 %v1672, 2147483648
      %v1689 = vxor.u32 %v1673, 2147483648
      %v1690 = vxor.u32 %v1674, 2147483648
      %v1691 = vxor.u32 %v1675, 2147483648
      %v1692 = vxor.u32 %v1676, 2147483648
      %v1693 = vxor.u32 %v1677, 2147483648
      %v1694 = vxor.u32 %v1678, 2147483648
      %v1695 = vxor.u32 %v1679, 2147483648
      %v1696 = vxor.u32 %v1680, 2147483648
      %v1697 = vxor.u32 %v1681, 2147483648
      %v1698 = vmul.f32 %v1682, 1.442695
      %v1699 = vpow.pop %v1698
      %v1700 = vmul.f32 %v1683, 1.442695
      %v1701 = vpow.pop %v1700
      %v1702 = vmul.f32 %v1684, 1.442695
      %v1703 = vpow.pop %v1702
      %v1704 = vmul.f32 %v1685, 1.442695
      %v1705 = vpow.pop %v1704
      %v1706 = vmul.f32 %v1686, 1.442695
      %v1707 = vpow.pop %v1706
      %v1708 = vmul.f32 %v1687, 1.442695
      %v1709 = vpow.pop %v1708
      %v1710 = vmul.f32 %v1688, 1.442695
      %v1711 = vpow.pop %v1710
      %v1712 = vmul.f32 %v1689, 1.442695
      %v1713 = vpow.pop %v1712
      %v1714 = vmul.f32 %v1690, 1.442695
      %v1715 = vpow.pop %v1714
      %v1716 = vmul.f32 %v1691, 1.442695
      %v1717 = vpow.pop %v1716
      %v1718 = vmul.f32 %v1692, 1.442695
      %v1719 = vpow.pop %v1718
      %v1720 = vmul.f32 %v1693, 1.442695
      %v1721 = vpow.pop %v1720
      %v1722 = vmul.f32 %v1694, 1.442695
      %v1723 = vpow.pop %v1722
      %v1724 = vmul.f32 %v1695, 1.442695
      %v1725 = vpow.pop %v1724
      %v1726 = vmul.f32 %v1696, 1.442695
      %v1727 = vpow.pop %v1726
      %v1728 = vmul.f32 %v1697, 1.442695
      %v1729 = vpow.pop %v1728
      %v1730 = vadd.f32 %v1699, 1.0
      %v1731 = vadd.f32 %v1701, 1.0
      %v1732 = vadd.f32 %v1703, 1.0
      %v1733 = vadd.f32 %v1705, 1.0
      %v1734 = vadd.f32 %v1707, 1.0
      %v1735 = vadd.f32 %v1709, 1.0
      %v1736 = vadd.f32 %v1711, 1.0
      %v1737 = vadd.f32 %v1713, 1.0
      %v1738 = vadd.f32 %v1715, 1.0
      %v1739 = vadd.f32 %v1717, 1.0
      %v1740 = vadd.f32 %v1719, 1.0
      %v1741 = vadd.f32 %v1721, 1.0
      %v1742 = vadd.f32 %v1723, 1.0
      %v1743 = vadd.f32 %v1725, 1.0
      %v1744 = vadd.f32 %v1727, 1.0
      %v1745 = vadd.f32 %v1729, 1.0
      %v1746 = vrcp.pop %v1730
      %v1747 = vmul.f32 1.0, %v1746
      %v1748 = vrcp.pop %v1731
      %v1749 = vmul.f32 1.0, %v1748
      %v1750 = vrcp.pop %v1732
      %v1751 = vmul.f32 1.0, %v1750
      %v1752 = vrcp.pop %v1733
      %v1753 = vmul.f32 1.0, %v1752
      %v1754 = vrcp.pop %v1734
      %v1755 = vmul.f32 1.0, %v1754
      %v1756 = vrcp.pop %v1735
      %v1757 = vmul.f32 1.0, %v1756
      %v1758 = vrcp.pop %v1736
      %v1759 = vmul.f32 1.0, %v1758
      %v1760 = vrcp.pop %v1737
      %v1761 = vmul.f32 1.0, %v1760
      %v1762 = vrcp.pop %v1738
      %v1763 = vmul.f32 1.0, %v1762
      %v1764 = vrcp.pop %v1739
      %v1765 = vmul.f32 1.0, %v1764
      %v1766 = vrcp.pop %v1740
      %v1767 = vmul.f32 1.0, %v1766
      %v1768 = vrcp.pop %v1741
      %v1769 = vmul.f32 1.0, %v1768
      %v1770 = vrcp.pop %v1742
      %v1771 = vmul.f32 1.0, %v1770
      %v1772 = vrcp.pop %v1743
      %v1773 = vmul.f32 1.0, %v1772
      %v1774 = vrcp.pop %v1744
      %v1775 = vmul.f32 1.0, %v1774
      %v1776 = vrcp.pop %v1745
      %v1777 = vmul.f32 1.0, %v1776
      %v1778 = vtanh.pop %v1666
      %v1779 = vtanh.pop %v1667
      %v1780 = vtanh.pop %v1668
      %v1781 = vtanh.pop %v1669
      %v1782 = vtanh.pop %v1670
      %v1783 = vtanh.pop %v1671
      %v1784 = vtanh.pop %v1672
      %v1785 = vtanh.pop %v1673
      %v1786 = vtanh.pop %v1674
      %v1787 = vtanh.pop %v1675
      %v1788 = vtanh.pop %v1676
      %v1789 = vtanh.pop %v1677
      %v1790 = vtanh.pop %v1678
      %v1791 = vtanh.pop %v1679
      %v1792 = vtanh.pop %v1680
      %v1793 = vtanh.pop %v1681
      %v1794 = vmul.f32 %v1747, %v767
      %v1795 = vmul.f32 %v1749, %v768
      %v1796 = vmul.f32 %v1751, %v769
      %v1797 = vmul.f32 %v1753, %v770
      %v1798 = vmul.f32 %v1755, %v771
      %v1799 = vmul.f32 %v1757, %v772
      %v1800 = vmul.f32 %v1759, %v773
      %v1801 = vmul.f32 %v1761, %v774
      %v1802 = vmul.f32 %v1763, %v775
      %v1803 = vmul.f32 %v1765, %v776
      %v1804 = vmul.f32 %v1767, %v777
      %v1805 = vmul.f32 %v1769, %v778
      %v1806 = vmul.f32 %v1771, %v779
      %v1807 = vmul.f32 %v1773, %v780
      %v1808 = vmul.f32 %v1775, %v781
      %v1809 = vmul.f32 %v1777, %v782
      %1826 = vrot.lane.b32.xlu0 %v1778, 64
      %v1827 = vpop.permute.xlu0 %1826
      %1828 = vrot.lane.b32.xlu0 %v1779, 64
      %v1829 = vpop.permute.xlu0 %1828
      %1830 = vrot.lane.b32.xlu0 %v1780, 64
      %v1831 = vpop.permute.xlu0 %1830
      %1832 = vrot.lane.b32.xlu0 %v1781, 64
      %v1833 = vpop.permute.xlu0 %1832
      %1834 = vrot.lane.b32.xlu0 %v1782, 64
      %v1835 = vpop.permute.xlu0 %1834
      %1836 = vrot.lane.b32.xlu0 %v1783, 64
      %v1837 = vpop.permute.xlu0 %1836
      %1838 = vrot.lane.b32.xlu0 %v1784, 64
      %v1839 = vpop.permute.xlu0 %1838
      %1840 = vrot.lane.b32.xlu0 %v1785, 64
      %v1841 = vpop.permute.xlu0 %1840
      %1842 = vrot.lane.b32.xlu0 %v1786, 64
      %v1843 = vpop.permute.xlu0 %1842
      %1844 = vrot.lane.b32.xlu0 %v1787, 64
      %v1845 = vpop.permute.xlu0 %1844
      %1846 = vrot.lane.b32.xlu0 %v1788, 64
      %v1847 = vpop.permute.xlu0 %1846
      %1848 = vrot.lane.b32.xlu0 %v1789, 64
      %v1849 = vpop.permute.xlu0 %1848
      %1850 = vrot.lane.b32.xlu0 %v1790, 64
      %v1851 = vpop.permute.xlu0 %1850
      %1852 = vrot.lane.b32.xlu0 %v1791, 64
      %v1853 = vpop.permute.xlu0 %1852
      %1854 = vrot.lane.b32.xlu0 %v1792, 64
      %v1855 = vpop.permute.xlu0 %1854
      %1856 = vrot.lane.b32.xlu0 %v1793, 64
      %v1857 = vpop.permute.xlu0 %1856
      %v1874 = vmul.f32 %v1747, %v1827
      %v1875 = vmul.f32 %v1749, %v1829
      %v1876 = vmul.f32 %v1751, %v1831
      %v1877 = vmul.f32 %v1753, %v1833
      %v1878 = vmul.f32 %v1755, %v1835
      %v1879 = vmul.f32 %v1757, %v1837
      %v1880 = vmul.f32 %v1759, %v1839
      %v1881 = vmul.f32 %v1761, %v1841
      %v1882 = vmul.f32 %v1763, %v1843
      %v1883 = vmul.f32 %v1765, %v1845
      %v1884 = vmul.f32 %v1767, %v1847
      %v1885 = vmul.f32 %v1769, %v1849
      %v1886 = vmul.f32 %v1771, %v1851
      %v1887 = vmul.f32 %v1773, %v1853
      %v1888 = vmul.f32 %v1775, %v1855
      %v1889 = vmul.f32 %v1777, %v1857
      %1906 = vrot.lane.b32.xlu0 %v1874, 32
      %v1907 = vpop.permute.xlu0 %1906
      %1908 = vrot.lane.b32.xlu0 %v1875, 32
      %v1909 = vpop.permute.xlu0 %1908
      %1910 = vrot.lane.b32.xlu0 %v1876, 32
      %v1911 = vpop.permute.xlu0 %1910
      %1912 = vrot.lane.b32.xlu0 %v1877, 32
      %v1913 = vpop.permute.xlu0 %1912
      %1914 = vrot.lane.b32.xlu0 %v1878, 32
      %v1915 = vpop.permute.xlu0 %1914
      %1916 = vrot.lane.b32.xlu0 %v1879, 32
      %v1917 = vpop.permute.xlu0 %1916
      %1918 = vrot.lane.b32.xlu0 %v1880, 32
      %v1919 = vpop.permute.xlu0 %1918
      %1920 = vrot.lane.b32.xlu0 %v1881, 32
      %v1921 = vpop.permute.xlu0 %1920
      %1922 = vrot.lane.b32.xlu0 %v1882, 32
      %v1923 = vpop.permute.xlu0 %1922
      %1924 = vrot.lane.b32.xlu0 %v1883, 32
      %v1925 = vpop.permute.xlu0 %1924
      %1926 = vrot.lane.b32.xlu0 %v1884, 32
      %v1927 = vpop.permute.xlu0 %1926
      %1928 = vrot.lane.b32.xlu0 %v1885, 32
      %v1929 = vpop.permute.xlu0 %1928
      %1930 = vrot.lane.b32.xlu0 %v1886, 32
      %v1931 = vpop.permute.xlu0 %1930
      %1932 = vrot.lane.b32.xlu0 %v1887, 32
      %v1933 = vpop.permute.xlu0 %1932
      %1934 = vrot.lane.b32.xlu0 %v1888, 32
      %v1935 = vpop.permute.xlu0 %1934
      %1936 = vrot.lane.b32.xlu0 %v1889, 32
      %v1937 = vpop.permute.xlu0 %1936
      %v1954 = vadd.f32 %v1794, %v1907
      %v1955 = vadd.f32 %v1795, %v1909
      %v1956 = vadd.f32 %v1796, %v1911
      %v1957 = vadd.f32 %v1797, %v1913
      %v1958 = vadd.f32 %v1798, %v1915
      %v1959 = vadd.f32 %v1799, %v1917
      %v1960 = vadd.f32 %v1800, %v1919
      %v1961 = vadd.f32 %v1801, %v1921
      %v1962 = vadd.f32 %v1802, %v1923
      %v1963 = vadd.f32 %v1803, %v1925
      %v1964 = vadd.f32 %v1804, %v1927
      %v1965 = vadd.f32 %v1805, %v1929
      %v1966 = vadd.f32 %v1806, %v1931
      %v1967 = vadd.f32 %v1807, %v1933
      %v1968 = vadd.f32 %v1808, %v1935
      %v1969 = vadd.f32 %v1809, %v1937
      %v1970 = vtanh.pop %v1954
      %v1971 = vtanh.pop %v1955
      %v1972 = vtanh.pop %v1956
      %v1973 = vtanh.pop %v1957
      %v1974 = vtanh.pop %v1958
      %v1975 = vtanh.pop %v1959
      %v1976 = vtanh.pop %v1960
      %v1977 = vtanh.pop %v1961
      %v1978 = vtanh.pop %v1962
      %v1979 = vtanh.pop %v1963
      %v1980 = vtanh.pop %v1964
      %v1981 = vtanh.pop %v1965
      %v1982 = vtanh.pop %v1966
      %v1983 = vtanh.pop %v1967
      %v1984 = vtanh.pop %v1968
      %v1985 = vtanh.pop %v1969
      %2002 = vrot.lane.b32.xlu0 %v1970, 64
      %v2003 = vpop.permute.xlu0 %2002
      %2004 = vrot.lane.b32.xlu0 %v1971, 64
      %v2005 = vpop.permute.xlu0 %2004
      %2006 = vrot.lane.b32.xlu0 %v1972, 64
      %v2007 = vpop.permute.xlu0 %2006
      %2008 = vrot.lane.b32.xlu0 %v1973, 64
      %v2009 = vpop.permute.xlu0 %2008
      %2010 = vrot.lane.b32.xlu0 %v1974, 64
      %v2011 = vpop.permute.xlu0 %2010
      %2012 = vrot.lane.b32.xlu0 %v1975, 64
      %v2013 = vpop.permute.xlu0 %2012
      %2014 = vrot.lane.b32.xlu0 %v1976, 64
      %v2015 = vpop.permute.xlu0 %2014
      %2016 = vrot.lane.b32.xlu0 %v1977, 64
      %v2017 = vpop.permute.xlu0 %2016
      %2018 = vrot.lane.b32.xlu0 %v1978, 64
      %v2019 = vpop.permute.xlu0 %2018
      %2020 = vrot.lane.b32.xlu0 %v1979, 64
      %v2021 = vpop.permute.xlu0 %2020
      %2022 = vrot.lane.b32.xlu0 %v1980, 64
      %v2023 = vpop.permute.xlu0 %2022
      %2024 = vrot.lane.b32.xlu0 %v1981, 64
      %v2025 = vpop.permute.xlu0 %2024
      %2026 = vrot.lane.b32.xlu0 %v1982, 64
      %v2027 = vpop.permute.xlu0 %2026
      %2028 = vrot.lane.b32.xlu0 %v1983, 64
      %v2029 = vpop.permute.xlu0 %2028
      %2030 = vrot.lane.b32.xlu0 %v1984, 64
      %v2031 = vpop.permute.xlu0 %2030
      %2032 = vrot.lane.b32.xlu0 %v1985, 64
      %v2033 = vpop.permute.xlu0 %2032
      %v2050 = vmul.f32 %v1747, %v2003
      %v2051 = vmul.f32 %v1749, %v2005
      %v2052 = vmul.f32 %v1751, %v2007
      %v2053 = vmul.f32 %v1753, %v2009
      %v2054 = vmul.f32 %v1755, %v2011
      %v2055 = vmul.f32 %v1757, %v2013
      %v2056 = vmul.f32 %v1759, %v2015
      %v2057 = vmul.f32 %v1761, %v2017
      %v2058 = vmul.f32 %v1763, %v2019
      %v2059 = vmul.f32 %v1765, %v2021
      %v2060 = vmul.f32 %v1767, %v2023
      %v2061 = vmul.f32 %v1769, %v2025
      %v2062 = vmul.f32 %v1771, %v2027
      %v2063 = vmul.f32 %v1773, %v2029
      %v2064 = vmul.f32 %v1775, %v2031
      %v2065 = vmul.f32 %v1777, %v2033
      %v2066 = vstv %s1481
      %vm2067 = vcmp.lt.s32.totalorder %v2066, %v39
      %vm2068 = vcmp.lt.s32.totalorder %v2066, %v40
      %vm2069 = vcmp.lt.s32.totalorder %v2066, %v41
      %vm2070 = vcmp.lt.s32.totalorder %v2066, %v42
      %vm2071 = vcmp.lt.s32.totalorder %v2066, %v43
      %vm2072 = vcmp.lt.s32.totalorder %v2066, %v44
      %vm2073 = vcmp.lt.s32.totalorder %v2066, %v45
      %vm2074 = vcmp.lt.s32.totalorder %v2066, %v46
      %vm2075 = vcmp.lt.s32.totalorder %v2066, %v47
      %vm2076 = vcmp.lt.s32.totalorder %v2066, %v48
      %vm2077 = vcmp.lt.s32.totalorder %v2066, %v49
      %vm2078 = vcmp.lt.s32.totalorder %v2066, %v50
      %vm2079 = vcmp.lt.s32.totalorder %v2066, %v51
      %vm2080 = vcmp.lt.s32.totalorder %v2066, %v52
      %vm2081 = vcmp.lt.s32.totalorder %v2066, %v53
      %vm2082 = vcmp.lt.s32.totalorder %v2066, %v54
      %s2083 = smul.u32 %s746, 512
      %v2084 = vsel %vm2067, 1, 0
      %v2085 = vsel %vm2068, 1, 0
      %v2086 = vsel %vm2069, 1, 0
      %v2087 = vsel %vm2070, 1, 0
      %v2088 = vsel %vm2071, 1, 0
      %v2089 = vsel %vm2072, 1, 0
      %v2090 = vsel %vm2073, 1, 0
      %v2091 = vsel %vm2074, 1, 0
      %v2092 = vsel %vm2075, 1, 0
      %v2093 = vsel %vm2076, 1, 0
      %v2094 = vsel %vm2077, 1, 0
      %v2095 = vsel %vm2078, 1, 0
      %v2096 = vsel %vm2079, 1, 0
      %v2097 = vsel %vm2080, 1, 0
      %v2098 = vsel %vm2081, 1, 0
      %v2099 = vsel %vm2082, 1, 0
      %2100 = vset.pattern.permute.xlu0 0
      %2101 = vperm.xlu0 %2100, %v2084
      %v2102 = vpop.permute.xlu0 %2101
      %2103 = vset.pattern.permute.xlu0 0
      %2104 = vperm.xlu0 %2103, %v2085
      %v2105 = vpop.permute.xlu0 %2104
      %2106 = vset.pattern.permute.xlu0 0
      %2107 = vperm.xlu0 %2106, %v2086
      %v2108 = vpop.permute.xlu0 %2107
      %2109 = vset.pattern.permute.xlu0 0
      %2110 = vperm.xlu0 %2109, %v2087
      %v2111 = vpop.permute.xlu0 %2110
      %2112 = vset.pattern.permute.xlu0 0
      %2113 = vperm.xlu0 %2112, %v2088
      %v2114 = vpop.permute.xlu0 %2113
      %2115 = vset.pattern.permute.xlu0 0
      %2116 = vperm.xlu0 %2115, %v2089
      %v2117 = vpop.permute.xlu0 %2116
      %2118 = vset.pattern.permute.xlu0 0
      %2119 = vperm.xlu0 %2118, %v2090
      %v2120 = vpop.permute.xlu0 %2119
      %2121 = vset.pattern.permute.xlu0 0
      %2122 = vperm.xlu0 %2121, %v2091
      %v2123 = vpop.permute.xlu0 %2122
      %2124 = vset.pattern.permute.xlu0 0
      %2125 = vperm.xlu0 %2124, %v2092
      %v2126 = vpop.permute.xlu0 %2125
      %2127 = vset.pattern.permute.xlu0 0
      %2128 = vperm.xlu0 %2127, %v2093
      %v2129 = vpop.permute.xlu0 %2128
      %2130 = vset.pattern.permute.xlu0 0
      %2131 = vperm.xlu0 %2130, %v2094
      %v2132 = vpop.permute.xlu0 %2131
      %2133 = vset.pattern.permute.xlu0 0
      %2134 = vperm.xlu0 %2133, %v2095
      %v2135 = vpop.permute.xlu0 %2134
      %2136 = vset.pattern.permute.xlu0 0
      %2137 = vperm.xlu0 %2136, %v2096
      %v2138 = vpop.permute.xlu0 %2137
      %2139 = vset.pattern.permute.xlu0 0
      %2140 = vperm.xlu0 %2139, %v2097
      %v2141 = vpop.permute.xlu0 %2140
      %2142 = vset.pattern.permute.xlu0 0
      %2143 = vperm.xlu0 %2142, %v2098
      %v2144 = vpop.permute.xlu0 %2143
      %2145 = vset.pattern.permute.xlu0 0
      %2146 = vperm.xlu0 %2145, %v2099
      %v2147 = vpop.permute.xlu0 %2146
      %vm2148 = vcmp.eq.s32.totalorder %v2102, 1
      %vm2149 = vcmp.eq.s32.totalorder %v2105, 1
      %vm2150 = vcmp.eq.s32.totalorder %v2108, 1
      %vm2151 = vcmp.eq.s32.totalorder %v2111, 1
      %vm2152 = vcmp.eq.s32.totalorder %v2114, 1
      %vm2153 = vcmp.eq.s32.totalorder %v2117, 1
      %vm2154 = vcmp.eq.s32.totalorder %v2120, 1
      %vm2155 = vcmp.eq.s32.totalorder %v2123, 1
      %vm2156 = vcmp.eq.s32.totalorder %v2126, 1
      %vm2157 = vcmp.eq.s32.totalorder %v2129, 1
      %vm2158 = vcmp.eq.s32.totalorder %v2132, 1
      %vm2159 = vcmp.eq.s32.totalorder %v2135, 1
      %vm2160 = vcmp.eq.s32.totalorder %v2138, 1
      %vm2161 = vcmp.eq.s32.totalorder %v2141, 1
      %vm2162 = vcmp.eq.s32.totalorder %v2144, 1
      %vm2163 = vcmp.eq.s32.totalorder %v2147, 1
      %v2164 = vsel %vm2148, %v2050, 0.0
      %v2165 = vsel %vm2149, %v2051, 0.0
      %v2166 = vsel %vm2150, %v2052, 0.0
      %v2167 = vsel %vm2151, %v2053, 0.0
      %v2168 = vsel %vm2152, %v2054, 0.0
      %v2169 = vsel %vm2153, %v2055, 0.0
      %v2170 = vsel %vm2154, %v2056, 0.0
      %v2171 = vsel %vm2155, %v2057, 0.0
      %v2172 = vsel %vm2156, %v2058, 0.0
      %v2173 = vsel %vm2157, %v2059, 0.0
      %v2174 = vsel %vm2158, %v2060, 0.0
      %v2175 = vsel %vm2159, %v2061, 0.0
      %v2176 = vsel %vm2160, %v2062, 0.0
      %v2177 = vsel %vm2161, %v2063, 0.0
      %v2178 = vsel %vm2162, %v2064, 0.0
      %v2179 = vsel %vm2163, %v2065, 0.0
      %v2180 = vpack.c.bf16 %v2165, %v2164
      %v2181 = vpack.c.bf16 %v2167, %v2166
      %v2182 = vpack.c.bf16 %v2169, %v2168
      %v2183 = vpack.c.bf16 %v2171, %v2170
      %v2184 = vpack.c.bf16 %v2173, %v2172
      %v2185 = vpack.c.bf16 %v2175, %v2174
      %v2186 = vpack.c.bf16 %v2177, %v2176
      %v2187 = vpack.c.bf16 %v2179, %v2178
      %2196 = vrot.lane.b32.xlu0 %v2180, 32
      %v2197 = vpop.permute.xlu0 %2196
      %2198 = vrot.lane.b32.xlu0 %v2181, 32
      %v2199 = vpop.permute.xlu0 %2198
      %2200 = vrot.lane.b32.xlu0 %v2182, 32
      %v2201 = vpop.permute.xlu0 %2200
      %2202 = vrot.lane.b32.xlu0 %v2183, 32
      %v2203 = vpop.permute.xlu0 %2202
      %2204 = vrot.lane.b32.xlu0 %v2184, 32
      %v2205 = vpop.permute.xlu0 %2204
      %2206 = vrot.lane.b32.xlu0 %v2185, 32
      %v2207 = vpop.permute.xlu0 %2206
      %2208 = vrot.lane.b32.xlu0 %v2186, 32
      %v2209 = vpop.permute.xlu0 %2208
      %2210 = vrot.lane.b32.xlu0 %v2187, 32
      %v2211 = vpop.permute.xlu0 %2210
      %s2220 = sshra.s32 %s2083, 4
      %s2221 = sand.u32 %s2083, 15
      %s2222 = smul.addr %s2220, 8
      %s2223 = scalar_lea.vmem [#allocation3], %s2222
      %2224 = vst.msk [vmem:[%s2223] sm:$0xff] %vm1544, %v2197
      %2225 = vst.msk [vmem:[%s2223 + $0x8] sm:$0xff] %vm1544, %v2199
      %2226 = vst.msk [vmem:[%s2223 + $0x10] sm:$0xff] %vm1544, %v2201
      %2227 = vst.msk [vmem:[%s2223 + $0x18] sm:$0xff] %vm1544, %v2203
      %2228 = vst.msk [vmem:[%s2223 + $0x20] sm:$0xff] %vm1544, %v2205
      %2229 = vst.msk [vmem:[%s2223 + $0x28] sm:$0xff] %vm1544, %v2207
      %2230 = vst.msk [vmem:[%s2223 + $0x30] sm:$0xff] %vm1544, %v2209
      %2231 = vst.msk [vmem:[%s2223 + $0x38] sm:$0xff] %vm1544, %v2211
      %v2232 = vsel %vm2148, %v2050, %v751
      %v2233 = vsel %vm2149, %v2051, %v752
      %v2234 = vsel %vm2150, %v2052, %v753
      %v2235 = vsel %vm2151, %v2053, %v754
      %v2236 = vsel %vm2152, %v2054, %v755
      %v2237 = vsel %vm2153, %v2055, %v756
      %v2238 = vsel %vm2154, %v2056, %v757
      %v2239 = vsel %vm2155, %v2057, %v758
      %v2240 = vsel %vm2156, %v2058, %v759
      %v2241 = vsel %vm2157, %v2059, %v760
      %v2242 = vsel %vm2158, %v2060, %v761
      %v2243 = vsel %vm2159, %v2061, %v762
      %v2244 = vsel %vm2160, %v2062, %v763
      %v2245 = vsel %vm2161, %v2063, %v764
      %v2246 = vsel %vm2162, %v2064, %v765
      %v2247 = vsel %vm2163, %v2065, %v766
      %v2248 = vsel %vm2148, %v1954, %v767
      %v2249 = vsel %vm2149, %v1955, %v768
      %v2250 = vsel %vm2150, %v1956, %v769
      %v2251 = vsel %vm2151, %v1957, %v770
      %v2252 = vsel %vm2152, %v1958, %v771
      %v2253 = vsel %vm2153, %v1959, %v772
      %v2254 = vsel %vm2154, %v1960, %v773
      %v2255 = vsel %vm2155, %v1961, %v774
      %v2256 = vsel %vm2156, %v1962, %v775
      %v2257 = vsel %vm2157, %v1963, %v776
      %v2258 = vsel %vm2158, %v1964, %v777
      %v2259 = vsel %vm2159, %v1965, %v778
      %v2260 = vsel %vm2160, %v1966, %v779
      %v2261 = vsel %vm2161, %v1967, %v780
      %v2262 = vsel %vm2162, %v1968, %v781
      %v2263 = vsel %vm2163, %v1969, %v782
      %s2264 = sadd.s32 %s1482, 128
      %s2265 = scalar_lea.vmem [#allocation2], %s2264
      %v2266 = vld [vmem:[%s2265] sm:$0xff]
      %v2267 = vld [vmem:[%s2265 + $0x8] sm:$0xff]
      %v2268 = vld [vmem:[%s2265 + $0x10] sm:$0xff]
      %v2269 = vld [vmem:[%s2265 + $0x18] sm:$0xff]
      %v2270 = vld [vmem:[%s2265 + $0x20] sm:$0xff]
      %v2271 = vld [vmem:[%s2265 + $0x28] sm:$0xff]
      %v2272 = vld [vmem:[%s2265 + $0x30] sm:$0xff]
      %v2273 = vld [vmem:[%s2265 + $0x38] sm:$0xff]
      %v2274 = vld [vmem:[%s2265 + $0x40] sm:$0xff]
      %v2275 = vld [vmem:[%s2265 + $0x48] sm:$0xff]
      %v2276 = vld [vmem:[%s2265 + $0x50] sm:$0xff]
      %v2277 = vld [vmem:[%s2265 + $0x58] sm:$0xff]
      %v2278 = vld [vmem:[%s2265 + $0x60] sm:$0xff]
      %v2279 = vld [vmem:[%s2265 + $0x68] sm:$0xff]
      %v2280 = vld [vmem:[%s2265 + $0x70] sm:$0xff]
      %v2281 = vld [vmem:[%s2265 + $0x78] sm:$0xff]
      %v2282 = vpack.c.bf16 %v2233, %v2232
      %v2283 = vpack.c.bf16 %v2235, %v2234
      %v2284 = vpack.c.bf16 %v2237, %v2236
      %v2285 = vpack.c.bf16 %v2239, %v2238
      %v2286 = vpack.c.bf16 %v2241, %v2240
      %v2287 = vpack.c.bf16 %v2243, %v2242
      %v2288 = vpack.c.bf16 %v2245, %v2244
      %v2289 = vpack.c.bf16 %v2247, %v2246
      %2298 = vrot.lane.b32.xlu0 %v2282, 32
      %v2299 = vpop.permute.xlu0 %2298
      %2300 = vrot.lane.b32.xlu0 %v2283, 32
      %v2301 = vpop.permute.xlu0 %2300
      %2302 = vrot.lane.b32.xlu0 %v2284, 32
      %v2303 = vpop.permute.xlu0 %2302
      %2304 = vrot.lane.b32.xlu0 %v2285, 32
      %v2305 = vpop.permute.xlu0 %2304
      %2306 = vrot.lane.b32.xlu0 %v2286, 32
      %v2307 = vpop.permute.xlu0 %2306
      %2308 = vrot.lane.b32.xlu0 %v2287, 32
      %v2309 = vpop.permute.xlu0 %2308
      %2310 = vrot.lane.b32.xlu0 %v2288, 32
      %v2311 = vpop.permute.xlu0 %2310
      %2312 = vrot.lane.b32.xlu0 %v2289, 32
      %v2313 = vpop.permute.xlu0 %2312
      %v2315 = vsel %vm1544, %v2299, 0
      %v2318 = vsel %vm1544, %v2301, 0
      %v2321 = vsel %vm1544, %v2303, 0
      %v2324 = vsel %vm1544, %v2305, 0
      %v2327 = vsel %vm1544, %v2307, 0
      %v2330 = vsel %vm1544, %v2309, 0
      %v2333 = vsel %vm1544, %v2311, 0
      %v2336 = vsel %vm1544, %v2313, 0
      %2338 = vmatprep.subr.bf16.mxu0 0
      %2339 = vmatpush1.bf16.msra.mxu0 %v1540
      %2340 = vmatprep.subr.bf16.mxu0 0
      %2341 = vmatpush1.bf16.msra.mxu0 %v1541
      %2342 = vmatprep.subr.bf16.mxu0 0
      %2343 = vmatpush1.bf16.msra.mxu0 0
      %2344 = vmatprep.subr.bf16.mxu0 0
      %2345 = vmatpush1.bf16.msra.mxu0 0
      %2346 = vmatprep.subr.bf16.mxu0 0
      %2347 = vmatpush1.bf16.msra.mxu0 0
      %2348 = vmatprep.subr.bf16.mxu0 0
      %2349 = vmatpush1.bf16.msra.mxu0 0
      %2350 = vmatprep.subr.bf16.mxu0 0
      %2351 = vmatpush1.bf16.msra.mxu0 0
      %2352 = vmatprep.subr.bf16.mxu0 0
      %2353 = vmatpush1.bf16.msra.mxu0 0
      %2354 = vmatprep.subr.bf16.mxu0 0
      %2355 = vmatpush1.bf16.msra.mxu0 0
      %2356 = vmatprep.subr.bf16.mxu0 0
      %2357 = vmatpush1.bf16.msra.mxu0 0
      %2358 = vmatprep.subr.bf16.mxu0 0
      %2359 = vmatpush1.bf16.msra.mxu0 0
      %2360 = vmatprep.subr.bf16.mxu0 0
      %2361 = vmatpush1.bf16.msra.mxu0 0
      %2362 = vmatprep.subr.bf16.mxu0 0
      %2363 = vmatpush1.bf16.msra.mxu0 0
      %2364 = vmatprep.subr.bf16.mxu0 0
      %2365 = vmatpush1.bf16.msra.mxu0 0
      %2366 = vmatprep.subr.bf16.mxu0 0
      %2367 = vmatpush1.bf16.msra.mxu0 0
      %2368 = vmatprep.subr.bf16.mxu0 0
      %2369 = vmatpush1.bf16.msra.mxu0 0
      %2370 = vmatprep.mubr.bf16.mxu0 0
      %2371 = vmatmul.mubr.bf16.gmra.mrb[0].mxu0 %v2315
      %v2372 = vpop.f32.mrb[0].mxu0
      %v2373 = vadd.f32 0.0, %v2372
      %v2374 = vpop.f32.mrb[0].mxu0
      %v2375 = vpop.f32.mrb[0].mxu0
      %v2376 = vadd.f32 0.0, %v2375
      %v2377 = vpop.f32.mrb[0].mxu0
      %2378 = vmatprep.mubr.bf16.mxu0 0
      %2379 = vmatmul.mubr.bf16.gmra.mrb[0].mxu0 %v2318
      %v2380 = vpop.f32.mrb[0].mxu0
      %v2381 = vadd.f32 0.0, %v2380
      %v2382 = vpop.f32.mrb[0].mxu0
      %v2383 = vpop.f32.mrb[0].mxu0
      %v2384 = vadd.f32 0.0, %v2383
      %v2385 = vpop.f32.mrb[0].mxu0
      %2386 = vmatprep.mubr.bf16.mxu0 0
      %2387 = vmatmul.mubr.bf16.gmra.mrb[0].mxu0 %v2321
      %v2388 = vpop.f32.mrb[0].mxu0
      %v2389 = vadd.f32 0.0, %v2388
      %v2390 = vpop.f32.mrb[0].mxu0
      %v2391 = vpop.f32.mrb[0].mxu0
      %v2392 = vadd.f32 0.0, %v2391
      %v2393 = vpop.f32.mrb[0].mxu0
      %2394 = vmatprep.mubr.bf16.mxu0 0
      %2395 = vmatmul.mubr.bf16.gmra.mrb[0].mxu0 %v2324
      %v2396 = vpop.f32.mrb[0].mxu0
      %v2397 = vadd.f32 0.0, %v2396
      %v2398 = vpop.f32.mrb[0].mxu0
      %v2399 = vpop.f32.mrb[0].mxu0
      %v2400 = vadd.f32 0.0, %v2399
      %v2401 = vpop.f32.mrb[0].mxu0
      %2402 = vmatprep.mubr.bf16.mxu0 0
      %2403 = vmatmul.mubr.bf16.gmra.mrb[0].mxu0 %v2327
      %v2404 = vpop.f32.mrb[0].mxu0
      %v2405 = vadd.f32 0.0, %v2404
      %v2406 = vpop.f32.mrb[0].mxu0
      %v2407 = vpop.f32.mrb[0].mxu0
      %v2408 = vadd.f32 0.0, %v2407
      %v2409 = vpop.f32.mrb[0].mxu0
      %2410 = vmatprep.mubr.bf16.mxu0 0
      %2411 = vmatmul.mubr.bf16.gmra.mrb[0].mxu0 %v2330
      %v2412 = vpop.f32.mrb[0].mxu0
      %v2413 = vadd.f32 0.0, %v2412
      %v2414 = vpop.f32.mrb[0].mxu0
      %v2415 = vpop.f32.mrb[0].mxu0
      %v2416 = vadd.f32 0.0, %v2415
      %v2417 = vpop.f32.mrb[0].mxu0
      %2418 = vmatprep.mubr.bf16.mxu0 0
      %2419 = vmatmul.mubr.bf16.gmra.mrb[0].mxu0 %v2333
      %v2420 = vpop.f32.mrb[0].mxu0
      %v2421 = vadd.f32 0.0, %v2420
      %v2422 = vpop.f32.mrb[0].mxu0
      %v2423 = vpop.f32.mrb[0].mxu0
      %v2424 = vadd.f32 0.0, %v2423
      %v2425 = vpop.f32.mrb[0].mxu0
      %2426 = vmatprep.mubr.bf16.mxu0 0
      %2427 = vmatmul.mubr.bf16.gmra.mrb[0].mxu0 %v2336
      %v2428 = vpop.f32.mrb[0].mxu0
      %v2429 = vadd.f32 0.0, %v2428
      %v2430 = vpop.f32.mrb[0].mxu0
      %v2431 = vpop.f32.mrb[0].mxu0
      %v2432 = vadd.f32 0.0, %v2431
      %v2433 = vpop.f32.mrb[0].mxu0
      %2434 = vdwg.mxu0
      %v2435 = vadd.f32 %v2266, %v2373
      %v2436 = vadd.f32 %v2267, %v2376
      %v2437 = vadd.f32 %v2268, %v2381
      %v2438 = vadd.f32 %v2269, %v2384
      %v2439 = vadd.f32 %v2270, %v2389
      %v2440 = vadd.f32 %v2271, %v2392
      %v2441 = vadd.f32 %v2272, %v2397
      %v2442 = vadd.f32 %v2273, %v2400
      %v2443 = vadd.f32 %v2274, %v2405
      %v2444 = vadd.f32 %v2275, %v2408
      %v2445 = vadd.f32 %v2276, %v2413
      %v2446 = vadd.f32 %v2277, %v2416
      %v2447 = vadd.f32 %v2278, %v2421
      %v2448 = vadd.f32 %v2279, %v2424
      %v2449 = vadd.f32 %v2280, %v2429
      %v2450 = vadd.f32 %v2281, %v2432
      %v2451 = vxor.u32 %v2435, 2147483648
      %v2452 = vxor.u32 %v2436, 2147483648
      %v2453 = vxor.u32 %v2437, 2147483648
      %v2454 = vxor.u32 %v2438, 2147483648
      %v2455 = vxor.u32 %v2439, 2147483648
      %v2456 = vxor.u32 %v2440, 2147483648
      %v2457 = vxor.u32 %v2441, 2147483648
      %v2458 = vxor.u32 %v2442, 2147483648
      %v2459 = vxor.u32 %v2443, 2147483648
      %v2460 = vxor.u32 %v2444, 2147483648
      %v2461 = vxor.u32 %v2445, 2147483648
      %v2462 = vxor.u32 %v2446, 2147483648
      %v2463 = vxor.u32 %v2447, 2147483648
      %v2464 = vxor.u32 %v2448, 2147483648
      %v2465 = vxor.u32 %v2449, 2147483648
      %v2466 = vxor.u32 %v2450, 2147483648
      %v2467 = vmul.f32 %v2451, 1.442695
      %v2468 = vpow.pop %v2467
      %v2469 = vmul.f32 %v2452, 1.442695
      %v2470 = vpow.pop %v2469
      %v2471 = vmul.f32 %v2453, 1.442695
      %v2472 = vpow.pop %v2471
      %v2473 = vmul.f32 %v2454, 1.442695
      %v2474 = vpow.pop %v2473
      %v2475 = vmul.f32 %v2455, 1.442695
      %v2476 = vpow.pop %v2475
      %v2477 = vmul.f32 %v2456, 1.442695
      %v2478 = vpow.pop %v2477
      %v2479 = vmul.f32 %v2457, 1.442695
      %v2480 = vpow.pop %v2479
      %v2481 = vmul.f32 %v2458, 1.442695
      %v2482 = vpow.pop %v2481
      %v2483 = vmul.f32 %v2459, 1.442695
      %v2484 = vpow.pop %v2483
      %v2485 = vmul.f32 %v2460, 1.442695
      %v2486 = vpow.pop %v2485
      %v2487 = vmul.f32 %v2461, 1.442695
      %v2488 = vpow.pop %v2487
      %v2489 = vmul.f32 %v2462, 1.442695
      %v2490 = vpow.pop %v2489
      %v2491 = vmul.f32 %v2463, 1.442695
      %v2492 = vpow.pop %v2491
      %v2493 = vmul.f32 %v2464, 1.442695
      %v2494 = vpow.pop %v2493
      %v2495 = vmul.f32 %v2465, 1.442695
      %v2496 = vpow.pop %v2495
      %v2497 = vmul.f32 %v2466, 1.442695
      %v2498 = vpow.pop %v2497
      %v2499 = vadd.f32 %v2468, 1.0
      %v2500 = vadd.f32 %v2470, 1.0
      %v2501 = vadd.f32 %v2472, 1.0
      %v2502 = vadd.f32 %v2474, 1.0
      %v2503 = vadd.f32 %v2476, 1.0
      %v2504 = vadd.f32 %v2478, 1.0
      %v2505 = vadd.f32 %v2480, 1.0
      %v2506 = vadd.f32 %v2482, 1.0
      %v2507 = vadd.f32 %v2484, 1.0
      %v2508 = vadd.f32 %v2486, 1.0
      %v2509 = vadd.f32 %v2488, 1.0
      %v2510 = vadd.f32 %v2490, 1.0
      %v2511 = vadd.f32 %v2492, 1.0
      %v2512 = vadd.f32 %v2494, 1.0
      %v2513 = vadd.f32 %v2496, 1.0
      %v2514 = vadd.f32 %v2498, 1.0
      %v2515 = vrcp.pop %v2499
      %v2516 = vmul.f32 1.0, %v2515
      %v2517 = vrcp.pop %v2500
      %v2518 = vmul.f32 1.0, %v2517
      %v2519 = vrcp.pop %v2501
      %v2520 = vmul.f32 1.0, %v2519
      %v2521 = vrcp.pop %v2502
      %v2522 = vmul.f32 1.0, %v2521
      %v2523 = vrcp.pop %v2503
      %v2524 = vmul.f32 1.0, %v2523
      %v2525 = vrcp.pop %v2504
      %v2526 = vmul.f32 1.0, %v2525
      %v2527 = vrcp.pop %v2505
      %v2528 = vmul.f32 1.0, %v2527
      %v2529 = vrcp.pop %v2506
      %v2530 = vmul.f32 1.0, %v2529
      %v2531 = vrcp.pop %v2507
      %v2532 = vmul.f32 1.0, %v2531
      %v2533 = vrcp.pop %v2508
      %v2534 = vmul.f32 1.0, %v2533
      %v2535 = vrcp.pop %v2509
      %v2536 = vmul.f32 1.0, %v2535
      %v2537 = vrcp.pop %v2510
      %v2538 = vmul.f32 1.0, %v2537
      %v2539 = vrcp.pop %v2511
      %v2540 = vmul.f32 1.0, %v2539
      %v2541 = vrcp.pop %v2512
      %v2542 = vmul.f32 1.0, %v2541
      %v2543 = vrcp.pop %v2513
      %v2544 = vmul.f32 1.0, %v2543
      %v2545 = vrcp.pop %v2514
      %v2546 = vmul.f32 1.0, %v2545
      %v2547 = vtanh.pop %v2435
      %v2548 = vtanh.pop %v2436
      %v2549 = vtanh.pop %v2437
      %v2550 = vtanh.pop %v2438
      %v2551 = vtanh.pop %v2439
      %v2552 = vtanh.pop %v2440
      %v2553 = vtanh.pop %v2441
      %v2554 = vtanh.pop %v2442
      %v2555 = vtanh.pop %v2443
      %v2556 = vtanh.pop %v2444
      %v2557 = vtanh.pop %v2445
      %v2558 = vtanh.pop %v2446
      %v2559 = vtanh.pop %v2447
      %v2560 = vtanh.pop %v2448
      %v2561 = vtanh.pop %v2449
      %v2562 = vtanh.pop %v2450
      %v2563 = vmul.f32 %v2516, %v2248
      %v2564 = vmul.f32 %v2518, %v2249
      %v2565 = vmul.f32 %v2520, %v2250
      %v2566 = vmul.f32 %v2522, %v2251
      %v2567 = vmul.f32 %v2524, %v2252
      %v2568 = vmul.f32 %v2526, %v2253
      %v2569 = vmul.f32 %v2528, %v2254
      %v2570 = vmul.f32 %v2530, %v2255
      %v2571 = vmul.f32 %v2532, %v2256
      %v2572 = vmul.f32 %v2534, %v2257
      %v2573 = vmul.f32 %v2536, %v2258
      %v2574 = vmul.f32 %v2538, %v2259
      %v2575 = vmul.f32 %v2540, %v2260
      %v2576 = vmul.f32 %v2542, %v2261
      %v2577 = vmul.f32 %v2544, %v2262
      %v2578 = vmul.f32 %v2546, %v2263
      %2595 = vrot.lane.b32.xlu0 %v2547, 64
      %v2596 = vpop.permute.xlu0 %2595
      %2597 = vrot.lane.b32.xlu0 %v2548, 64
      %v2598 = vpop.permute.xlu0 %2597
      %2599 = vrot.lane.b32.xlu0 %v2549, 64
      %v2600 = vpop.permute.xlu0 %2599
      %2601 = vrot.lane.b32.xlu0 %v2550, 64
      %v2602 = vpop.permute.xlu0 %2601
      %2603 = vrot.lane.b32.xlu0 %v2551, 64
      %v2604 = vpop.permute.xlu0 %2603
      %2605 = vrot.lane.b32.xlu0 %v2552, 64
      %v2606 = vpop.permute.xlu0 %2605
      %2607 = vrot.lane.b32.xlu0 %v2553, 64
      %v2608 = vpop.permute.xlu0 %2607
      %2609 = vrot.lane.b32.xlu0 %v2554, 64
      %v2610 = vpop.permute.xlu0 %2609
      %2611 = vrot.lane.b32.xlu0 %v2555, 64
      %v2612 = vpop.permute.xlu0 %2611
      %2613 = vrot.lane.b32.xlu0 %v2556, 64
      %v2614 = vpop.permute.xlu0 %2613
      %2615 = vrot.lane.b32.xlu0 %v2557, 64
      %v2616 = vpop.permute.xlu0 %2615
      %2617 = vrot.lane.b32.xlu0 %v2558, 64
      %v2618 = vpop.permute.xlu0 %2617
      %2619 = vrot.lane.b32.xlu0 %v2559, 64
      %v2620 = vpop.permute.xlu0 %2619
      %2621 = vrot.lane.b32.xlu0 %v2560, 64
      %v2622 = vpop.permute.xlu0 %2621
      %2623 = vrot.lane.b32.xlu0 %v2561, 64
      %v2624 = vpop.permute.xlu0 %2623
      %2625 = vrot.lane.b32.xlu0 %v2562, 64
      %v2626 = vpop.permute.xlu0 %2625
      %v2643 = vmul.f32 %v2516, %v2596
      %v2644 = vmul.f32 %v2518, %v2598
      %v2645 = vmul.f32 %v2520, %v2600
      %v2646 = vmul.f32 %v2522, %v2602
      %v2647 = vmul.f32 %v2524, %v2604
      %v2648 = vmul.f32 %v2526, %v2606
      %v2649 = vmul.f32 %v2528, %v2608
      %v2650 = vmul.f32 %v2530, %v2610
      %v2651 = vmul.f32 %v2532, %v2612
      %v2652 = vmul.f32 %v2534, %v2614
      %v2653 = vmul.f32 %v2536, %v2616
      %v2654 = vmul.f32 %v2538, %v2618
      %v2655 = vmul.f32 %v2540, %v2620
      %v2656 = vmul.f32 %v2542, %v2622
      %v2657 = vmul.f32 %v2544, %v2624
      %v2658 = vmul.f32 %v2546, %v2626
      %2675 = vrot.lane.b32.xlu0 %v2643, 32
      %v2676 = vpop.permute.xlu0 %2675
      %2677 = vrot.lane.b32.xlu0 %v2644, 32
      %v2678 = vpop.permute.xlu0 %2677
      %2679 = vrot.lane.b32.xlu0 %v2645, 32
      %v2680 = vpop.permute.xlu0 %2679
      %2681 = vrot.lane.b32.xlu0 %v2646, 32
      %v2682 = vpop.permute.xlu0 %2681
      %2683 = vrot.lane.b32.xlu0 %v2647, 32
      %v2684 = vpop.permute.xlu0 %2683
      %2685 = vrot.lane.b32.xlu0 %v2648, 32
      %v2686 = vpop.permute.xlu0 %2685
      %2687 = vrot.lane.b32.xlu0 %v2649, 32
      %v2688 = vpop.permute.xlu0 %2687
      %2689 = vrot.lane.b32.xlu0 %v2650, 32
      %v2690 = vpop.permute.xlu0 %2689
      %2691 = vrot.lane.b32.xlu0 %v2651, 32
      %v2692 = vpop.permute.xlu0 %2691
      %2693 = vrot.lane.b32.xlu0 %v2652, 32
      %v2694 = vpop.permute.xlu0 %2693
      %2695 = vrot.lane.b32.xlu0 %v2653, 32
      %v2696 = vpop.permute.xlu0 %2695
      %2697 = vrot.lane.b32.xlu0 %v2654, 32
      %v2698 = vpop.permute.xlu0 %2697
      %2699 = vrot.lane.b32.xlu0 %v2655, 32
      %v2700 = vpop.permute.xlu0 %2699
      %2701 = vrot.lane.b32.xlu0 %v2656, 32
      %v2702 = vpop.permute.xlu0 %2701
      %2703 = vrot.lane.b32.xlu0 %v2657, 32
      %v2704 = vpop.permute.xlu0 %2703
      %2705 = vrot.lane.b32.xlu0 %v2658, 32
      %v2706 = vpop.permute.xlu0 %2705
      %v2723 = vadd.f32 %v2563, %v2676
      %v2724 = vadd.f32 %v2564, %v2678
      %v2725 = vadd.f32 %v2565, %v2680
      %v2726 = vadd.f32 %v2566, %v2682
      %v2727 = vadd.f32 %v2567, %v2684
      %v2728 = vadd.f32 %v2568, %v2686
      %v2729 = vadd.f32 %v2569, %v2688
      %v2730 = vadd.f32 %v2570, %v2690
      %v2731 = vadd.f32 %v2571, %v2692
      %v2732 = vadd.f32 %v2572, %v2694
      %v2733 = vadd.f32 %v2573, %v2696
      %v2734 = vadd.f32 %v2574, %v2698
      %v2735 = vadd.f32 %v2575, %v2700
      %v2736 = vadd.f32 %v2576, %v2702
      %v2737 = vadd.f32 %v2577, %v2704
      %v2738 = vadd.f32 %v2578, %v2706
      %v2739 = vtanh.pop %v2723
      %v2740 = vtanh.pop %v2724
      %v2741 = vtanh.pop %v2725
      %v2742 = vtanh.pop %v2726
      %v2743 = vtanh.pop %v2727
      %v2744 = vtanh.pop %v2728
      %v2745 = vtanh.pop %v2729
      %v2746 = vtanh.pop %v2730
      %v2747 = vtanh.pop %v2731
      %v2748 = vtanh.pop %v2732
      %v2749 = vtanh.pop %v2733
      %v2750 = vtanh.pop %v2734
      %v2751 = vtanh.pop %v2735
      %v2752 = vtanh.pop %v2736
      %v2753 = vtanh.pop %v2737
      %v2754 = vtanh.pop %v2738
      %2771 = vrot.lane.b32.xlu0 %v2739, 64
      %v2772 = vpop.permute.xlu0 %2771
      %2773 = vrot.lane.b32.xlu0 %v2740, 64
      %v2774 = vpop.permute.xlu0 %2773
      %2775 = vrot.lane.b32.xlu0 %v2741, 64
      %v2776 = vpop.permute.xlu0 %2775
      %2777 = vrot.lane.b32.xlu0 %v2742, 64
      %v2778 = vpop.permute.xlu0 %2777
      %2779 = vrot.lane.b32.xlu0 %v2743, 64
      %v2780 = vpop.permute.xlu0 %2779
      %2781 = vrot.lane.b32.xlu0 %v2744, 64
      %v2782 = vpop.permute.xlu0 %2781
      %2783 = vrot.lane.b32.xlu0 %v2745, 64
      %v2784 = vpop.permute.xlu0 %2783
      %2785 = vrot.lane.b32.xlu0 %v2746, 64
      %v2786 = vpop.permute.xlu0 %2785
      %2787 = vrot.lane.b32.xlu0 %v2747, 64
      %v2788 = vpop.permute.xlu0 %2787
      %2789 = vrot.lane.b32.xlu0 %v2748, 64
      %v2790 = vpop.permute.xlu0 %2789
      %2791 = vrot.lane.b32.xlu0 %v2749, 64
      %v2792 = vpop.permute.xlu0 %2791
      %2793 = vrot.lane.b32.xlu0 %v2750, 64
      %v2794 = vpop.permute.xlu0 %2793
      %2795 = vrot.lane.b32.xlu0 %v2751, 64
      %v2796 = vpop.permute.xlu0 %2795
      %2797 = vrot.lane.b32.xlu0 %v2752, 64
      %v2798 = vpop.permute.xlu0 %2797
      %2799 = vrot.lane.b32.xlu0 %v2753, 64
      %v2800 = vpop.permute.xlu0 %2799
      %2801 = vrot.lane.b32.xlu0 %v2754, 64
      %v2802 = vpop.permute.xlu0 %2801
      %v2819 = vmul.f32 %v2516, %v2772
      %v2820 = vmul.f32 %v2518, %v2774
      %v2821 = vmul.f32 %v2520, %v2776
      %v2822 = vmul.f32 %v2522, %v2778
      %v2823 = vmul.f32 %v2524, %v2780
      %v2824 = vmul.f32 %v2526, %v2782
      %v2825 = vmul.f32 %v2528, %v2784
      %v2826 = vmul.f32 %v2530, %v2786
      %v2827 = vmul.f32 %v2532, %v2788
      %v2828 = vmul.f32 %v2534, %v2790
      %v2829 = vmul.f32 %v2536, %v2792
      %v2830 = vmul.f32 %v2538, %v2794
      %v2831 = vmul.f32 %v2540, %v2796
      %v2832 = vmul.f32 %v2542, %v2798
      %v2833 = vmul.f32 %v2544, %v2800
      %v2834 = vmul.f32 %v2546, %v2802
      %s2835 = sadd.s32 %s1481, 1
      %v2836 = vstv %s2835
      %vm2837 = vcmp.lt.s32.totalorder %v2836, %v39
      %vm2838 = vcmp.lt.s32.totalorder %v2836, %v40
      %vm2839 = vcmp.lt.s32.totalorder %v2836, %v41
      %vm2840 = vcmp.lt.s32.totalorder %v2836, %v42
      %vm2841 = vcmp.lt.s32.totalorder %v2836, %v43
      %vm2842 = vcmp.lt.s32.totalorder %v2836, %v44
      %vm2843 = vcmp.lt.s32.totalorder %v2836, %v45
      %vm2844 = vcmp.lt.s32.totalorder %v2836, %v46
      %vm2845 = vcmp.lt.s32.totalorder %v2836, %v47
      %vm2846 = vcmp.lt.s32.totalorder %v2836, %v48
      %vm2847 = vcmp.lt.s32.totalorder %v2836, %v49
      %vm2848 = vcmp.lt.s32.totalorder %v2836, %v50
      %vm2849 = vcmp.lt.s32.totalorder %v2836, %v51
      %vm2850 = vcmp.lt.s32.totalorder %v2836, %v52
      %vm2851 = vcmp.lt.s32.totalorder %v2836, %v53
      %vm2852 = vcmp.lt.s32.totalorder %v2836, %v54
      %s2853 = smul.u32 %s2835, 128
      %v2854 = vsel %vm2837, 1, 0
      %v2855 = vsel %vm2838, 1, 0
      %v2856 = vsel %vm2839, 1, 0
      %v2857 = vsel %vm2840, 1, 0
      %v2858 = vsel %vm2841, 1, 0
      %v2859 = vsel %vm2842, 1, 0
      %v2860 = vsel %vm2843, 1, 0
      %v2861 = vsel %vm2844, 1, 0
      %v2862 = vsel %vm2845, 1, 0
      %v2863 = vsel %vm2846, 1, 0
      %v2864 = vsel %vm2847, 1, 0
      %v2865 = vsel %vm2848, 1, 0
      %v2866 = vsel %vm2849, 1, 0
      %v2867 = vsel %vm2850, 1, 0
      %v2868 = vsel %vm2851, 1, 0
      %v2869 = vsel %vm2852, 1, 0
      %2870 = vset.pattern.permute.xlu0 0
      %2871 = vperm.xlu0 %2870, %v2854
      %v2872 = vpop.permute.xlu0 %2871
      %2873 = vset.pattern.permute.xlu0 0
      %2874 = vperm.xlu0 %2873, %v2855
      %v2875 = vpop.permute.xlu0 %2874
      %2876 = vset.pattern.permute.xlu0 0
      %2877 = vperm.xlu0 %2876, %v2856
      %v2878 = vpop.permute.xlu0 %2877
      %2879 = vset.pattern.permute.xlu0 0
      %2880 = vperm.xlu0 %2879, %v2857
      %v2881 = vpop.permute.xlu0 %2880
      %2882 = vset.pattern.permute.xlu0 0
      %2883 = vperm.xlu0 %2882, %v2858
      %v2884 = vpop.permute.xlu0 %2883
      %2885 = vset.pattern.permute.xlu0 0
      %2886 = vperm.xlu0 %2885, %v2859
      %v2887 = vpop.permute.xlu0 %2886
      %2888 = vset.pattern.permute.xlu0 0
      %2889 = vperm.xlu0 %2888, %v2860
      %v2890 = vpop.permute.xlu0 %2889
      %2891 = vset.pattern.permute.xlu0 0
      %2892 = vperm.xlu0 %2891, %v2861
      %v2893 = vpop.permute.xlu0 %2892
      %2894 = vset.pattern.permute.xlu0 0
      %2895 = vperm.xlu0 %2894, %v2862
      %v2896 = vpop.permute.xlu0 %2895
      %2897 = vset.pattern.permute.xlu0 0
      %2898 = vperm.xlu0 %2897, %v2863
      %v2899 = vpop.permute.xlu0 %2898
      %2900 = vset.pattern.permute.xlu0 0
      %2901 = vperm.xlu0 %2900, %v2864
      %v2902 = vpop.permute.xlu0 %2901
      %2903 = vset.pattern.permute.xlu0 0
      %2904 = vperm.xlu0 %2903, %v2865
      %v2905 = vpop.permute.xlu0 %2904
      %2906 = vset.pattern.permute.xlu0 0
      %2907 = vperm.xlu0 %2906, %v2866
      %v2908 = vpop.permute.xlu0 %2907
      %2909 = vset.pattern.permute.xlu0 0
      %2910 = vperm.xlu0 %2909, %v2867
      %v2911 = vpop.permute.xlu0 %2910
      %2912 = vset.pattern.permute.xlu0 0
      %2913 = vperm.xlu0 %2912, %v2868
      %v2914 = vpop.permute.xlu0 %2913
      %2915 = vset.pattern.permute.xlu0 0
      %2916 = vperm.xlu0 %2915, %v2869
      %v2917 = vpop.permute.xlu0 %2916
      %vm2918 = vcmp.eq.s32.totalorder %v2872, 1
      %vm2919 = vcmp.eq.s32.totalorder %v2875, 1
      %vm2920 = vcmp.eq.s32.totalorder %v2878, 1
      %vm2921 = vcmp.eq.s32.totalorder %v2881, 1
      %vm2922 = vcmp.eq.s32.totalorder %v2884, 1
      %vm2923 = vcmp.eq.s32.totalorder %v2887, 1
      %vm2924 = vcmp.eq.s32.totalorder %v2890, 1
      %vm2925 = vcmp.eq.s32.totalorder %v2893, 1
      %vm2926 = vcmp.eq.s32.totalorder %v2896, 1
      %vm2927 = vcmp.eq.s32.totalorder %v2899, 1
      %vm2928 = vcmp.eq.s32.totalorder %v2902, 1
      %vm2929 = vcmp.eq.s32.totalorder %v2905, 1
      %vm2930 = vcmp.eq.s32.totalorder %v2908, 1
      %vm2931 = vcmp.eq.s32.totalorder %v2911, 1
      %vm2932 = vcmp.eq.s32.totalorder %v2914, 1
      %vm2933 = vcmp.eq.s32.totalorder %v2917, 1
      %v2934 = vsel %vm2918, %v2819, 0.0
      %v2935 = vsel %vm2919, %v2820, 0.0
      %v2936 = vsel %vm2920, %v2821, 0.0
      %v2937 = vsel %vm2921, %v2822, 0.0
      %v2938 = vsel %vm2922, %v2823, 0.0
      %v2939 = vsel %vm2923, %v2824, 0.0
      %v2940 = vsel %vm2924, %v2825, 0.0
      %v2941 = vsel %vm2925, %v2826, 0.0
      %v2942 = vsel %vm2926, %v2827, 0.0
      %v2943 = vsel %vm2927, %v2828, 0.0
      %v2944 = vsel %vm2928, %v2829, 0.0
      %v2945 = vsel %vm2929, %v2830, 0.0
      %v2946 = vsel %vm2930, %v2831, 0.0
      %v2947 = vsel %vm2931, %v2832, 0.0
      %v2948 = vsel %vm2932, %v2833, 0.0
      %v2949 = vsel %vm2933, %v2834, 0.0
      %v2950 = vpack.c.bf16 %v2935, %v2934
      %v2951 = vpack.c.bf16 %v2937, %v2936
      %v2952 = vpack.c.bf16 %v2939, %v2938
      %v2953 = vpack.c.bf16 %v2941, %v2940
      %v2954 = vpack.c.bf16 %v2943, %v2942
      %v2955 = vpack.c.bf16 %v2945, %v2944
      %v2956 = vpack.c.bf16 %v2947, %v2946
      %v2957 = vpack.c.bf16 %v2949, %v2948
      %2966 = vrot.lane.b32.xlu0 %v2950, 32
      %v2967 = vpop.permute.xlu0 %2966
      %2968 = vrot.lane.b32.xlu0 %v2951, 32
      %v2969 = vpop.permute.xlu0 %2968
      %2970 = vrot.lane.b32.xlu0 %v2952, 32
      %v2971 = vpop.permute.xlu0 %2970
      %2972 = vrot.lane.b32.xlu0 %v2953, 32
      %v2973 = vpop.permute.xlu0 %2972
      %2974 = vrot.lane.b32.xlu0 %v2954, 32
      %v2975 = vpop.permute.xlu0 %2974
      %2976 = vrot.lane.b32.xlu0 %v2955, 32
      %v2977 = vpop.permute.xlu0 %2976
      %2978 = vrot.lane.b32.xlu0 %v2956, 32
      %v2979 = vpop.permute.xlu0 %2978
      %2980 = vrot.lane.b32.xlu0 %v2957, 32
      %v2981 = vpop.permute.xlu0 %2980
      %s2990 = sshra.s32 %s2853, 4
      %s2991 = sand.u32 %s2853, 15
      %s2992 = smul.addr %s2990, 8
      %s2993 = scalar_lea.vmem [#allocation3], %s2992
      %2994 = vst.msk [vmem:[%s2993] sm:$0xff] %vm1544, %v2967
      %2995 = vst.msk [vmem:[%s2993 + $0x8] sm:$0xff] %vm1544, %v2969
      %2996 = vst.msk [vmem:[%s2993 + $0x10] sm:$0xff] %vm1544, %v2971
      %2997 = vst.msk [vmem:[%s2993 + $0x18] sm:$0xff] %vm1544, %v2973
      %2998 = vst.msk [vmem:[%s2993 + $0x20] sm:$0xff] %vm1544, %v2975
      %2999 = vst.msk [vmem:[%s2993 + $0x28] sm:$0xff] %vm1544, %v2977
      %3000 = vst.msk [vmem:[%s2993 + $0x30] sm:$0xff] %vm1544, %v2979
      %3001 = vst.msk [vmem:[%s2993 + $0x38] sm:$0xff] %vm1544, %v2981
      %v3002 = vsel %vm2918, %v2819, %v2232
      %v3003 = vsel %vm2919, %v2820, %v2233
      %v3004 = vsel %vm2920, %v2821, %v2234
      %v3005 = vsel %vm2921, %v2822, %v2235
      %v3006 = vsel %vm2922, %v2823, %v2236
      %v3007 = vsel %vm2923, %v2824, %v2237
      %v3008 = vsel %vm2924, %v2825, %v2238
      %v3009 = vsel %vm2925, %v2826, %v2239
      %v3010 = vsel %vm2926, %v2827, %v2240
      %v3011 = vsel %vm2927, %v2828, %v2241
      %v3012 = vsel %vm2928, %v2829, %v2242
      %v3013 = vsel %vm2929, %v2830, %v2243
      %v3014 = vsel %vm2930, %v2831, %v2244
      %v3015 = vsel %vm2931, %v2832, %v2245
      %v3016 = vsel %vm2932, %v2833, %v2246
      %v3017 = vsel %vm2933, %v2834, %v2247
      %v3018 = vsel %vm2918, %v2723, %v2248
      %v3019 = vsel %vm2919, %v2724, %v2249
      %v3020 = vsel %vm2920, %v2725, %v2250
      %v3021 = vsel %vm2921, %v2726, %v2251
      %v3022 = vsel %vm2922, %v2727, %v2252
      %v3023 = vsel %vm2923, %v2728, %v2253
      %v3024 = vsel %vm2924, %v2729, %v2254
      %v3025 = vsel %vm2925, %v2730, %v2255
      %v3026 = vsel %vm2926, %v2731, %v2256
      %v3027 = vsel %vm2927, %v2732, %v2257
      %v3028 = vsel %vm2928, %v2733, %v2258
      %v3029 = vsel %vm2929, %v2734, %v2259
      %v3030 = vsel %vm2930, %v2735, %v2260
      %v3031 = vsel %vm2931, %v2736, %v2261
      %v3032 = vsel %vm2932, %v2737, %v2262
      %v3033 = vsel %vm2933, %v2738, %v2263
      %s3034 = sadd.s32 %s1482, 256
      %s3035 = scalar_lea.vmem [#allocation2], %s3034
      %v3036 = vld [vmem:[%s3035] sm:$0xff]
      %v3037 = vld [vmem:[%s3035 + $0x8] sm:$0xff]
      %v3038 = vld [vmem:[%s3035 + $0x10] sm:$0xff]
      %v3039 = vld [vmem:[%s3035 + $0x18] sm:$0xff]
      %v3040 = vld [vmem:[%s3035 + $0x20] sm:$0xff]
      %v3041 = vld [vmem:[%s3035 + $0x28] sm:$0xff]
      %v3042 = vld [vmem:[%s3035 + $0x30] sm:$0xff]
      %v3043 = vld [vmem:[%s3035 + $0x38] sm:$0xff]
      %v3044 = vld [vmem:[%s3035 + $0x40] sm:$0xff]
      %v3045 = vld [vmem:[%s3035 + $0x48] sm:$0xff]
      %v3046 = vld [vmem:[%s3035 + $0x50] sm:$0xff]
      %v3047 = vld [vmem:[%s3035 + $0x58] sm:$0xff]
      %v3048 = vld [vmem:[%s3035 + $0x60] sm:$0xff]
      %v3049 = vld [vmem:[%s3035 + $0x68] sm:$0xff]
      %v3050 = vld [vmem:[%s3035 + $0x70] sm:$0xff]
      %v3051 = vld [vmem:[%s3035 + $0x78] sm:$0xff]
      %v3052 = vpack.c.bf16 %v3003, %v3002
      %v3053 = vpack.c.bf16 %v3005, %v3004
      %v3054 = vpack.c.bf16 %v3007, %v3006
      %v3055 = vpack.c.bf16 %v3009, %v3008
      %v3056 = vpack.c.bf16 %v3011, %v3010
      %v3057 = vpack.c.bf16 %v3013, %v3012
      %v3058 = vpack.c.bf16 %v3015, %v3014
      %v3059 = vpack.c.bf16 %v3017, %v3016
      %3068 = vrot.lane.b32.xlu0 %v3052, 32
      %v3069 = vpop.permute.xlu0 %3068
      %3070 = vrot.lane.b32.xlu0 %v3053, 32
      %v3071 = vpop.permute.xlu0 %3070
      %3072 = vrot.lane.b32.xlu0 %v3054, 32
      %v3073 = vpop.permute.xlu0 %3072
      %3074 = vrot.lane.b32.xlu0 %v3055, 32
      %v3075 = vpop.permute.xlu0 %3074
      %3076 = vrot.lane.b32.xlu0 %v3056, 32
      %v3077 = vpop.permute.xlu0 %3076
      %3078 = vrot.lane.b32.xlu0 %v3057, 32
      %v3079 = vpop.permute.xlu0 %3078
      %3080 = vrot.lane.b32.xlu0 %v3058, 32
      %v3081 = vpop.permute.xlu0 %3080
      %3082 = vrot.lane.b32.xlu0 %v3059, 32
      %v3083 = vpop.permute.xlu0 %3082
      %v3085 = vsel %vm1544, %v3069, 0
      %v3088 = vsel %vm1544, %v3071, 0
      %v3091 = vsel %vm1544, %v3073, 0
      %v3094 = vsel %vm1544, %v3075, 0
      %v3097 = vsel %vm1544, %v3077, 0
      %v3100 = vsel %vm1544, %v3079, 0
      %v3103 = vsel %vm1544, %v3081, 0
      %v3106 = vsel %vm1544, %v3083, 0
      %3108 = vmatprep.subr.bf16.mxu0 0
      %3109 = vmatpush1.bf16.msra.mxu0 %v1540
      %3110 = vmatprep.subr.bf16.mxu0 0
      %3111 = vmatpush1.bf16.msra.mxu0 %v1541
      %3112 = vmatprep.subr.bf16.mxu0 0
      %3113 = vmatpush1.bf16.msra.mxu0 0
      %3114 = vmatprep.subr.bf16.mxu0 0
      %3115 = vmatpush1.bf16.msra.mxu0 0
      %3116 = vmatprep.subr.bf16.mxu0 0
      %3117 = vmatpush1.bf16.msra.mxu0 0
      %3118 = vmatprep.subr.bf16.mxu0 0
      %3119 = vmatpush1.bf16.msra.mxu0 0
      %3120 = vmatprep.subr.bf16.mxu0 0
      %3121 = vmatpush1.bf16.msra.mxu0 0
      %3122 = vmatprep.subr.bf16.mxu0 0
      %3123 = vmatpush1.bf16.msra.mxu0 0
      %3124 = vmatprep.subr.bf16.mxu0 0
      %3125 = vmatpush1.bf16.msra.mxu0 0
      %3126 = vmatprep.subr.bf16.mxu0 0
      %3127 = vmatpush1.bf16.msra.mxu0 0
      %3128 = vmatprep.subr.bf16.mxu0 0
      %3129 = vmatpush1.bf16.msra.mxu0 0
      %3130 = vmatprep.subr.bf16.mxu0 0
      %3131 = vmatpush1.bf16.msra.mxu0 0
      %3132 = vmatprep.subr.bf16.mxu0 0
      %3133 = vmatpush1.bf16.msra.mxu0 0
      %3134 = vmatprep.subr.bf16.mxu0 0
      %3135 = vmatpush1.bf16.msra.mxu0 0
      %3136 = vmatprep.subr.bf16.mxu0 0
      %3137 = vmatpush1.bf16.msra.mxu0 0
      %3138 = vmatprep.subr.bf16.mxu0 0
      %3139 = vmatpush1.bf16.msra.mxu0 0
      %3140 = vmatprep.mubr.bf16.mxu0 0
      %3141 = vmatmul.mubr.bf16.gmra.mrb[0].mxu0 %v3085
      %v3142 = vpop.f32.mrb[0].mxu0
      %v3143 = vadd.f32 0.0, %v3142
      %v3144 = vpop.f32.mrb[0].mxu0
      %v3145 = vpop.f32.mrb[0].mxu0
      %v3146 = vadd.f32 0.0, %v3145
      %v3147 = vpop.f32.mrb[0].mxu0
      %3148 = vmatprep.mubr.bf16.mxu0 0
      %3149 = vmatmul.mubr.bf16.gmra.mrb[0].mxu0 %v3088
      %v3150 = vpop.f32.mrb[0].mxu0
      %v3151 = vadd.f32 0.0, %v3150
      %v3152 = vpop.f32.mrb[0].mxu0
      %v3153 = vpop.f32.mrb[0].mxu0
      %v3154 = vadd.f32 0.0, %v3153
      %v3155 = vpop.f32.mrb[0].mxu0
      %3156 = vmatprep.mubr.bf16.mxu0 0
      %3157 = vmatmul.mubr.bf16.gmra.mrb[0].mxu0 %v3091
      %v3158 = vpop.f32.mrb[0].mxu0
      %v3159 = vadd.f32 0.0, %v3158
      %v3160 = vpop.f32.mrb[0].mxu0
      %v3161 = vpop.f32.mrb[0].mxu0
      %v3162 = vadd.f32 0.0, %v3161
      %v3163 = vpop.f32.mrb[0].mxu0
      %3164 = vmatprep.mubr.bf16.mxu0 0
      %3165 = vmatmul.mubr.bf16.gmra.mrb[0].mxu0 %v3094
      %v3166 = vpop.f32.mrb[0].mxu0
      %v3167 = vadd.f32 0.0, %v3166
      %v3168 = vpop.f32.mrb[0].mxu0
      %v3169 = vpop.f32.mrb[0].mxu0
      %v3170 = vadd.f32 0.0, %v3169
      %v3171 = vpop.f32.mrb[0].mxu0
      %3172 = vmatprep.mubr.bf16.mxu0 0
      %3173 = vmatmul.mubr.bf16.gmra.mrb[0].mxu0 %v3097
      %v3174 = vpop.f32.mrb[0].mxu0
      %v3175 = vadd.f32 0.0, %v3174
      %v3176 = vpop.f32.mrb[0].mxu0
      %v3177 = vpop.f32.mrb[0].mxu0
      %v3178 = vadd.f32 0.0, %v3177
      %v3179 = vpop.f32.mrb[0].mxu0
      %3180 = vmatprep.mubr.bf16.mxu0 0
      %3181 = vmatmul.mubr.bf16.gmra.mrb[0].mxu0 %v3100
      %v3182 = vpop.f32.mrb[0].mxu0
      %v3183 = vadd.f32 0.0, %v3182
      %v3184 = vpop.f32.mrb[0].mxu0
      %v3185 = vpop.f32.mrb[0].mxu0
      %v3186 = vadd.f32 0.0, %v3185
      %v3187 = vpop.f32.mrb[0].mxu0
      %3188 = vmatprep.mubr.bf16.mxu0 0
      %3189 = vmatmul.mubr.bf16.gmra.mrb[0].mxu0 %v3103
      %v3190 = vpop.f32.mrb[0].mxu0
      %v3191 = vadd.f32 0.0, %v3190
      %v3192 = vpop.f32.mrb[0].mxu0
      %v3193 = vpop.f32.mrb[0].mxu0
      %v3194 = vadd.f32 0.0, %v3193
      %v3195 = vpop.f32.mrb[0].mxu0
      %3196 = vmatprep.mubr.bf16.mxu0 0
      %3197 = vmatmul.mubr.bf16.gmra.mrb[0].mxu0 %v3106
      %v3198 = vpop.f32.mrb[0].mxu0
      %v3199 = vadd.f32 0.0, %v3198
      %v3200 = vpop.f32.mrb[0].mxu0
      %v3201 = vpop.f32.mrb[0].mxu0
      %v3202 = vadd.f32 0.0, %v3201
      %v3203 = vpop.f32.mrb[0].mxu0
      %3204 = vdwg.mxu0
      %v3205 = vadd.f32 %v3036, %v3143
      %v3206 = vadd.f32 %v3037, %v3146
      %v3207 = vadd.f32 %v3038, %v3151
      %v3208 = vadd.f32 %v3039, %v3154
      %v3209 = vadd.f32 %v3040, %v3159
      %v3210 = vadd.f32 %v3041, %v3162
      %v3211 = vadd.f32 %v3042, %v3167
      %v3212 = vadd.f32 %v3043, %v3170
      %v3213 = vadd.f32 %v3044, %v3175
      %v3214 = vadd.f32 %v3045, %v3178
      %v3215 = vadd.f32 %v3046, %v3183
      %v3216 = vadd.f32 %v3047, %v3186
      %v3217 = vadd.f32 %v3048, %v3191
      %v3218 = vadd.f32 %v3049, %v3194
      %v3219 = vadd.f32 %v3050, %v3199
      %v3220 = vadd.f32 %v3051, %v3202
      %v3221 = vxor.u32 %v3205, 2147483648
      %v3222 = vxor.u32 %v3206, 2147483648
      %v3223 = vxor.u32 %v3207, 2147483648
      %v3224 = vxor.u32 %v3208, 2147483648
      %v3225 = vxor.u32 %v3209, 2147483648
      %v3226 = vxor.u32 %v3210, 2147483648
      %v3227 = vxor.u32 %v3211, 2147483648
      %v3228 = vxor.u32 %v3212, 2147483648
      %v3229 = vxor.u32 %v3213, 2147483648
      %v3230 = vxor.u32 %v3214, 2147483648
      %v3231 = vxor.u32 %v3215, 2147483648
      %v3232 = vxor.u32 %v3216, 2147483648
      %v3233 = vxor.u32 %v3217, 2147483648
      %v3234 = vxor.u32 %v3218, 2147483648
      %v3235 = vxor.u32 %v3219, 2147483648
      %v3236 = vxor.u32 %v3220, 2147483648
      %v3237 = vmul.f32 %v3221, 1.442695
      %v3238 = vpow.pop %v3237
      %v3239 = vmul.f32 %v3222, 1.442695
      %v3240 = vpow.pop %v3239
      %v3241 = vmul.f32 %v3223, 1.442695
      %v3242 = vpow.pop %v3241
      %v3243 = vmul.f32 %v3224, 1.442695
      %v3244 = vpow.pop %v3243
      %v3245 = vmul.f32 %v3225, 1.442695
      %v3246 = vpow.pop %v3245
      %v3247 = vmul.f32 %v3226, 1.442695
      %v3248 = vpow.pop %v3247
      %v3249 = vmul.f32 %v3227, 1.442695
      %v3250 = vpow.pop %v3249
      %v3251 = vmul.f32 %v3228, 1.442695
      %v3252 = vpow.pop %v3251
      %v3253 = vmul.f32 %v3229, 1.442695
      %v3254 = vpow.pop %v3253
      %v3255 = vmul.f32 %v3230, 1.442695
      %v3256 = vpow.pop %v3255
      %v3257 = vmul.f32 %v3231, 1.442695
      %v3258 = vpow.pop %v3257
      %v3259 = vmul.f32 %v3232, 1.442695
      %v3260 = vpow.pop %v3259
      %v3261 = vmul.f32 %v3233, 1.442695
      %v3262 = vpow.pop %v3261
      %v3263 = vmul.f32 %v3234, 1.442695
      %v3264 = vpow.pop %v3263
      %v3265 = vmul.f32 %v3235, 1.442695
      %v3266 = vpow.pop %v3265
      %v3267 = vmul.f32 %v3236, 1.442695
      %v3268 = vpow.pop %v3267
      %v3269 = vadd.f32 %v3238, 1.0
      %v3270 = vadd.f32 %v3240, 1.0
      %v3271 = vadd.f32 %v3242, 1.0
      %v3272 = vadd.f32 %v3244, 1.0
      %v3273 = vadd.f32 %v3246, 1.0
      %v3274 = vadd.f32 %v3248, 1.0
      %v3275 = vadd.f32 %v3250, 1.0
      %v3276 = vadd.f32 %v3252, 1.0
      %v3277 = vadd.f32 %v3254, 1.0
      %v3278 = vadd.f32 %v3256, 1.0
      %v3279 = vadd.f32 %v3258, 1.0
      %v3280 = vadd.f32 %v3260, 1.0
      %v3281 = vadd.f32 %v3262, 1.0
      %v3282 = vadd.f32 %v3264, 1.0
      %v3283 = vadd.f32 %v3266, 1.0
      %v3284 = vadd.f32 %v3268, 1.0
      %v3285 = vrcp.pop %v3269
      %v3286 = vmul.f32 1.0, %v3285
      %v3287 = vrcp.pop %v3270
      %v3288 = vmul.f32 1.0, %v3287
      %v3289 = vrcp.pop %v3271
      %v3290 = vmul.f32 1.0, %v3289
      %v3291 = vrcp.pop %v3272
      %v3292 = vmul.f32 1.0, %v3291
      %v3293 = vrcp.pop %v3273
      %v3294 = vmul.f32 1.0, %v3293
      %v3295 = vrcp.pop %v3274
      %v3296 = vmul.f32 1.0, %v3295
      %v3297 = vrcp.pop %v3275
      %v3298 = vmul.f32 1.0, %v3297
      %v3299 = vrcp.pop %v3276
      %v3300 = vmul.f32 1.0, %v3299
      %v3301 = vrcp.pop %v3277
      %v3302 = vmul.f32 1.0, %v3301
      %v3303 = vrcp.pop %v3278
      %v3304 = vmul.f32 1.0, %v3303
      %v3305 = vrcp.pop %v3279
      %v3306 = vmul.f32 1.0, %v3305
      %v3307 = vrcp.pop %v3280
      %v3308 = vmul.f32 1.0, %v3307
      %v3309 = vrcp.pop %v3281
      %v3310 = vmul.f32 1.0, %v3309
      %v3311 = vrcp.pop %v3282
      %v3312 = vmul.f32 1.0, %v3311
      %v3313 = vrcp.pop %v3283
      %v3314 = vmul.f32 1.0, %v3313
      %v3315 = vrcp.pop %v3284
      %v3316 = vmul.f32 1.0, %v3315
      %v3317 = vtanh.pop %v3205
      %v3318 = vtanh.pop %v3206
      %v3319 = vtanh.pop %v3207
      %v3320 = vtanh.pop %v3208
      %v3321 = vtanh.pop %v3209
      %v3322 = vtanh.pop %v3210
      %v3323 = vtanh.pop %v3211
      %v3324 = vtanh.pop %v3212
      %v3325 = vtanh.pop %v3213
      %v3326 = vtanh.pop %v3214
      %v3327 = vtanh.pop %v3215
      %v3328 = vtanh.pop %v3216
      %v3329 = vtanh.pop %v3217
      %v3330 = vtanh.pop %v3218
      %v3331 = vtanh.pop %v3219
      %v3332 = vtanh.pop %v3220
      %v3333 = vmul.f32 %v3286, %v3018
      %v3334 = vmul.f32 %v3288, %v3019
      %v3335 = vmul.f32 %v3290, %v3020
      %v3336 = vmul.f32 %v3292, %v3021
      %v3337 = vmul.f32 %v3294, %v3022
      %v3338 = vmul.f32 %v3296, %v3023
      %v3339 = vmul.f32 %v3298, %v3024
      %v3340 = vmul.f32 %v3300, %v3025
      %v3341 = vmul.f32 %v3302, %v3026
      %v3342 = vmul.f32 %v3304, %v3027
      %v3343 = vmul.f32 %v3306, %v3028
      %v3344 = vmul.f32 %v3308, %v3029
      %v3345 = vmul.f32 %v3310, %v3030
      %v3346 = vmul.f32 %v3312, %v3031
      %v3347 = vmul.f32 %v3314, %v3032
      %v3348 = vmul.f32 %v3316, %v3033
      %3365 = vrot.lane.b32.xlu0 %v3317, 64
      %v3366 = vpop.permute.xlu0 %3365
      %3367 = vrot.lane.b32.xlu0 %v3318, 64
      %v3368 = vpop.permute.xlu0 %3367
      %3369 = vrot.lane.b32.xlu0 %v3319, 64
      %v3370 = vpop.permute.xlu0 %3369
      %3371 = vrot.lane.b32.xlu0 %v3320, 64
      %v3372 = vpop.permute.xlu0 %3371
      %3373 = vrot.lane.b32.xlu0 %v3321, 64
      %v3374 = vpop.permute.xlu0 %3373
      %3375 = vrot.lane.b32.xlu0 %v3322, 64
      %v3376 = vpop.permute.xlu0 %3375
      %3377 = vrot.lane.b32.xlu0 %v3323, 64
      %v3378 = vpop.permute.xlu0 %3377
      %3379 = vrot.lane.b32.xlu0 %v3324, 64
      %v3380 = vpop.permute.xlu0 %3379
      %3381 = vrot.lane.b32.xlu0 %v3325, 64
      %v3382 = vpop.permute.xlu0 %3381
      %3383 = vrot.lane.b32.xlu0 %v3326, 64
      %v3384 = vpop.permute.xlu0 %3383
      %3385 = vrot.lane.b32.xlu0 %v3327, 64
      %v3386 = vpop.permute.xlu0 %3385
      %3387 = vrot.lane.b32.xlu0 %v3328, 64
      %v3388 = vpop.permute.xlu0 %3387
      %3389 = vrot.lane.b32.xlu0 %v3329, 64
      %v3390 = vpop.permute.xlu0 %3389
      %3391 = vrot.lane.b32.xlu0 %v3330, 64
      %v3392 = vpop.permute.xlu0 %3391
      %3393 = vrot.lane.b32.xlu0 %v3331, 64
      %v3394 = vpop.permute.xlu0 %3393
      %3395 = vrot.lane.b32.xlu0 %v3332, 64
      %v3396 = vpop.permute.xlu0 %3395
      %v3413 = vmul.f32 %v3286, %v3366
      %v3414 = vmul.f32 %v3288, %v3368
      %v3415 = vmul.f32 %v3290, %v3370
      %v3416 = vmul.f32 %v3292, %v3372
      %v3417 = vmul.f32 %v3294, %v3374
      %v3418 = vmul.f32 %v3296, %v3376
      %v3419 = vmul.f32 %v3298, %v3378
      %v3420 = vmul.f32 %v3300, %v3380
      %v3421 = vmul.f32 %v3302, %v3382
      %v3422 = vmul.f32 %v3304, %v3384
      %v3423 = vmul.f32 %v3306, %v3386
      %v3424 = vmul.f32 %v3308, %v3388
      %v3425 = vmul.f32 %v3310, %v3390
      %v3426 = vmul.f32 %v3312, %v3392
      %v3427 = vmul.f32 %v3314, %v3394
      %v3428 = vmul.f32 %v3316, %v3396
      %3445 = vrot.lane.b32.xlu0 %v3413, 32
      %v3446 = vpop.permute.xlu0 %3445
      %3447 = vrot.lane.b32.xlu0 %v3414, 32
      %v3448 = vpop.permute.xlu0 %3447
      %3449 = vrot.lane.b32.xlu0 %v3415, 32
      %v3450 = vpop.permute.xlu0 %3449
      %3451 = vrot.lane.b32.xlu0 %v3416, 32
      %v3452 = vpop.permute.xlu0 %3451
      %3453 = vrot.lane.b32.xlu0 %v3417, 32
      %v3454 = vpop.permute.xlu0 %3453
      %3455 = vrot.lane.b32.xlu0 %v3418, 32
      %v3456 = vpop.permute.xlu0 %3455
      %3457 = vrot.lane.b32.xlu0 %v3419, 32
      %v3458 = vpop.permute.xlu0 %3457
      %3459 = vrot.lane.b32.xlu0 %v3420, 32
      %v3460 = vpop.permute.xlu0 %3459
      %3461 = vrot.lane.b32.xlu0 %v3421, 32
      %v3462 = vpop.permute.xlu0 %3461
      %3463 = vrot.lane.b32.xlu0 %v3422, 32
      %v3464 = vpop.permute.xlu0 %3463
      %3465 = vrot.lane.b32.xlu0 %v3423, 32
      %v3466 = vpop.permute.xlu0 %3465
      %3467 = vrot.lane.b32.xlu0 %v3424, 32
      %v3468 = vpop.permute.xlu0 %3467
      %3469 = vrot.lane.b32.xlu0 %v3425, 32
      %v3470 = vpop.permute.xlu0 %3469
      %3471 = vrot.lane.b32.xlu0 %v3426, 32
      %v3472 = vpop.permute.xlu0 %3471
      %3473 = vrot.lane.b32.xlu0 %v3427, 32
      %v3474 = vpop.permute.xlu0 %3473
      %3475 = vrot.lane.b32.xlu0 %v3428, 32
      %v3476 = vpop.permute.xlu0 %3475
      %v3493 = vadd.f32 %v3333, %v3446
      %v3494 = vadd.f32 %v3334, %v3448
      %v3495 = vadd.f32 %v3335, %v3450
      %v3496 = vadd.f32 %v3336, %v3452
      %v3497 = vadd.f32 %v3337, %v3454
      %v3498 = vadd.f32 %v3338, %v3456
      %v3499 = vadd.f32 %v3339, %v3458
      %v3500 = vadd.f32 %v3340, %v3460
      %v3501 = vadd.f32 %v3341, %v3462
      %v3502 = vadd.f32 %v3342, %v3464
      %v3503 = vadd.f32 %v3343, %v3466
      %v3504 = vadd.f32 %v3344, %v3468
      %v3505 = vadd.f32 %v3345, %v3470
      %v3506 = vadd.f32 %v3346, %v3472
      %v3507 = vadd.f32 %v3347, %v3474
      %v3508 = vadd.f32 %v3348, %v3476
      %v3509 = vtanh.pop %v3493
      %v3510 = vtanh.pop %v3494
      %v3511 = vtanh.pop %v3495
      %v3512 = vtanh.pop %v3496
      %v3513 = vtanh.pop %v3497
      %v3514 = vtanh.pop %v3498
      %v3515 = vtanh.pop %v3499
      %v3516 = vtanh.pop %v3500
      %v3517 = vtanh.pop %v3501
      %v3518 = vtanh.pop %v3502
      %v3519 = vtanh.pop %v3503
      %v3520 = vtanh.pop %v3504
      %v3521 = vtanh.pop %v3505
      %v3522 = vtanh.pop %v3506
      %v3523 = vtanh.pop %v3507
      %v3524 = vtanh.pop %v3508
      %3541 = vrot.lane.b32.xlu0 %v3509, 64
      %v3542 = vpop.permute.xlu0 %3541
      %3543 = vrot.lane.b32.xlu0 %v3510, 64
      %v3544 = vpop.permute.xlu0 %3543
      %3545 = vrot.lane.b32.xlu0 %v3511, 64
      %v3546 = vpop.permute.xlu0 %3545
      %3547 = vrot.lane.b32.xlu0 %v3512, 64
      %v3548 = vpop.permute.xlu0 %3547
      %3549 = vrot.lane.b32.xlu0 %v3513, 64
      %v3550 = vpop.permute.xlu0 %3549
      %3551 = vrot.lane.b32.xlu0 %v3514, 64
      %v3552 = vpop.permute.xlu0 %3551
      %3553 = vrot.lane.b32.xlu0 %v3515, 64
      %v3554 = vpop.permute.xlu0 %3553
      %3555 = vrot.lane.b32.xlu0 %v3516, 64
      %v3556 = vpop.permute.xlu0 %3555
      %3557 = vrot.lane.b32.xlu0 %v3517, 64
      %v3558 = vpop.permute.xlu0 %3557
      %3559 = vrot.lane.b32.xlu0 %v3518, 64
      %v3560 = vpop.permute.xlu0 %3559
      %3561 = vrot.lane.b32.xlu0 %v3519, 64
      %v3562 = vpop.permute.xlu0 %3561
      %3563 = vrot.lane.b32.xlu0 %v3520, 64
      %v3564 = vpop.permute.xlu0 %3563
      %3565 = vrot.lane.b32.xlu0 %v3521, 64
      %v3566 = vpop.permute.xlu0 %3565
      %3567 = vrot.lane.b32.xlu0 %v3522, 64
      %v3568 = vpop.permute.xlu0 %3567
      %3569 = vrot.lane.b32.xlu0 %v3523, 64
      %v3570 = vpop.permute.xlu0 %3569
      %3571 = vrot.lane.b32.xlu0 %v3524, 64
      %v3572 = vpop.permute.xlu0 %3571
      %v3589 = vmul.f32 %v3286, %v3542
      %v3590 = vmul.f32 %v3288, %v3544
      %v3591 = vmul.f32 %v3290, %v3546
      %v3592 = vmul.f32 %v3292, %v3548
      %v3593 = vmul.f32 %v3294, %v3550
      %v3594 = vmul.f32 %v3296, %v3552
      %v3595 = vmul.f32 %v3298, %v3554
      %v3596 = vmul.f32 %v3300, %v3556
      %v3597 = vmul.f32 %v3302, %v3558
      %v3598 = vmul.f32 %v3304, %v3560
      %v3599 = vmul.f32 %v3306, %v3562
      %v3600 = vmul.f32 %v3308, %v3564
      %v3601 = vmul.f32 %v3310, %v3566
      %v3602 = vmul.f32 %v3312, %v3568
      %v3603 = vmul.f32 %v3314, %v3570
      %v3604 = vmul.f32 %v3316, %v3572
      %s3605 = sadd.s32 %s1481, 2
      %v3606 = vstv %s3605
      %vm3607 = vcmp.lt.s32.totalorder %v3606, %v39
      %vm3608 = vcmp.lt.s32.totalorder %v3606, %v40
      %vm3609 = vcmp.lt.s32.totalorder %v3606, %v41
      %vm3610 = vcmp.lt.s32.totalorder %v3606, %v42
      %vm3611 = vcmp.lt.s32.totalorder %v3606, %v43
      %vm3612 = vcmp.lt.s32.totalorder %v3606, %v44
      %vm3613 = vcmp.lt.s32.totalorder %v3606, %v45
      %vm3614 = vcmp.lt.s32.totalorder %v3606, %v46
      %vm3615 = vcmp.lt.s32.totalorder %v3606, %v47
      %vm3616 = vcmp.lt.s32.totalorder %v3606, %v48
      %vm3617 = vcmp.lt.s32.totalorder %v3606, %v49
      %vm3618 = vcmp.lt.s32.totalorder %v3606, %v50
      %vm3619 = vcmp.lt.s32.totalorder %v3606, %v51
      %vm3620 = vcmp.lt.s32.totalorder %v3606, %v52
      %vm3621 = vcmp.lt.s32.totalorder %v3606, %v53
      %vm3622 = vcmp.lt.s32.totalorder %v3606, %v54
      %s3623 = smul.u32 %s3605, 128
      %v3624 = vsel %vm3607, 1, 0
      %v3625 = vsel %vm3608, 1, 0
      %v3626 = vsel %vm3609, 1, 0
      %v3627 = vsel %vm3610, 1, 0
      %v3628 = vsel %vm3611, 1, 0
      %v3629 = vsel %vm3612, 1, 0
      %v3630 = vsel %vm3613, 1, 0
      %v3631 = vsel %vm3614, 1, 0
      %v3632 = vsel %vm3615, 1, 0
      %v3633 = vsel %vm3616, 1, 0
      %v3634 = vsel %vm3617, 1, 0
      %v3635 = vsel %vm3618, 1, 0
      %v3636 = vsel %vm3619, 1, 0
      %v3637 = vsel %vm3620, 1, 0
      %v3638 = vsel %vm3621, 1, 0
      %v3639 = vsel %vm3622, 1, 0
      %3640 = vset.pattern.permute.xlu0 0
      %3641 = vperm.xlu0 %3640, %v3624
      %v3642 = vpop.permute.xlu0 %3641
      %3643 = vset.pattern.permute.xlu0 0
      %3644 = vperm.xlu0 %3643, %v3625
      %v3645 = vpop.permute.xlu0 %3644
      %3646 = vset.pattern.permute.xlu0 0
      %3647 = vperm.xlu0 %3646, %v3626
      %v3648 = vpop.permute.xlu0 %3647
      %3649 = vset.pattern.permute.xlu0 0
      %3650 = vperm.xlu0 %3649, %v3627
      %v3651 = vpop.permute.xlu0 %3650
      %3652 = vset.pattern.permute.xlu0 0
      %3653 = vperm.xlu0 %3652, %v3628
      %v3654 = vpop.permute.xlu0 %3653
      %3655 = vset.pattern.permute.xlu0 0
      %3656 = vperm.xlu0 %3655, %v3629
      %v3657 = vpop.permute.xlu0 %3656
      %3658 = vset.pattern.permute.xlu0 0
      %3659 = vperm.xlu0 %3658, %v3630
      %v3660 = vpop.permute.xlu0 %3659
      %3661 = vset.pattern.permute.xlu0 0
      %3662 = vperm.xlu0 %3661, %v3631
      %v3663 = vpop.permute.xlu0 %3662
      %3664 = vset.pattern.permute.xlu0 0
      %3665 = vperm.xlu0 %3664, %v3632
      %v3666 = vpop.permute.xlu0 %3665
      %3667 = vset.pattern.permute.xlu0 0
      %3668 = vperm.xlu0 %3667, %v3633
      %v3669 = vpop.permute.xlu0 %3668
      %3670 = vset.pattern.permute.xlu0 0
      %3671 = vperm.xlu0 %3670, %v3634
      %v3672 = vpop.permute.xlu0 %3671
      %3673 = vset.pattern.permute.xlu0 0
      %3674 = vperm.xlu0 %3673, %v3635
      %v3675 = vpop.permute.xlu0 %3674
      %3676 = vset.pattern.permute.xlu0 0
      %3677 = vperm.xlu0 %3676, %v3636
      %v3678 = vpop.permute.xlu0 %3677
      %3679 = vset.pattern.permute.xlu0 0
      %3680 = vperm.xlu0 %3679, %v3637
      %v3681 = vpop.permute.xlu0 %3680
      %3682 = vset.pattern.permute.xlu0 0
      %3683 = vperm.xlu0 %3682, %v3638
      %v3684 = vpop.permute.xlu0 %3683
      %3685 = vset.pattern.permute.xlu0 0
      %3686 = vperm.xlu0 %3685, %v3639
      %v3687 = vpop.permute.xlu0 %3686
      %vm3688 = vcmp.eq.s32.totalorder %v3642, 1
      %vm3689 = vcmp.eq.s32.totalorder %v3645, 1
      %vm3690 = vcmp.eq.s32.totalorder %v3648, 1
      %vm3691 = vcmp.eq.s32.totalorder %v3651, 1
      %vm3692 = vcmp.eq.s32.totalorder %v3654, 1
      %vm3693 = vcmp.eq.s32.totalorder %v3657, 1
      %vm3694 = vcmp.eq.s32.totalorder %v3660, 1
      %vm3695 = vcmp.eq.s32.totalorder %v3663, 1
      %vm3696 = vcmp.eq.s32.totalorder %v3666, 1
      %vm3697 = vcmp.eq.s32.totalorder %v3669, 1
      %vm3698 = vcmp.eq.s32.totalorder %v3672, 1
      %vm3699 = vcmp.eq.s32.totalorder %v3675, 1
      %vm3700 = vcmp.eq.s32.totalorder %v3678, 1
      %vm3701 = vcmp.eq.s32.totalorder %v3681, 1
      %vm3702 = vcmp.eq.s32.totalorder %v3684, 1
      %vm3703 = vcmp.eq.s32.totalorder %v3687, 1
      %v3704 = vsel %vm3688, %v3589, 0.0
      %v3705 = vsel %vm3689, %v3590, 0.0
      %v3706 = vsel %vm3690, %v3591, 0.0
      %v3707 = vsel %vm3691, %v3592, 0.0
      %v3708 = vsel %vm3692, %v3593, 0.0
      %v3709 = vsel %vm3693, %v3594, 0.0
      %v3710 = vsel %vm3694, %v3595, 0.0
      %v3711 = vsel %vm3695, %v3596, 0.0
      %v3712 = vsel %vm3696, %v3597, 0.0
      %v3713 = vsel %vm3697, %v3598, 0.0
      %v3714 = vsel %vm3698, %v3599, 0.0
      %v3715 = vsel %vm3699, %v3600, 0.0
      %v3716 = vsel %vm3700, %v3601, 0.0
      %v3717 = vsel %vm3701, %v3602, 0.0
      %v3718 = vsel %vm3702, %v3603, 0.0
      %v3719 = vsel %vm3703, %v3604, 0.0
      %v3720 = vpack.c.bf16 %v3705, %v3704
      %v3721 = vpack.c.bf16 %v3707, %v3706
      %v3722 = vpack.c.bf16 %v3709, %v3708
      %v3723 = vpack.c.bf16 %v3711, %v3710
      %v3724 = vpack.c.bf16 %v3713, %v3712
      %v3725 = vpack.c.bf16 %v3715, %v3714
      %v3726 = vpack.c.bf16 %v3717, %v3716
      %v3727 = vpack.c.bf16 %v3719, %v3718
      %3736 = vrot.lane.b32.xlu0 %v3720, 32
      %v3737 = vpop.permute.xlu0 %3736
      %3738 = vrot.lane.b32.xlu0 %v3721, 32
      %v3739 = vpop.permute.xlu0 %3738
      %3740 = vrot.lane.b32.xlu0 %v3722, 32
      %v3741 = vpop.permute.xlu0 %3740
      %3742 = vrot.lane.b32.xlu0 %v3723, 32
      %v3743 = vpop.permute.xlu0 %3742
      %3744 = vrot.lane.b32.xlu0 %v3724, 32
      %v3745 = vpop.permute.xlu0 %3744
      %3746 = vrot.lane.b32.xlu0 %v3725, 32
      %v3747 = vpop.permute.xlu0 %3746
      %3748 = vrot.lane.b32.xlu0 %v3726, 32
      %v3749 = vpop.permute.xlu0 %3748
      %3750 = vrot.lane.b32.xlu0 %v3727, 32
      %v3751 = vpop.permute.xlu0 %3750
      %s3760 = sshra.s32 %s3623, 4
      %s3761 = sand.u32 %s3623, 15
      %s3762 = smul.addr %s3760, 8
      %s3763 = scalar_lea.vmem [#allocation3], %s3762
      %3764 = vst.msk [vmem:[%s3763] sm:$0xff] %vm1544, %v3737
      %3765 = vst.msk [vmem:[%s3763 + $0x8] sm:$0xff] %vm1544, %v3739
      %3766 = vst.msk [vmem:[%s3763 + $0x10] sm:$0xff] %vm1544, %v3741
      %3767 = vst.msk [vmem:[%s3763 + $0x18] sm:$0xff] %vm1544, %v3743
      %3768 = vst.msk [vmem:[%s3763 + $0x20] sm:$0xff] %vm1544, %v3745
      %3769 = vst.msk [vmem:[%s3763 + $0x28] sm:$0xff] %vm1544, %v3747
      %3770 = vst.msk [vmem:[%s3763 + $0x30] sm:$0xff] %vm1544, %v3749
      %3771 = vst.msk [vmem:[%s3763 + $0x38] sm:$0xff] %vm1544, %v3751
      %v3772 = vsel %vm3688, %v3589, %v3002
      %v3773 = vsel %vm3689, %v3590, %v3003
      %v3774 = vsel %vm3690, %v3591, %v3004
      %v3775 = vsel %vm3691, %v3592, %v3005
      %v3776 = vsel %vm3692, %v3593, %v3006
      %v3777 = vsel %vm3693, %v3594, %v3007
      %v3778 = vsel %vm3694, %v3595, %v3008
      %v3779 = vsel %vm3695, %v3596, %v3009
      %v3780 = vsel %vm3696, %v3597, %v3010
      %v3781 = vsel %vm3697, %v3598, %v3011
      %v3782 = vsel %vm3698, %v3599, %v3012
      %v3783 = vsel %vm3699, %v3600, %v3013
      %v3784 = vsel %vm3700, %v3601, %v3014
      %v3785 = vsel %vm3701, %v3602, %v3015
      %v3786 = vsel %vm3702, %v3603, %v3016
      %v3787 = vsel %vm3703, %v3604, %v3017
      %v3788 = vsel %vm3688, %v3493, %v3018
      %v3789 = vsel %vm3689, %v3494, %v3019
      %v3790 = vsel %vm3690, %v3495, %v3020
      %v3791 = vsel %vm3691, %v3496, %v3021
      %v3792 = vsel %vm3692, %v3497, %v3022
      %v3793 = vsel %vm3693, %v3498, %v3023
      %v3794 = vsel %vm3694, %v3499, %v3024
      %v3795 = vsel %vm3695, %v3500, %v3025
      %v3796 = vsel %vm3696, %v3501, %v3026
      %v3797 = vsel %vm3697, %v3502, %v3027
      %v3798 = vsel %vm3698, %v3503, %v3028
      %v3799 = vsel %vm3699, %v3504, %v3029
      %v3800 = vsel %vm3700, %v3505, %v3030
      %v3801 = vsel %vm3701, %v3506, %v3031
      %v3802 = vsel %vm3702, %v3507, %v3032
      %v3803 = vsel %vm3703, %v3508, %v3033
      %s3804 = sadd.s32 %s1482, 384
      %s3805 = scalar_lea.vmem [#allocation2], %s3804
      %v3806 = vld [vmem:[%s3805] sm:$0xff]
      %v3807 = vld [vmem:[%s3805 + $0x8] sm:$0xff]
      %v3808 = vld [vmem:[%s3805 + $0x10] sm:$0xff]
      %v3809 = vld [vmem:[%s3805 + $0x18] sm:$0xff]
      %v3810 = vld [vmem:[%s3805 + $0x20] sm:$0xff]
      %v3811 = vld [vmem:[%s3805 + $0x28] sm:$0xff]
      %v3812 = vld [vmem:[%s3805 + $0x30] sm:$0xff]
      %v3813 = vld [vmem:[%s3805 + $0x38] sm:$0xff]
      %v3814 = vld [vmem:[%s3805 + $0x40] sm:$0xff]
      %v3815 = vld [vmem:[%s3805 + $0x48] sm:$0xff]
      %v3816 = vld [vmem:[%s3805 + $0x50] sm:$0xff]
      %v3817 = vld [vmem:[%s3805 + $0x58] sm:$0xff]
      %v3818 = vld [vmem:[%s3805 + $0x60] sm:$0xff]
      %v3819 = vld [vmem:[%s3805 + $0x68] sm:$0xff]
      %v3820 = vld [vmem:[%s3805 + $0x70] sm:$0xff]
      %v3821 = vld [vmem:[%s3805 + $0x78] sm:$0xff]
      %v3822 = vpack.c.bf16 %v3773, %v3772
      %v3823 = vpack.c.bf16 %v3775, %v3774
      %v3824 = vpack.c.bf16 %v3777, %v3776
      %v3825 = vpack.c.bf16 %v3779, %v3778
      %v3826 = vpack.c.bf16 %v3781, %v3780
      %v3827 = vpack.c.bf16 %v3783, %v3782
      %v3828 = vpack.c.bf16 %v3785, %v3784
      %v3829 = vpack.c.bf16 %v3787, %v3786
      %3838 = vrot.lane.b32.xlu0 %v3822, 32
      %v3839 = vpop.permute.xlu0 %3838
      %3840 = vrot.lane.b32.xlu0 %v3823, 32
      %v3841 = vpop.permute.xlu0 %3840
      %3842 = vrot.lane.b32.xlu0 %v3824, 32
      %v3843 = vpop.permute.xlu0 %3842
      %3844 = vrot.lane.b32.xlu0 %v3825, 32
      %v3845 = vpop.permute.xlu0 %3844
      %3846 = vrot.lane.b32.xlu0 %v3826, 32
      %v3847 = vpop.permute.xlu0 %3846
      %3848 = vrot.lane.b32.xlu0 %v3827, 32
      %v3849 = vpop.permute.xlu0 %3848
      %3850 = vrot.lane.b32.xlu0 %v3828, 32
      %v3851 = vpop.permute.xlu0 %3850
      %3852 = vrot.lane.b32.xlu0 %v3829, 32
      %v3853 = vpop.permute.xlu0 %3852
      %v3855 = vsel %vm1544, %v3839, 0
      %v3858 = vsel %vm1544, %v3841, 0
      %v3861 = vsel %vm1544, %v3843, 0
      %v3864 = vsel %vm1544, %v3845, 0
      %v3867 = vsel %vm1544, %v3847, 0
      %v3870 = vsel %vm1544, %v3849, 0
      %v3873 = vsel %vm1544, %v3851, 0
      %v3876 = vsel %vm1544, %v3853, 0
      %3878 = vmatprep.subr.bf16.mxu0 0
      %3879 = vmatpush1.bf16.msra.mxu0 %v1540
      %3880 = vmatprep.subr.bf16.mxu0 0
      %3881 = vmatpush1.bf16.msra.mxu0 %v1541
      %3882 = vmatprep.subr.bf16.mxu0 0
      %3883 = vmatpush1.bf16.msra.mxu0 0
      %3884 = vmatprep.subr.bf16.mxu0 0
      %3885 = vmatpush1.bf16.msra.mxu0 0
      %3886 = vmatprep.subr.bf16.mxu0 0
      %3887 = vmatpush1.bf16.msra.mxu0 0
      %3888 = vmatprep.subr.bf16.mxu0 0
      %3889 = vmatpush1.bf16.msra.mxu0 0
      %3890 = vmatprep.subr.bf16.mxu0 0
      %3891 = vmatpush1.bf16.msra.mxu0 0
      %3892 = vmatprep.subr.bf16.mxu0 0
      %3893 = vmatpush1.bf16.msra.mxu0 0
      %3894 = vmatprep.subr.bf16.mxu0 0
      %3895 = vmatpush1.bf16.msra.mxu0 0
      %3896 = vmatprep.subr.bf16.mxu0 0
      %3897 = vmatpush1.bf16.msra.mxu0 0
      %3898 = vmatprep.subr.bf16.mxu0 0
      %3899 = vmatpush1.bf16.msra.mxu0 0
      %3900 = vmatprep.subr.bf16.mxu0 0
      %3901 = vmatpush1.bf16.msra.mxu0 0
      %3902 = vmatprep.subr.bf16.mxu0 0
      %3903 = vmatpush1.bf16.msra.mxu0 0
      %3904 = vmatprep.subr.bf16.mxu0 0
      %3905 = vmatpush1.bf16.msra.mxu0 0
      %3906 = vmatprep.subr.bf16.mxu0 0
      %3907 = vmatpush1.bf16.msra.mxu0 0
      %3908 = vmatprep.subr.bf16.mxu0 0
      %3909 = vmatpush1.bf16.msra.mxu0 0
      %3910 = vmatprep.mubr.bf16.mxu0 0
      %3911 = vmatmul.mubr.bf16.gmra.mrb[0].mxu0 %v3855
      %v3912 = vpop.f32.mrb[0].mxu0
      %v3913 = vadd.f32 0.0, %v3912
      %v3914 = vpop.f32.mrb[0].mxu0
      %v3915 = vpop.f32.mrb[0].mxu0
      %v3916 = vadd.f32 0.0, %v3915
      %v3917 = vpop.f32.mrb[0].mxu0
      %3918 = vmatprep.mubr.bf16.mxu0 0
      %3919 = vmatmul.mubr.bf16.gmra.mrb[0].mxu0 %v3858
      %v3920 = vpop.f32.mrb[0].mxu0
      %v3921 = vadd.f32 0.0, %v3920
      %v3922 = vpop.f32.mrb[0].mxu0
      %v3923 = vpop.f32.mrb[0].mxu0
      %v3924 = vadd.f32 0.0, %v3923
      %v3925 = vpop.f32.mrb[0].mxu0
      %3926 = vmatprep.mubr.bf16.mxu0 0
      %3927 = vmatmul.mubr.bf16.gmra.mrb[0].mxu0 %v3861
      %v3928 = vpop.f32.mrb[0].mxu0
      %v3929 = vadd.f32 0.0, %v3928
      %v3930 = vpop.f32.mrb[0].mxu0
      %v3931 = vpop.f32.mrb[0].mxu0
      %v3932 = vadd.f32 0.0, %v3931
      %v3933 = vpop.f32.mrb[0].mxu0
      %3934 = vmatprep.mubr.bf16.mxu0 0
      %3935 = vmatmul.mubr.bf16.gmra.mrb[0].mxu0 %v3864
      %v3936 = vpop.f32.mrb[0].mxu0
      %v3937 = vadd.f32 0.0, %v3936
      %v3938 = vpop.f32.mrb[0].mxu0
      %v3939 = vpop.f32.mrb[0].mxu0
      %v3940 = vadd.f32 0.0, %v3939
      %v3941 = vpop.f32.mrb[0].mxu0
      %3942 = vmatprep.mubr.bf16.mxu0 0
      %3943 = vmatmul.mubr.bf16.gmra.mrb[0].mxu0 %v3867
      %v3944 = vpop.f32.mrb[0].mxu0
      %v3945 = vadd.f32 0.0, %v3944
      %v3946 = vpop.f32.mrb[0].mxu0
      %v3947 = vpop.f32.mrb[0].mxu0
      %v3948 = vadd.f32 0.0, %v3947
      %v3949 = vpop.f32.mrb[0].mxu0
      %3950 = vmatprep.mubr.bf16.mxu0 0
      %3951 = vmatmul.mubr.bf16.gmra.mrb[0].mxu0 %v3870
      %v3952 = vpop.f32.mrb[0].mxu0
      %v3953 = vadd.f32 0.0, %v3952
      %v3954 = vpop.f32.mrb[0].mxu0
      %v3955 = vpop.f32.mrb[0].mxu0
      %v3956 = vadd.f32 0.0, %v3955
      %v3957 = vpop.f32.mrb[0].mxu0
      %3958 = vmatprep.mubr.bf16.mxu0 0
      %3959 = vmatmul.mubr.bf16.gmra.mrb[0].mxu0 %v3873
      %v3960 = vpop.f32.mrb[0].mxu0
      %v3961 = vadd.f32 0.0, %v3960
      %v3962 = vpop.f32.mrb[0].mxu0
      %v3963 = vpop.f32.mrb[0].mxu0
      %v3964 = vadd.f32 0.0, %v3963
      %v3965 = vpop.f32.mrb[0].mxu0
      %3966 = vmatprep.mubr.bf16.mxu0 0
      %3967 = vmatmul.mubr.bf16.gmra.mrb[0].mxu0 %v3876
      %v3968 = vpop.f32.mrb[0].mxu0
      %v3969 = vadd.f32 0.0, %v3968
      %v3970 = vpop.f32.mrb[0].mxu0
      %v3971 = vpop.f32.mrb[0].mxu0
      %v3972 = vadd.f32 0.0, %v3971
      %v3973 = vpop.f32.mrb[0].mxu0
      %3974 = vdwg.mxu0
      %v3975 = vadd.f32 %v3806, %v3913
      %v3976 = vadd.f32 %v3807, %v3916
      %v3977 = vadd.f32 %v3808, %v3921
      %v3978 = vadd.f32 %v3809, %v3924
      %v3979 = vadd.f32 %v3810, %v3929
      %v3980 = vadd.f32 %v3811, %v3932
      %v3981 = vadd.f32 %v3812, %v3937
      %v3982 = vadd.f32 %v3813, %v3940
      %v3983 = vadd.f32 %v3814, %v3945
      %v3984 = vadd.f32 %v3815, %v3948
      %v3985 = vadd.f32 %v3816, %v3953
      %v3986 = vadd.f32 %v3817, %v3956
      %v3987 = vadd.f32 %v3818, %v3961
      %v3988 = vadd.f32 %v3819, %v3964
      %v3989 = vadd.f32 %v3820, %v3969
      %v3990 = vadd.f32 %v3821, %v3972
      %v3991 = vxor.u32 %v3975, 2147483648
      %v3992 = vxor.u32 %v3976, 2147483648
      %v3993 = vxor.u32 %v3977, 2147483648
      %v3994 = vxor.u32 %v3978, 2147483648
      %v3995 = vxor.u32 %v3979, 2147483648
      %v3996 = vxor.u32 %v3980, 2147483648
      %v3997 = vxor.u32 %v3981, 2147483648
      %v3998 = vxor.u32 %v3982, 2147483648
      %v3999 = vxor.u32 %v3983, 2147483648
      %v4000 = vxor.u32 %v3984, 2147483648
      %v4001 = vxor.u32 %v3985, 2147483648
      %v4002 = vxor.u32 %v3986, 2147483648
      %v4003 = vxor.u32 %v3987, 2147483648
      %v4004 = vxor.u32 %v3988, 2147483648
      %v4005 = vxor.u32 %v3989, 2147483648
      %v4006 = vxor.u32 %v3990, 2147483648
      %v4007 = vmul.f32 %v3991, 1.442695
      %v4008 = vpow.pop %v4007
      %v4009 = vmul.f32 %v3992, 1.442695
      %v4010 = vpow.pop %v4009
      %v4011 = vmul.f32 %v3993, 1.442695
      %v4012 = vpow.pop %v4011
      %v4013 = vmul.f32 %v3994, 1.442695
      %v4014 = vpow.pop %v4013
      %v4015 = vmul.f32 %v3995, 1.442695
      %v4016 = vpow.pop %v4015
      %v4017 = vmul.f32 %v3996, 1.442695
      %v4018 = vpow.pop %v4017
      %v4019 = vmul.f32 %v3997, 1.442695
      %v4020 = vpow.pop %v4019
      %v4021 = vmul.f32 %v3998, 1.442695
      %v4022 = vpow.pop %v4021
      %v4023 = vmul.f32 %v3999, 1.442695
      %v4024 = vpow.pop %v4023
      %v4025 = vmul.f32 %v4000, 1.442695
      %v4026 = vpow.pop %v4025
      %v4027 = vmul.f32 %v4001, 1.442695
      %v4028 = vpow.pop %v4027
      %v4029 = vmul.f32 %v4002, 1.442695
      %v4030 = vpow.pop %v4029
      %v4031 = vmul.f32 %v4003, 1.442695
      %v4032 = vpow.pop %v4031
      %v4033 = vmul.f32 %v4004, 1.442695
      %v4034 = vpow.pop %v4033
      %v4035 = vmul.f32 %v4005, 1.442695
      %v4036 = vpow.pop %v4035
      %v4037 = vmul.f32 %v4006, 1.442695
      %v4038 = vpow.pop %v4037
      %v4039 = vadd.f32 %v4008, 1.0
      %v4040 = vadd.f32 %v4010, 1.0
      %v4041 = vadd.f32 %v4012, 1.0
      %v4042 = vadd.f32 %v4014, 1.0
      %v4043 = vadd.f32 %v4016, 1.0
      %v4044 = vadd.f32 %v4018, 1.0
      %v4045 = vadd.f32 %v4020, 1.0
      %v4046 = vadd.f32 %v4022, 1.0
      %v4047 = vadd.f32 %v4024, 1.0
      %v4048 = vadd.f32 %v4026, 1.0
      %v4049 = vadd.f32 %v4028, 1.0
      %v4050 = vadd.f32 %v4030, 1.0
      %v4051 = vadd.f32 %v4032, 1.0
      %v4052 = vadd.f32 %v4034, 1.0
      %v4053 = vadd.f32 %v4036, 1.0
      %v4054 = vadd.f32 %v4038, 1.0
      %v4055 = vrcp.pop %v4039
      %v4056 = vmul.f32 1.0, %v4055
      %v4057 = vrcp.pop %v4040
      %v4058 = vmul.f32 1.0, %v4057
      %v4059 = vrcp.pop %v4041
      %v4060 = vmul.f32 1.0, %v4059
      %v4061 = vrcp.pop %v4042
      %v4062 = vmul.f32 1.0, %v4061
      %v4063 = vrcp.pop %v4043
      %v4064 = vmul.f32 1.0, %v4063
      %v4065 = vrcp.pop %v4044
      %v4066 = vmul.f32 1.0, %v4065
      %v4067 = vrcp.pop %v4045
      %v4068 = vmul.f32 1.0, %v4067
      %v4069 = vrcp.pop %v4046
      %v4070 = vmul.f32 1.0, %v4069
      %v4071 = vrcp.pop %v4047
      %v4072 = vmul.f32 1.0, %v4071
      %v4073 = vrcp.pop %v4048
      %v4074 = vmul.f32 1.0, %v4073
      %v4075 = vrcp.pop %v4049
      %v4076 = vmul.f32 1.0, %v4075
      %v4077 = vrcp.pop %v4050
      %v4078 = vmul.f32 1.0, %v4077
      %v4079 = vrcp.pop %v4051
      %v4080 = vmul.f32 1.0, %v4079
      %v4081 = vrcp.pop %v4052
      %v4082 = vmul.f32 1.0, %v4081
      %v4083 = vrcp.pop %v4053
      %v4084 = vmul.f32 1.0, %v4083
      %v4085 = vrcp.pop %v4054
      %v4086 = vmul.f32 1.0, %v4085
      %v4087 = vtanh.pop %v3975
      %v4088 = vtanh.pop %v3976
      %v4089 = vtanh.pop %v3977
      %v4090 = vtanh.pop %v3978
      %v4091 = vtanh.pop %v3979
      %v4092 = vtanh.pop %v3980
      %v4093 = vtanh.pop %v3981
      %v4094 = vtanh.pop %v3982
      %v4095 = vtanh.pop %v3983
      %v4096 = vtanh.pop %v3984
      %v4097 = vtanh.pop %v3985
      %v4098 = vtanh.pop %v3986
      %v4099 = vtanh.pop %v3987
      %v4100 = vtanh.pop %v3988
      %v4101 = vtanh.pop %v3989
      %v4102 = vtanh.pop %v3990
      %v4103 = vmul.f32 %v4056, %v3788
      %v4104 = vmul.f32 %v4058, %v3789
      %v4105 = vmul.f32 %v4060, %v3790
      %v4106 = vmul.f32 %v4062, %v3791
      %v4107 = vmul.f32 %v4064, %v3792
      %v4108 = vmul.f32 %v4066, %v3793
      %v4109 = vmul.f32 %v4068, %v3794
      %v4110 = vmul.f32 %v4070, %v3795
      %v4111 = vmul.f32 %v4072, %v3796
      %v4112 = vmul.f32 %v4074, %v3797
      %v4113 = vmul.f32 %v4076, %v3798
      %v4114 = vmul.f32 %v4078, %v3799
      %v4115 = vmul.f32 %v4080, %v3800
      %v4116 = vmul.f32 %v4082, %v3801
      %v4117 = vmul.f32 %v4084, %v3802
      %v4118 = vmul.f32 %v4086, %v3803
      %4135 = vrot.lane.b32.xlu0 %v4087, 64
      %v4136 = vpop.permute.xlu0 %4135
      %4137 = vrot.lane.b32.xlu0 %v4088, 64
      %v4138 = vpop.permute.xlu0 %4137
      %4139 = vrot.lane.b32.xlu0 %v4089, 64
      %v4140 = vpop.permute.xlu0 %4139
      %4141 = vrot.lane.b32.xlu0 %v4090, 64
      %v4142 = vpop.permute.xlu0 %4141
      %4143 = vrot.lane.b32.xlu0 %v4091, 64
      %v4144 = vpop.permute.xlu0 %4143
      %4145 = vrot.lane.b32.xlu0 %v4092, 64
      %v4146 = vpop.permute.xlu0 %4145
      %4147 = vrot.lane.b32.xlu0 %v4093, 64
      %v4148 = vpop.permute.xlu0 %4147
      %4149 = vrot.lane.b32.xlu0 %v4094, 64
      %v4150 = vpop.permute.xlu0 %4149
      %4151 = vrot.lane.b32.xlu0 %v4095, 64
      %v4152 = vpop.permute.xlu0 %4151
      %4153 = vrot.lane.b32.xlu0 %v4096, 64
      %v4154 = vpop.permute.xlu0 %4153
      %4155 = vrot.lane.b32.xlu0 %v4097, 64
      %v4156 = vpop.permute.xlu0 %4155
      %4157 = vrot.lane.b32.xlu0 %v4098, 64
      %v4158 = vpop.permute.xlu0 %4157
      %4159 = vrot.lane.b32.xlu0 %v4099, 64
      %v4160 = vpop.permute.xlu0 %4159
      %4161 = vrot.lane.b32.xlu0 %v4100, 64
      %v4162 = vpop.permute.xlu0 %4161
      %4163 = vrot.lane.b32.xlu0 %v4101, 64
      %v4164 = vpop.permute.xlu0 %4163
      %4165 = vrot.lane.b32.xlu0 %v4102, 64
      %v4166 = vpop.permute.xlu0 %4165
      %v4183 = vmul.f32 %v4056, %v4136
      %v4184 = vmul.f32 %v4058, %v4138
      %v4185 = vmul.f32 %v4060, %v4140
      %v4186 = vmul.f32 %v4062, %v4142
      %v4187 = vmul.f32 %v4064, %v4144
      %v4188 = vmul.f32 %v4066, %v4146
      %v4189 = vmul.f32 %v4068, %v4148
      %v4190 = vmul.f32 %v4070, %v4150
      %v4191 = vmul.f32 %v4072, %v4152
      %v4192 = vmul.f32 %v4074, %v4154
      %v4193 = vmul.f32 %v4076, %v4156
      %v4194 = vmul.f32 %v4078, %v4158
      %v4195 = vmul.f32 %v4080, %v4160
      %v4196 = vmul.f32 %v4082, %v4162
      %v4197 = vmul.f32 %v4084, %v4164
      %v4198 = vmul.f32 %v4086, %v4166
      %4215 = vrot.lane.b32.xlu0 %v4183, 32
      %v4216 = vpop.permute.xlu0 %4215
      %4217 = vrot.lane.b32.xlu0 %v4184, 32
      %v4218 = vpop.permute.xlu0 %4217
      %4219 = vrot.lane.b32.xlu0 %v4185, 32
      %v4220 = vpop.permute.xlu0 %4219
      %4221 = vrot.lane.b32.xlu0 %v4186, 32
      %v4222 = vpop.permute.xlu0 %4221
      %4223 = vrot.lane.b32.xlu0 %v4187, 32
      %v4224 = vpop.permute.xlu0 %4223
      %4225 = vrot.lane.b32.xlu0 %v4188, 32
      %v4226 = vpop.permute.xlu0 %4225
      %4227 = vrot.lane.b32.xlu0 %v4189, 32
      %v4228 = vpop.permute.xlu0 %4227
      %4229 = vrot.lane.b32.xlu0 %v4190, 32
      %v4230 = vpop.permute.xlu0 %4229
      %4231 = vrot.lane.b32.xlu0 %v4191, 32
      %v4232 = vpop.permute.xlu0 %4231
      %4233 = vrot.lane.b32.xlu0 %v4192, 32
      %v4234 = vpop.permute.xlu0 %4233
      %4235 = vrot.lane.b32.xlu0 %v4193, 32
      %v4236 = vpop.permute.xlu0 %4235
      %4237 = vrot.lane.b32.xlu0 %v4194, 32
      %v4238 = vpop.permute.xlu0 %4237
      %4239 = vrot.lane.b32.xlu0 %v4195, 32
      %v4240 = vpop.permute.xlu0 %4239
      %4241 = vrot.lane.b32.xlu0 %v4196, 32
      %v4242 = vpop.permute.xlu0 %4241
      %4243 = vrot.lane.b32.xlu0 %v4197, 32
      %v4244 = vpop.permute.xlu0 %4243
      %4245 = vrot.lane.b32.xlu0 %v4198, 32
      %v4246 = vpop.permute.xlu0 %4245
      %v4263 = vadd.f32 %v4103, %v4216
      %v4264 = vadd.f32 %v4104, %v4218
      %v4265 = vadd.f32 %v4105, %v4220
      %v4266 = vadd.f32 %v4106, %v4222
      %v4267 = vadd.f32 %v4107, %v4224
      %v4268 = vadd.f32 %v4108, %v4226
      %v4269 = vadd.f32 %v4109, %v4228
      %v4270 = vadd.f32 %v4110, %v4230
      %v4271 = vadd.f32 %v4111, %v4232
      %v4272 = vadd.f32 %v4112, %v4234
      %v4273 = vadd.f32 %v4113, %v4236
      %v4274 = vadd.f32 %v4114, %v4238
      %v4275 = vadd.f32 %v4115, %v4240
      %v4276 = vadd.f32 %v4116, %v4242
      %v4277 = vadd.f32 %v4117, %v4244
      %v4278 = vadd.f32 %v4118, %v4246
      %v4279 = vtanh.pop %v4263
      %v4280 = vtanh.pop %v4264
      %v4281 = vtanh.pop %v4265
      %v4282 = vtanh.pop %v4266
      %v4283 = vtanh.pop %v4267
      %v4284 = vtanh.pop %v4268
      %v4285 = vtanh.pop %v4269
      %v4286 = vtanh.pop %v4270
      %v4287 = vtanh.pop %v4271
      %v4288 = vtanh.pop %v4272
      %v4289 = vtanh.pop %v4273
      %v4290 = vtanh.pop %v4274
      %v4291 = vtanh.pop %v4275
      %v4292 = vtanh.pop %v4276
      %v4293 = vtanh.pop %v4277
      %v4294 = vtanh.pop %v4278
      %4311 = vrot.lane.b32.xlu0 %v4279, 64
      %v4312 = vpop.permute.xlu0 %4311
      %4313 = vrot.lane.b32.xlu0 %v4280, 64
      %v4314 = vpop.permute.xlu0 %4313
      %4315 = vrot.lane.b32.xlu0 %v4281, 64
      %v4316 = vpop.permute.xlu0 %4315
      %4317 = vrot.lane.b32.xlu0 %v4282, 64
      %v4318 = vpop.permute.xlu0 %4317
      %4319 = vrot.lane.b32.xlu0 %v4283, 64
      %v4320 = vpop.permute.xlu0 %4319
      %4321 = vrot.lane.b32.xlu0 %v4284, 64
      %v4322 = vpop.permute.xlu0 %4321
      %4323 = vrot.lane.b32.xlu0 %v4285, 64
      %v4324 = vpop.permute.xlu0 %4323
      %4325 = vrot.lane.b32.xlu0 %v4286, 64
      %v4326 = vpop.permute.xlu0 %4325
      %4327 = vrot.lane.b32.xlu0 %v4287, 64
      %v4328 = vpop.permute.xlu0 %4327
      %4329 = vrot.lane.b32.xlu0 %v4288, 64
      %v4330 = vpop.permute.xlu0 %4329
      %4331 = vrot.lane.b32.xlu0 %v4289, 64
      %v4332 = vpop.permute.xlu0 %4331
      %4333 = vrot.lane.b32.xlu0 %v4290, 64
      %v4334 = vpop.permute.xlu0 %4333
      %4335 = vrot.lane.b32.xlu0 %v4291, 64
      %v4336 = vpop.permute.xlu0 %4335
      %4337 = vrot.lane.b32.xlu0 %v4292, 64
      %v4338 = vpop.permute.xlu0 %4337
      %4339 = vrot.lane.b32.xlu0 %v4293, 64
      %v4340 = vpop.permute.xlu0 %4339
      %4341 = vrot.lane.b32.xlu0 %v4294, 64
      %v4342 = vpop.permute.xlu0 %4341
      %v4359 = vmul.f32 %v4056, %v4312
      %v4360 = vmul.f32 %v4058, %v4314
      %v4361 = vmul.f32 %v4060, %v4316
      %v4362 = vmul.f32 %v4062, %v4318
      %v4363 = vmul.f32 %v4064, %v4320
      %v4364 = vmul.f32 %v4066, %v4322
      %v4365 = vmul.f32 %v4068, %v4324
      %v4366 = vmul.f32 %v4070, %v4326
      %v4367 = vmul.f32 %v4072, %v4328
      %v4368 = vmul.f32 %v4074, %v4330
      %v4369 = vmul.f32 %v4076, %v4332
      %v4370 = vmul.f32 %v4078, %v4334
      %v4371 = vmul.f32 %v4080, %v4336
      %v4372 = vmul.f32 %v4082, %v4338
      %v4373 = vmul.f32 %v4084, %v4340
      %v4374 = vmul.f32 %v4086, %v4342
      %s4375 = sadd.s32 %s1481, 3
      %v4376 = vstv %s4375
      %vm4377 = vcmp.lt.s32.totalorder %v4376, %v39
      %vm4378 = vcmp.lt.s32.totalorder %v4376, %v40
      %vm4379 = vcmp.lt.s32.totalorder %v4376, %v41
      %vm4380 = vcmp.lt.s32.totalorder %v4376, %v42
      %vm4381 = vcmp.lt.s32.totalorder %v4376, %v43
      %vm4382 = vcmp.lt.s32.totalorder %v4376, %v44
      %vm4383 = vcmp.lt.s32.totalorder %v4376, %v45
      %vm4384 = vcmp.lt.s32.totalorder %v4376, %v46
      %vm4385 = vcmp.lt.s32.totalorder %v4376, %v47
      %vm4386 = vcmp.lt.s32.totalorder %v4376, %v48
      %vm4387 = vcmp.lt.s32.totalorder %v4376, %v49
      %vm4388 = vcmp.lt.s32.totalorder %v4376, %v50
      %vm4389 = vcmp.lt.s32.totalorder %v4376, %v51
      %vm4390 = vcmp.lt.s32.totalorder %v4376, %v52
      %vm4391 = vcmp.lt.s32.totalorder %v4376, %v53
      %vm4392 = vcmp.lt.s32.totalorder %v4376, %v54
      %s4393 = smul.u32 %s4375, 128
      %v4394 = vsel %vm4377, 1, 0
      %v4395 = vsel %vm4378, 1, 0
      %v4396 = vsel %vm4379, 1, 0
      %v4397 = vsel %vm4380, 1, 0
      %v4398 = vsel %vm4381, 1, 0
      %v4399 = vsel %vm4382, 1, 0
      %v4400 = vsel %vm4383, 1, 0
      %v4401 = vsel %vm4384, 1, 0
      %v4402 = vsel %vm4385, 1, 0
      %v4403 = vsel %vm4386, 1, 0
      %v4404 = vsel %vm4387, 1, 0
      %v4405 = vsel %vm4388, 1, 0
      %v4406 = vsel %vm4389, 1, 0
      %v4407 = vsel %vm4390, 1, 0
      %v4408 = vsel %vm4391, 1, 0
      %v4409 = vsel %vm4392, 1, 0
      %4410 = vset.pattern.permute.xlu0 0
      %4411 = vperm.xlu0 %4410, %v4394
      %v4412 = vpop.permute.xlu0 %4411
      %4413 = vset.pattern.permute.xlu0 0
      %4414 = vperm.xlu0 %4413, %v4395
      %v4415 = vpop.permute.xlu0 %4414
      %4416 = vset.pattern.permute.xlu0 0
      %4417 = vperm.xlu0 %4416, %v4396
      %v4418 = vpop.permute.xlu0 %4417
      %4419 = vset.pattern.permute.xlu0 0
      %4420 = vperm.xlu0 %4419, %v4397
      %v4421 = vpop.permute.xlu0 %4420
      %4422 = vset.pattern.permute.xlu0 0
      %4423 = vperm.xlu0 %4422, %v4398
      %v4424 = vpop.permute.xlu0 %4423
      %4425 = vset.pattern.permute.xlu0 0
      %4426 = vperm.xlu0 %4425, %v4399
      %v4427 = vpop.permute.xlu0 %4426
      %4428 = vset.pattern.permute.xlu0 0
      %4429 = vperm.xlu0 %4428, %v4400
      %v4430 = vpop.permute.xlu0 %4429
      %4431 = vset.pattern.permute.xlu0 0
      %4432 = vperm.xlu0 %4431, %v4401
      %v4433 = vpop.permute.xlu0 %4432
      %4434 = vset.pattern.permute.xlu0 0
      %4435 = vperm.xlu0 %4434, %v4402
      %v4436 = vpop.permute.xlu0 %4435
      %4437 = vset.pattern.permute.xlu0 0
      %4438 = vperm.xlu0 %4437, %v4403
      %v4439 = vpop.permute.xlu0 %4438
      %4440 = vset.pattern.permute.xlu0 0
      %4441 = vperm.xlu0 %4440, %v4404
      %v4442 = vpop.permute.xlu0 %4441
      %4443 = vset.pattern.permute.xlu0 0
      %4444 = vperm.xlu0 %4443, %v4405
      %v4445 = vpop.permute.xlu0 %4444
      %4446 = vset.pattern.permute.xlu0 0
      %4447 = vperm.xlu0 %4446, %v4406
      %v4448 = vpop.permute.xlu0 %4447
      %4449 = vset.pattern.permute.xlu0 0
      %4450 = vperm.xlu0 %4449, %v4407
      %v4451 = vpop.permute.xlu0 %4450
      %4452 = vset.pattern.permute.xlu0 0
      %4453 = vperm.xlu0 %4452, %v4408
      %v4454 = vpop.permute.xlu0 %4453
      %4455 = vset.pattern.permute.xlu0 0
      %4456 = vperm.xlu0 %4455, %v4409
      %v4457 = vpop.permute.xlu0 %4456
      %vm4458 = vcmp.eq.s32.totalorder %v4412, 1
      %vm4459 = vcmp.eq.s32.totalorder %v4415, 1
      %vm4460 = vcmp.eq.s32.totalorder %v4418, 1
      %vm4461 = vcmp.eq.s32.totalorder %v4421, 1
      %vm4462 = vcmp.eq.s32.totalorder %v4424, 1
      %vm4463 = vcmp.eq.s32.totalorder %v4427, 1
      %vm4464 = vcmp.eq.s32.totalorder %v4430, 1
      %vm4465 = vcmp.eq.s32.totalorder %v4433, 1
      %vm4466 = vcmp.eq.s32.totalorder %v4436, 1
      %vm4467 = vcmp.eq.s32.totalorder %v4439, 1
      %vm4468 = vcmp.eq.s32.totalorder %v4442, 1
      %vm4469 = vcmp.eq.s32.totalorder %v4445, 1
      %vm4470 = vcmp.eq.s32.totalorder %v4448, 1
      %vm4471 = vcmp.eq.s32.totalorder %v4451, 1
      %vm4472 = vcmp.eq.s32.totalorder %v4454, 1
      %vm4473 = vcmp.eq.s32.totalorder %v4457, 1
      %v4474 = vsel %vm4458, %v4359, 0.0
      %v4475 = vsel %vm4459, %v4360, 0.0
      %v4476 = vsel %vm4460, %v4361, 0.0
      %v4477 = vsel %vm4461, %v4362, 0.0
      %v4478 = vsel %vm4462, %v4363, 0.0
      %v4479 = vsel %vm4463, %v4364, 0.0
      %v4480 = vsel %vm4464, %v4365, 0.0
      %v4481 = vsel %vm4465, %v4366, 0.0
      %v4482 = vsel %vm4466, %v4367, 0.0
      %v4483 = vsel %vm4467, %v4368, 0.0
      %v4484 = vsel %vm4468, %v4369, 0.0
      %v4485 = vsel %vm4469, %v4370, 0.0
      %v4486 = vsel %vm4470, %v4371, 0.0
      %v4487 = vsel %vm4471, %v4372, 0.0
      %v4488 = vsel %vm4472, %v4373, 0.0
      %v4489 = vsel %vm4473, %v4374, 0.0
      %v4490 = vpack.c.bf16 %v4475, %v4474
      %v4491 = vpack.c.bf16 %v4477, %v4476
      %v4492 = vpack.c.bf16 %v4479, %v4478
      %v4493 = vpack.c.bf16 %v4481, %v4480
      %v4494 = vpack.c.bf16 %v4483, %v4482
      %v4495 = vpack.c.bf16 %v4485, %v4484
      %v4496 = vpack.c.bf16 %v4487, %v4486
      %v4497 = vpack.c.bf16 %v4489, %v4488
      %4506 = vrot.lane.b32.xlu0 %v4490, 32
      %v4507 = vpop.permute.xlu0 %4506
      %4508 = vrot.lane.b32.xlu0 %v4491, 32
      %v4509 = vpop.permute.xlu0 %4508
      %4510 = vrot.lane.b32.xlu0 %v4492, 32
      %v4511 = vpop.permute.xlu0 %4510
      %4512 = vrot.lane.b32.xlu0 %v4493, 32
      %v4513 = vpop.permute.xlu0 %4512
      %4514 = vrot.lane.b32.xlu0 %v4494, 32
      %v4515 = vpop.permute.xlu0 %4514
      %4516 = vrot.lane.b32.xlu0 %v4495, 32
      %v4517 = vpop.permute.xlu0 %4516
      %4518 = vrot.lane.b32.xlu0 %v4496, 32
      %v4519 = vpop.permute.xlu0 %4518
      %4520 = vrot.lane.b32.xlu0 %v4497, 32
      %v4521 = vpop.permute.xlu0 %4520
      %s4530 = sshra.s32 %s4393, 4
      %s4531 = sand.u32 %s4393, 15
      %s4532 = smul.addr %s4530, 8
      %s4533 = scalar_lea.vmem [#allocation3], %s4532
      %4534 = vst.msk [vmem:[%s4533] sm:$0xff] %vm1544, %v4507
      %4535 = vst.msk [vmem:[%s4533 + $0x8] sm:$0xff] %vm1544, %v4509
      %4536 = vst.msk [vmem:[%s4533 + $0x10] sm:$0xff] %vm1544, %v4511
      %4537 = vst.msk [vmem:[%s4533 + $0x18] sm:$0xff] %vm1544, %v4513
      %4538 = vst.msk [vmem:[%s4533 + $0x20] sm:$0xff] %vm1544, %v4515
      %4539 = vst.msk [vmem:[%s4533 + $0x28] sm:$0xff] %vm1544, %v4517
      %4540 = vst.msk [vmem:[%s4533 + $0x30] sm:$0xff] %vm1544, %v4519
      %4541 = vst.msk [vmem:[%s4533 + $0x38] sm:$0xff] %vm1544, %v4521
      %v4542 = vsel %vm4458, %v4359, %v3772
      %v4543 = vsel %vm4459, %v4360, %v3773
      %v4544 = vsel %vm4460, %v4361, %v3774
      %v4545 = vsel %vm4461, %v4362, %v3775
      %v4546 = vsel %vm4462, %v4363, %v3776
      %v4547 = vsel %vm4463, %v4364, %v3777
      %v4548 = vsel %vm4464, %v4365, %v3778
      %v4549 = vsel %vm4465, %v4366, %v3779
      %v4550 = vsel %vm4466, %v4367, %v3780
      %v4551 = vsel %vm4467, %v4368, %v3781
      %v4552 = vsel %vm4468, %v4369, %v3782
      %v4553 = vsel %vm4469, %v4370, %v3783
      %v4554 = vsel %vm4470, %v4371, %v3784
      %v4555 = vsel %vm4471, %v4372, %v3785
      %v4556 = vsel %vm4472, %v4373, %v3786
      %v4557 = vsel %vm4473, %v4374, %v3787
      %v4558 = vsel %vm4458, %v4263, %v3788
      %v4559 = vsel %vm4459, %v4264, %v3789
      %v4560 = vsel %vm4460, %v4265, %v3790
      %v4561 = vsel %vm4461, %v4266, %v3791
      %v4562 = vsel %vm4462, %v4267, %v3792
      %v4563 = vsel %vm4463, %v4268, %v3793
      %v4564 = vsel %vm4464, %v4269, %v3794
      %v4565 = vsel %vm4465, %v4270, %v3795
      %v4566 = vsel %vm4466, %v4271, %v3796
      %v4567 = vsel %vm4467, %v4272, %v3797
      %v4568 = vsel %vm4468, %v4273, %v3798
      %v4569 = vsel %vm4469, %v4274, %v3799
      %v4570 = vsel %vm4470, %v4275, %v3800
      %v4571 = vsel %vm4471, %v4276, %v3801
      %v4572 = vsel %vm4472, %v4277, %v3802
      %v4573 = vsel %vm4473, %v4278, %v3803
    $region46: #{tpu_custom_call.1} parent=1 // loop_footer
      %s750 = sadd.s32 1, %s746
    $region47: #{tpu_custom_call.1} parent=1 // loop_footer_branch
      %745 = sbr.rel target = $region43
    $region48: #{tpu_custom_call.1} parent=1 // loop_exit
      _
    %4590 = vrot.lane.b32.xlu0 %v751, 32
    %v4591 = vpop.permute.xlu0 %4590
    %4592 = vrot.lane.b32.xlu0 %v752, 32
    %v4593 = vpop.permute.xlu0 %4592
    %4594 = vrot.lane.b32.xlu0 %v753, 32
    %v4595 = vpop.permute.xlu0 %4594
    %4596 = vrot.lane.b32.xlu0 %v754, 32
    %v4597 = vpop.permute.xlu0 %4596
    %4598 = vrot.lane.b32.xlu0 %v755, 32
    %v4599 = vpop.permute.xlu0 %4598
    %4600 = vrot.lane.b32.xlu0 %v756, 32
    %v4601 = vpop.permute.xlu0 %4600
    %4602 = vrot.lane.b32.xlu0 %v757, 32
    %v4603 = vpop.permute.xlu0 %4602
    %4604 = vrot.lane.b32.xlu0 %v758, 32
    %v4605 = vpop.permute.xlu0 %4604
    %4606 = vrot.lane.b32.xlu0 %v759, 32
    %v4607 = vpop.permute.xlu0 %4606
    %4608 = vrot.lane.b32.xlu0 %v760, 32
    %v4609 = vpop.permute.xlu0 %4608
    %4610 = vrot.lane.b32.xlu0 %v761, 32
    %v4611 = vpop.permute.xlu0 %4610
    %4612 = vrot.lane.b32.xlu0 %v762, 32
    %v4613 = vpop.permute.xlu0 %4612
    %4614 = vrot.lane.b32.xlu0 %v763, 32
    %v4615 = vpop.permute.xlu0 %4614
    %4616 = vrot.lane.b32.xlu0 %v764, 32
    %v4617 = vpop.permute.xlu0 %4616
    %4618 = vrot.lane.b32.xlu0 %v765, 32
    %v4619 = vpop.permute.xlu0 %4618
    %4620 = vrot.lane.b32.xlu0 %v766, 32
    %v4621 = vpop.permute.xlu0 %4620
    %vm4638 = vcmask 261120
    %4639 = vst.msk [vmem:[%s11] sm:$0xff] %vm4638, %v4591
    %4640 = vst.msk [vmem:[%s11 + $0x8] sm:$0xff] %vm4638, %v4593
    %4641 = vst.msk [vmem:[%s11 + $0x10] sm:$0xff] %vm4638, %v4595
    %4642 = vst.msk [vmem:[%s11 + $0x18] sm:$0xff] %vm4638, %v4597
    %4643 = vst.msk [vmem:[%s11 + $0x20] sm:$0xff] %vm4638, %v4599
    %4644 = vst.msk [vmem:[%s11 + $0x28] sm:$0xff] %vm4638, %v4601
    %4645 = vst.msk [vmem:[%s11 + $0x30] sm:$0xff] %vm4638, %v4603
    %4646 = vst.msk [vmem:[%s11 + $0x38] sm:$0xff] %vm4638, %v4605
    %4647 = vst.msk [vmem:[%s11 + $0x40] sm:$0xff] %vm4638, %v4607
    %4648 = vst.msk [vmem:[%s11 + $0x48] sm:$0xff] %vm4638, %v4609
    %4649 = vst.msk [vmem:[%s11 + $0x50] sm:$0xff] %vm4638, %v4611
    %4650 = vst.msk [vmem:[%s11 + $0x58] sm:$0xff] %vm4638, %v4613
    %4651 = vst.msk [vmem:[%s11 + $0x60] sm:$0xff] %vm4638, %v4615
    %4652 = vst.msk [vmem:[%s11 + $0x68] sm:$0xff] %vm4638, %v4617
    %4653 = vst.msk [vmem:[%s11 + $0x70] sm:$0xff] %vm4638, %v4619
    %4654 = vst.msk [vmem:[%s11 + $0x78] sm:$0xff] %vm4638, %v4621
    %vm4655 = vcmask 523520
    %4656 = vst.msk [vmem:[%s11] sm:$0xff] %vm4655, %v767
    %4657 = vst.msk [vmem:[%s11 + $0x8] sm:$0xff] %vm4655, %v768
    %4658 = vst.msk [vmem:[%s11 + $0x10] sm:$0xff] %vm4655, %v769
    %4659 = vst.msk [vmem:[%s11 + $0x18] sm:$0xff] %vm4655, %v770
    %4660 = vst.msk [vmem:[%s11 + $0x20] sm:$0xff] %vm4655, %v771
    %4661 = vst.msk [vmem:[%s11 + $0x28] sm:$0xff] %vm4655, %v772
    %4662 = vst.msk [vmem:[%s11 + $0x30] sm:$0xff] %vm4655, %v773
    %4663 = vst.msk [vmem:[%s11 + $0x38] sm:$0xff] %vm4655, %v774
    %4664 = vst.msk [vmem:[%s11 + $0x40] sm:$0xff] %vm4655, %v775
    %4665 = vst.msk [vmem:[%s11 + $0x48] sm:$0xff] %vm4655, %v776
    %4666 = vst.msk [vmem:[%s11 + $0x50] sm:$0xff] %vm4655, %v777
    %4667 = vst.msk [vmem:[%s11 + $0x58] sm:$0xff] %vm4655, %v778
    %4668 = vst.msk [vmem:[%s11 + $0x60] sm:$0xff] %vm4655, %v779
    %4669 = vst.msk [vmem:[%s11 + $0x68] sm:$0xff] %vm4655, %v780
    %4670 = vst.msk [vmem:[%s11 + $0x70] sm:$0xff] %vm4655, %v781
    %4671 = vst.msk [vmem:[%s11 + $0x78] sm:$0xff] %vm4655, %v782
    %v4672 = vld [vmem:[%s5] sm:$0xf]
    %v4673 = vld [vmem:[%s5 + $0x4] sm:$0xf]
    %v4674 = vld [vmem:[%s5 + $0x8] sm:$0xf]
    %v4675 = vld [vmem:[%s5 + $0xc] sm:$0xf]
    %v4676 = vld [vmem:[%s6] sm:$0xf]
    %v4677 = vld [vmem:[%s6 + $0x4] sm:$0xf]
    %v4678 = vld [vmem:[%s6 + $0x8] sm:$0xf]
    %v4679 = vld [vmem:[%s6 + $0xc] sm:$0xf]
    %v4680 = vld [vmem:[%s7] sm:$0x1]
    %v4681 = vld [vmem:[#allocation3] sm:$0xff]
    %v4682 = vld [vmem:[#allocation3 + $0x8] sm:$0xff]
    %v4683 = vld [vmem:[#allocation3 + $0x10] sm:$0xff]
    %v4684 = vld [vmem:[#allocation3 + $0x18] sm:$0xff]
    %v4685 = vld [vmem:[#allocation3 + $0x20] sm:$0xff]
    %v4686 = vld [vmem:[#allocation3 + $0x28] sm:$0xff]
    %v4687 = vld [vmem:[#allocation3 + $0x30] sm:$0xff]
    %v4688 = vld [vmem:[#allocation3 + $0x38] sm:$0xff]
    %v4689 = vld [vmem:[#allocation3 + $0x40] sm:$0xff]
    %v4690 = vld [vmem:[#allocation3 + $0x48] sm:$0xff]
    %v4691 = vld [vmem:[#allocation3 + $0x50] sm:$0xff]
    %v4692 = vld [vmem:[#allocation3 + $0x58] sm:$0xff]
    %v4693 = vld [vmem:[#allocation3 + $0x60] sm:$0xff]
    %v4694 = vld [vmem:[#allocation3 + $0x68] sm:$0xff]
    %v4695 = vld [vmem:[#allocation3 + $0x70] sm:$0xff]
    %v4696 = vld [vmem:[#allocation3 + $0x78] sm:$0xff]
    %v4697 = vld [vmem:[#allocation3 + $0x80] sm:$0xff]
    %v4698 = vld [vmem:[#allocation3 + $0x88] sm:$0xff]
    %v4699 = vld [vmem:[#allocation3 + $0x90] sm:$0xff]
    %v4700 = vld [vmem:[#allocation3 + $0x98] sm:$0xff]
    %v4701 = vld [vmem:[#allocation3 + $0xa0] sm:$0xff]
    %v4702 = vld [vmem:[#allocation3 + $0xa8] sm:$0xff]
    %v4703 = vld [vmem:[#allocation3 + $0xb0] sm:$0xff]
    %v4704 = vld [vmem:[#allocation3 + $0xb8] sm:$0xff]
    %v4705 = vld [vmem:[#allocation3 + $0xc0] sm:$0xff]
    %v4706 = vld [vmem:[#allocation3 + $0xc8] sm:$0xff]
    %v4707 = vld [vmem:[#allocation3 + $0xd0] sm:$0xff]
    %v4708 = vld [vmem:[#allocation3 + $0xd8] sm:$0xff]
    %v4709 = vld [vmem:[#allocation3 + $0xe0] sm:$0xff]
    %v4710 = vld [vmem:[#allocation3 + $0xe8] sm:$0xff]
    %v4711 = vld [vmem:[#allocation3 + $0xf0] sm:$0xff]
    %v4712 = vld [vmem:[#allocation3 + $0xf8] sm:$0xff]
    %v4714 = vlaneseq
    %v4715 = vshrl.u32 %v4714, 7
    %v4716 = vsub.s32 0, %v4715
    %v4717 = vrot.slane %v4680, %v4716
    %v4723 = vunpack.c.l.b16 %v4672
    %v4724 = vunpack.c.l.b16 %v4673
    %v4725 = vunpack.c.l.b16 %v4674
    %v4726 = vunpack.c.l.b16 %v4675
    %v4727 = vpack.c.b16 %v4724, %v4723
    %v4728 = vpack.c.b16 %v4726, %v4725
    %v4732 = vsel %vm4638, %v4681, 0
    %v4735 = vsel %vm4638, %v4682, 0
    %v4738 = vsel %vm4638, %v4683, 0
    %v4741 = vsel %vm4638, %v4684, 0
    %v4744 = vsel %vm4638, %v4685, 0
    %v4747 = vsel %vm4638, %v4686, 0
    %v4750 = vsel %vm4638, %v4687, 0
    %v4753 = vsel %vm4638, %v4688, 0
    %v4756 = vsel %vm4638, %v4689, 0
    %v4759 = vsel %vm4638, %v4690, 0
    %v4762 = vsel %vm4638, %v4691, 0
    %v4765 = vsel %vm4638, %v4692, 0
    %v4768 = vsel %vm4638, %v4693, 0
    %v4771 = vsel %vm4638, %v4694, 0
    %v4774 = vsel %vm4638, %v4695, 0
    %v4777 = vsel %vm4638, %v4696, 0
    %v4780 = vsel %vm4638, %v4697, 0
    %v4783 = vsel %vm4638, %v4698, 0
    %v4786 = vsel %vm4638, %v4699, 0
    %v4789 = vsel %vm4638, %v4700, 0
    %v4792 = vsel %vm4638, %v4701, 0
    %v4795 = vsel %vm4638, %v4702, 0
    %v4798 = vsel %vm4638, %v4703, 0
    %v4801 = vsel %vm4638, %v4704, 0
    %v4804 = vsel %vm4638, %v4705, 0
    %v4807 = vsel %vm4638, %v4706, 0
    %v4810 = vsel %vm4638, %v4707, 0
    %v4813 = vsel %vm4638, %v4708, 0
    %v4816 = vsel %vm4638, %v4709, 0
    %v4819 = vsel %vm4638, %v4710, 0
    %v4822 = vsel %vm4638, %v4711, 0
    %v4825 = vsel %vm4638, %v4712, 0
    %4827 = vmatprep.subr.bf16.mxu0 0
    %4828 = vmatpush1.bf16.msra.mxu0 %v4727
    %4829 = vmatprep.subr.bf16.mxu0 0
    %4830 = vmatpush1.bf16.msra.mxu0 %v4728
    %4831 = vmatprep.subr.bf16.mxu0 0
    %4832 = vmatpush1.bf16.msra.mxu0 0
    %4833 = vmatprep.subr.bf16.mxu0 0
    %4834 = vmatpush1.bf16.msra.mxu0 0
    %4835 = vmatprep.subr.bf16.mxu0 0
    %4836 = vmatpush1.bf16.msra.mxu0 0
    %4837 = vmatprep.subr.bf16.mxu0 0
    %4838 = vmatpush1.bf16.msra.mxu0 0
    %4839 = vmatprep.subr.bf16.mxu0 0
    %4840 = vmatpush1.bf16.msra.mxu0 0
    %4841 = vmatprep.subr.bf16.mxu0 0
    %4842 = vmatpush1.bf16.msra.mxu0 0
    %4843 = vmatprep.subr.bf16.mxu0 0
    %4844 = vmatpush1.bf16.msra.mxu0 0
    %4845 = vmatprep.subr.bf16.mxu0 0
    %4846 = vmatpush1.bf16.msra.mxu0 0
    %4847 = vmatprep.subr.bf16.mxu0 0
    %4848 = vmatpush1.bf16.msra.mxu0 0
    %4849 = vmatprep.subr.bf16.mxu0 0
    %4850 = vmatpush1.bf16.msra.mxu0 0
    %4851 = vmatprep.subr.bf16.mxu0 0
    %4852 = vmatpush1.bf16.msra.mxu0 0
    %4853 = vmatprep.subr.bf16.mxu0 0
    %4854 = vmatpush1.bf16.msra.mxu0 0
    %4855 = vmatprep.subr.bf16.mxu0 0
    %4856 = vmatpush1.bf16.msra.mxu0 0
    %4857 = vmatprep.subr.bf16.mxu0 0
    %4858 = vmatpush1.bf16.msra.mxu0 0
    %4859 = vmatprep.mubr.bf16.mxu0 0
    %4860 = vmatmul.mubr.bf16.gmra.mrb[0].mxu0 %v4732
    %v4861 = vpop.f32.mrb[0].mxu0
    %v4862 = vadd.f32 %v4717, %v4861
    %v4863 = vpop.f32.mrb[0].mxu0
    %v4864 = vpop.f32.mrb[0].mxu0
    %v4865 = vadd.f32 %v4717, %v4864
    %v4866 = vpop.f32.mrb[0].mxu0
    %4867 = vmatprep.mubr.bf16.mxu0 0
    %4868 = vmatmul.mubr.bf16.gmra.mrb[0].mxu0 %v4735
    %v4869 = vpop.f32.mrb[0].mxu0
    %v4870 = vadd.f32 %v4717, %v4869
    %v4871 = vpop.f32.mrb[0].mxu0
    %v4872 = vpop.f32.mrb[0].mxu0
    %v4873 = vadd.f32 %v4717, %v4872
    %v4874 = vpop.f32.mrb[0].mxu0
    %4875 = vmatprep.mubr.bf16.mxu0 0
    %4876 = vmatmul.mubr.bf16.gmra.mrb[0].mxu0 %v4738
    %v4877 = vpop.f32.mrb[0].mxu0
    %v4878 = vadd.f32 %v4717, %v4877
    %v4879 = vpop.f32.mrb[0].mxu0
    %v4880 = vpop.f32.mrb[0].mxu0
    %v4881 = vadd.f32 %v4717, %v4880
    %v4882 = vpop.f32.mrb[0].mxu0
    %4883 = vmatprep.mubr.bf16.mxu0 0
    %4884 = vmatmul.mubr.bf16.gmra.mrb[0].mxu0 %v4741
    %v4885 = vpop.f32.mrb[0].mxu0
    %v4886 = vadd.f32 %v4717, %v4885
    %v4887 = vpop.f32.mrb[0].mxu0
    %v4888 = vpop.f32.mrb[0].mxu0
    %v4889 = vadd.f32 %v4717, %v4888
    %v4890 = vpop.f32.mrb[0].mxu0
    %4891 = vmatprep.mubr.bf16.mxu0 0
    %4892 = vmatmul.mubr.bf16.gmra.mrb[0].mxu0 %v4744
    %v4893 = vpop.f32.mrb[0].mxu0
    %v4894 = vadd.f32 %v4717, %v4893
    %v4895 = vpop.f32.mrb[0].mxu0
    %v4896 = vpop.f32.mrb[0].mxu0
    %v4897 = vadd.f32 %v4717, %v4896
    %v4898 = vpop.f32.mrb[0].mxu0
    %4899 = vmatprep.mubr.bf16.mxu0 0
    %4900 = vmatmul.mubr.bf16.gmra.mrb[0].mxu0 %v4747
    %v4901 = vpop.f32.mrb[0].mxu0
    %v4902 = vadd.f32 %v4717, %v4901
    %v4903 = vpop.f32.mrb[0].mxu0
    %v4904 = vpop.f32.mrb[0].mxu0
    %v4905 = vadd.f32 %v4717, %v4904
    %v4906 = vpop.f32.mrb[0].mxu0
    %4907 = vmatprep.mubr.bf16.mxu0 0
    %4908 = vmatmul.mubr.bf16.gmra.mrb[0].mxu0 %v4750
    %v4909 = vpop.f32.mrb[0].mxu0
    %v4910 = vadd.f32 %v4717, %v4909
    %v4911 = vpop.f32.mrb[0].mxu0
    %v4912 = vpop.f32.mrb[0].mxu0
    %v4913 = vadd.f32 %v4717, %v4912
    %v4914 = vpop.f32.mrb[0].mxu0
    %4915 = vmatprep.mubr.bf16.mxu0 0
    %4916 = vmatmul.mubr.bf16.gmra.mrb[0].mxu0 %v4753
    %v4917 = vpop.f32.mrb[0].mxu0
    %v4918 = vadd.f32 %v4717, %v4917
    %v4919 = vpop.f32.mrb[0].mxu0
    %v4920 = vpop.f32.mrb[0].mxu0
    %v4921 = vadd.f32 %v4717, %v4920
    %v4922 = vpop.f32.mrb[0].mxu0
    %4923 = vmatprep.mubr.bf16.mxu0 0
    %4924 = vmatmul.mubr.bf16.gmra.mrb[0].mxu0 %v4756
    %v4925 = vpop.f32.mrb[0].mxu0
    %v4926 = vadd.f32 %v4717, %v4925
    %v4927 = vpop.f32.mrb[0].mxu0
    %v4928 = vpop.f32.mrb[0].mxu0
    %v4929 = vadd.f32 %v4717, %v4928
    %v4930 = vpop.f32.mrb[0].mxu0
    %4931 = vmatprep.mubr.bf16.mxu0 0
    %4932 = vmatmul.mubr.bf16.gmra.mrb[0].mxu0 %v4759
    %v4933 = vpop.f32.mrb[0].mxu0
    %v4934 = vadd.f32 %v4717, %v4933
    %v4935 = vpop.f32.mrb[0].mxu0
    %v4936 = vpop.f32.mrb[0].mxu0
    %v4937 = vadd.f32 %v4717, %v4936
    %v4938 = vpop.f32.mrb[0].mxu0
    %4939 = vmatprep.mubr.bf16.mxu0 0
    %4940 = vmatmul.mubr.bf16.gmra.mrb[0].mxu0 %v4762
    %v4941 = vpop.f32.mrb[0].mxu0
    %v4942 = vadd.f32 %v4717, %v4941
    %v4943 = vpop.f32.mrb[0].mxu0
    %v4944 = vpop.f32.mrb[0].mxu0
    %v4945 = vadd.f32 %v4717, %v4944
    %v4946 = vpop.f32.mrb[0].mxu0
    %4947 = vmatprep.mubr.bf16.mxu0 0
    %4948 = vmatmul.mubr.bf16.gmra.mrb[0].mxu0 %v4765
    %v4949 = vpop.f32.mrb[0].mxu0
    %v4950 = vadd.f32 %v4717, %v4949
    %v4951 = vpop.f32.mrb[0].mxu0
    %v4952 = vpop.f32.mrb[0].mxu0
    %v4953 = vadd.f32 %v4717, %v4952
    %v4954 = vpop.f32.mrb[0].mxu0
    %4955 = vmatprep.mubr.bf16.mxu0 0
    %4956 = vmatmul.mubr.bf16.gmra.mrb[0].mxu0 %v4768
    %v4957 = vpop.f32.mrb[0].mxu0
    %v4958 = vadd.f32 %v4717, %v4957
    %v4959 = vpop.f32.mrb[0].mxu0
    %v4960 = vpop.f32.mrb[0].mxu0
    %v4961 = vadd.f32 %v4717, %v4960
    %v4962 = vpop.f32.mrb[0].mxu0
    %4963 = vmatprep.mubr.bf16.mxu0 0
    %4964 = vmatmul.mubr.bf16.gmra.mrb[0].mxu0 %v4771
    %v4965 = vpop.f32.mrb[0].mxu0
    %v4966 = vadd.f32 %v4717, %v4965
    %v4967 = vpop.f32.mrb[0].mxu0
    %v4968 = vpop.f32.mrb[0].mxu0
    %v4969 = vadd.f32 %v4717, %v4968
    %v4970 = vpop.f32.mrb[0].mxu0
    %4971 = vmatprep.mubr.bf16.mxu0 0
    %4972 = vmatmul.mubr.bf16.gmra.mrb[0].mxu0 %v4774
    %v4973 = vpop.f32.mrb[0].mxu0
    %v4974 = vadd.f32 %v4717, %v4973
    %v4975 = vpop.f32.mrb[0].mxu0
    %v4976 = vpop.f32.mrb[0].mxu0
    %v4977 = vadd.f32 %v4717, %v4976
    %v4978 = vpop.f32.mrb[0].mxu0
    %4979 = vmatprep.mubr.bf16.mxu0 0
    %4980 = vmatmul.mubr.bf16.gmra.mrb[0].mxu0 %v4777
    %v4981 = vpop.f32.mrb[0].mxu0
    %v4982 = vadd.f32 %v4717, %v4981
    %v4983 = vpop.f32.mrb[0].mxu0
    %v4984 = vpop.f32.mrb[0].mxu0
    %v4985 = vadd.f32 %v4717, %v4984
    %v4986 = vpop.f32.mrb[0].mxu0
    %4987 = vmatprep.mubr.bf16.mxu0 0
    %4988 = vmatmul.mubr.bf16.gmra.mrb[0].mxu0 %v4780
    %v4989 = vpop.f32.mrb[0].mxu0
    %v4990 = vadd.f32 %v4717, %v4989
    %v4991 = vpop.f32.mrb[0].mxu0
    %v4992 = vpop.f32.mrb[0].mxu0
    %v4993 = vadd.f32 %v4717, %v4992
    %v4994 = vpop.f32.mrb[0].mxu0
    %4995 = vmatprep.mubr.bf16.mxu0 0
    %4996 = vmatmul.mubr.bf16.gmra.mrb[0].mxu0 %v4783
    %v4997 = vpop.f32.mrb[0].mxu0
    %v4998 = vadd.f32 %v4717, %v4997
    %v4999 = vpop.f32.mrb[0].mxu0
    %v5000 = vpop.f32.mrb[0].mxu0
    %v5001 = vadd.f32 %v4717, %v5000
    %v5002 = vpop.f32.mrb[0].mxu0
    %5003 = vmatprep.mubr.bf16.mxu0 0
    %5004 = vmatmul.mubr.bf16.gmra.mrb[0].mxu0 %v4786
    %v5005 = vpop.f32.mrb[0].mxu0
    %v5006 = vadd.f32 %v4717, %v5005
    %v5007 = vpop.f32.mrb[0].mxu0
    %v5008 = vpop.f32.mrb[0].mxu0
    %v5009 = vadd.f32 %v4717, %v5008
    %v5010 = vpop.f32.mrb[0].mxu0
    %5011 = vmatprep.mubr.bf16.mxu0 0
    %5012 = vmatmul.mubr.bf16.gmra.mrb[0].mxu0 %v4789
    %v5013 = vpop.f32.mrb[0].mxu0
    %v5014 = vadd.f32 %v4717, %v5013
    %v5015 = vpop.f32.mrb[0].mxu0
    %v5016 = vpop.f32.mrb[0].mxu0
    %v5017 = vadd.f32 %v4717, %v5016
    %v5018 = vpop.f32.mrb[0].mxu0
    %5019 = vmatprep.mubr.bf16.mxu0 0
    %5020 = vmatmul.mubr.bf16.gmra.mrb[0].mxu0 %v4792
    %v5021 = vpop.f32.mrb[0].mxu0
    %v5022 = vadd.f32 %v4717, %v5021
    %v5023 = vpop.f32.mrb[0].mxu0
    %v5024 = vpop.f32.mrb[0].mxu0
    %v5025 = vadd.f32 %v4717, %v5024
    %v5026 = vpop.f32.mrb[0].mxu0
    %5027 = vmatprep.mubr.bf16.mxu0 0
    %5028 = vmatmul.mubr.bf16.gmra.mrb[0].mxu0 %v4795
    %v5029 = vpop.f32.mrb[0].mxu0
    %v5030 = vadd.f32 %v4717, %v5029
    %v5031 = vpop.f32.mrb[0].mxu0
    %v5032 = vpop.f32.mrb[0].mxu0
    %v5033 = vadd.f32 %v4717, %v5032
    %v5034 = vpop.f32.mrb[0].mxu0
    %5035 = vmatprep.mubr.bf16.mxu0 0
    %5036 = vmatmul.mubr.bf16.gmra.mrb[0].mxu0 %v4798
    %v5037 = vpop.f32.mrb[0].mxu0
    %v5038 = vadd.f32 %v4717, %v5037
    %v5039 = vpop.f32.mrb[0].mxu0
    %v5040 = vpop.f32.mrb[0].mxu0
    %v5041 = vadd.f32 %v4717, %v5040
    %v5042 = vpop.f32.mrb[0].mxu0
    %5043 = vmatprep.mubr.bf16.mxu0 0
    %5044 = vmatmul.mubr.bf16.gmra.mrb[0].mxu0 %v4801
    %v5045 = vpop.f32.mrb[0].mxu0
    %v5046 = vadd.f32 %v4717, %v5045
    %v5047 = vpop.f32.mrb[0].mxu0
    %v5048 = vpop.f32.mrb[0].mxu0
    %v5049 = vadd.f32 %v4717, %v5048
    %v5050 = vpop.f32.mrb[0].mxu0
    %5051 = vmatprep.mubr.bf16.mxu0 0
    %5052 = vmatmul.mubr.bf16.gmra.mrb[0].mxu0 %v4804
    %v5053 = vpop.f32.mrb[0].mxu0
    %v5054 = vadd.f32 %v4717, %v5053
    %v5055 = vpop.f32.mrb[0].mxu0
    %v5056 = vpop.f32.mrb[0].mxu0
    %v5057 = vadd.f32 %v4717, %v5056
    %v5058 = vpop.f32.mrb[0].mxu0
    %5059 = vmatprep.mubr.bf16.mxu0 0
    %5060 = vmatmul.mubr.bf16.gmra.mrb[0].mxu0 %v4807
    %v5061 = vpop.f32.mrb[0].mxu0
    %v5062 = vadd.f32 %v4717, %v5061
    %v5063 = vpop.f32.mrb[0].mxu0
    %v5064 = vpop.f32.mrb[0].mxu0
    %v5065 = vadd.f32 %v4717, %v5064
    %v5066 = vpop.f32.mrb[0].mxu0
    %5067 = vmatprep.mubr.bf16.mxu0 0
    %5068 = vmatmul.mubr.bf16.gmra.mrb[0].mxu0 %v4810
    %v5069 = vpop.f32.mrb[0].mxu0
    %v5070 = vadd.f32 %v4717, %v5069
    %v5071 = vpop.f32.mrb[0].mxu0
    %v5072 = vpop.f32.mrb[0].mxu0
    %v5073 = vadd.f32 %v4717, %v5072
    %v5074 = vpop.f32.mrb[0].mxu0
    %5075 = vmatprep.mubr.bf16.mxu0 0
    %5076 = vmatmul.mubr.bf16.gmra.mrb[0].mxu0 %v4813
    %v5077 = vpop.f32.mrb[0].mxu0
    %v5078 = vadd.f32 %v4717, %v5077
    %v5079 = vpop.f32.mrb[0].mxu0
    %v5080 = vpop.f32.mrb[0].mxu0
    %v5081 = vadd.f32 %v4717, %v5080
    %v5082 = vpop.f32.mrb[0].mxu0
    %5083 = vmatprep.mubr.bf16.mxu0 0
    %5084 = vmatmul.mubr.bf16.gmra.mrb[0].mxu0 %v4816
    %v5085 = vpop.f32.mrb[0].mxu0
    %v5086 = vadd.f32 %v4717, %v5085
    %v5087 = vpop.f32.mrb[0].mxu0
    %v5088 = vpop.f32.mrb[0].mxu0
    %v5089 = vadd.f32 %v4717, %v5088
    %v5090 = vpop.f32.mrb[0].mxu0
    %5091 = vmatprep.mubr.bf16.mxu0 0
    %5092 = vmatmul.mubr.bf16.gmra.mrb[0].mxu0 %v4819
    %v5093 = vpop.f32.mrb[0].mxu0
    %v5094 = vadd.f32 %v4717, %v5093
    %v5095 = vpop.f32.mrb[0].mxu0
    %v5096 = vpop.f32.mrb[0].mxu0
    %v5097 = vadd.f32 %v4717, %v5096
    %v5098 = vpop.f32.mrb[0].mxu0
    %5099 = vmatprep.mubr.bf16.mxu0 0
    %5100 = vmatmul.mubr.bf16.gmra.mrb[0].mxu0 %v4822
    %v5101 = vpop.f32.mrb[0].mxu0
    %v5102 = vadd.f32 %v4717, %v5101
    %v5103 = vpop.f32.mrb[0].mxu0
    %v5104 = vpop.f32.mrb[0].mxu0
    %v5105 = vadd.f32 %v4717, %v5104
    %v5106 = vpop.f32.mrb[0].mxu0
    %5107 = vmatprep.mubr.bf16.mxu0 0
    %5108 = vmatmul.mubr.bf16.gmra.mrb[0].mxu0 %v4825
    %v5109 = vpop.f32.mrb[0].mxu0
    %v5110 = vadd.f32 %v4717, %v5109
    %v5111 = vpop.f32.mrb[0].mxu0
    %v5112 = vpop.f32.mrb[0].mxu0
    %v5113 = vadd.f32 %v4717, %v5112
    %v5114 = vpop.f32.mrb[0].mxu0
    %5115 = vdwg.mxu0
    %5116 = vst [vmem:[#allocation2] sm:$0xff] %v4862
    %5117 = vst [vmem:[#allocation2 + $0x8] sm:$0xff] %v4865
    %5118 = vst [vmem:[#allocation2 + $0x10] sm:$0xff] %v4870
    %5119 = vst [vmem:[#allocation2 + $0x18] sm:$0xff] %v4873
    %5120 = vst [vmem:[#allocation2 + $0x20] sm:$0xff] %v4878
    %5121 = vst [vmem:[#allocation2 + $0x28] sm:$0xff] %v4881
    %5122 = vst [vmem:[#allocation2 + $0x30] sm:$0xff] %v4886
    %5123 = vst [vmem:[#allocation2 + $0x38] sm:$0xff] %v4889
    %5124 = vst [vmem:[#allocation2 + $0x40] sm:$0xff] %v4894
    %5125 = vst [vmem:[#allocation2 + $0x48] sm:$0xff] %v4897
    %5126 = vst [vmem:[#allocation2 + $0x50] sm:$0xff] %v4902
    %5127 = vst [vmem:[#allocation2 + $0x58] sm:$0xff] %v4905
    %5128 = vst [vmem:[#allocation2 + $0x60] sm:$0xff] %v4910
    %5129 = vst [vmem:[#allocation2 + $0x68] sm:$0xff] %v4913
    %5130 = vst [vmem:[#allocation2 + $0x70] sm:$0xff] %v4918
    %5131 = vst [vmem:[#allocation2 + $0x78] sm:$0xff] %v4921
    %5132 = vst [vmem:[#allocation2 + $0x80] sm:$0xff] %v4926
    %5133 = vst [vmem:[#allocation2 + $0x88] sm:$0xff] %v4929
    %5134 = vst [vmem:[#allocation2 + $0x90] sm:$0xff] %v4934
    %5135 = vst [vmem:[#allocation2 + $0x98] sm:$0xff] %v4937
    %5136 = vst [vmem:[#allocation2 + $0xa0] sm:$0xff] %v4942
    %5137 = vst [vmem:[#allocation2 + $0xa8] sm:$0xff] %v4945
    %5138 = vst [vmem:[#allocation2 + $0xb0] sm:$0xff] %v4950
    %5139 = vst [vmem:[#allocation2 + $0xb8] sm:$0xff] %v4953
    %5140 = vst [vmem:[#allocation2 + $0xc0] sm:$0xff] %v4958
    %5141 = vst [vmem:[#allocation2 + $0xc8] sm:$0xff] %v4961
    %5142 = vst [vmem:[#allocation2 + $0xd0] sm:$0xff] %v4966
    %5143 = vst [vmem:[#allocation2 + $0xd8] sm:$0xff] %v4969
    %5144 = vst [vmem:[#allocation2 + $0xe0] sm:$0xff] %v4974
    %5145 = vst [vmem:[#allocation2 + $0xe8] sm:$0xff] %v4977
    %5146 = vst [vmem:[#allocation2 + $0xf0] sm:$0xff] %v4982
    %5147 = vst [vmem:[#allocation2 + $0xf8] sm:$0xff] %v4985
    %5148 = vst [vmem:[#allocation2 + $0x100] sm:$0xff] %v4990
    %5149 = vst [vmem:[#allocation2 + $0x108] sm:$0xff] %v4993
    %5150 = vst [vmem:[#allocation2 + $0x110] sm:$0xff] %v4998
    %5151 = vst [vmem:[#allocation2 + $0x118] sm:$0xff] %v5001
    %5152 = vst [vmem:[#allocation2 + $0x120] sm:$0xff] %v5006
    %5153 = vst [vmem:[#allocation2 + $0x128] sm:$0xff] %v5009
    %5154 = vst [vmem:[#allocation2 + $0x130] sm:$0xff] %v5014
    %5155 = vst [vmem:[#allocation2 + $0x138] sm:$0xff] %v5017
    %5156 = vst [vmem:[#allocation2 + $0x140] sm:$0xff] %v5022
    %5157 = vst [vmem:[#allocation2 + $0x148] sm:$0xff] %v5025
    %5158 = vst [vmem:[#allocation2 + $0x150] sm:$0xff] %v5030
    %5159 = vst [vmem:[#allocation2 + $0x158] sm:$0xff] %v5033
    %5160 = vst [vmem:[#allocation2 + $0x160] sm:$0xff] %v5038
    %5161 = vst [vmem:[#allocation2 + $0x168] sm:$0xff] %v5041
    %5162 = vst [vmem:[#allocation2 + $0x170] sm:$0xff] %v5046
    %5163 = vst [vmem:[#allocation2 + $0x178] sm:$0xff] %v5049
    %5164 = vst [vmem:[#allocation2 + $0x180] sm:$0xff] %v5054
    %5165 = vst [vmem:[#allocation2 + $0x188] sm:$0xff] %v5057
    %5166 = vst [vmem:[#allocation2 + $0x190] sm:$0xff] %v5062
    %5167 = vst [vmem:[#allocation2 + $0x198] sm:$0xff] %v5065
    %5168 = vst [vmem:[#allocation2 + $0x1a0] sm:$0xff] %v5070
    %5169 = vst [vmem:[#allocation2 + $0x1a8] sm:$0xff] %v5073
    %5170 = vst [vmem:[#allocation2 + $0x1b0] sm:$0xff] %v5078
    %5171 = vst [vmem:[#allocation2 + $0x1b8] sm:$0xff] %v5081
    %5172 = vst [vmem:[#allocation2 + $0x1c0] sm:$0xff] %v5086
    %5173 = vst [vmem:[#allocation2 + $0x1c8] sm:$0xff] %v5089
    %5174 = vst [vmem:[#allocation2 + $0x1d0] sm:$0xff] %v5094
    %5175 = vst [vmem:[#allocation2 + $0x1d8] sm:$0xff] %v5097
    %5176 = vst [vmem:[#allocation2 + $0x1e0] sm:$0xff] %v5102
    %5177 = vst [vmem:[#allocation2 + $0x1e8] sm:$0xff] %v5105
    %5178 = vst [vmem:[#allocation2 + $0x1f0] sm:$0xff] %v5110
    %5179 = vst [vmem:[#allocation2 + $0x1f8] sm:$0xff] %v5113
    loop: start=0, step=1, limit=2
    $region53: #{tpu_custom_call.1} parent=1 // loop_pre_header
      _
    $region54: #{tpu_custom_call.1} parent=1 // loop_header
      %s5181 = sphi 0, %s5185
      %p5182 = scmp.ge.s32.totalorder %s5181, 2
      %v5186 = vphi 0.0, %v8784
      %v5187 = vphi 0.0, %v8785
      %v5188 = vphi 0.0, %v8786
      %v5189 = vphi 0.0, %v8787
      %v5190 = vphi 0.0, %v8788
      %v5191 = vphi 0.0, %v8789
      %v5192 = vphi 0.0, %v8790
      %v5193 = vphi 0.0, %v8791
      %v5194 = vphi 0.0, %v8792
      %v5195 = vphi 0.0, %v8793
      %v5196 = vphi 0.0, %v8794
      %v5197 = vphi 0.0, %v8795
      %v5198 = vphi 0.0, %v8796
      %v5199 = vphi 0.0, %v8797
      %v5200 = vphi 0.0, %v8798
      %v5201 = vphi 0.0, %v8799
      %v5202 = vphi 0.0, %v8800
      %v5203 = vphi 0.0, %v8801
      %v5204 = vphi 0.0, %v8802
      %v5205 = vphi 0.0, %v8803
      %v5206 = vphi 0.0, %v8804
      %v5207 = vphi 0.0, %v8805
      %v5208 = vphi 0.0, %v8806
      %v5209 = vphi 0.0, %v8807
      %v5210 = vphi 0.0, %v8808
      %v5211 = vphi 0.0, %v8809
      %v5212 = vphi 0.0, %v8810
      %v5213 = vphi 0.0, %v8811
      %v5214 = vphi 0.0, %v8812
      %v5215 = vphi 0.0, %v8813
      %v5216 = vphi 0.0, %v8814
      %v5217 = vphi 0.0, %v8815
    $region55: #{tpu_custom_call.1} parent=1 // loop_header_branch
      %5184 = sbr.rel (%p5182) target = $region59
    $region56: #{tpu_custom_call.1} parent=1 // loop_body
      %p5218 = scmp.lt.s32.totalorder %s5181, 0
      %s5219 = ssub.s32 0, %s5181
      %s5220 = scalar_select %p5218, %s5219, %s5181
      %s5221 = sand.u32 %s5220, 1
      %s5222 = ssub.s32 0, %s5221
      %s5223 = scalar_select %p5218, %s5222, %s5221
      %p5224 = scmp.ne.s32.totalorder %s5223, 0
      %p5225 = scmp.lt.s32.totalorder %s5223, 0
      %p5226 = pnand %p5225, %p5224
      %p5227 = pneg %p5226
      %s5228 = sadd.s32 %s5223, 2
      %s5229 = scalar_select %p5227, %s5228, %s5223
      %s5230 = sadd.s32 %s5181, 1
      %p5231 = scmp.lt.s32.totalorder %s5230, 2
      // Predicated region
      $region60: #{tpu_custom_call.1} parent=56 // pred_check
        %p5232 = pneg %p5231
      $region61: #{tpu_custom_call.1} parent=56 // pred_check_branch
        %5234 = sbr.rel (%p5232) target = $region63
      $region62: #{tpu_custom_call.1} parent=56 // pred_region
        %s5235 = ssub.s32 1, %s5229
        %s5236 = smul.u32 %s5230, 512
        %s5237 = smul.u32 %s5235, 512
        %s5238 = sshra.s32 %s5236, 4
        %s5239 = sand.u32 %s5236, 15
        %s5240 = smul.addr %s5238, 8
        %s5241 = scalar_lea.vmem [#allocation3], %s5240
        %v5242 = vld [vmem:[%s5241] sm:$0xff]
        %v5243 = vld [vmem:[%s5241 + $0x8] sm:$0xff]
        %v5244 = vld [vmem:[%s5241 + $0x10] sm:$0xff]
        %v5245 = vld [vmem:[%s5241 + $0x18] sm:$0xff]
        %v5246 = vld [vmem:[%s5241 + $0x20] sm:$0xff]
        %v5247 = vld [vmem:[%s5241 + $0x28] sm:$0xff]
        %v5248 = vld [vmem:[%s5241 + $0x30] sm:$0xff]
        %v5249 = vld [vmem:[%s5241 + $0x38] sm:$0xff]
        %v5250 = vld [vmem:[%s5241 + $0x40] sm:$0xff]
        %v5251 = vld [vmem:[%s5241 + $0x48] sm:$0xff]
        %v5252 = vld [vmem:[%s5241 + $0x50] sm:$0xff]
        %v5253 = vld [vmem:[%s5241 + $0x58] sm:$0xff]
        %v5254 = vld [vmem:[%s5241 + $0x60] sm:$0xff]
        %v5255 = vld [vmem:[%s5241 + $0x68] sm:$0xff]
        %v5256 = vld [vmem:[%s5241 + $0x70] sm:$0xff]
        %v5257 = vld [vmem:[%s5241 + $0x78] sm:$0xff]
        %v5258 = vld [vmem:[%s5241 + $0x80] sm:$0xff]
        %v5259 = vld [vmem:[%s5241 + $0x88] sm:$0xff]
        %v5260 = vld [vmem:[%s5241 + $0x90] sm:$0xff]
        %v5261 = vld [vmem:[%s5241 + $0x98] sm:$0xff]
        %v5262 = vld [vmem:[%s5241 + $0xa0] sm:$0xff]
        %v5263 = vld [vmem:[%s5241 + $0xa8] sm:$0xff]
        %v5264 = vld [vmem:[%s5241 + $0xb0] sm:$0xff]
        %v5265 = vld [vmem:[%s5241 + $0xb8] sm:$0xff]
        %v5266 = vld [vmem:[%s5241 + $0xc0] sm:$0xff]
        %v5267 = vld [vmem:[%s5241 + $0xc8] sm:$0xff]
        %v5268 = vld [vmem:[%s5241 + $0xd0] sm:$0xff]
        %v5269 = vld [vmem:[%s5241 + $0xd8] sm:$0xff]
        %v5270 = vld [vmem:[%s5241 + $0xe0] sm:$0xff]
        %v5271 = vld [vmem:[%s5241 + $0xe8] sm:$0xff]
        %v5272 = vld [vmem:[%s5241 + $0xf0] sm:$0xff]
        %v5273 = vld [vmem:[%s5241 + $0xf8] sm:$0xff]
        %v5275 = vsel %vm4638, %v5242, 0
        %v5278 = vsel %vm4638, %v5243, 0
        %v5281 = vsel %vm4638, %v5244, 0
        %v5284 = vsel %vm4638, %v5245, 0
        %v5287 = vsel %vm4638, %v5246, 0
        %v5290 = vsel %vm4638, %v5247, 0
        %v5293 = vsel %vm4638, %v5248, 0
        %v5296 = vsel %vm4638, %v5249, 0
        %v5299 = vsel %vm4638, %v5250, 0
        %v5302 = vsel %vm4638, %v5251, 0
        %v5305 = vsel %vm4638, %v5252, 0
        %v5308 = vsel %vm4638, %v5253, 0
        %v5311 = vsel %vm4638, %v5254, 0
        %v5314 = vsel %vm4638, %v5255, 0
        %v5317 = vsel %vm4638, %v5256, 0
        %v5320 = vsel %vm4638, %v5257, 0
        %v5323 = vsel %vm4638, %v5258, 0
        %v5326 = vsel %vm4638, %v5259, 0
        %v5329 = vsel %vm4638, %v5260, 0
        %v5332 = vsel %vm4638, %v5261, 0
        %v5335 = vsel %vm4638, %v5262, 0
        %v5338 = vsel %vm4638, %v5263, 0
        %v5341 = vsel %vm4638, %v5264, 0
        %v5344 = vsel %vm4638, %v5265, 0
        %v5347 = vsel %vm4638, %v5266, 0
        %v5350 = vsel %vm4638, %v5267, 0
        %v5353 = vsel %vm4638, %v5268, 0
        %v5356 = vsel %vm4638, %v5269, 0
        %v5359 = vsel %vm4638, %v5270, 0
        %v5362 = vsel %vm4638, %v5271, 0
        %v5365 = vsel %vm4638, %v5272, 0
        %v5368 = vsel %vm4638, %v5273, 0
        %5370 = vmatprep.subr.bf16.mxu0 0
        %5371 = vmatpush1.bf16.msra.mxu0 %v4727
        %5372 = vmatprep.subr.bf16.mxu0 0
        %5373 = vmatpush1.bf16.msra.mxu0 %v4728
        %5374 = vmatprep.subr.bf16.mxu0 0
        %5375 = vmatpush1.bf16.msra.mxu0 0
        %5376 = vmatprep.subr.bf16.mxu0 0
        %5377 = vmatpush1.bf16.msra.mxu0 0
        %5378 = vmatprep.subr.bf16.mxu0 0
        %5379 = vmatpush1.bf16.msra.mxu0 0
        %5380 = vmatprep.subr.bf16.mxu0 0
        %5381 = vmatpush1.bf16.msra.mxu0 0
        %5382 = vmatprep.subr.bf16.mxu0 0
        %5383 = vmatpush1.bf16.msra.mxu0 0
        %5384 = vmatprep.subr.bf16.mxu0 0
        %5385 = vmatpush1.bf16.msra.mxu0 0
        %5386 = vmatprep.subr.bf16.mxu0 0
        %5387 = vmatpush1.bf16.msra.mxu0 0
        %5388 = vmatprep.subr.bf16.mxu0 0
        %5389 = vmatpush1.bf16.msra.mxu0 0
        %5390 = vmatprep.subr.bf16.mxu0 0
        %5391 = vmatpush1.bf16.msra.mxu0 0
        %5392 = vmatprep.subr.bf16.mxu0 0
        %5393 = vmatpush1.bf16.msra.mxu0 0
        %5394 = vmatprep.subr.bf16.mxu0 0
        %5395 = vmatpush1.bf16.msra.mxu0 0
        %5396 = vmatprep.subr.bf16.mxu0 0
        %5397 = vmatpush1.bf16.msra.mxu0 0
        %5398 = vmatprep.subr.bf16.mxu0 0
        %5399 = vmatpush1.bf16.msra.mxu0 0
        %5400 = vmatprep.subr.bf16.mxu0 0
        %5401 = vmatpush1.bf16.msra.mxu0 0
        %5402 = vmatprep.mubr.bf16.mxu0 0
        %5403 = vmatmul.mubr.bf16.gmra.mrb[0].mxu0 %v5275
        %v5404 = vpop.f32.mrb[0].mxu0
        %v5405 = vadd.f32 %v4717, %v5404
        %v5406 = vpop.f32.mrb[0].mxu0
        %v5407 = vpop.f32.mrb[0].mxu0
        %v5408 = vadd.f32 %v4717, %v5407
        %v5409 = vpop.f32.mrb[0].mxu0
        %5410 = vmatprep.mubr.bf16.mxu0 0
        %5411 = vmatmul.mubr.bf16.gmra.mrb[0].mxu0 %v5278
        %v5412 = vpop.f32.mrb[0].mxu0
        %v5413 = vadd.f32 %v4717, %v5412
        %v5414 = vpop.f32.mrb[0].mxu0
        %v5415 = vpop.f32.mrb[0].mxu0
        %v5416 = vadd.f32 %v4717, %v5415
        %v5417 = vpop.f32.mrb[0].mxu0
        %5418 = vmatprep.mubr.bf16.mxu0 0
        %5419 = vmatmul.mubr.bf16.gmra.mrb[0].mxu0 %v5281
        %v5420 = vpop.f32.mrb[0].mxu0
        %v5421 = vadd.f32 %v4717, %v5420
        %v5422 = vpop.f32.mrb[0].mxu0
        %v5423 = vpop.f32.mrb[0].mxu0
        %v5424 = vadd.f32 %v4717, %v5423
        %v5425 = vpop.f32.mrb[0].mxu0
        %5426 = vmatprep.mubr.bf16.mxu0 0
        %5427 = vmatmul.mubr.bf16.gmra.mrb[0].mxu0 %v5284
        %v5428 = vpop.f32.mrb[0].mxu0
        %v5429 = vadd.f32 %v4717, %v5428
        %v5430 = vpop.f32.mrb[0].mxu0
        %v5431 = vpop.f32.mrb[0].mxu0
        %v5432 = vadd.f32 %v4717, %v5431
        %v5433 = vpop.f32.mrb[0].mxu0
        %5434 = vmatprep.mubr.bf16.mxu0 0
        %5435 = vmatmul.mubr.bf16.gmra.mrb[0].mxu0 %v5287
        %v5436 = vpop.f32.mrb[0].mxu0
        %v5437 = vadd.f32 %v4717, %v5436
        %v5438 = vpop.f32.mrb[0].mxu0
        %v5439 = vpop.f32.mrb[0].mxu0
        %v5440 = vadd.f32 %v4717, %v5439
        %v5441 = vpop.f32.mrb[0].mxu0
        %5442 = vmatprep.mubr.bf16.mxu0 0
        %5443 = vmatmul.mubr.bf16.gmra.mrb[0].mxu0 %v5290
        %v5444 = vpop.f32.mrb[0].mxu0
        %v5445 = vadd.f32 %v4717, %v5444
        %v5446 = vpop.f32.mrb[0].mxu0
        %v5447 = vpop.f32.mrb[0].mxu0
        %v5448 = vadd.f32 %v4717, %v5447
        %v5449 = vpop.f32.mrb[0].mxu0
        %5450 = vmatprep.mubr.bf16.mxu0 0
        %5451 = vmatmul.mubr.bf16.gmra.mrb[0].mxu0 %v5293
        %v5452 = vpop.f32.mrb[0].mxu0
        %v5453 = vadd.f32 %v4717, %v5452
        %v5454 = vpop.f32.mrb[0].mxu0
        %v5455 = vpop.f32.mrb[0].mxu0
        %v5456 = vadd.f32 %v4717, %v5455
        %v5457 = vpop.f32.mrb[0].mxu0
        %5458 = vmatprep.mubr.bf16.mxu0 0
        %5459 = vmatmul.mubr.bf16.gmra.mrb[0].mxu0 %v5296
        %v5460 = vpop.f32.mrb[0].mxu0
        %v5461 = vadd.f32 %v4717, %v5460
        %v5462 = vpop.f32.mrb[0].mxu0
        %v5463 = vpop.f32.mrb[0].mxu0
        %v5464 = vadd.f32 %v4717, %v5463
        %v5465 = vpop.f32.mrb[0].mxu0
        %5466 = vmatprep.mubr.bf16.mxu0 0
        %5467 = vmatmul.mubr.bf16.gmra.mrb[0].mxu0 %v5299
        %v5468 = vpop.f32.mrb[0].mxu0
        %v5469 = vadd.f32 %v4717, %v5468
        %v5470 = vpop.f32.mrb[0].mxu0
        %v5471 = vpop.f32.mrb[0].mxu0
        %v5472 = vadd.f32 %v4717, %v5471
        %v5473 = vpop.f32.mrb[0].mxu0
        %5474 = vmatprep.mubr.bf16.mxu0 0
        %5475 = vmatmul.mubr.bf16.gmra.mrb[0].mxu0 %v5302
        %v5476 = vpop.f32.mrb[0].mxu0
        %v5477 = vadd.f32 %v4717, %v5476
        %v5478 = vpop.f32.mrb[0].mxu0
        %v5479 = vpop.f32.mrb[0].mxu0
        %v5480 = vadd.f32 %v4717, %v5479
        %v5481 = vpop.f32.mrb[0].mxu0
        %5482 = vmatprep.mubr.bf16.mxu0 0
        %5483 = vmatmul.mubr.bf16.gmra.mrb[0].mxu0 %v5305
        %v5484 = vpop.f32.mrb[0].mxu0
        %v5485 = vadd.f32 %v4717, %v5484
        %v5486 = vpop.f32.mrb[0].mxu0
        %v5487 = vpop.f32.mrb[0].mxu0
        %v5488 = vadd.f32 %v4717, %v5487
        %v5489 = vpop.f32.mrb[0].mxu0
        %5490 = vmatprep.mubr.bf16.mxu0 0
        %5491 = vmatmul.mubr.bf16.gmra.mrb[0].mxu0 %v5308
        %v5492 = vpop.f32.mrb[0].mxu0
        %v5493 = vadd.f32 %v4717, %v5492
        %v5494 = vpop.f32.mrb[0].mxu0
        %v5495 = vpop.f32.mrb[0].mxu0
        %v5496 = vadd.f32 %v4717, %v5495
        %v5497 = vpop.f32.mrb[0].mxu0
        %5498 = vmatprep.mubr.bf16.mxu0 0
        %5499 = vmatmul.mubr.bf16.gmra.mrb[0].mxu0 %v5311
        %v5500 = vpop.f32.mrb[0].mxu0
        %v5501 = vadd.f32 %v4717, %v5500
        %v5502 = vpop.f32.mrb[0].mxu0
        %v5503 = vpop.f32.mrb[0].mxu0
        %v5504 = vadd.f32 %v4717, %v5503
        %v5505 = vpop.f32.mrb[0].mxu0
        %5506 = vmatprep.mubr.bf16.mxu0 0
        %5507 = vmatmul.mubr.bf16.gmra.mrb[0].mxu0 %v5314
        %v5508 = vpop.f32.mrb[0].mxu0
        %v5509 = vadd.f32 %v4717, %v5508
        %v5510 = vpop.f32.mrb[0].mxu0
        %v5511 = vpop.f32.mrb[0].mxu0
        %v5512 = vadd.f32 %v4717, %v5511
        %v5513 = vpop.f32.mrb[0].mxu0
        %5514 = vmatprep.mubr.bf16.mxu0 0
        %5515 = vmatmul.mubr.bf16.gmra.mrb[0].mxu0 %v5317
        %v5516 = vpop.f32.mrb[0].mxu0
        %v5517 = vadd.f32 %v4717, %v5516
        %v5518 = vpop.f32.mrb[0].mxu0
        %v5519 = vpop.f32.mrb[0].mxu0
        %v5520 = vadd.f32 %v4717, %v5519
        %v5521 = vpop.f32.mrb[0].mxu0
        %5522 = vmatprep.mubr.bf16.mxu0 0
        %5523 = vmatmul.mubr.bf16.gmra.mrb[0].mxu0 %v5320
        %v5524 = vpop.f32.mrb[0].mxu0
        %v5525 = vadd.f32 %v4717, %v5524
        %v5526 = vpop.f32.mrb[0].mxu0
        %v5527 = vpop.f32.mrb[0].mxu0
        %v5528 = vadd.f32 %v4717, %v5527
        %v5529 = vpop.f32.mrb[0].mxu0
        %5530 = vmatprep.mubr.bf16.mxu0 0
        %5531 = vmatmul.mubr.bf16.gmra.mrb[0].mxu0 %v5323
        %v5532 = vpop.f32.mrb[0].mxu0
        %v5533 = vadd.f32 %v4717, %v5532
        %v5534 = vpop.f32.mrb[0].mxu0
        %v5535 = vpop.f32.mrb[0].mxu0
        %v5536 = vadd.f32 %v4717, %v5535
        %v5537 = vpop.f32.mrb[0].mxu0
        %5538 = vmatprep.mubr.bf16.mxu0 0
        %5539 = vmatmul.mubr.bf16.gmra.mrb[0].mxu0 %v5326
        %v5540 = vpop.f32.mrb[0].mxu0
        %v5541 = vadd.f32 %v4717, %v5540
        %v5542 = vpop.f32.mrb[0].mxu0
        %v5543 = vpop.f32.mrb[0].mxu0
        %v5544 = vadd.f32 %v4717, %v5543
        %v5545 = vpop.f32.mrb[0].mxu0
        %5546 = vmatprep.mubr.bf16.mxu0 0
        %5547 = vmatmul.mubr.bf16.gmra.mrb[0].mxu0 %v5329
        %v5548 = vpop.f32.mrb[0].mxu0
        %v5549 = vadd.f32 %v4717, %v5548
        %v5550 = vpop.f32.mrb[0].mxu0
        %v5551 = vpop.f32.mrb[0].mxu0
        %v5552 = vadd.f32 %v4717, %v5551
        %v5553 = vpop.f32.mrb[0].mxu0
        %5554 = vmatprep.mubr.bf16.mxu0 0
        %5555 = vmatmul.mubr.bf16.gmra.mrb[0].mxu0 %v5332
        %v5556 = vpop.f32.mrb[0].mxu0
        %v5557 = vadd.f32 %v4717, %v5556
        %v5558 = vpop.f32.mrb[0].mxu0
        %v5559 = vpop.f32.mrb[0].mxu0
        %v5560 = vadd.f32 %v4717, %v5559
        %v5561 = vpop.f32.mrb[0].mxu0
        %5562 = vmatprep.mubr.bf16.mxu0 0
        %5563 = vmatmul.mubr.bf16.gmra.mrb[0].mxu0 %v5335
        %v5564 = vpop.f32.mrb[0].mxu0
        %v5565 = vadd.f32 %v4717, %v5564
        %v5566 = vpop.f32.mrb[0].mxu0
        %v5567 = vpop.f32.mrb[0].mxu0
        %v5568 = vadd.f32 %v4717, %v5567
        %v5569 = vpop.f32.mrb[0].mxu0
        %5570 = vmatprep.mubr.bf16.mxu0 0
        %5571 = vmatmul.mubr.bf16.gmra.mrb[0].mxu0 %v5338
        %v5572 = vpop.f32.mrb[0].mxu0
        %v5573 = vadd.f32 %v4717, %v5572
        %v5574 = vpop.f32.mrb[0].mxu0
        %v5575 = vpop.f32.mrb[0].mxu0
        %v5576 = vadd.f32 %v4717, %v5575
        %v5577 = vpop.f32.mrb[0].mxu0
        %5578 = vmatprep.mubr.bf16.mxu0 0
        %5579 = vmatmul.mubr.bf16.gmra.mrb[0].mxu0 %v5341
        %v5580 = vpop.f32.mrb[0].mxu0
        %v5581 = vadd.f32 %v4717, %v5580
        %v5582 = vpop.f32.mrb[0].mxu0
        %v5583 = vpop.f32.mrb[0].mxu0
        %v5584 = vadd.f32 %v4717, %v5583
        %v5585 = vpop.f32.mrb[0].mxu0
        %5586 = vmatprep.mubr.bf16.mxu0 0
        %5587 = vmatmul.mubr.bf16.gmra.mrb[0].mxu0 %v5344
        %v5588 = vpop.f32.mrb[0].mxu0
        %v5589 = vadd.f32 %v4717, %v5588
        %v5590 = vpop.f32.mrb[0].mxu0
        %v5591 = vpop.f32.mrb[0].mxu0
        %v5592 = vadd.f32 %v4717, %v5591
        %v5593 = vpop.f32.mrb[0].mxu0
        %5594 = vmatprep.mubr.bf16.mxu0 0
        %5595 = vmatmul.mubr.bf16.gmra.mrb[0].mxu0 %v5347
        %v5596 = vpop.f32.mrb[0].mxu0
        %v5597 = vadd.f32 %v4717, %v5596
        %v5598 = vpop.f32.mrb[0].mxu0
        %v5599 = vpop.f32.mrb[0].mxu0
        %v5600 = vadd.f32 %v4717, %v5599
        %v5601 = vpop.f32.mrb[0].mxu0
        %5602 = vmatprep.mubr.bf16.mxu0 0
        %5603 = vmatmul.mubr.bf16.gmra.mrb[0].mxu0 %v5350
        %v5604 = vpop.f32.mrb[0].mxu0
        %v5605 = vadd.f32 %v4717, %v5604
        %v5606 = vpop.f32.mrb[0].mxu0
        %v5607 = vpop.f32.mrb[0].mxu0
        %v5608 = vadd.f32 %v4717, %v5607
        %v5609 = vpop.f32.mrb[0].mxu0
        %5610 = vmatprep.mubr.bf16.mxu0 0
        %5611 = vmatmul.mubr.bf16.gmra.mrb[0].mxu0 %v5353
        %v5612 = vpop.f32.mrb[0].mxu0
        %v5613 = vadd.f32 %v4717, %v5612
        %v5614 = vpop.f32.mrb[0].mxu0
        %v5615 = vpop.f32.mrb[0].mxu0
        %v5616 = vadd.f32 %v4717, %v5615
        %v5617 = vpop.f32.mrb[0].mxu0
        %5618 = vmatprep.mubr.bf16.mxu0 0
        %5619 = vmatmul.mubr.bf16.gmra.mrb[0].mxu0 %v5356
        %v5620 = vpop.f32.mrb[0].mxu0
        %v5621 = vadd.f32 %v4717, %v5620
        %v5622 = vpop.f32.mrb[0].mxu0
        %v5623 = vpop.f32.mrb[0].mxu0
        %v5624 = vadd.f32 %v4717, %v5623
        %v5625 = vpop.f32.mrb[0].mxu0
        %5626 = vmatprep.mubr.bf16.mxu0 0
        %5627 = vmatmul.mubr.bf16.gmra.mrb[0].mxu0 %v5359
        %v5628 = vpop.f32.mrb[0].mxu0
        %v5629 = vadd.f32 %v4717, %v5628
        %v5630 = vpop.f32.mrb[0].mxu0
        %v5631 = vpop.f32.mrb[0].mxu0
        %v5632 = vadd.f32 %v4717, %v5631
        %v5633 = vpop.f32.mrb[0].mxu0
        %5634 = vmatprep.mubr.bf16.mxu0 0
        %5635 = vmatmul.mubr.bf16.gmra.mrb[0].mxu0 %v5362
        %v5636 = vpop.f32.mrb[0].mxu0
        %v5637 = vadd.f32 %v4717, %v5636
        %v5638 = vpop.f32.mrb[0].mxu0
        %v5639 = vpop.f32.mrb[0].mxu0
        %v5640 = vadd.f32 %v4717, %v5639
        %v5641 = vpop.f32.mrb[0].mxu0
        %5642 = vmatprep.mubr.bf16.mxu0 0
        %5643 = vmatmul.mubr.bf16.gmra.mrb[0].mxu0 %v5365
        %v5644 = vpop.f32.mrb[0].mxu0
        %v5645 = vadd.f32 %v4717, %v5644
        %v5646 = vpop.f32.mrb[0].mxu0
        %v5647 = vpop.f32.mrb[0].mxu0
        %v5648 = vadd.f32 %v4717, %v5647
        %v5649 = vpop.f32.mrb[0].mxu0
        %5650 = vmatprep.mubr.bf16.mxu0 0
        %5651 = vmatmul.mubr.bf16.gmra.mrb[0].mxu0 %v5368
        %v5652 = vpop.f32.mrb[0].mxu0
        %v5653 = vadd.f32 %v4717, %v5652
        %v5654 = vpop.f32.mrb[0].mxu0
        %v5655 = vpop.f32.mrb[0].mxu0
        %v5656 = vadd.f32 %v4717, %v5655
        %v5657 = vpop.f32.mrb[0].mxu0
        %5658 = vdwg.mxu0
        %s5659 = scalar_lea.vmem [#allocation2], %s5237
        %5660 = vst [vmem:[%s5659] sm:$0xff] %v5405
        %5661 = vst [vmem:[%s5659 + $0x8] sm:$0xff] %v5408
        %5662 = vst [vmem:[%s5659 + $0x10] sm:$0xff] %v5413
        %5663 = vst [vmem:[%s5659 + $0x18] sm:$0xff] %v5416
        %5664 = vst [vmem:[%s5659 + $0x20] sm:$0xff] %v5421
        %5665 = vst [vmem:[%s5659 + $0x28] sm:$0xff] %v5424
        %5666 = vst [vmem:[%s5659 + $0x30] sm:$0xff] %v5429
        %5667 = vst [vmem:[%s5659 + $0x38] sm:$0xff] %v5432
        %5668 = vst [vmem:[%s5659 + $0x40] sm:$0xff] %v5437
        %5669 = vst [vmem:[%s5659 + $0x48] sm:$0xff] %v5440
        %5670 = vst [vmem:[%s5659 + $0x50] sm:$0xff] %v5445
        %5671 = vst [vmem:[%s5659 + $0x58] sm:$0xff] %v5448
        %5672 = vst [vmem:[%s5659 + $0x60] sm:$0xff] %v5453
        %5673 = vst [vmem:[%s5659 + $0x68] sm:$0xff] %v5456
        %5674 = vst [vmem:[%s5659 + $0x70] sm:$0xff] %v5461
        %5675 = vst [vmem:[%s5659 + $0x78] sm:$0xff] %v5464
        %5676 = vst [vmem:[%s5659 + $0x80] sm:$0xff] %v5469
        %5677 = vst [vmem:[%s5659 + $0x88] sm:$0xff] %v5472
        %5678 = vst [vmem:[%s5659 + $0x90] sm:$0xff] %v5477
        %5679 = vst [vmem:[%s5659 + $0x98] sm:$0xff] %v5480
        %5680 = vst [vmem:[%s5659 + $0xa0] sm:$0xff] %v5485
        %5681 = vst [vmem:[%s5659 + $0xa8] sm:$0xff] %v5488
        %5682 = vst [vmem:[%s5659 + $0xb0] sm:$0xff] %v5493
        %5683 = vst [vmem:[%s5659 + $0xb8] sm:$0xff] %v5496
        %5684 = vst [vmem:[%s5659 + $0xc0] sm:$0xff] %v5501
        %5685 = vst [vmem:[%s5659 + $0xc8] sm:$0xff] %v5504
        %5686 = vst [vmem:[%s5659 + $0xd0] sm:$0xff] %v5509
        %5687 = vst [vmem:[%s5659 + $0xd8] sm:$0xff] %v5512
        %5688 = vst [vmem:[%s5659 + $0xe0] sm:$0xff] %v5517
        %5689 = vst [vmem:[%s5659 + $0xe8] sm:$0xff] %v5520
        %5690 = vst [vmem:[%s5659 + $0xf0] sm:$0xff] %v5525
        %5691 = vst [vmem:[%s5659 + $0xf8] sm:$0xff] %v5528
        %5692 = vst [vmem:[%s5659 + $0x100] sm:$0xff] %v5533
        %5693 = vst [vmem:[%s5659 + $0x108] sm:$0xff] %v5536
        %5694 = vst [vmem:[%s5659 + $0x110] sm:$0xff] %v5541
        %5695 = vst [vmem:[%s5659 + $0x118] sm:$0xff] %v5544
        %5696 = vst [vmem:[%s5659 + $0x120] sm:$0xff] %v5549
        %5697 = vst [vmem:[%s5659 + $0x128] sm:$0xff] %v5552
        %5698 = vst [vmem:[%s5659 + $0x130] sm:$0xff] %v5557
        %5699 = vst [vmem:[%s5659 + $0x138] sm:$0xff] %v5560
        %5700 = vst [vmem:[%s5659 + $0x140] sm:$0xff] %v5565
        %5701 = vst [vmem:[%s5659 + $0x148] sm:$0xff] %v5568
        %5702 = vst [vmem:[%s5659 + $0x150] sm:$0xff] %v5573
        %5703 = vst [vmem:[%s5659 + $0x158] sm:$0xff] %v5576
        %5704 = vst [vmem:[%s5659 + $0x160] sm:$0xff] %v5581
        %5705 = vst [vmem:[%s5659 + $0x168] sm:$0xff] %v5584
        %5706 = vst [vmem:[%s5659 + $0x170] sm:$0xff] %v5589
        %5707 = vst [vmem:[%s5659 + $0x178] sm:$0xff] %v5592
        %5708 = vst [vmem:[%s5659 + $0x180] sm:$0xff] %v5597
        %5709 = vst [vmem:[%s5659 + $0x188] sm:$0xff] %v5600
        %5710 = vst [vmem:[%s5659 + $0x190] sm:$0xff] %v5605
        %5711 = vst [vmem:[%s5659 + $0x198] sm:$0xff] %v5608
        %5712 = vst [vmem:[%s5659 + $0x1a0] sm:$0xff] %v5613
        %5713 = vst [vmem:[%s5659 + $0x1a8] sm:$0xff] %v5616
        %5714 = vst [vmem:[%s5659 + $0x1b0] sm:$0xff] %v5621
        %5715 = vst [vmem:[%s5659 + $0x1b8] sm:$0xff] %v5624
        %5716 = vst [vmem:[%s5659 + $0x1c0] sm:$0xff] %v5629
        %5717 = vst [vmem:[%s5659 + $0x1c8] sm:$0xff] %v5632
        %5718 = vst [vmem:[%s5659 + $0x1d0] sm:$0xff] %v5637
        %5719 = vst [vmem:[%s5659 + $0x1d8] sm:$0xff] %v5640
        %5720 = vst [vmem:[%s5659 + $0x1e0] sm:$0xff] %v5645
        %5721 = vst [vmem:[%s5659 + $0x1e8] sm:$0xff] %v5648
        %5722 = vst [vmem:[%s5659 + $0x1f0] sm:$0xff] %v5653
        %5723 = vst [vmem:[%s5659 + $0x1f8] sm:$0xff] %v5656
      $region63: #{tpu_custom_call.1} parent=56 // pred_fallthru
        _
      %s5724 = smul.u32 %s5181, 4
      %s5725 = smul.u32 %s5229, 512
      %s5726 = scalar_lea.vmem [#allocation2], %s5725
      %v5727 = vld [vmem:[%s5726] sm:$0xff]
      %v5728 = vld [vmem:[%s5726 + $0x8] sm:$0xff]
      %v5729 = vld [vmem:[%s5726 + $0x10] sm:$0xff]
      %v5730 = vld [vmem:[%s5726 + $0x18] sm:$0xff]
      %v5731 = vld [vmem:[%s5726 + $0x20] sm:$0xff]
      %v5732 = vld [vmem:[%s5726 + $0x28] sm:$0xff]
      %v5733 = vld [vmem:[%s5726 + $0x30] sm:$0xff]
      %v5734 = vld [vmem:[%s5726 + $0x38] sm:$0xff]
      %v5735 = vld [vmem:[%s5726 + $0x40] sm:$0xff]
      %v5736 = vld [vmem:[%s5726 + $0x48] sm:$0xff]
      %v5737 = vld [vmem:[%s5726 + $0x50] sm:$0xff]
      %v5738 = vld [vmem:[%s5726 + $0x58] sm:$0xff]
      %v5739 = vld [vmem:[%s5726 + $0x60] sm:$0xff]
      %v5740 = vld [vmem:[%s5726 + $0x68] sm:$0xff]
      %v5741 = vld [vmem:[%s5726 + $0x70] sm:$0xff]
      %v5742 = vld [vmem:[%s5726 + $0x78] sm:$0xff]
      %v5743 = vpack.c.bf16 %v5187, %v5186
      %v5744 = vpack.c.bf16 %v5189, %v5188
      %v5745 = vpack.c.bf16 %v5191, %v5190
      %v5746 = vpack.c.bf16 %v5193, %v5192
      %v5747 = vpack.c.bf16 %v5195, %v5194
      %v5748 = vpack.c.bf16 %v5197, %v5196
      %v5749 = vpack.c.bf16 %v5199, %v5198
      %v5750 = vpack.c.bf16 %v5201, %v5200
      %5759 = vrot.lane.b32.xlu0 %v5743, 32
      %v5760 = vpop.permute.xlu0 %5759
      %5761 = vrot.lane.b32.xlu0 %v5744, 32
      %v5762 = vpop.permute.xlu0 %5761
      %5763 = vrot.lane.b32.xlu0 %v5745, 32
      %v5764 = vpop.permute.xlu0 %5763
      %5765 = vrot.lane.b32.xlu0 %v5746, 32
      %v5766 = vpop.permute.xlu0 %5765
      %5767 = vrot.lane.b32.xlu0 %v5747, 32
      %v5768 = vpop.permute.xlu0 %5767
      %5769 = vrot.lane.b32.xlu0 %v5748, 32
      %v5770 = vpop.permute.xlu0 %5769
      %5771 = vrot.lane.b32.xlu0 %v5749, 32
      %v5772 = vpop.permute.xlu0 %5771
      %5773 = vrot.lane.b32.xlu0 %v5750, 32
      %v5774 = vpop.permute.xlu0 %5773
      %v5779 = vunpack.c.l.b16 %v4676
      %v5780 = vunpack.c.l.b16 %v4677
      %v5781 = vunpack.c.l.b16 %v4678
      %v5782 = vunpack.c.l.b16 %v4679
      %v5783 = vpack.c.b16 %v5780, %v5779
      %v5784 = vpack.c.b16 %v5782, %v5781
      %v5788 = vsel %vm4638, %v5760, 0
      %v5791 = vsel %vm4638, %v5762, 0
      %v5794 = vsel %vm4638, %v5764, 0
      %v5797 = vsel %vm4638, %v5766, 0
      %v5800 = vsel %vm4638, %v5768, 0
      %v5803 = vsel %vm4638, %v5770, 0
      %v5806 = vsel %vm4638, %v5772, 0
      %v5809 = vsel %vm4638, %v5774, 0
      %5811 = vmatprep.subr.bf16.mxu0 0
      %5812 = vmatpush1.bf16.msra.mxu0 %v5783
      %5813 = vmatprep.subr.bf16.mxu0 0
      %5814 = vmatpush1.bf16.msra.mxu0 %v5784
      %5815 = vmatprep.subr.bf16.mxu0 0
      %5816 = vmatpush1.bf16.msra.mxu0 0
      %5817 = vmatprep.subr.bf16.mxu0 0
      %5818 = vmatpush1.bf16.msra.mxu0 0
      %5819 = vmatprep.subr.bf16.mxu0 0
      %5820 = vmatpush1.bf16.msra.mxu0 0
      %5821 = vmatprep.subr.bf16.mxu0 0
      %5822 = vmatpush1.bf16.msra.mxu0 0
      %5823 = vmatprep.subr.bf16.mxu0 0
      %5824 = vmatpush1.bf16.msra.mxu0 0
      %5825 = vmatprep.subr.bf16.mxu0 0
      %5826 = vmatpush1.bf16.msra.mxu0 0
      %5827 = vmatprep.subr.bf16.mxu0 0
      %5828 = vmatpush1.bf16.msra.mxu0 0
      %5829 = vmatprep.subr.bf16.mxu0 0
      %5830 = vmatpush1.bf16.msra.mxu0 0
      %5831 = vmatprep.subr.bf16.mxu0 0
      %5832 = vmatpush1.bf16.msra.mxu0 0
      %5833 = vmatprep.subr.bf16.mxu0 0
      %5834 = vmatpush1.bf16.msra.mxu0 0
      %5835 = vmatprep.subr.bf16.mxu0 0
      %5836 = vmatpush1.bf16.msra.mxu0 0
      %5837 = vmatprep.subr.bf16.mxu0 0
      %5838 = vmatpush1.bf16.msra.mxu0 0
      %5839 = vmatprep.subr.bf16.mxu0 0
      %5840 = vmatpush1.bf16.msra.mxu0 0
      %5841 = vmatprep.subr.bf16.mxu0 0
      %5842 = vmatpush1.bf16.msra.mxu0 0
      %5843 = vmatprep.mubr.bf16.mxu0 0
      %5844 = vmatmul.mubr.bf16.gmra.mrb[0].mxu0 %v5788
      %v5845 = vpop.f32.mrb[0].mxu0
      %v5846 = vadd.f32 0.0, %v5845
      %v5847 = vpop.f32.mrb[0].mxu0
      %v5848 = vpop.f32.mrb[0].mxu0
      %v5849 = vadd.f32 0.0, %v5848
      %v5850 = vpop.f32.mrb[0].mxu0
      %5851 = vmatprep.mubr.bf16.mxu0 0
      %5852 = vmatmul.mubr.bf16.gmra.mrb[0].mxu0 %v5791
      %v5853 = vpop.f32.mrb[0].mxu0
      %v5854 = vadd.f32 0.0, %v5853
      %v5855 = vpop.f32.mrb[0].mxu0
      %v5856 = vpop.f32.mrb[0].mxu0
      %v5857 = vadd.f32 0.0, %v5856
      %v5858 = vpop.f32.mrb[0].mxu0
      %5859 = vmatprep.mubr.bf16.mxu0 0
      %5860 = vmatmul.mubr.bf16.gmra.mrb[0].mxu0 %v5794
      %v5861 = vpop.f32.mrb[0].mxu0
      %v5862 = vadd.f32 0.0, %v5861
      %v5863 = vpop.f32.mrb[0].mxu0
      %v5864 = vpop.f32.mrb[0].mxu0
      %v5865 = vadd.f32 0.0, %v5864
      %v5866 = vpop.f32.mrb[0].mxu0
      %5867 = vmatprep.mubr.bf16.mxu0 0
      %5868 = vmatmul.mubr.bf16.gmra.mrb[0].mxu0 %v5797
      %v5869 = vpop.f32.mrb[0].mxu0
      %v5870 = vadd.f32 0.0, %v5869
      %v5871 = vpop.f32.mrb[0].mxu0
      %v5872 = vpop.f32.mrb[0].mxu0
      %v5873 = vadd.f32 0.0, %v5872
      %v5874 = vpop.f32.mrb[0].mxu0
      %5875 = vmatprep.mubr.bf16.mxu0 0
      %5876 = vmatmul.mubr.bf16.gmra.mrb[0].mxu0 %v5800
      %v5877 = vpop.f32.mrb[0].mxu0
      %v5878 = vadd.f32 0.0, %v5877
      %v5879 = vpop.f32.mrb[0].mxu0
      %v5880 = vpop.f32.mrb[0].mxu0
      %v5881 = vadd.f32 0.0, %v5880
      %v5882 = vpop.f32.mrb[0].mxu0
      %5883 = vmatprep.mubr.bf16.mxu0 0
      %5884 = vmatmul.mubr.bf16.gmra.mrb[0].mxu0 %v5803
      %v5885 = vpop.f32.mrb[0].mxu0
      %v5886 = vadd.f32 0.0, %v5885
      %v5887 = vpop.f32.mrb[0].mxu0
      %v5888 = vpop.f32.mrb[0].mxu0
      %v5889 = vadd.f32 0.0, %v5888
      %v5890 = vpop.f32.mrb[0].mxu0
      %5891 = vmatprep.mubr.bf16.mxu0 0
      %5892 = vmatmul.mubr.bf16.gmra.mrb[0].mxu0 %v5806
      %v5893 = vpop.f32.mrb[0].mxu0
      %v5894 = vadd.f32 0.0, %v5893
      %v5895 = vpop.f32.mrb[0].mxu0
      %v5896 = vpop.f32.mrb[0].mxu0
      %v5897 = vadd.f32 0.0, %v5896
      %v5898 = vpop.f32.mrb[0].mxu0
      %5899 = vmatprep.mubr.bf16.mxu0 0
      %5900 = vmatmul.mubr.bf16.gmra.mrb[0].mxu0 %v5809
      %v5901 = vpop.f32.mrb[0].mxu0
      %v5902 = vadd.f32 0.0, %v5901
      %v5903 = vpop.f32.mrb[0].mxu0
      %v5904 = vpop.f32.mrb[0].mxu0
      %v5905 = vadd.f32 0.0, %v5904
      %v5906 = vpop.f32.mrb[0].mxu0
      %5907 = vdwg.mxu0
      %v5908 = vadd.f32 %v5727, %v5846
      %v5909 = vadd.f32 %v5728, %v5849
      %v5910 = vadd.f32 %v5729, %v5854
      %v5911 = vadd.f32 %v5730, %v5857
      %v5912 = vadd.f32 %v5731, %v5862
      %v5913 = vadd.f32 %v5732, %v5865
      %v5914 = vadd.f32 %v5733, %v5870
      %v5915 = vadd.f32 %v5734, %v5873
      %v5916 = vadd.f32 %v5735, %v5878
      %v5917 = vadd.f32 %v5736, %v5881
      %v5918 = vadd.f32 %v5737, %v5886
      %v5919 = vadd.f32 %v5738, %v5889
      %v5920 = vadd.f32 %v5739, %v5894
      %v5921 = vadd.f32 %v5740, %v5897
      %v5922 = vadd.f32 %v5741, %v5902
      %v5923 = vadd.f32 %v5742, %v5905
      %v5924 = vxor.u32 %v5908, 2147483648
      %v5925 = vxor.u32 %v5909, 2147483648
      %v5926 = vxor.u32 %v5910, 2147483648
      %v5927 = vxor.u32 %v5911, 2147483648
      %v5928 = vxor.u32 %v5912, 2147483648
      %v5929 = vxor.u32 %v5913, 2147483648
      %v5930 = vxor.u32 %v5914, 2147483648
      %v5931 = vxor.u32 %v5915, 2147483648
      %v5932 = vxor.u32 %v5916, 2147483648
      %v5933 = vxor.u32 %v5917, 2147483648
      %v5934 = vxor.u32 %v5918, 2147483648
      %v5935 = vxor.u32 %v5919, 2147483648
      %v5936 = vxor.u32 %v5920, 2147483648
      %v5937 = vxor.u32 %v5921, 2147483648
      %v5938 = vxor.u32 %v5922, 2147483648
      %v5939 = vxor.u32 %v5923, 2147483648
      %v5940 = vmul.f32 %v5924, 1.442695
      %v5941 = vpow.pop %v5940
      %v5942 = vmul.f32 %v5925, 1.442695
      %v5943 = vpow.pop %v5942
      %v5944 = vmul.f32 %v5926, 1.442695
      %v5945 = vpow.pop %v5944
      %v5946 = vmul.f32 %v5927, 1.442695
      %v5947 = vpow.pop %v5946
      %v5948 = vmul.f32 %v5928, 1.442695
      %v5949 = vpow.pop %v5948
      %v5950 = vmul.f32 %v5929, 1.442695
      %v5951 = vpow.pop %v5950
      %v5952 = vmul.f32 %v5930, 1.442695
      %v5953 = vpow.pop %v5952
      %v5954 = vmul.f32 %v5931, 1.442695
      %v5955 = vpow.pop %v5954
      %v5956 = vmul.f32 %v5932, 1.442695
      %v5957 = vpow.pop %v5956
      %v5958 = vmul.f32 %v5933, 1.442695
      %v5959 = vpow.pop %v5958
      %v5960 = vmul.f32 %v5934, 1.442695
      %v5961 = vpow.pop %v5960
      %v5962 = vmul.f32 %v5935, 1.442695
      %v5963 = vpow.pop %v5962
      %v5964 = vmul.f32 %v5936, 1.442695
      %v5965 = vpow.pop %v5964
      %v5966 = vmul.f32 %v5937, 1.442695
      %v5967 = vpow.pop %v5966
      %v5968 = vmul.f32 %v5938, 1.442695
      %v5969 = vpow.pop %v5968
      %v5970 = vmul.f32 %v5939, 1.442695
      %v5971 = vpow.pop %v5970
      %v5972 = vadd.f32 %v5941, 1.0
      %v5973 = vadd.f32 %v5943, 1.0
      %v5974 = vadd.f32 %v5945, 1.0
      %v5975 = vadd.f32 %v5947, 1.0
      %v5976 = vadd.f32 %v5949, 1.0
      %v5977 = vadd.f32 %v5951, 1.0
      %v5978 = vadd.f32 %v5953, 1.0
      %v5979 = vadd.f32 %v5955, 1.0
      %v5980 = vadd.f32 %v5957, 1.0
      %v5981 = vadd.f32 %v5959, 1.0
      %v5982 = vadd.f32 %v5961, 1.0
      %v5983 = vadd.f32 %v5963, 1.0
      %v5984 = vadd.f32 %v5965, 1.0
      %v5985 = vadd.f32 %v5967, 1.0
      %v5986 = vadd.f32 %v5969, 1.0
      %v5987 = vadd.f32 %v5971, 1.0
      %v5988 = vrcp.pop %v5972
      %v5989 = vmul.f32 1.0, %v5988
      %v5990 = vrcp.pop %v5973
      %v5991 = vmul.f32 1.0, %v5990
      %v5992 = vrcp.pop %v5974
      %v5993 = vmul.f32 1.0, %v5992
      %v5994 = vrcp.pop %v5975
      %v5995 = vmul.f32 1.0, %v5994
      %v5996 = vrcp.pop %v5976
      %v5997 = vmul.f32 1.0, %v5996
      %v5998 = vrcp.pop %v5977
      %v5999 = vmul.f32 1.0, %v5998
      %v6000 = vrcp.pop %v5978
      %v6001 = vmul.f32 1.0, %v6000
      %v6002 = vrcp.pop %v5979
      %v6003 = vmul.f32 1.0, %v6002
      %v6004 = vrcp.pop %v5980
      %v6005 = vmul.f32 1.0, %v6004
      %v6006 = vrcp.pop %v5981
      %v6007 = vmul.f32 1.0, %v6006
      %v6008 = vrcp.pop %v5982
      %v6009 = vmul.f32 1.0, %v6008
      %v6010 = vrcp.pop %v5983
      %v6011 = vmul.f32 1.0, %v6010
      %v6012 = vrcp.pop %v5984
      %v6013 = vmul.f32 1.0, %v6012
      %v6014 = vrcp.pop %v5985
      %v6015 = vmul.f32 1.0, %v6014
      %v6016 = vrcp.pop %v5986
      %v6017 = vmul.f32 1.0, %v6016
      %v6018 = vrcp.pop %v5987
      %v6019 = vmul.f32 1.0, %v6018
      %v6020 = vtanh.pop %v5908
      %v6021 = vtanh.pop %v5909
      %v6022 = vtanh.pop %v5910
      %v6023 = vtanh.pop %v5911
      %v6024 = vtanh.pop %v5912
      %v6025 = vtanh.pop %v5913
      %v6026 = vtanh.pop %v5914
      %v6027 = vtanh.pop %v5915
      %v6028 = vtanh.pop %v5916
      %v6029 = vtanh.pop %v5917
      %v6030 = vtanh.pop %v5918
      %v6031 = vtanh.pop %v5919
      %v6032 = vtanh.pop %v5920
      %v6033 = vtanh.pop %v5921
      %v6034 = vtanh.pop %v5922
      %v6035 = vtanh.pop %v5923
      %v6036 = vmul.f32 %v5989, %v5202
      %v6037 = vmul.f32 %v5991, %v5203
      %v6038 = vmul.f32 %v5993, %v5204
      %v6039 = vmul.f32 %v5995, %v5205
      %v6040 = vmul.f32 %v5997, %v5206
      %v6041 = vmul.f32 %v5999, %v5207
      %v6042 = vmul.f32 %v6001, %v5208
      %v6043 = vmul.f32 %v6003, %v5209
      %v6044 = vmul.f32 %v6005, %v5210
      %v6045 = vmul.f32 %v6007, %v5211
      %v6046 = vmul.f32 %v6009, %v5212
      %v6047 = vmul.f32 %v6011, %v5213
      %v6048 = vmul.f32 %v6013, %v5214
      %v6049 = vmul.f32 %v6015, %v5215
      %v6050 = vmul.f32 %v6017, %v5216
      %v6051 = vmul.f32 %v6019, %v5217
      %6068 = vrot.lane.b32.xlu0 %v6020, 64
      %v6069 = vpop.permute.xlu0 %6068
      %6070 = vrot.lane.b32.xlu0 %v6021, 64
      %v6071 = vpop.permute.xlu0 %6070
      %6072 = vrot.lane.b32.xlu0 %v6022, 64
      %v6073 = vpop.permute.xlu0 %6072
      %6074 = vrot.lane.b32.xlu0 %v6023, 64
      %v6075 = vpop.permute.xlu0 %6074
      %6076 = vrot.lane.b32.xlu0 %v6024, 64
      %v6077 = vpop.permute.xlu0 %6076
      %6078 = vrot.lane.b32.xlu0 %v6025, 64
      %v6079 = vpop.permute.xlu0 %6078
      %6080 = vrot.lane.b32.xlu0 %v6026, 64
      %v6081 = vpop.permute.xlu0 %6080
      %6082 = vrot.lane.b32.xlu0 %v6027, 64
      %v6083 = vpop.permute.xlu0 %6082
      %6084 = vrot.lane.b32.xlu0 %v6028, 64
      %v6085 = vpop.permute.xlu0 %6084
      %6086 = vrot.lane.b32.xlu0 %v6029, 64
      %v6087 = vpop.permute.xlu0 %6086
      %6088 = vrot.lane.b32.xlu0 %v6030, 64
      %v6089 = vpop.permute.xlu0 %6088
      %6090 = vrot.lane.b32.xlu0 %v6031, 64
      %v6091 = vpop.permute.xlu0 %6090
      %6092 = vrot.lane.b32.xlu0 %v6032, 64
      %v6093 = vpop.permute.xlu0 %6092
      %6094 = vrot.lane.b32.xlu0 %v6033, 64
      %v6095 = vpop.permute.xlu0 %6094
      %6096 = vrot.lane.b32.xlu0 %v6034, 64
      %v6097 = vpop.permute.xlu0 %6096
      %6098 = vrot.lane.b32.xlu0 %v6035, 64
      %v6099 = vpop.permute.xlu0 %6098
      %v6116 = vmul.f32 %v5989, %v6069
      %v6117 = vmul.f32 %v5991, %v6071
      %v6118 = vmul.f32 %v5993, %v6073
      %v6119 = vmul.f32 %v5995, %v6075
      %v6120 = vmul.f32 %v5997, %v6077
      %v6121 = vmul.f32 %v5999, %v6079
      %v6122 = vmul.f32 %v6001, %v6081
      %v6123 = vmul.f32 %v6003, %v6083
      %v6124 = vmul.f32 %v6005, %v6085
      %v6125 = vmul.f32 %v6007, %v6087
      %v6126 = vmul.f32 %v6009, %v6089
      %v6127 = vmul.f32 %v6011, %v6091
      %v6128 = vmul.f32 %v6013, %v6093
      %v6129 = vmul.f32 %v6015, %v6095
      %v6130 = vmul.f32 %v6017, %v6097
      %v6131 = vmul.f32 %v6019, %v6099
      %6148 = vrot.lane.b32.xlu0 %v6116, 32
      %v6149 = vpop.permute.xlu0 %6148
      %6150 = vrot.lane.b32.xlu0 %v6117, 32
      %v6151 = vpop.permute.xlu0 %6150
      %6152 = vrot.lane.b32.xlu0 %v6118, 32
      %v6153 = vpop.permute.xlu0 %6152
      %6154 = vrot.lane.b32.xlu0 %v6119, 32
      %v6155 = vpop.permute.xlu0 %6154
      %6156 = vrot.lane.b32.xlu0 %v6120, 32
      %v6157 = vpop.permute.xlu0 %6156
      %6158 = vrot.lane.b32.xlu0 %v6121, 32
      %v6159 = vpop.permute.xlu0 %6158
      %6160 = vrot.lane.b32.xlu0 %v6122, 32
      %v6161 = vpop.permute.xlu0 %6160
      %6162 = vrot.lane.b32.xlu0 %v6123, 32
      %v6163 = vpop.permute.xlu0 %6162
      %6164 = vrot.lane.b32.xlu0 %v6124, 32
      %v6165 = vpop.permute.xlu0 %6164
      %6166 = vrot.lane.b32.xlu0 %v6125, 32
      %v6167 = vpop.permute.xlu0 %6166
      %6168 = vrot.lane.b32.xlu0 %v6126, 32
      %v6169 = vpop.permute.xlu0 %6168
      %6170 = vrot.lane.b32.xlu0 %v6127, 32
      %v6171 = vpop.permute.xlu0 %6170
      %6172 = vrot.lane.b32.xlu0 %v6128, 32
      %v6173 = vpop.permute.xlu0 %6172
      %6174 = vrot.lane.b32.xlu0 %v6129, 32
      %v6175 = vpop.permute.xlu0 %6174
      %6176 = vrot.lane.b32.xlu0 %v6130, 32
      %v6177 = vpop.permute.xlu0 %6176
      %6178 = vrot.lane.b32.xlu0 %v6131, 32
      %v6179 = vpop.permute.xlu0 %6178
      %v6196 = vadd.f32 %v6036, %v6149
      %v6197 = vadd.f32 %v6037, %v6151
      %v6198 = vadd.f32 %v6038, %v6153
      %v6199 = vadd.f32 %v6039, %v6155
      %v6200 = vadd.f32 %v6040, %v6157
      %v6201 = vadd.f32 %v6041, %v6159
      %v6202 = vadd.f32 %v6042, %v6161
      %v6203 = vadd.f32 %v6043, %v6163
      %v6204 = vadd.f32 %v6044, %v6165
      %v6205 = vadd.f32 %v6045, %v6167
      %v6206 = vadd.f32 %v6046, %v6169
      %v6207 = vadd.f32 %v6047, %v6171
      %v6208 = vadd.f32 %v6048, %v6173
      %v6209 = vadd.f32 %v6049, %v6175
      %v6210 = vadd.f32 %v6050, %v6177
      %v6211 = vadd.f32 %v6051, %v6179
      %v6212 = vtanh.pop %v6196
      %v6213 = vtanh.pop %v6197
      %v6214 = vtanh.pop %v6198
      %v6215 = vtanh.pop %v6199
      %v6216 = vtanh.pop %v6200
      %v6217 = vtanh.pop %v6201
      %v6218 = vtanh.pop %v6202
      %v6219 = vtanh.pop %v6203
      %v6220 = vtanh.pop %v6204
      %v6221 = vtanh.pop %v6205
      %v6222 = vtanh.pop %v6206
      %v6223 = vtanh.pop %v6207
      %v6224 = vtanh.pop %v6208
      %v6225 = vtanh.pop %v6209
      %v6226 = vtanh.pop %v6210
      %v6227 = vtanh.pop %v6211
      %6244 = vrot.lane.b32.xlu0 %v6212, 64
      %v6245 = vpop.permute.xlu0 %6244
      %6246 = vrot.lane.b32.xlu0 %v6213, 64
      %v6247 = vpop.permute.xlu0 %6246
      %6248 = vrot.lane.b32.xlu0 %v6214, 64
      %v6249 = vpop.permute.xlu0 %6248
      %6250 = vrot.lane.b32.xlu0 %v6215, 64
      %v6251 = vpop.permute.xlu0 %6250
      %6252 = vrot.lane.b32.xlu0 %v6216, 64
      %v6253 = vpop.permute.xlu0 %6252
      %6254 = vrot.lane.b32.xlu0 %v6217, 64
      %v6255 = vpop.permute.xlu0 %6254
      %6256 = vrot.lane.b32.xlu0 %v6218, 64
      %v6257 = vpop.permute.xlu0 %6256
      %6258 = vrot.lane.b32.xlu0 %v6219, 64
      %v6259 = vpop.permute.xlu0 %6258
      %6260 = vrot.lane.b32.xlu0 %v6220, 64
      %v6261 = vpop.permute.xlu0 %6260
      %6262 = vrot.lane.b32.xlu0 %v6221, 64
      %v6263 = vpop.permute.xlu0 %6262
      %6264 = vrot.lane.b32.xlu0 %v6222, 64
      %v6265 = vpop.permute.xlu0 %6264
      %6266 = vrot.lane.b32.xlu0 %v6223, 64
      %v6267 = vpop.permute.xlu0 %6266
      %6268 = vrot.lane.b32.xlu0 %v6224, 64
      %v6269 = vpop.permute.xlu0 %6268
      %6270 = vrot.lane.b32.xlu0 %v6225, 64
      %v6271 = vpop.permute.xlu0 %6270
      %6272 = vrot.lane.b32.xlu0 %v6226, 64
      %v6273 = vpop.permute.xlu0 %6272
      %6274 = vrot.lane.b32.xlu0 %v6227, 64
      %v6275 = vpop.permute.xlu0 %6274
      %v6292 = vmul.f32 %v5989, %v6245
      %v6293 = vmul.f32 %v5991, %v6247
      %v6294 = vmul.f32 %v5993, %v6249
      %v6295 = vmul.f32 %v5995, %v6251
      %v6296 = vmul.f32 %v5997, %v6253
      %v6297 = vmul.f32 %v5999, %v6255
      %v6298 = vmul.f32 %v6001, %v6257
      %v6299 = vmul.f32 %v6003, %v6259
      %v6300 = vmul.f32 %v6005, %v6261
      %v6301 = vmul.f32 %v6007, %v6263
      %v6302 = vmul.f32 %v6009, %v6265
      %v6303 = vmul.f32 %v6011, %v6267
      %v6304 = vmul.f32 %v6013, %v6269
      %v6305 = vmul.f32 %v6015, %v6271
      %v6306 = vmul.f32 %v6017, %v6273
      %v6307 = vmul.f32 %v6019, %v6275
      %v6308 = vstv %s5724
      %vm6309 = vcmp.lt.s32.totalorder %v6308, %v39
      %vm6310 = vcmp.lt.s32.totalorder %v6308, %v40
      %vm6311 = vcmp.lt.s32.totalorder %v6308, %v41
      %vm6312 = vcmp.lt.s32.totalorder %v6308, %v42
      %vm6313 = vcmp.lt.s32.totalorder %v6308, %v43
      %vm6314 = vcmp.lt.s32.totalorder %v6308, %v44
      %vm6315 = vcmp.lt.s32.totalorder %v6308, %v45
      %vm6316 = vcmp.lt.s32.totalorder %v6308, %v46
      %vm6317 = vcmp.lt.s32.totalorder %v6308, %v47
      %vm6318 = vcmp.lt.s32.totalorder %v6308, %v48
      %vm6319 = vcmp.lt.s32.totalorder %v6308, %v49
      %vm6320 = vcmp.lt.s32.totalorder %v6308, %v50
      %vm6321 = vcmp.lt.s32.totalorder %v6308, %v51
      %vm6322 = vcmp.lt.s32.totalorder %v6308, %v52
      %vm6323 = vcmp.lt.s32.totalorder %v6308, %v53
      %vm6324 = vcmp.lt.s32.totalorder %v6308, %v54
      %s6325 = smul.u32 %s5181, 512
      %v6326 = vsel %vm6309, 1, 0
      %v6327 = vsel %vm6310, 1, 0
      %v6328 = vsel %vm6311, 1, 0
      %v6329 = vsel %vm6312, 1, 0
      %v6330 = vsel %vm6313, 1, 0
      %v6331 = vsel %vm6314, 1, 0
      %v6332 = vsel %vm6315, 1, 0
      %v6333 = vsel %vm6316, 1, 0
      %v6334 = vsel %vm6317, 1, 0
      %v6335 = vsel %vm6318, 1, 0
      %v6336 = vsel %vm6319, 1, 0
      %v6337 = vsel %vm6320, 1, 0
      %v6338 = vsel %vm6321, 1, 0
      %v6339 = vsel %vm6322, 1, 0
      %v6340 = vsel %vm6323, 1, 0
      %v6341 = vsel %vm6324, 1, 0
      %6342 = vset.pattern.permute.xlu0 0
      %6343 = vperm.xlu0 %6342, %v6326
      %v6344 = vpop.permute.xlu0 %6343
      %6345 = vset.pattern.permute.xlu0 0
      %6346 = vperm.xlu0 %6345, %v6327
      %v6347 = vpop.permute.xlu0 %6346
      %6348 = vset.pattern.permute.xlu0 0
      %6349 = vperm.xlu0 %6348, %v6328
      %v6350 = vpop.permute.xlu0 %6349
      %6351 = vset.pattern.permute.xlu0 0
      %6352 = vperm.xlu0 %6351, %v6329
      %v6353 = vpop.permute.xlu0 %6352
      %6354 = vset.pattern.permute.xlu0 0
      %6355 = vperm.xlu0 %6354, %v6330
      %v6356 = vpop.permute.xlu0 %6355
      %6357 = vset.pattern.permute.xlu0 0
      %6358 = vperm.xlu0 %6357, %v6331
      %v6359 = vpop.permute.xlu0 %6358
      %6360 = vset.pattern.permute.xlu0 0
      %6361 = vperm.xlu0 %6360, %v6332
      %v6362 = vpop.permute.xlu0 %6361
      %6363 = vset.pattern.permute.xlu0 0
      %6364 = vperm.xlu0 %6363, %v6333
      %v6365 = vpop.permute.xlu0 %6364
      %6366 = vset.pattern.permute.xlu0 0
      %6367 = vperm.xlu0 %6366, %v6334
      %v6368 = vpop.permute.xlu0 %6367
      %6369 = vset.pattern.permute.xlu0 0
      %6370 = vperm.xlu0 %6369, %v6335
      %v6371 = vpop.permute.xlu0 %6370
      %6372 = vset.pattern.permute.xlu0 0
      %6373 = vperm.xlu0 %6372, %v6336
      %v6374 = vpop.permute.xlu0 %6373
      %6375 = vset.pattern.permute.xlu0 0
      %6376 = vperm.xlu0 %6375, %v6337
      %v6377 = vpop.permute.xlu0 %6376
      %6378 = vset.pattern.permute.xlu0 0
      %6379 = vperm.xlu0 %6378, %v6338
      %v6380 = vpop.permute.xlu0 %6379
      %6381 = vset.pattern.permute.xlu0 0
      %6382 = vperm.xlu0 %6381, %v6339
      %v6383 = vpop.permute.xlu0 %6382
      %6384 = vset.pattern.permute.xlu0 0
      %6385 = vperm.xlu0 %6384, %v6340
      %v6386 = vpop.permute.xlu0 %6385
      %6387 = vset.pattern.permute.xlu0 0
      %6388 = vperm.xlu0 %6387, %v6341
      %v6389 = vpop.permute.xlu0 %6388
      %vm6390 = vcmp.eq.s32.totalorder %v6344, 1
      %vm6391 = vcmp.eq.s32.totalorder %v6347, 1
      %vm6392 = vcmp.eq.s32.totalorder %v6350, 1
      %vm6393 = vcmp.eq.s32.totalorder %v6353, 1
      %vm6394 = vcmp.eq.s32.totalorder %v6356, 1
      %vm6395 = vcmp.eq.s32.totalorder %v6359, 1
      %vm6396 = vcmp.eq.s32.totalorder %v6362, 1
      %vm6397 = vcmp.eq.s32.totalorder %v6365, 1
      %vm6398 = vcmp.eq.s32.totalorder %v6368, 1
      %vm6399 = vcmp.eq.s32.totalorder %v6371, 1
      %vm6400 = vcmp.eq.s32.totalorder %v6374, 1
      %vm6401 = vcmp.eq.s32.totalorder %v6377, 1
      %vm6402 = vcmp.eq.s32.totalorder %v6380, 1
      %vm6403 = vcmp.eq.s32.totalorder %v6383, 1
      %vm6404 = vcmp.eq.s32.totalorder %v6386, 1
      %vm6405 = vcmp.eq.s32.totalorder %v6389, 1
      %v6406 = vsel %vm6390, %v6292, 0.0
      %v6407 = vsel %vm6391, %v6293, 0.0
      %v6408 = vsel %vm6392, %v6294, 0.0
      %v6409 = vsel %vm6393, %v6295, 0.0
      %v6410 = vsel %vm6394, %v6296, 0.0
      %v6411 = vsel %vm6395, %v6297, 0.0
      %v6412 = vsel %vm6396, %v6298, 0.0
      %v6413 = vsel %vm6397, %v6299, 0.0
      %v6414 = vsel %vm6398, %v6300, 0.0
      %v6415 = vsel %vm6399, %v6301, 0.0
      %v6416 = vsel %vm6400, %v6302, 0.0
      %v6417 = vsel %vm6401, %v6303, 0.0
      %v6418 = vsel %vm6402, %v6304, 0.0
      %v6419 = vsel %vm6403, %v6305, 0.0
      %v6420 = vsel %vm6404, %v6306, 0.0
      %v6421 = vsel %vm6405, %v6307, 0.0
      %v6422 = vpack.c.bf16 %v6407, %v6406
      %v6423 = vpack.c.bf16 %v6409, %v6408
      %v6424 = vpack.c.bf16 %v6411, %v6410
      %v6425 = vpack.c.bf16 %v6413, %v6412
      %v6426 = vpack.c.bf16 %v6415, %v6414
      %v6427 = vpack.c.bf16 %v6417, %v6416
      %v6428 = vpack.c.bf16 %v6419, %v6418
      %v6429 = vpack.c.bf16 %v6421, %v6420
      %6438 = vrot.lane.b32.xlu0 %v6422, 32
      %v6439 = vpop.permute.xlu0 %6438
      %6440 = vrot.lane.b32.xlu0 %v6423, 32
      %v6441 = vpop.permute.xlu0 %6440
      %6442 = vrot.lane.b32.xlu0 %v6424, 32
      %v6443 = vpop.permute.xlu0 %6442
      %6444 = vrot.lane.b32.xlu0 %v6425, 32
      %v6445 = vpop.permute.xlu0 %6444
      %6446 = vrot.lane.b32.xlu0 %v6426, 32
      %v6447 = vpop.permute.xlu0 %6446
      %6448 = vrot.lane.b32.xlu0 %v6427, 32
      %v6449 = vpop.permute.xlu0 %6448
      %6450 = vrot.lane.b32.xlu0 %v6428, 32
      %v6451 = vpop.permute.xlu0 %6450
      %6452 = vrot.lane.b32.xlu0 %v6429, 32
      %v6453 = vpop.permute.xlu0 %6452
      %s6462 = sshra.s32 %s6325, 4
      %s6463 = sand.u32 %s6325, 15
      %s6464 = smul.addr %s6462, 8
      %s6465 = scalar_lea.vmem [#allocation3], %s6464
      %6466 = vst.msk [vmem:[%s6465] sm:$0xff] %vm4638, %v6439
      %6467 = vst.msk [vmem:[%s6465 + $0x8] sm:$0xff] %vm4638, %v6441
      %6468 = vst.msk [vmem:[%s6465 + $0x10] sm:$0xff] %vm4638, %v6443
      %6469 = vst.msk [vmem:[%s6465 + $0x18] sm:$0xff] %vm4638, %v6445
      %6470 = vst.msk [vmem:[%s6465 + $0x20] sm:$0xff] %vm4638, %v6447
      %6471 = vst.msk [vmem:[%s6465 + $0x28] sm:$0xff] %vm4638, %v6449
      %6472 = vst.msk [vmem:[%s6465 + $0x30] sm:$0xff] %vm4638, %v6451
      %6473 = vst.msk [vmem:[%s6465 + $0x38] sm:$0xff] %vm4638, %v6453
      %v6474 = vsel %vm6390, %v6292, %v5186
      %v6475 = vsel %vm6391, %v6293, %v5187
      %v6476 = vsel %vm6392, %v6294, %v5188
      %v6477 = vsel %vm6393, %v6295, %v5189
      %v6478 = vsel %vm6394, %v6296, %v5190
      %v6479 = vsel %vm6395, %v6297, %v5191
      %v6480 = vsel %vm6396, %v6298, %v5192
      %v6481 = vsel %vm6397, %v6299, %v5193
      %v6482 = vsel %vm6398, %v6300, %v5194
      %v6483 = vsel %vm6399, %v6301, %v5195
      %v6484 = vsel %vm6400, %v6302, %v5196
      %v6485 = vsel %vm6401, %v6303, %v5197
      %v6486 = vsel %vm6402, %v6304, %v5198
      %v6487 = vsel %vm6403, %v6305, %v5199
      %v6488 = vsel %vm6404, %v6306, %v5200
      %v6489 = vsel %vm6405, %v6307, %v5201
      %v6490 = vsel %vm6390, %v6196, %v5202
      %v6491 = vsel %vm6391, %v6197, %v5203
      %v6492 = vsel %vm6392, %v6198, %v5204
      %v6493 = vsel %vm6393, %v6199, %v5205
      %v6494 = vsel %vm6394, %v6200, %v5206
      %v6495 = vsel %vm6395, %v6201, %v5207
      %v6496 = vsel %vm6396, %v6202, %v5208
      %v6497 = vsel %vm6397, %v6203, %v5209
      %v6498 = vsel %vm6398, %v6204, %v5210
      %v6499 = vsel %vm6399, %v6205, %v5211
      %v6500 = vsel %vm6400, %v6206, %v5212
      %v6501 = vsel %vm6401, %v6207, %v5213
      %v6502 = vsel %vm6402, %v6208, %v5214
      %v6503 = vsel %vm6403, %v6209, %v5215
      %v6504 = vsel %vm6404, %v6210, %v5216
      %v6505 = vsel %vm6405, %v6211, %v5217
      %s6506 = sadd.s32 %s5725, 128
      %s6507 = scalar_lea.vmem [#allocation2], %s6506
      %v6508 = vld [vmem:[%s6507] sm:$0xff]
      %v6509 = vld [vmem:[%s6507 + $0x8] sm:$0xff]
      %v6510 = vld [vmem:[%s6507 + $0x10] sm:$0xff]
      %v6511 = vld [vmem:[%s6507 + $0x18] sm:$0xff]
      %v6512 = vld [vmem:[%s6507 + $0x20] sm:$0xff]
      %v6513 = vld [vmem:[%s6507 + $0x28] sm:$0xff]
      %v6514 = vld [vmem:[%s6507 + $0x30] sm:$0xff]
      %v6515 = vld [vmem:[%s6507 + $0x38] sm:$0xff]
      %v6516 = vld [vmem:[%s6507 + $0x40] sm:$0xff]
      %v6517 = vld [vmem:[%s6507 + $0x48] sm:$0xff]
      %v6518 = vld [vmem:[%s6507 + $0x50] sm:$0xff]
      %v6519 = vld [vmem:[%s6507 + $0x58] sm:$0xff]
      %v6520 = vld [vmem:[%s6507 + $0x60] sm:$0xff]
      %v6521 = vld [vmem:[%s6507 + $0x68] sm:$0xff]
      %v6522 = vld [vmem:[%s6507 + $0x70] sm:$0xff]
      %v6523 = vld [vmem:[%s6507 + $0x78] sm:$0xff]
      %v6524 = vpack.c.bf16 %v6475, %v6474
      %v6525 = vpack.c.bf16 %v6477, %v6476
      %v6526 = vpack.c.bf16 %v6479, %v6478
      %v6527 = vpack.c.bf16 %v6481, %v6480
      %v6528 = vpack.c.bf16 %v6483, %v6482
      %v6529 = vpack.c.bf16 %v6485, %v6484
      %v6530 = vpack.c.bf16 %v6487, %v6486
      %v6531 = vpack.c.bf16 %v6489, %v6488
      %6540 = vrot.lane.b32.xlu0 %v6524, 32
      %v6541 = vpop.permute.xlu0 %6540
      %6542 = vrot.lane.b32.xlu0 %v6525, 32
      %v6543 = vpop.permute.xlu0 %6542
      %6544 = vrot.lane.b32.xlu0 %v6526, 32
      %v6545 = vpop.permute.xlu0 %6544
      %6546 = vrot.lane.b32.xlu0 %v6527, 32
      %v6547 = vpop.permute.xlu0 %6546
      %6548 = vrot.lane.b32.xlu0 %v6528, 32
      %v6549 = vpop.permute.xlu0 %6548
      %6550 = vrot.lane.b32.xlu0 %v6529, 32
      %v6551 = vpop.permute.xlu0 %6550
      %6552 = vrot.lane.b32.xlu0 %v6530, 32
      %v6553 = vpop.permute.xlu0 %6552
      %6554 = vrot.lane.b32.xlu0 %v6531, 32
      %v6555 = vpop.permute.xlu0 %6554
      %v6557 = vsel %vm4638, %v6541, 0
      %v6560 = vsel %vm4638, %v6543, 0
      %v6563 = vsel %vm4638, %v6545, 0
      %v6566 = vsel %vm4638, %v6547, 0
      %v6569 = vsel %vm4638, %v6549, 0
      %v6572 = vsel %vm4638, %v6551, 0
      %v6575 = vsel %vm4638, %v6553, 0
      %v6578 = vsel %vm4638, %v6555, 0
      %6580 = vmatprep.subr.bf16.mxu0 0
      %6581 = vmatpush1.bf16.msra.mxu0 %v5783
      %6582 = vmatprep.subr.bf16.mxu0 0
      %6583 = vmatpush1.bf16.msra.mxu0 %v5784
      %6584 = vmatprep.subr.bf16.mxu0 0
      %6585 = vmatpush1.bf16.msra.mxu0 0
      %6586 = vmatprep.subr.bf16.mxu0 0
      %6587 = vmatpush1.bf16.msra.mxu0 0
      %6588 = vmatprep.subr.bf16.mxu0 0
      %6589 = vmatpush1.bf16.msra.mxu0 0
      %6590 = vmatprep.subr.bf16.mxu0 0
      %6591 = vmatpush1.bf16.msra.mxu0 0
      %6592 = vmatprep.subr.bf16.mxu0 0
      %6593 = vmatpush1.bf16.msra.mxu0 0
      %6594 = vmatprep.subr.bf16.mxu0 0
      %6595 = vmatpush1.bf16.msra.mxu0 0
      %6596 = vmatprep.subr.bf16.mxu0 0
      %6597 = vmatpush1.bf16.msra.mxu0 0
      %6598 = vmatprep.subr.bf16.mxu0 0
      %6599 = vmatpush1.bf16.msra.mxu0 0
      %6600 = vmatprep.subr.bf16.mxu0 0
      %6601 = vmatpush1.bf16.msra.mxu0 0
      %6602 = vmatprep.subr.bf16.mxu0 0
      %6603 = vmatpush1.bf16.msra.mxu0 0
      %6604 = vmatprep.subr.bf16.mxu0 0
      %6605 = vmatpush1.bf16.msra.mxu0 0
      %6606 = vmatprep.subr.bf16.mxu0 0
      %6607 = vmatpush1.bf16.msra.mxu0 0
      %6608 = vmatprep.subr.bf16.mxu0 0
      %6609 = vmatpush1.bf16.msra.mxu0 0
      %6610 = vmatprep.subr.bf16.mxu0 0
      %6611 = vmatpush1.bf16.msra.mxu0 0
      %6612 = vmatprep.mubr.bf16.mxu0 0
      %6613 = vmatmul.mubr.bf16.gmra.mrb[0].mxu0 %v6557
      %v6614 = vpop.f32.mrb[0].mxu0
      %v6615 = vadd.f32 0.0, %v6614
      %v6616 = vpop.f32.mrb[0].mxu0
      %v6617 = vpop.f32.mrb[0].mxu0
      %v6618 = vadd.f32 0.0, %v6617
      %v6619 = vpop.f32.mrb[0].mxu0
      %6620 = vmatprep.mubr.bf16.mxu0 0
      %6621 = vmatmul.mubr.bf16.gmra.mrb[0].mxu0 %v6560
      %v6622 = vpop.f32.mrb[0].mxu0
      %v6623 = vadd.f32 0.0, %v6622
      %v6624 = vpop.f32.mrb[0].mxu0
      %v6625 = vpop.f32.mrb[0].mxu0
      %v6626 = vadd.f32 0.0, %v6625
      %v6627 = vpop.f32.mrb[0].mxu0
      %6628 = vmatprep.mubr.bf16.mxu0 0
      %6629 = vmatmul.mubr.bf16.gmra.mrb[0].mxu0 %v6563
      %v6630 = vpop.f32.mrb[0].mxu0
      %v6631 = vadd.f32 0.0, %v6630
      %v6632 = vpop.f32.mrb[0].mxu0
      %v6633 = vpop.f32.mrb[0].mxu0
      %v6634 = vadd.f32 0.0, %v6633
      %v6635 = vpop.f32.mrb[0].mxu0
      %6636 = vmatprep.mubr.bf16.mxu0 0
      %6637 = vmatmul.mubr.bf16.gmra.mrb[0].mxu0 %v6566
      %v6638 = vpop.f32.mrb[0].mxu0
      %v6639 = vadd.f32 0.0, %v6638
      %v6640 = vpop.f32.mrb[0].mxu0
      %v6641 = vpop.f32.mrb[0].mxu0
      %v6642 = vadd.f32 0.0, %v6641
      %v6643 = vpop.f32.mrb[0].mxu0
      %6644 = vmatprep.mubr.bf16.mxu0 0
      %6645 = vmatmul.mubr.bf16.gmra.mrb[0].mxu0 %v6569
      %v6646 = vpop.f32.mrb[0].mxu0
      %v6647 = vadd.f32 0.0, %v6646
      %v6648 = vpop.f32.mrb[0].mxu0
      %v6649 = vpop.f32.mrb[0].mxu0
      %v6650 = vadd.f32 0.0, %v6649
      %v6651 = vpop.f32.mrb[0].mxu0
      %6652 = vmatprep.mubr.bf16.mxu0 0
      %6653 = vmatmul.mubr.bf16.gmra.mrb[0].mxu0 %v6572
      %v6654 = vpop.f32.mrb[0].mxu0
      %v6655 = vadd.f32 0.0, %v6654
      %v6656 = vpop.f32.mrb[0].mxu0
      %v6657 = vpop.f32.mrb[0].mxu0
      %v6658 = vadd.f32 0.0, %v6657
      %v6659 = vpop.f32.mrb[0].mxu0
      %6660 = vmatprep.mubr.bf16.mxu0 0
      %6661 = vmatmul.mubr.bf16.gmra.mrb[0].mxu0 %v6575
      %v6662 = vpop.f32.mrb[0].mxu0
      %v6663 = vadd.f32 0.0, %v6662
      %v6664 = vpop.f32.mrb[0].mxu0
      %v6665 = vpop.f32.mrb[0].mxu0
      %v6666 = vadd.f32 0.0, %v6665
      %v6667 = vpop.f32.mrb[0].mxu0
      %6668 = vmatprep.mubr.bf16.mxu0 0
      %6669 = vmatmul.mubr.bf16.gmra.mrb[0].mxu0 %v6578
      %v6670 = vpop.f32.mrb[0].mxu0
      %v6671 = vadd.f32 0.0, %v6670
      %v6672 = vpop.f32.mrb[0].mxu0
      %v6673 = vpop.f32.mrb[0].mxu0
      %v6674 = vadd.f32 0.0, %v6673
      %v6675 = vpop.f32.mrb[0].mxu0
      %6676 = vdwg.mxu0
      %v6677 = vadd.f32 %v6508, %v6615
      %v6678 = vadd.f32 %v6509, %v6618
      %v6679 = vadd.f32 %v6510, %v6623
      %v6680 = vadd.f32 %v6511, %v6626
      %v6681 = vadd.f32 %v6512, %v6631
      %v6682 = vadd.f32 %v6513, %v6634
      %v6683 = vadd.f32 %v6514, %v6639
      %v6684 = vadd.f32 %v6515, %v6642
      %v6685 = vadd.f32 %v6516, %v6647
      %v6686 = vadd.f32 %v6517, %v6650
      %v6687 = vadd.f32 %v6518, %v6655
      %v6688 = vadd.f32 %v6519, %v6658
      %v6689 = vadd.f32 %v6520, %v6663
      %v6690 = vadd.f32 %v6521, %v6666
      %v6691 = vadd.f32 %v6522, %v6671
      %v6692 = vadd.f32 %v6523, %v6674
      %v6693 = vxor.u32 %v6677, 2147483648
      %v6694 = vxor.u32 %v6678, 2147483648
      %v6695 = vxor.u32 %v6679, 2147483648
      %v6696 = vxor.u32 %v6680, 2147483648
      %v6697 = vxor.u32 %v6681, 2147483648
      %v6698 = vxor.u32 %v6682, 2147483648
      %v6699 = vxor.u32 %v6683, 2147483648
      %v6700 = vxor.u32 %v6684, 2147483648
      %v6701 = vxor.u32 %v6685, 2147483648
      %v6702 = vxor.u32 %v6686, 2147483648
      %v6703 = vxor.u32 %v6687, 2147483648
      %v6704 = vxor.u32 %v6688, 2147483648
      %v6705 = vxor.u32 %v6689, 2147483648
      %v6706 = vxor.u32 %v6690, 2147483648
      %v6707 = vxor.u32 %v6691, 2147483648
      %v6708 = vxor.u32 %v6692, 2147483648
      %v6709 = vmul.f32 %v6693, 1.442695
      %v6710 = vpow.pop %v6709
      %v6711 = vmul.f32 %v6694, 1.442695
      %v6712 = vpow.pop %v6711
      %v6713 = vmul.f32 %v6695, 1.442695
      %v6714 = vpow.pop %v6713
      %v6715 = vmul.f32 %v6696, 1.442695
      %v6716 = vpow.pop %v6715
      %v6717 = vmul.f32 %v6697, 1.442695
      %v6718 = vpow.pop %v6717
      %v6719 = vmul.f32 %v6698, 1.442695
      %v6720 = vpow.pop %v6719
      %v6721 = vmul.f32 %v6699, 1.442695
      %v6722 = vpow.pop %v6721
      %v6723 = vmul.f32 %v6700, 1.442695
      %v6724 = vpow.pop %v6723
      %v6725 = vmul.f32 %v6701, 1.442695
      %v6726 = vpow.pop %v6725
      %v6727 = vmul.f32 %v6702, 1.442695
      %v6728 = vpow.pop %v6727
      %v6729 = vmul.f32 %v6703, 1.442695
      %v6730 = vpow.pop %v6729
      %v6731 = vmul.f32 %v6704, 1.442695
      %v6732 = vpow.pop %v6731
      %v6733 = vmul.f32 %v6705, 1.442695
      %v6734 = vpow.pop %v6733
      %v6735 = vmul.f32 %v6706, 1.442695
      %v6736 = vpow.pop %v6735
      %v6737 = vmul.f32 %v6707, 1.442695
      %v6738 = vpow.pop %v6737
      %v6739 = vmul.f32 %v6708, 1.442695
      %v6740 = vpow.pop %v6739
      %v6741 = vadd.f32 %v6710, 1.0
      %v6742 = vadd.f32 %v6712, 1.0
      %v6743 = vadd.f32 %v6714, 1.0
      %v6744 = vadd.f32 %v6716, 1.0
      %v6745 = vadd.f32 %v6718, 1.0
      %v6746 = vadd.f32 %v6720, 1.0
      %v6747 = vadd.f32 %v6722, 1.0
      %v6748 = vadd.f32 %v6724, 1.0
      %v6749 = vadd.f32 %v6726, 1.0
      %v6750 = vadd.f32 %v6728, 1.0
      %v6751 = vadd.f32 %v6730, 1.0
      %v6752 = vadd.f32 %v6732, 1.0
      %v6753 = vadd.f32 %v6734, 1.0
      %v6754 = vadd.f32 %v6736, 1.0
      %v6755 = vadd.f32 %v6738, 1.0
      %v6756 = vadd.f32 %v6740, 1.0
      %v6757 = vrcp.pop %v6741
      %v6758 = vmul.f32 1.0, %v6757
      %v6759 = vrcp.pop %v6742
      %v6760 = vmul.f32 1.0, %v6759
      %v6761 = vrcp.pop %v6743
      %v6762 = vmul.f32 1.0, %v6761
      %v6763 = vrcp.pop %v6744
      %v6764 = vmul.f32 1.0, %v6763
      %v6765 = vrcp.pop %v6745
      %v6766 = vmul.f32 1.0, %v6765
      %v6767 = vrcp.pop %v6746
      %v6768 = vmul.f32 1.0, %v6767
      %v6769 = vrcp.pop %v6747
      %v6770 = vmul.f32 1.0, %v6769
      %v6771 = vrcp.pop %v6748
      %v6772 = vmul.f32 1.0, %v6771
      %v6773 = vrcp.pop %v6749
      %v6774 = vmul.f32 1.0, %v6773
      %v6775 = vrcp.pop %v6750
      %v6776 = vmul.f32 1.0, %v6775
      %v6777 = vrcp.pop %v6751
      %v6778 = vmul.f32 1.0, %v6777
      %v6779 = vrcp.pop %v6752
      %v6780 = vmul.f32 1.0, %v6779
      %v6781 = vrcp.pop %v6753
      %v6782 = vmul.f32 1.0, %v6781
      %v6783 = vrcp.pop %v6754
      %v6784 = vmul.f32 1.0, %v6783
      %v6785 = vrcp.pop %v6755
      %v6786 = vmul.f32 1.0, %v6785
      %v6787 = vrcp.pop %v6756
      %v6788 = vmul.f32 1.0, %v6787
      %v6789 = vtanh.pop %v6677
      %v6790 = vtanh.pop %v6678
      %v6791 = vtanh.pop %v6679
      %v6792 = vtanh.pop %v6680
      %v6793 = vtanh.pop %v6681
      %v6794 = vtanh.pop %v6682
      %v6795 = vtanh.pop %v6683
      %v6796 = vtanh.pop %v6684
      %v6797 = vtanh.pop %v6685
      %v6798 = vtanh.pop %v6686
      %v6799 = vtanh.pop %v6687
      %v6800 = vtanh.pop %v6688
      %v6801 = vtanh.pop %v6689
      %v6802 = vtanh.pop %v6690
      %v6803 = vtanh.pop %v6691
      %v6804 = vtanh.pop %v6692
      %v6805 = vmul.f32 %v6758, %v6490
      %v6806 = vmul.f32 %v6760, %v6491
      %v6807 = vmul.f32 %v6762, %v6492
      %v6808 = vmul.f32 %v6764, %v6493
      %v6809 = vmul.f32 %v6766, %v6494
      %v6810 = vmul.f32 %v6768, %v6495
      %v6811 = vmul.f32 %v6770, %v6496
      %v6812 = vmul.f32 %v6772, %v6497
      %v6813 = vmul.f32 %v6774, %v6498
      %v6814 = vmul.f32 %v6776, %v6499
      %v6815 = vmul.f32 %v6778, %v6500
      %v6816 = vmul.f32 %v6780, %v6501
      %v6817 = vmul.f32 %v6782, %v6502
      %v6818 = vmul.f32 %v6784, %v6503
      %v6819 = vmul.f32 %v6786, %v6504
      %v6820 = vmul.f32 %v6788, %v6505
      %6837 = vrot.lane.b32.xlu0 %v6789, 64
      %v6838 = vpop.permute.xlu0 %6837
      %6839 = vrot.lane.b32.xlu0 %v6790, 64
      %v6840 = vpop.permute.xlu0 %6839
      %6841 = vrot.lane.b32.xlu0 %v6791, 64
      %v6842 = vpop.permute.xlu0 %6841
      %6843 = vrot.lane.b32.xlu0 %v6792, 64
      %v6844 = vpop.permute.xlu0 %6843
      %6845 = vrot.lane.b32.xlu0 %v6793, 64
      %v6846 = vpop.permute.xlu0 %6845
      %6847 = vrot.lane.b32.xlu0 %v6794, 64
      %v6848 = vpop.permute.xlu0 %6847
      %6849 = vrot.lane.b32.xlu0 %v6795, 64
      %v6850 = vpop.permute.xlu0 %6849
      %6851 = vrot.lane.b32.xlu0 %v6796, 64
      %v6852 = vpop.permute.xlu0 %6851
      %6853 = vrot.lane.b32.xlu0 %v6797, 64
      %v6854 = vpop.permute.xlu0 %6853
      %6855 = vrot.lane.b32.xlu0 %v6798, 64
      %v6856 = vpop.permute.xlu0 %6855
      %6857 = vrot.lane.b32.xlu0 %v6799, 64
      %v6858 = vpop.permute.xlu0 %6857
      %6859 = vrot.lane.b32.xlu0 %v6800, 64
      %v6860 = vpop.permute.xlu0 %6859
      %6861 = vrot.lane.b32.xlu0 %v6801, 64
      %v6862 = vpop.permute.xlu0 %6861
      %6863 = vrot.lane.b32.xlu0 %v6802, 64
      %v6864 = vpop.permute.xlu0 %6863
      %6865 = vrot.lane.b32.xlu0 %v6803, 64
      %v6866 = vpop.permute.xlu0 %6865
      %6867 = vrot.lane.b32.xlu0 %v6804, 64
      %v6868 = vpop.permute.xlu0 %6867
      %v6885 = vmul.f32 %v6758, %v6838
      %v6886 = vmul.f32 %v6760, %v6840
      %v6887 = vmul.f32 %v6762, %v6842
      %v6888 = vmul.f32 %v6764, %v6844
      %v6889 = vmul.f32 %v6766, %v6846
      %v6890 = vmul.f32 %v6768, %v6848
      %v6891 = vmul.f32 %v6770, %v6850
      %v6892 = vmul.f32 %v6772, %v6852
      %v6893 = vmul.f32 %v6774, %v6854
      %v6894 = vmul.f32 %v6776, %v6856
      %v6895 = vmul.f32 %v6778, %v6858
      %v6896 = vmul.f32 %v6780, %v6860
      %v6897 = vmul.f32 %v6782, %v6862
      %v6898 = vmul.f32 %v6784, %v6864
      %v6899 = vmul.f32 %v6786, %v6866
      %v6900 = vmul.f32 %v6788, %v6868
      %6917 = vrot.lane.b32.xlu0 %v6885, 32
      %v6918 = vpop.permute.xlu0 %6917
      %6919 = vrot.lane.b32.xlu0 %v6886, 32
      %v6920 = vpop.permute.xlu0 %6919
      %6921 = vrot.lane.b32.xlu0 %v6887, 32
      %v6922 = vpop.permute.xlu0 %6921
      %6923 = vrot.lane.b32.xlu0 %v6888, 32
      %v6924 = vpop.permute.xlu0 %6923
      %6925 = vrot.lane.b32.xlu0 %v6889, 32
      %v6926 = vpop.permute.xlu0 %6925
      %6927 = vrot.lane.b32.xlu0 %v6890, 32
      %v6928 = vpop.permute.xlu0 %6927
      %6929 = vrot.lane.b32.xlu0 %v6891, 32
      %v6930 = vpop.permute.xlu0 %6929
      %6931 = vrot.lane.b32.xlu0 %v6892, 32
      %v6932 = vpop.permute.xlu0 %6931
      %6933 = vrot.lane.b32.xlu0 %v6893, 32
      %v6934 = vpop.permute.xlu0 %6933
      %6935 = vrot.lane.b32.xlu0 %v6894, 32
      %v6936 = vpop.permute.xlu0 %6935
      %6937 = vrot.lane.b32.xlu0 %v6895, 32
      %v6938 = vpop.permute.xlu0 %6937
      %6939 = vrot.lane.b32.xlu0 %v6896, 32
      %v6940 = vpop.permute.xlu0 %6939
      %6941 = vrot.lane.b32.xlu0 %v6897, 32
      %v6942 = vpop.permute.xlu0 %6941
      %6943 = vrot.lane.b32.xlu0 %v6898, 32
      %v6944 = vpop.permute.xlu0 %6943
      %6945 = vrot.lane.b32.xlu0 %v6899, 32
      %v6946 = vpop.permute.xlu0 %6945
      %6947 = vrot.lane.b32.xlu0 %v6900, 32
      %v6948 = vpop.permute.xlu0 %6947
      %v6965 = vadd.f32 %v6805, %v6918
      %v6966 = vadd.f32 %v6806, %v6920
      %v6967 = vadd.f32 %v6807, %v6922
      %v6968 = vadd.f32 %v6808, %v6924
      %v6969 = vadd.f32 %v6809, %v6926
      %v6970 = vadd.f32 %v6810, %v6928
      %v6971 = vadd.f32 %v6811, %v6930
      %v6972 = vadd.f32 %v6812, %v6932
      %v6973 = vadd.f32 %v6813, %v6934
      %v6974 = vadd.f32 %v6814, %v6936
      %v6975 = vadd.f32 %v6815, %v6938
      %v6976 = vadd.f32 %v6816, %v6940
      %v6977 = vadd.f32 %v6817, %v6942
      %v6978 = vadd.f32 %v6818, %v6944
      %v6979 = vadd.f32 %v6819, %v6946
      %v6980 = vadd.f32 %v6820, %v6948
      %v6981 = vtanh.pop %v6965
      %v6982 = vtanh.pop %v6966
      %v6983 = vtanh.pop %v6967
      %v6984 = vtanh.pop %v6968
      %v6985 = vtanh.pop %v6969
      %v6986 = vtanh.pop %v6970
      %v6987 = vtanh.pop %v6971
      %v6988 = vtanh.pop %v6972
      %v6989 = vtanh.pop %v6973
      %v6990 = vtanh.pop %v6974
      %v6991 = vtanh.pop %v6975
      %v6992 = vtanh.pop %v6976
      %v6993 = vtanh.pop %v6977
      %v6994 = vtanh.pop %v6978
      %v6995 = vtanh.pop %v6979
      %v6996 = vtanh.pop %v6980
      %7013 = vrot.lane.b32.xlu0 %v6981, 64
      %v7014 = vpop.permute.xlu0 %7013
      %7015 = vrot.lane.b32.xlu0 %v6982, 64
      %v7016 = vpop.permute.xlu0 %7015
      %7017 = vrot.lane.b32.xlu0 %v6983, 64
      %v7018 = vpop.permute.xlu0 %7017
      %7019 = vrot.lane.b32.xlu0 %v6984, 64
      %v7020 = vpop.permute.xlu0 %7019
      %7021 = vrot.lane.b32.xlu0 %v6985, 64
      %v7022 = vpop.permute.xlu0 %7021
      %7023 = vrot.lane.b32.xlu0 %v6986, 64
      %v7024 = vpop.permute.xlu0 %7023
      %7025 = vrot.lane.b32.xlu0 %v6987, 64
      %v7026 = vpop.permute.xlu0 %7025
      %7027 = vrot.lane.b32.xlu0 %v6988, 64
      %v7028 = vpop.permute.xlu0 %7027
      %7029 = vrot.lane.b32.xlu0 %v6989, 64
      %v7030 = vpop.permute.xlu0 %7029
      %7031 = vrot.lane.b32.xlu0 %v6990, 64
      %v7032 = vpop.permute.xlu0 %7031
      %7033 = vrot.lane.b32.xlu0 %v6991, 64
      %v7034 = vpop.permute.xlu0 %7033
      %7035 = vrot.lane.b32.xlu0 %v6992, 64
      %v7036 = vpop.permute.xlu0 %7035
      %7037 = vrot.lane.b32.xlu0 %v6993, 64
      %v7038 = vpop.permute.xlu0 %7037
      %7039 = vrot.lane.b32.xlu0 %v6994, 64
      %v7040 = vpop.permute.xlu0 %7039
      %7041 = vrot.lane.b32.xlu0 %v6995, 64
      %v7042 = vpop.permute.xlu0 %7041
      %7043 = vrot.lane.b32.xlu0 %v6996, 64
      %v7044 = vpop.permute.xlu0 %7043
      %v7061 = vmul.f32 %v6758, %v7014
      %v7062 = vmul.f32 %v6760, %v7016
      %v7063 = vmul.f32 %v6762, %v7018
      %v7064 = vmul.f32 %v6764, %v7020
      %v7065 = vmul.f32 %v6766, %v7022
      %v7066 = vmul.f32 %v6768, %v7024
      %v7067 = vmul.f32 %v6770, %v7026
      %v7068 = vmul.f32 %v6772, %v7028
      %v7069 = vmul.f32 %v6774, %v7030
      %v7070 = vmul.f32 %v6776, %v7032
      %v7071 = vmul.f32 %v6778, %v7034
      %v7072 = vmul.f32 %v6780, %v7036
      %v7073 = vmul.f32 %v6782, %v7038
      %v7074 = vmul.f32 %v6784, %v7040
      %v7075 = vmul.f32 %v6786, %v7042
      %v7076 = vmul.f32 %v6788, %v7044
      %s7077 = sadd.s32 %s5724, 1
      %v7078 = vstv %s7077
      %vm7079 = vcmp.lt.s32.totalorder %v7078, %v39
      %vm7080 = vcmp.lt.s32.totalorder %v7078, %v40
      %vm7081 = vcmp.lt.s32.totalorder %v7078, %v41
      %vm7082 = vcmp.lt.s32.totalorder %v7078, %v42
      %vm7083 = vcmp.lt.s32.totalorder %v7078, %v43
      %vm7084 = vcmp.lt.s32.totalorder %v7078, %v44
      %vm7085 = vcmp.lt.s32.totalorder %v7078, %v45
      %vm7086 = vcmp.lt.s32.totalorder %v7078, %v46
      %vm7087 = vcmp.lt.s32.totalorder %v7078, %v47
      %vm7088 = vcmp.lt.s32.totalorder %v7078, %v48
      %vm7089 = vcmp.lt.s32.totalorder %v7078, %v49
      %vm7090 = vcmp.lt.s32.totalorder %v7078, %v50
      %vm7091 = vcmp.lt.s32.totalorder %v7078, %v51
      %vm7092 = vcmp.lt.s32.totalorder %v7078, %v52
      %vm7093 = vcmp.lt.s32.totalorder %v7078, %v53
      %vm7094 = vcmp.lt.s32.totalorder %v7078, %v54
      %s7095 = smul.u32 %s7077, 128
      %v7096 = vsel %vm7079, 1, 0
      %v7097 = vsel %vm7080, 1, 0
      %v7098 = vsel %vm7081, 1, 0
      %v7099 = vsel %vm7082, 1, 0
      %v7100 = vsel %vm7083, 1, 0
      %v7101 = vsel %vm7084, 1, 0
      %v7102 = vsel %vm7085, 1, 0
      %v7103 = vsel %vm7086, 1, 0
      %v7104 = vsel %vm7087, 1, 0
      %v7105 = vsel %vm7088, 1, 0
      %v7106 = vsel %vm7089, 1, 0
      %v7107 = vsel %vm7090, 1, 0
      %v7108 = vsel %vm7091, 1, 0
      %v7109 = vsel %vm7092, 1, 0
      %v7110 = vsel %vm7093, 1, 0
      %v7111 = vsel %vm7094, 1, 0
      %7112 = vset.pattern.permute.xlu0 0
      %7113 = vperm.xlu0 %7112, %v7096
      %v7114 = vpop.permute.xlu0 %7113
      %7115 = vset.pattern.permute.xlu0 0
      %7116 = vperm.xlu0 %7115, %v7097
      %v7117 = vpop.permute.xlu0 %7116
      %7118 = vset.pattern.permute.xlu0 0
      %7119 = vperm.xlu0 %7118, %v7098
      %v7120 = vpop.permute.xlu0 %7119
      %7121 = vset.pattern.permute.xlu0 0
      %7122 = vperm.xlu0 %7121, %v7099
      %v7123 = vpop.permute.xlu0 %7122
      %7124 = vset.pattern.permute.xlu0 0
      %7125 = vperm.xlu0 %7124, %v7100
      %v7126 = vpop.permute.xlu0 %7125
      %7127 = vset.pattern.permute.xlu0 0
      %7128 = vperm.xlu0 %7127, %v7101
      %v7129 = vpop.permute.xlu0 %7128
      %7130 = vset.pattern.permute.xlu0 0
      %7131 = vperm.xlu0 %7130, %v7102
      %v7132 = vpop.permute.xlu0 %7131
      %7133 = vset.pattern.permute.xlu0 0
      %7134 = vperm.xlu0 %7133, %v7103
      %v7135 = vpop.permute.xlu0 %7134
      %7136 = vset.pattern.permute.xlu0 0
      %7137 = vperm.xlu0 %7136, %v7104
      %v7138 = vpop.permute.xlu0 %7137
      %7139 = vset.pattern.permute.xlu0 0
      %7140 = vperm.xlu0 %7139, %v7105
      %v7141 = vpop.permute.xlu0 %7140
      %7142 = vset.pattern.permute.xlu0 0
      %7143 = vperm.xlu0 %7142, %v7106
      %v7144 = vpop.permute.xlu0 %7143
      %7145 = vset.pattern.permute.xlu0 0
      %7146 = vperm.xlu0 %7145, %v7107
      %v7147 = vpop.permute.xlu0 %7146
      %7148 = vset.pattern.permute.xlu0 0
      %7149 = vperm.xlu0 %7148, %v7108
      %v7150 = vpop.permute.xlu0 %7149
      %7151 = vset.pattern.permute.xlu0 0
      %7152 = vperm.xlu0 %7151, %v7109
      %v7153 = vpop.permute.xlu0 %7152
      %7154 = vset.pattern.permute.xlu0 0
      %7155 = vperm.xlu0 %7154, %v7110
      %v7156 = vpop.permute.xlu0 %7155
      %7157 = vset.pattern.permute.xlu0 0
      %7158 = vperm.xlu0 %7157, %v7111
      %v7159 = vpop.permute.xlu0 %7158
      %vm7160 = vcmp.eq.s32.totalorder %v7114, 1
      %vm7161 = vcmp.eq.s32.totalorder %v7117, 1
      %vm7162 = vcmp.eq.s32.totalorder %v7120, 1
      %vm7163 = vcmp.eq.s32.totalorder %v7123, 1
      %vm7164 = vcmp.eq.s32.totalorder %v7126, 1
      %vm7165 = vcmp.eq.s32.totalorder %v7129, 1
      %vm7166 = vcmp.eq.s32.totalorder %v7132, 1
      %vm7167 = vcmp.eq.s32.totalorder %v7135, 1
      %vm7168 = vcmp.eq.s32.totalorder %v7138, 1
      %vm7169 = vcmp.eq.s32.totalorder %v7141, 1
      %vm7170 = vcmp.eq.s32.totalorder %v7144, 1
      %vm7171 = vcmp.eq.s32.totalorder %v7147, 1
      %vm7172 = vcmp.eq.s32.totalorder %v7150, 1
      %vm7173 = vcmp.eq.s32.totalorder %v7153, 1
      %vm7174 = vcmp.eq.s32.totalorder %v7156, 1
      %vm7175 = vcmp.eq.s32.totalorder %v7159, 1
      %v7176 = vsel %vm7160, %v7061, 0.0
      %v7177 = vsel %vm7161, %v7062, 0.0
      %v7178 = vsel %vm7162, %v7063, 0.0
      %v7179 = vsel %vm7163, %v7064, 0.0
      %v7180 = vsel %vm7164, %v7065, 0.0
      %v7181 = vsel %vm7165, %v7066, 0.0
      %v7182 = vsel %vm7166, %v7067, 0.0
      %v7183 = vsel %vm7167, %v7068, 0.0
      %v7184 = vsel %vm7168, %v7069, 0.0
      %v7185 = vsel %vm7169, %v7070, 0.0
      %v7186 = vsel %vm7170, %v7071, 0.0
      %v7187 = vsel %vm7171, %v7072, 0.0
      %v7188 = vsel %vm7172, %v7073, 0.0
      %v7189 = vsel %vm7173, %v7074, 0.0
      %v7190 = vsel %vm7174, %v7075, 0.0
      %v7191 = vsel %vm7175, %v7076, 0.0
      %v7192 = vpack.c.bf16 %v7177, %v7176
      %v7193 = vpack.c.bf16 %v7179, %v7178
      %v7194 = vpack.c.bf16 %v7181, %v7180
      %v7195 = vpack.c.bf16 %v7183, %v7182
      %v7196 = vpack.c.bf16 %v7185, %v7184
      %v7197 = vpack.c.bf16 %v7187, %v7186
      %v7198 = vpack.c.bf16 %v7189, %v7188
      %v7199 = vpack.c.bf16 %v7191, %v7190
      %7208 = vrot.lane.b32.xlu0 %v7192, 32
      %v7209 = vpop.permute.xlu0 %7208
      %7210 = vrot.lane.b32.xlu0 %v7193, 32
      %v7211 = vpop.permute.xlu0 %7210
      %7212 = vrot.lane.b32.xlu0 %v7194, 32
      %v7213 = vpop.permute.xlu0 %7212
      %7214 = vrot.lane.b32.xlu0 %v7195, 32
      %v7215 = vpop.permute.xlu0 %7214
      %7216 = vrot.lane.b32.xlu0 %v7196, 32
      %v7217 = vpop.permute.xlu0 %7216
      %7218 = vrot.lane.b32.xlu0 %v7197, 32
      %v7219 = vpop.permute.xlu0 %7218
      %7220 = vrot.lane.b32.xlu0 %v7198, 32
      %v7221 = vpop.permute.xlu0 %7220
      %7222 = vrot.lane.b32.xlu0 %v7199, 32
      %v7223 = vpop.permute.xlu0 %7222
      %s7232 = sshra.s32 %s7095, 4
      %s7233 = sand.u32 %s7095, 15
      %s7234 = smul.addr %s7232, 8
      %s7235 = scalar_lea.vmem [#allocation3], %s7234
      %7236 = vst.msk [vmem:[%s7235] sm:$0xff] %vm4638, %v7209
      %7237 = vst.msk [vmem:[%s7235 + $0x8] sm:$0xff] %vm4638, %v7211
      %7238 = vst.msk [vmem:[%s7235 + $0x10] sm:$0xff] %vm4638, %v7213
      %7239 = vst.msk [vmem:[%s7235 + $0x18] sm:$0xff] %vm4638, %v7215
      %7240 = vst.msk [vmem:[%s7235 + $0x20] sm:$0xff] %vm4638, %v7217
      %7241 = vst.msk [vmem:[%s7235 + $0x28] sm:$0xff] %vm4638, %v7219
      %7242 = vst.msk [vmem:[%s7235 + $0x30] sm:$0xff] %vm4638, %v7221
      %7243 = vst.msk [vmem:[%s7235 + $0x38] sm:$0xff] %vm4638, %v7223
      %v7244 = vsel %vm7160, %v7061, %v6474
      %v7245 = vsel %vm7161, %v7062, %v6475
      %v7246 = vsel %vm7162, %v7063, %v6476
      %v7247 = vsel %vm7163, %v7064, %v6477
      %v7248 = vsel %vm7164, %v7065, %v6478
      %v7249 = vsel %vm7165, %v7066, %v6479
      %v7250 = vsel %vm7166, %v7067, %v6480
      %v7251 = vsel %vm7167, %v7068, %v6481
      %v7252 = vsel %vm7168, %v7069, %v6482
      %v7253 = vsel %vm7169, %v7070, %v6483
      %v7254 = vsel %vm7170, %v7071, %v6484
      %v7255 = vsel %vm7171, %v7072, %v6485
      %v7256 = vsel %vm7172, %v7073, %v6486
      %v7257 = vsel %vm7173, %v7074, %v6487
      %v7258 = vsel %vm7174, %v7075, %v6488
      %v7259 = vsel %vm7175, %v7076, %v6489
      %v7260 = vsel %vm7160, %v6965, %v6490
      %v7261 = vsel %vm7161, %v6966, %v6491
      %v7262 = vsel %vm7162, %v6967, %v6492
      %v7263 = vsel %vm7163, %v6968, %v6493
      %v7264 = vsel %vm7164, %v6969, %v6494
      %v7265 = vsel %vm7165, %v6970, %v6495
      %v7266 = vsel %vm7166, %v6971, %v6496
      %v7267 = vsel %vm7167, %v6972, %v6497
      %v7268 = vsel %vm7168, %v6973, %v6498
      %v7269 = vsel %vm7169, %v6974, %v6499
      %v7270 = vsel %vm7170, %v6975, %v6500
      %v7271 = vsel %vm7171, %v6976, %v6501
      %v7272 = vsel %vm7172, %v6977, %v6502
      %v7273 = vsel %vm7173, %v6978, %v6503
      %v7274 = vsel %vm7174, %v6979, %v6504
      %v7275 = vsel %vm7175, %v6980, %v6505
      %s7276 = sadd.s32 %s5725, 256
      %s7277 = scalar_lea.vmem [#allocation2], %s7276
      %v7278 = vld [vmem:[%s7277] sm:$0xff]
      %v7279 = vld [vmem:[%s7277 + $0x8] sm:$0xff]
      %v7280 = vld [vmem:[%s7277 + $0x10] sm:$0xff]
      %v7281 = vld [vmem:[%s7277 + $0x18] sm:$0xff]
      %v7282 = vld [vmem:[%s7277 + $0x20] sm:$0xff]
      %v7283 = vld [vmem:[%s7277 + $0x28] sm:$0xff]
      %v7284 = vld [vmem:[%s7277 + $0x30] sm:$0xff]
      %v7285 = vld [vmem:[%s7277 + $0x38] sm:$0xff]
      %v7286 = vld [vmem:[%s7277 + $0x40] sm:$0xff]
      %v7287 = vld [vmem:[%s7277 + $0x48] sm:$0xff]
      %v7288 = vld [vmem:[%s7277 + $0x50] sm:$0xff]
      %v7289 = vld [vmem:[%s7277 + $0x58] sm:$0xff]
      %v7290 = vld [vmem:[%s7277 + $0x60] sm:$0xff]
      %v7291 = vld [vmem:[%s7277 + $0x68] sm:$0xff]
      %v7292 = vld [vmem:[%s7277 + $0x70] sm:$0xff]
      %v7293 = vld [vmem:[%s7277 + $0x78] sm:$0xff]
      %v7294 = vpack.c.bf16 %v7245, %v7244
      %v7295 = vpack.c.bf16 %v7247, %v7246
      %v7296 = vpack.c.bf16 %v7249, %v7248
      %v7297 = vpack.c.bf16 %v7251, %v7250
      %v7298 = vpack.c.bf16 %v7253, %v7252
      %v7299 = vpack.c.bf16 %v7255, %v7254
      %v7300 = vpack.c.bf16 %v7257, %v7256
      %v7301 = vpack.c.bf16 %v7259, %v7258
      %7310 = vrot.lane.b32.xlu0 %v7294, 32
      %v7311 = vpop.permute.xlu0 %7310
      %7312 = vrot.lane.b32.xlu0 %v7295, 32
      %v7313 = vpop.permute.xlu0 %7312
      %7314 = vrot.lane.b32.xlu0 %v7296, 32
      %v7315 = vpop.permute.xlu0 %7314
      %7316 = vrot.lane.b32.xlu0 %v7297, 32
      %v7317 = vpop.permute.xlu0 %7316
      %7318 = vrot.lane.b32.xlu0 %v7298, 32
      %v7319 = vpop.permute.xlu0 %7318
      %7320 = vrot.lane.b32.xlu0 %v7299, 32
      %v7321 = vpop.permute.xlu0 %7320
      %7322 = vrot.lane.b32.xlu0 %v7300, 32
      %v7323 = vpop.permute.xlu0 %7322
      %7324 = vrot.lane.b32.xlu0 %v7301, 32
      %v7325 = vpop.permute.xlu0 %7324
      %v7327 = vsel %vm4638, %v7311, 0
      %v7330 = vsel %vm4638, %v7313, 0
      %v7333 = vsel %vm4638, %v7315, 0
      %v7336 = vsel %vm4638, %v7317, 0
      %v7339 = vsel %vm4638, %v7319, 0
      %v7342 = vsel %vm4638, %v7321, 0
      %v7345 = vsel %vm4638, %v7323, 0
      %v7348 = vsel %vm4638, %v7325, 0
      %7350 = vmatprep.subr.bf16.mxu0 0
      %7351 = vmatpush1.bf16.msra.mxu0 %v5783
      %7352 = vmatprep.subr.bf16.mxu0 0
      %7353 = vmatpush1.bf16.msra.mxu0 %v5784
      %7354 = vmatprep.subr.bf16.mxu0 0
      %7355 = vmatpush1.bf16.msra.mxu0 0
      %7356 = vmatprep.subr.bf16.mxu0 0
      %7357 = vmatpush1.bf16.msra.mxu0 0
      %7358 = vmatprep.subr.bf16.mxu0 0
      %7359 = vmatpush1.bf16.msra.mxu0 0
      %7360 = vmatprep.subr.bf16.mxu0 0
      %7361 = vmatpush1.bf16.msra.mxu0 0
      %7362 = vmatprep.subr.bf16.mxu0 0
      %7363 = vmatpush1.bf16.msra.mxu0 0
      %7364 = vmatprep.subr.bf16.mxu0 0
      %7365 = vmatpush1.bf16.msra.mxu0 0
      %7366 = vmatprep.subr.bf16.mxu0 0
      %7367 = vmatpush1.bf16.msra.mxu0 0
      %7368 = vmatprep.subr.bf16.mxu0 0
      %7369 = vmatpush1.bf16.msra.mxu0 0
      %7370 = vmatprep.subr.bf16.mxu0 0
      %7371 = vmatpush1.bf16.msra.mxu0 0
      %7372 = vmatprep.subr.bf16.mxu0 0
      %7373 = vmatpush1.bf16.msra.mxu0 0
      %7374 = vmatprep.subr.bf16.mxu0 0
      %7375 = vmatpush1.bf16.msra.mxu0 0
      %7376 = vmatprep.subr.bf16.mxu0 0
      %7377 = vmatpush1.bf16.msra.mxu0 0
      %7378 = vmatprep.subr.bf16.mxu0 0
      %7379 = vmatpush1.bf16.msra.mxu0 0
      %7380 = vmatprep.subr.bf16.mxu0 0
      %7381 = vmatpush1.bf16.msra.mxu0 0
      %7382 = vmatprep.mubr.bf16.mxu0 0
      %7383 = vmatmul.mubr.bf16.gmra.mrb[0].mxu0 %v7327
      %v7384 = vpop.f32.mrb[0].mxu0
      %v7385 = vadd.f32 0.0, %v7384
      %v7386 = vpop.f32.mrb[0].mxu0
      %v7387 = vpop.f32.mrb[0].mxu0
      %v7388 = vadd.f32 0.0, %v7387
      %v7389 = vpop.f32.mrb[0].mxu0
      %7390 = vmatprep.mubr.bf16.mxu0 0
      %7391 = vmatmul.mubr.bf16.gmra.mrb[0].mxu0 %v7330
      %v7392 = vpop.f32.mrb[0].mxu0
      %v7393 = vadd.f32 0.0, %v7392
      %v7394 = vpop.f32.mrb[0].mxu0
      %v7395 = vpop.f32.mrb[0].mxu0
      %v7396 = vadd.f32 0.0, %v7395
      %v7397 = vpop.f32.mrb[0].mxu0
      %7398 = vmatprep.mubr.bf16.mxu0 0
      %7399 = vmatmul.mubr.bf16.gmra.mrb[0].mxu0 %v7333
      %v7400 = vpop.f32.mrb[0].mxu0
      %v7401 = vadd.f32 0.0, %v7400
      %v7402 = vpop.f32.mrb[0].mxu0
      %v7403 = vpop.f32.mrb[0].mxu0
      %v7404 = vadd.f32 0.0, %v7403
      %v7405 = vpop.f32.mrb[0].mxu0
      %7406 = vmatprep.mubr.bf16.mxu0 0
      %7407 = vmatmul.mubr.bf16.gmra.mrb[0].mxu0 %v7336
      %v7408 = vpop.f32.mrb[0].mxu0
      %v7409 = vadd.f32 0.0, %v7408
      %v7410 = vpop.f32.mrb[0].mxu0
      %v7411 = vpop.f32.mrb[0].mxu0
      %v7412 = vadd.f32 0.0, %v7411
      %v7413 = vpop.f32.mrb[0].mxu0
      %7414 = vmatprep.mubr.bf16.mxu0 0
      %7415 = vmatmul.mubr.bf16.gmra.mrb[0].mxu0 %v7339
      %v7416 = vpop.f32.mrb[0].mxu0
      %v7417 = vadd.f32 0.0, %v7416
      %v7418 = vpop.f32.mrb[0].mxu0
      %v7419 = vpop.f32.mrb[0].mxu0
      %v7420 = vadd.f32 0.0, %v7419
      %v7421 = vpop.f32.mrb[0].mxu0
      %7422 = vmatprep.mubr.bf16.mxu0 0
      %7423 = vmatmul.mubr.bf16.gmra.mrb[0].mxu0 %v7342
      %v7424 = vpop.f32.mrb[0].mxu0
      %v7425 = vadd.f32 0.0, %v7424
      %v7426 = vpop.f32.mrb[0].mxu0
      %v7427 = vpop.f32.mrb[0].mxu0
      %v7428 = vadd.f32 0.0, %v7427
      %v7429 = vpop.f32.mrb[0].mxu0
      %7430 = vmatprep.mubr.bf16.mxu0 0
      %7431 = vmatmul.mubr.bf16.gmra.mrb[0].mxu0 %v7345
      %v7432 = vpop.f32.mrb[0].mxu0
      %v7433 = vadd.f32 0.0, %v7432
      %v7434 = vpop.f32.mrb[0].mxu0
      %v7435 = vpop.f32.mrb[0].mxu0
      %v7436 = vadd.f32 0.0, %v7435
      %v7437 = vpop.f32.mrb[0].mxu0
      %7438 = vmatprep.mubr.bf16.mxu0 0
      %7439 = vmatmul.mubr.bf16.gmra.mrb[0].mxu0 %v7348
      %v7440 = vpop.f32.mrb[0].mxu0
      %v7441 = vadd.f32 0.0, %v7440
      %v7442 = vpop.f32.mrb[0].mxu0
      %v7443 = vpop.f32.mrb[0].mxu0
      %v7444 = vadd.f32 0.0, %v7443
      %v7445 = vpop.f32.mrb[0].mxu0
      %7446 = vdwg.mxu0
      %v7447 = vadd.f32 %v7278, %v7385
      %v7448 = vadd.f32 %v7279, %v7388
      %v7449 = vadd.f32 %v7280, %v7393
      %v7450 = vadd.f32 %v7281, %v7396
      %v7451 = vadd.f32 %v7282, %v7401
      %v7452 = vadd.f32 %v7283, %v7404
      %v7453 = vadd.f32 %v7284, %v7409
      %v7454 = vadd.f32 %v7285, %v7412
      %v7455 = vadd.f32 %v7286, %v7417
      %v7456 = vadd.f32 %v7287, %v7420
      %v7457 = vadd.f32 %v7288, %v7425
      %v7458 = vadd.f32 %v7289, %v7428
      %v7459 = vadd.f32 %v7290, %v7433
      %v7460 = vadd.f32 %v7291, %v7436
      %v7461 = vadd.f32 %v7292, %v7441
      %v7462 = vadd.f32 %v7293, %v7444
      %v7463 = vxor.u32 %v7447, 2147483648
      %v7464 = vxor.u32 %v7448, 2147483648
      %v7465 = vxor.u32 %v7449, 2147483648
      %v7466 = vxor.u32 %v7450, 2147483648
      %v7467 = vxor.u32 %v7451, 2147483648
      %v7468 = vxor.u32 %v7452, 2147483648
      %v7469 = vxor.u32 %v7453, 2147483648
      %v7470 = vxor.u32 %v7454, 2147483648
      %v7471 = vxor.u32 %v7455, 2147483648
      %v7472 = vxor.u32 %v7456, 2147483648
      %v7473 = vxor.u32 %v7457, 2147483648
      %v7474 = vxor.u32 %v7458, 2147483648
      %v7475 = vxor.u32 %v7459, 2147483648
      %v7476 = vxor.u32 %v7460, 2147483648
      %v7477 = vxor.u32 %v7461, 2147483648
      %v7478 = vxor.u32 %v7462, 2147483648
      %v7479 = vmul.f32 %v7463, 1.442695
      %v7480 = vpow.pop %v7479
      %v7481 = vmul.f32 %v7464, 1.442695
      %v7482 = vpow.pop %v7481
      %v7483 = vmul.f32 %v7465, 1.442695
      %v7484 = vpow.pop %v7483
      %v7485 = vmul.f32 %v7466, 1.442695
      %v7486 = vpow.pop %v7485
      %v7487 = vmul.f32 %v7467, 1.442695
      %v7488 = vpow.pop %v7487
      %v7489 = vmul.f32 %v7468, 1.442695
      %v7490 = vpow.pop %v7489
      %v7491 = vmul.f32 %v7469, 1.442695
      %v7492 = vpow.pop %v7491
      %v7493 = vmul.f32 %v7470, 1.442695
      %v7494 = vpow.pop %v7493
      %v7495 = vmul.f32 %v7471, 1.442695
      %v7496 = vpow.pop %v7495
      %v7497 = vmul.f32 %v7472, 1.442695
      %v7498 = vpow.pop %v7497
      %v7499 = vmul.f32 %v7473, 1.442695
      %v7500 = vpow.pop %v7499
      %v7501 = vmul.f32 %v7474, 1.442695
      %v7502 = vpow.pop %v7501
      %v7503 = vmul.f32 %v7475, 1.442695
      %v7504 = vpow.pop %v7503
      %v7505 = vmul.f32 %v7476, 1.442695
      %v7506 = vpow.pop %v7505
      %v7507 = vmul.f32 %v7477, 1.442695
      %v7508 = vpow.pop %v7507
      %v7509 = vmul.f32 %v7478, 1.442695
      %v7510 = vpow.pop %v7509
      %v7511 = vadd.f32 %v7480, 1.0
      %v7512 = vadd.f32 %v7482, 1.0
      %v7513 = vadd.f32 %v7484, 1.0
      %v7514 = vadd.f32 %v7486, 1.0
      %v7515 = vadd.f32 %v7488, 1.0
      %v7516 = vadd.f32 %v7490, 1.0
      %v7517 = vadd.f32 %v7492, 1.0
      %v7518 = vadd.f32 %v7494, 1.0
      %v7519 = vadd.f32 %v7496, 1.0
      %v7520 = vadd.f32 %v7498, 1.0
      %v7521 = vadd.f32 %v7500, 1.0
      %v7522 = vadd.f32 %v7502, 1.0
      %v7523 = vadd.f32 %v7504, 1.0
      %v7524 = vadd.f32 %v7506, 1.0
      %v7525 = vadd.f32 %v7508, 1.0
      %v7526 = vadd.f32 %v7510, 1.0
      %v7527 = vrcp.pop %v7511
      %v7528 = vmul.f32 1.0, %v7527
      %v7529 = vrcp.pop %v7512
      %v7530 = vmul.f32 1.0, %v7529
      %v7531 = vrcp.pop %v7513
      %v7532 = vmul.f32 1.0, %v7531
      %v7533 = vrcp.pop %v7514
      %v7534 = vmul.f32 1.0, %v7533
      %v7535 = vrcp.pop %v7515
      %v7536 = vmul.f32 1.0, %v7535
      %v7537 = vrcp.pop %v7516
      %v7538 = vmul.f32 1.0, %v7537
      %v7539 = vrcp.pop %v7517
      %v7540 = vmul.f32 1.0, %v7539
      %v7541 = vrcp.pop %v7518
      %v7542 = vmul.f32 1.0, %v7541
      %v7543 = vrcp.pop %v7519
      %v7544 = vmul.f32 1.0, %v7543
      %v7545 = vrcp.pop %v7520
      %v7546 = vmul.f32 1.0, %v7545
      %v7547 = vrcp.pop %v7521
      %v7548 = vmul.f32 1.0, %v7547
      %v7549 = vrcp.pop %v7522
      %v7550 = vmul.f32 1.0, %v7549
      %v7551 = vrcp.pop %v7523
      %v7552 = vmul.f32 1.0, %v7551
      %v7553 = vrcp.pop %v7524
      %v7554 = vmul.f32 1.0, %v7553
      %v7555 = vrcp.pop %v7525
      %v7556 = vmul.f32 1.0, %v7555
      %v7557 = vrcp.pop %v7526
      %v7558 = vmul.f32 1.0, %v7557
      %v7559 = vtanh.pop %v7447
      %v7560 = vtanh.pop %v7448
      %v7561 = vtanh.pop %v7449
      %v7562 = vtanh.pop %v7450
      %v7563 = vtanh.pop %v7451
      %v7564 = vtanh.pop %v7452
      %v7565 = vtanh.pop %v7453
      %v7566 = vtanh.pop %v7454
      %v7567 = vtanh.pop %v7455
      %v7568 = vtanh.pop %v7456
      %v7569 = vtanh.pop %v7457
      %v7570 = vtanh.pop %v7458
      %v7571 = vtanh.pop %v7459
      %v7572 = vtanh.pop %v7460
      %v7573 = vtanh.pop %v7461
      %v7574 = vtanh.pop %v7462
      %v7575 = vmul.f32 %v7528, %v7260
      %v7576 = vmul.f32 %v7530, %v7261
      %v7577 = vmul.f32 %v7532, %v7262
      %v7578 = vmul.f32 %v7534, %v7263
      %v7579 = vmul.f32 %v7536, %v7264
      %v7580 = vmul.f32 %v7538, %v7265
      %v7581 = vmul.f32 %v7540, %v7266
      %v7582 = vmul.f32 %v7542, %v7267
      %v7583 = vmul.f32 %v7544, %v7268
      %v7584 = vmul.f32 %v7546, %v7269
      %v7585 = vmul.f32 %v7548, %v7270
      %v7586 = vmul.f32 %v7550, %v7271
      %v7587 = vmul.f32 %v7552, %v7272
      %v7588 = vmul.f32 %v7554, %v7273
      %v7589 = vmul.f32 %v7556, %v7274
      %v7590 = vmul.f32 %v7558, %v7275
      %7607 = vrot.lane.b32.xlu0 %v7559, 64
      %v7608 = vpop.permute.xlu0 %7607
      %7609 = vrot.lane.b32.xlu0 %v7560, 64
      %v7610 = vpop.permute.xlu0 %7609
      %7611 = vrot.lane.b32.xlu0 %v7561, 64
      %v7612 = vpop.permute.xlu0 %7611
      %7613 = vrot.lane.b32.xlu0 %v7562, 64
      %v7614 = vpop.permute.xlu0 %7613
      %7615 = vrot.lane.b32.xlu0 %v7563, 64
      %v7616 = vpop.permute.xlu0 %7615
      %7617 = vrot.lane.b32.xlu0 %v7564, 64
      %v7618 = vpop.permute.xlu0 %7617
      %7619 = vrot.lane.b32.xlu0 %v7565, 64
      %v7620 = vpop.permute.xlu0 %7619
      %7621 = vrot.lane.b32.xlu0 %v7566, 64
      %v7622 = vpop.permute.xlu0 %7621
      %7623 = vrot.lane.b32.xlu0 %v7567, 64
      %v7624 = vpop.permute.xlu0 %7623
      %7625 = vrot.lane.b32.xlu0 %v7568, 64
      %v7626 = vpop.permute.xlu0 %7625
      %7627 = vrot.lane.b32.xlu0 %v7569, 64
      %v7628 = vpop.permute.xlu0 %7627
      %7629 = vrot.lane.b32.xlu0 %v7570, 64
      %v7630 = vpop.permute.xlu0 %7629
      %7631 = vrot.lane.b32.xlu0 %v7571, 64
      %v7632 = vpop.permute.xlu0 %7631
      %7633 = vrot.lane.b32.xlu0 %v7572, 64
      %v7634 = vpop.permute.xlu0 %7633
      %7635 = vrot.lane.b32.xlu0 %v7573, 64
      %v7636 = vpop.permute.xlu0 %7635
      %7637 = vrot.lane.b32.xlu0 %v7574, 64
      %v7638 = vpop.permute.xlu0 %7637
      %v7655 = vmul.f32 %v7528, %v7608
      %v7656 = vmul.f32 %v7530, %v7610
      %v7657 = vmul.f32 %v7532, %v7612
      %v7658 = vmul.f32 %v7534, %v7614
      %v7659 = vmul.f32 %v7536, %v7616
      %v7660 = vmul.f32 %v7538, %v7618
      %v7661 = vmul.f32 %v7540, %v7620
      %v7662 = vmul.f32 %v7542, %v7622
      %v7663 = vmul.f32 %v7544, %v7624
      %v7664 = vmul.f32 %v7546, %v7626
      %v7665 = vmul.f32 %v7548, %v7628
      %v7666 = vmul.f32 %v7550, %v7630
      %v7667 = vmul.f32 %v7552, %v7632
      %v7668 = vmul.f32 %v7554, %v7634
      %v7669 = vmul.f32 %v7556, %v7636
      %v7670 = vmul.f32 %v7558, %v7638
      %7687 = vrot.lane.b32.xlu0 %v7655, 32
      %v7688 = vpop.permute.xlu0 %7687
      %7689 = vrot.lane.b32.xlu0 %v7656, 32
      %v7690 = vpop.permute.xlu0 %7689
      %7691 = vrot.lane.b32.xlu0 %v7657, 32
      %v7692 = vpop.permute.xlu0 %7691
      %7693 = vrot.lane.b32.xlu0 %v7658, 32
      %v7694 = vpop.permute.xlu0 %7693
      %7695 = vrot.lane.b32.xlu0 %v7659, 32
      %v7696 = vpop.permute.xlu0 %7695
      %7697 = vrot.lane.b32.xlu0 %v7660, 32
      %v7698 = vpop.permute.xlu0 %7697
      %7699 = vrot.lane.b32.xlu0 %v7661, 32
      %v7700 = vpop.permute.xlu0 %7699
      %7701 = vrot.lane.b32.xlu0 %v7662, 32
      %v7702 = vpop.permute.xlu0 %7701
      %7703 = vrot.lane.b32.xlu0 %v7663, 32
      %v7704 = vpop.permute.xlu0 %7703
      %7705 = vrot.lane.b32.xlu0 %v7664, 32
      %v7706 = vpop.permute.xlu0 %7705
      %7707 = vrot.lane.b32.xlu0 %v7665, 32
      %v7708 = vpop.permute.xlu0 %7707
      %7709 = vrot.lane.b32.xlu0 %v7666, 32
      %v7710 = vpop.permute.xlu0 %7709
      %7711 = vrot.lane.b32.xlu0 %v7667, 32
      %v7712 = vpop.permute.xlu0 %7711
      %7713 = vrot.lane.b32.xlu0 %v7668, 32
      %v7714 = vpop.permute.xlu0 %7713
      %7715 = vrot.lane.b32.xlu0 %v7669, 32
      %v7716 = vpop.permute.xlu0 %7715
      %7717 = vrot.lane.b32.xlu0 %v7670, 32
      %v7718 = vpop.permute.xlu0 %7717
      %v7735 = vadd.f32 %v7575, %v7688
      %v7736 = vadd.f32 %v7576, %v7690
      %v7737 = vadd.f32 %v7577, %v7692
      %v7738 = vadd.f32 %v7578, %v7694
      %v7739 = vadd.f32 %v7579, %v7696
      %v7740 = vadd.f32 %v7580, %v7698
      %v7741 = vadd.f32 %v7581, %v7700
      %v7742 = vadd.f32 %v7582, %v7702
      %v7743 = vadd.f32 %v7583, %v7704
      %v7744 = vadd.f32 %v7584, %v7706
      %v7745 = vadd.f32 %v7585, %v7708
      %v7746 = vadd.f32 %v7586, %v7710
      %v7747 = vadd.f32 %v7587, %v7712
      %v7748 = vadd.f32 %v7588, %v7714
      %v7749 = vadd.f32 %v7589, %v7716
      %v7750 = vadd.f32 %v7590, %v7718
      %v7751 = vtanh.pop %v7735
      %v7752 = vtanh.pop %v7736
      %v7753 = vtanh.pop %v7737
      %v7754 = vtanh.pop %v7738
      %v7755 = vtanh.pop %v7739
      %v7756 = vtanh.pop %v7740
      %v7757 = vtanh.pop %v7741
      %v7758 = vtanh.pop %v7742
      %v7759 = vtanh.pop %v7743
      %v7760 = vtanh.pop %v7744
      %v7761 = vtanh.pop %v7745
      %v7762 = vtanh.pop %v7746
      %v7763 = vtanh.pop %v7747
      %v7764 = vtanh.pop %v7748
      %v7765 = vtanh.pop %v7749
      %v7766 = vtanh.pop %v7750
      %7783 = vrot.lane.b32.xlu0 %v7751, 64
      %v7784 = vpop.permute.xlu0 %7783
      %7785 = vrot.lane.b32.xlu0 %v7752, 64
      %v7786 = vpop.permute.xlu0 %7785
      %7787 = vrot.lane.b32.xlu0 %v7753, 64
      %v7788 = vpop.permute.xlu0 %7787
      %7789 = vrot.lane.b32.xlu0 %v7754, 64
      %v7790 = vpop.permute.xlu0 %7789
      %7791 = vrot.lane.b32.xlu0 %v7755, 64
      %v7792 = vpop.permute.xlu0 %7791
      %7793 = vrot.lane.b32.xlu0 %v7756, 64
      %v7794 = vpop.permute.xlu0 %7793
      %7795 = vrot.lane.b32.xlu0 %v7757, 64
      %v7796 = vpop.permute.xlu0 %7795
      %7797 = vrot.lane.b32.xlu0 %v7758, 64
      %v7798 = vpop.permute.xlu0 %7797
      %7799 = vrot.lane.b32.xlu0 %v7759, 64
      %v7800 = vpop.permute.xlu0 %7799
      %7801 = vrot.lane.b32.xlu0 %v7760, 64
      %v7802 = vpop.permute.xlu0 %7801
      %7803 = vrot.lane.b32.xlu0 %v7761, 64
      %v7804 = vpop.permute.xlu0 %7803
      %7805 = vrot.lane.b32.xlu0 %v7762, 64
      %v7806 = vpop.permute.xlu0 %7805
      %7807 = vrot.lane.b32.xlu0 %v7763, 64
      %v7808 = vpop.permute.xlu0 %7807
      %7809 = vrot.lane.b32.xlu0 %v7764, 64
      %v7810 = vpop.permute.xlu0 %7809
      %7811 = vrot.lane.b32.xlu0 %v7765, 64
      %v7812 = vpop.permute.xlu0 %7811
      %7813 = vrot.lane.b32.xlu0 %v7766, 64
      %v7814 = vpop.permute.xlu0 %7813
      %v7831 = vmul.f32 %v7528, %v7784
      %v7832 = vmul.f32 %v7530, %v7786
      %v7833 = vmul.f32 %v7532, %v7788
      %v7834 = vmul.f32 %v7534, %v7790
      %v7835 = vmul.f32 %v7536, %v7792
      %v7836 = vmul.f32 %v7538, %v7794
      %v7837 = vmul.f32 %v7540, %v7796
      %v7838 = vmul.f32 %v7542, %v7798
      %v7839 = vmul.f32 %v7544, %v7800
      %v7840 = vmul.f32 %v7546, %v7802
      %v7841 = vmul.f32 %v7548, %v7804
      %v7842 = vmul.f32 %v7550, %v7806
      %v7843 = vmul.f32 %v7552, %v7808
      %v7844 = vmul.f32 %v7554, %v7810
      %v7845 = vmul.f32 %v7556, %v7812
      %v7846 = vmul.f32 %v7558, %v7814
      %s7847 = sadd.s32 %s5724, 2
      %v7848 = vstv %s7847
      %vm7849 = vcmp.lt.s32.totalorder %v7848, %v39
      %vm7850 = vcmp.lt.s32.totalorder %v7848, %v40
      %vm7851 = vcmp.lt.s32.totalorder %v7848, %v41
      %vm7852 = vcmp.lt.s32.totalorder %v7848, %v42
      %vm7853 = vcmp.lt.s32.totalorder %v7848, %v43
      %vm7854 = vcmp.lt.s32.totalorder %v7848, %v44
      %vm7855 = vcmp.lt.s32.totalorder %v7848, %v45
      %vm7856 = vcmp.lt.s32.totalorder %v7848, %v46
      %vm7857 = vcmp.lt.s32.totalorder %v7848, %v47
      %vm7858 = vcmp.lt.s32.totalorder %v7848, %v48
      %vm7859 = vcmp.lt.s32.totalorder %v7848, %v49
      %vm7860 = vcmp.lt.s32.totalorder %v7848, %v50
      %vm7861 = vcmp.lt.s32.totalorder %v7848, %v51
      %vm7862 = vcmp.lt.s32.totalorder %v7848, %v52
      %vm7863 = vcmp.lt.s32.totalorder %v7848, %v53
      %vm7864 = vcmp.lt.s32.totalorder %v7848, %v54
      %s7865 = smul.u32 %s7847, 128
      %v7866 = vsel %vm7849, 1, 0
      %v7867 = vsel %vm7850, 1, 0
      %v7868 = vsel %vm7851, 1, 0
      %v7869 = vsel %vm7852, 1, 0
      %v7870 = vsel %vm7853, 1, 0
      %v7871 = vsel %vm7854, 1, 0
      %v7872 = vsel %vm7855, 1, 0
      %v7873 = vsel %vm7856, 1, 0
      %v7874 = vsel %vm7857, 1, 0
      %v7875 = vsel %vm7858, 1, 0
      %v7876 = vsel %vm7859, 1, 0
      %v7877 = vsel %vm7860, 1, 0
      %v7878 = vsel %vm7861, 1, 0
      %v7879 = vsel %vm7862, 1, 0
      %v7880 = vsel %vm7863, 1, 0
      %v7881 = vsel %vm7864, 1, 0
      %7882 = vset.pattern.permute.xlu0 0
      %7883 = vperm.xlu0 %7882, %v7866
      %v7884 = vpop.permute.xlu0 %7883
      %7885 = vset.pattern.permute.xlu0 0
      %7886 = vperm.xlu0 %7885, %v7867
      %v7887 = vpop.permute.xlu0 %7886
      %7888 = vset.pattern.permute.xlu0 0
      %7889 = vperm.xlu0 %7888, %v7868
      %v7890 = vpop.permute.xlu0 %7889
      %7891 = vset.pattern.permute.xlu0 0
      %7892 = vperm.xlu0 %7891, %v7869
      %v7893 = vpop.permute.xlu0 %7892
      %7894 = vset.pattern.permute.xlu0 0
      %7895 = vperm.xlu0 %7894, %v7870
      %v7896 = vpop.permute.xlu0 %7895
      %7897 = vset.pattern.permute.xlu0 0
      %7898 = vperm.xlu0 %7897, %v7871
      %v7899 = vpop.permute.xlu0 %7898
      %7900 = vset.pattern.permute.xlu0 0
      %7901 = vperm.xlu0 %7900, %v7872
      %v7902 = vpop.permute.xlu0 %7901
      %7903 = vset.pattern.permute.xlu0 0
      %7904 = vperm.xlu0 %7903, %v7873
      %v7905 = vpop.permute.xlu0 %7904
      %7906 = vset.pattern.permute.xlu0 0
      %7907 = vperm.xlu0 %7906, %v7874
      %v7908 = vpop.permute.xlu0 %7907
      %7909 = vset.pattern.permute.xlu0 0
      %7910 = vperm.xlu0 %7909, %v7875
      %v7911 = vpop.permute.xlu0 %7910
      %7912 = vset.pattern.permute.xlu0 0
      %7913 = vperm.xlu0 %7912, %v7876
      %v7914 = vpop.permute.xlu0 %7913
      %7915 = vset.pattern.permute.xlu0 0
      %7916 = vperm.xlu0 %7915, %v7877
      %v7917 = vpop.permute.xlu0 %7916
      %7918 = vset.pattern.permute.xlu0 0
      %7919 = vperm.xlu0 %7918, %v7878
      %v7920 = vpop.permute.xlu0 %7919
      %7921 = vset.pattern.permute.xlu0 0
      %7922 = vperm.xlu0 %7921, %v7879
      %v7923 = vpop.permute.xlu0 %7922
      %7924 = vset.pattern.permute.xlu0 0
      %7925 = vperm.xlu0 %7924, %v7880
      %v7926 = vpop.permute.xlu0 %7925
      %7927 = vset.pattern.permute.xlu0 0
      %7928 = vperm.xlu0 %7927, %v7881
      %v7929 = vpop.permute.xlu0 %7928
      %vm7930 = vcmp.eq.s32.totalorder %v7884, 1
      %vm7931 = vcmp.eq.s32.totalorder %v7887, 1
      %vm7932 = vcmp.eq.s32.totalorder %v7890, 1
      %vm7933 = vcmp.eq.s32.totalorder %v7893, 1
      %vm7934 = vcmp.eq.s32.totalorder %v7896, 1
      %vm7935 = vcmp.eq.s32.totalorder %v7899, 1
      %vm7936 = vcmp.eq.s32.totalorder %v7902, 1
      %vm7937 = vcmp.eq.s32.totalorder %v7905, 1
      %vm7938 = vcmp.eq.s32.totalorder %v7908, 1
      %vm7939 = vcmp.eq.s32.totalorder %v7911, 1
      %vm7940 = vcmp.eq.s32.totalorder %v7914, 1
      %vm7941 = vcmp.eq.s32.totalorder %v7917, 1
      %vm7942 = vcmp.eq.s32.totalorder %v7920, 1
      %vm7943 = vcmp.eq.s32.totalorder %v7923, 1
      %vm7944 = vcmp.eq.s32.totalorder %v7926, 1
      %vm7945 = vcmp.eq.s32.totalorder %v7929, 1
      %v7946 = vsel %vm7930, %v7831, 0.0
      %v7947 = vsel %vm7931, %v7832, 0.0
      %v7948 = vsel %vm7932, %v7833, 0.0
      %v7949 = vsel %vm7933, %v7834, 0.0
      %v7950 = vsel %vm7934, %v7835, 0.0
      %v7951 = vsel %vm7935, %v7836, 0.0
      %v7952 = vsel %vm7936, %v7837, 0.0
      %v7953 = vsel %vm7937, %v7838, 0.0
      %v7954 = vsel %vm7938, %v7839, 0.0
      %v7955 = vsel %vm7939, %v7840, 0.0
      %v7956 = vsel %vm7940, %v7841, 0.0
      %v7957 = vsel %vm7941, %v7842, 0.0
      %v7958 = vsel %vm7942, %v7843, 0.0
      %v7959 = vsel %vm7943, %v7844, 0.0
      %v7960 = vsel %vm7944, %v7845, 0.0
      %v7961 = vsel %vm7945, %v7846, 0.0
      %v7962 = vpack.c.bf16 %v7947, %v7946
      %v7963 = vpack.c.bf16 %v7949, %v7948
      %v7964 = vpack.c.bf16 %v7951, %v7950
      %v7965 = vpack.c.bf16 %v7953, %v7952
      %v7966 = vpack.c.bf16 %v7955, %v7954
      %v7967 = vpack.c.bf16 %v7957, %v7956
      %v7968 = vpack.c.bf16 %v7959, %v7958
      %v7969 = vpack.c.bf16 %v7961, %v7960
      %7978 = vrot.lane.b32.xlu0 %v7962, 32
      %v7979 = vpop.permute.xlu0 %7978
      %7980 = vrot.lane.b32.xlu0 %v7963, 32
      %v7981 = vpop.permute.xlu0 %7980
      %7982 = vrot.lane.b32.xlu0 %v7964, 32
      %v7983 = vpop.permute.xlu0 %7982
      %7984 = vrot.lane.b32.xlu0 %v7965, 32
      %v7985 = vpop.permute.xlu0 %7984
      %7986 = vrot.lane.b32.xlu0 %v7966, 32
      %v7987 = vpop.permute.xlu0 %7986
      %7988 = vrot.lane.b32.xlu0 %v7967, 32
      %v7989 = vpop.permute.xlu0 %7988
      %7990 = vrot.lane.b32.xlu0 %v7968, 32
      %v7991 = vpop.permute.xlu0 %7990
      %7992 = vrot.lane.b32.xlu0 %v7969, 32
      %v7993 = vpop.permute.xlu0 %7992
      %s8002 = sshra.s32 %s7865, 4
      %s8003 = sand.u32 %s7865, 15
      %s8004 = smul.addr %s8002, 8
      %s8005 = scalar_lea.vmem [#allocation3], %s8004
      %8006 = vst.msk [vmem:[%s8005] sm:$0xff] %vm4638, %v7979
      %8007 = vst.msk [vmem:[%s8005 + $0x8] sm:$0xff] %vm4638, %v7981
      %8008 = vst.msk [vmem:[%s8005 + $0x10] sm:$0xff] %vm4638, %v7983
      %8009 = vst.msk [vmem:[%s8005 + $0x18] sm:$0xff] %vm4638, %v7985
      %8010 = vst.msk [vmem:[%s8005 + $0x20] sm:$0xff] %vm4638, %v7987
      %8011 = vst.msk [vmem:[%s8005 + $0x28] sm:$0xff] %vm4638, %v7989
      %8012 = vst.msk [vmem:[%s8005 + $0x30] sm:$0xff] %vm4638, %v7991
      %8013 = vst.msk [vmem:[%s8005 + $0x38] sm:$0xff] %vm4638, %v7993
      %v8014 = vsel %vm7930, %v7831, %v7244
      %v8015 = vsel %vm7931, %v7832, %v7245
      %v8016 = vsel %vm7932, %v7833, %v7246
      %v8017 = vsel %vm7933, %v7834, %v7247
      %v8018 = vsel %vm7934, %v7835, %v7248
      %v8019 = vsel %vm7935, %v7836, %v7249
      %v8020 = vsel %vm7936, %v7837, %v7250
      %v8021 = vsel %vm7937, %v7838, %v7251
      %v8022 = vsel %vm7938, %v7839, %v7252
      %v8023 = vsel %vm7939, %v7840, %v7253
      %v8024 = vsel %vm7940, %v7841, %v7254
      %v8025 = vsel %vm7941, %v7842, %v7255
      %v8026 = vsel %vm7942, %v7843, %v7256
      %v8027 = vsel %vm7943, %v7844, %v7257
      %v8028 = vsel %vm7944, %v7845, %v7258
      %v8029 = vsel %vm7945, %v7846, %v7259
      %v8030 = vsel %vm7930, %v7735, %v7260
      %v8031 = vsel %vm7931, %v7736, %v7261
      %v8032 = vsel %vm7932, %v7737, %v7262
      %v8033 = vsel %vm7933, %v7738, %v7263
      %v8034 = vsel %vm7934, %v7739, %v7264
      %v8035 = vsel %vm7935, %v7740, %v7265
      %v8036 = vsel %vm7936, %v7741, %v7266
      %v8037 = vsel %vm7937, %v7742, %v7267
      %v8038 = vsel %vm7938, %v7743, %v7268
      %v8039 = vsel %vm7939, %v7744, %v7269
      %v8040 = vsel %vm7940, %v7745, %v7270
      %v8041 = vsel %vm7941, %v7746, %v7271
      %v8042 = vsel %vm7942, %v7747, %v7272
      %v8043 = vsel %vm7943, %v7748, %v7273
      %v8044 = vsel %vm7944, %v7749, %v7274
      %v8045 = vsel %vm7945, %v7750, %v7275
      %s8046 = sadd.s32 %s5725, 384
      %s8047 = scalar_lea.vmem [#allocation2], %s8046
      %v8048 = vld [vmem:[%s8047] sm:$0xff]
      %v8049 = vld [vmem:[%s8047 + $0x8] sm:$0xff]
      %v8050 = vld [vmem:[%s8047 + $0x10] sm:$0xff]
      %v8051 = vld [vmem:[%s8047 + $0x18] sm:$0xff]
      %v8052 = vld [vmem:[%s8047 + $0x20] sm:$0xff]
      %v8053 = vld [vmem:[%s8047 + $0x28] sm:$0xff]
      %v8054 = vld [vmem:[%s8047 + $0x30] sm:$0xff]
      %v8055 = vld [vmem:[%s8047 + $0x38] sm:$0xff]
      %v8056 = vld [vmem:[%s8047 + $0x40] sm:$0xff]
      %v8057 = vld [vmem:[%s8047 + $0x48] sm:$0xff]
      %v8058 = vld [vmem:[%s8047 + $0x50] sm:$0xff]
      %v8059 = vld [vmem:[%s8047 + $0x58] sm:$0xff]
      %v8060 = vld [vmem:[%s8047 + $0x60] sm:$0xff]
      %v8061 = vld [vmem:[%s8047 + $0x68] sm:$0xff]
      %v8062 = vld [vmem:[%s8047 + $0x70] sm:$0xff]
      %v8063 = vld [vmem:[%s8047 + $0x78] sm:$0xff]
      %v8064 = vpack.c.bf16 %v8015, %v8014
      %v8065 = vpack.c.bf16 %v8017, %v8016
      %v8066 = vpack.c.bf16 %v8019, %v8018
      %v8067 = vpack.c.bf16 %v8021, %v8020
      %v8068 = vpack.c.bf16 %v8023, %v8022
      %v8069 = vpack.c.bf16 %v8025, %v8024
      %v8070 = vpack.c.bf16 %v8027, %v8026
      %v8071 = vpack.c.bf16 %v8029, %v8028
      %8080 = vrot.lane.b32.xlu0 %v8064, 32
      %v8081 = vpop.permute.xlu0 %8080
      %8082 = vrot.lane.b32.xlu0 %v8065, 32
      %v8083 = vpop.permute.xlu0 %8082
      %8084 = vrot.lane.b32.xlu0 %v8066, 32
      %v8085 = vpop.permute.xlu0 %8084
      %8086 = vrot.lane.b32.xlu0 %v8067, 32
      %v8087 = vpop.permute.xlu0 %8086
      %8088 = vrot.lane.b32.xlu0 %v8068, 32
      %v8089 = vpop.permute.xlu0 %8088
      %8090 = vrot.lane.b32.xlu0 %v8069, 32
      %v8091 = vpop.permute.xlu0 %8090
      %8092 = vrot.lane.b32.xlu0 %v8070, 32
      %v8093 = vpop.permute.xlu0 %8092
      %8094 = vrot.lane.b32.xlu0 %v8071, 32
      %v8095 = vpop.permute.xlu0 %8094
      %v8097 = vsel %vm4638, %v8081, 0
      %v8100 = vsel %vm4638, %v8083, 0
      %v8103 = vsel %vm4638, %v8085, 0
      %v8106 = vsel %vm4638, %v8087, 0
      %v8109 = vsel %vm4638, %v8089, 0
      %v8112 = vsel %vm4638, %v8091, 0
      %v8115 = vsel %vm4638, %v8093, 0
      %v8118 = vsel %vm4638, %v8095, 0
      %8120 = vmatprep.subr.bf16.mxu0 0
      %8121 = vmatpush1.bf16.msra.mxu0 %v5783
      %8122 = vmatprep.subr.bf16.mxu0 0
      %8123 = vmatpush1.bf16.msra.mxu0 %v5784
      %8124 = vmatprep.subr.bf16.mxu0 0
      %8125 = vmatpush1.bf16.msra.mxu0 0
      %8126 = vmatprep.subr.bf16.mxu0 0
      %8127 = vmatpush1.bf16.msra.mxu0 0
      %8128 = vmatprep.subr.bf16.mxu0 0
      %8129 = vmatpush1.bf16.msra.mxu0 0
      %8130 = vmatprep.subr.bf16.mxu0 0
      %8131 = vmatpush1.bf16.msra.mxu0 0
      %8132 = vmatprep.subr.bf16.mxu0 0
      %8133 = vmatpush1.bf16.msra.mxu0 0
      %8134 = vmatprep.subr.bf16.mxu0 0
      %8135 = vmatpush1.bf16.msra.mxu0 0
      %8136 = vmatprep.subr.bf16.mxu0 0
      %8137 = vmatpush1.bf16.msra.mxu0 0
      %8138 = vmatprep.subr.bf16.mxu0 0
      %8139 = vmatpush1.bf16.msra.mxu0 0
      %8140 = vmatprep.subr.bf16.mxu0 0
      %8141 = vmatpush1.bf16.msra.mxu0 0
      %8142 = vmatprep.subr.bf16.mxu0 0
      %8143 = vmatpush1.bf16.msra.mxu0 0
      %8144 = vmatprep.subr.bf16.mxu0 0
      %8145 = vmatpush1.bf16.msra.mxu0 0
      %8146 = vmatprep.subr.bf16.mxu0 0
      %8147 = vmatpush1.bf16.msra.mxu0 0
      %8148 = vmatprep.subr.bf16.mxu0 0
      %8149 = vmatpush1.bf16.msra.mxu0 0
      %8150 = vmatprep.subr.bf16.mxu0 0
      %8151 = vmatpush1.bf16.msra.mxu0 0
      %8152 = vmatprep.mubr.bf16.mxu0 0
      %8153 = vmatmul.mubr.bf16.gmra.mrb[0].mxu0 %v8097
      %v8154 = vpop.f32.mrb[0].mxu0
      %v8155 = vadd.f32 0.0, %v8154
      %v8156 = vpop.f32.mrb[0].mxu0
      %v8157 = vpop.f32.mrb[0].mxu0
      %v8158 = vadd.f32 0.0, %v8157
      %v8159 = vpop.f32.mrb[0].mxu0
      %8160 = vmatprep.mubr.bf16.mxu0 0
      %8161 = vmatmul.mubr.bf16.gmra.mrb[0].mxu0 %v8100
      %v8162 = vpop.f32.mrb[0].mxu0
      %v8163 = vadd.f32 0.0, %v8162
      %v8164 = vpop.f32.mrb[0].mxu0
      %v8165 = vpop.f32.mrb[0].mxu0
      %v8166 = vadd.f32 0.0, %v8165
      %v8167 = vpop.f32.mrb[0].mxu0
      %8168 = vmatprep.mubr.bf16.mxu0 0
      %8169 = vmatmul.mubr.bf16.gmra.mrb[0].mxu0 %v8103
      %v8170 = vpop.f32.mrb[0].mxu0
      %v8171 = vadd.f32 0.0, %v8170
      %v8172 = vpop.f32.mrb[0].mxu0
      %v8173 = vpop.f32.mrb[0].mxu0
      %v8174 = vadd.f32 0.0, %v8173
      %v8175 = vpop.f32.mrb[0].mxu0
      %8176 = vmatprep.mubr.bf16.mxu0 0
      %8177 = vmatmul.mubr.bf16.gmra.mrb[0].mxu0 %v8106
      %v8178 = vpop.f32.mrb[0].mxu0
      %v8179 = vadd.f32 0.0, %v8178
      %v8180 = vpop.f32.mrb[0].mxu0
      %v8181 = vpop.f32.mrb[0].mxu0
      %v8182 = vadd.f32 0.0, %v8181
      %v8183 = vpop.f32.mrb[0].mxu0
      %8184 = vmatprep.mubr.bf16.mxu0 0
      %8185 = vmatmul.mubr.bf16.gmra.mrb[0].mxu0 %v8109
      %v8186 = vpop.f32.mrb[0].mxu0
      %v8187 = vadd.f32 0.0, %v8186
      %v8188 = vpop.f32.mrb[0].mxu0
      %v8189 = vpop.f32.mrb[0].mxu0
      %v8190 = vadd.f32 0.0, %v8189
      %v8191 = vpop.f32.mrb[0].mxu0
      %8192 = vmatprep.mubr.bf16.mxu0 0
      %8193 = vmatmul.mubr.bf16.gmra.mrb[0].mxu0 %v8112
      %v8194 = vpop.f32.mrb[0].mxu0
      %v8195 = vadd.f32 0.0, %v8194
      %v8196 = vpop.f32.mrb[0].mxu0
      %v8197 = vpop.f32.mrb[0].mxu0
      %v8198 = vadd.f32 0.0, %v8197
      %v8199 = vpop.f32.mrb[0].mxu0
      %8200 = vmatprep.mubr.bf16.mxu0 0
      %8201 = vmatmul.mubr.bf16.gmra.mrb[0].mxu0 %v8115
      %v8202 = vpop.f32.mrb[0].mxu0
      %v8203 = vadd.f32 0.0, %v8202
      %v8204 = vpop.f32.mrb[0].mxu0
      %v8205 = vpop.f32.mrb[0].mxu0
      %v8206 = vadd.f32 0.0, %v8205
      %v8207 = vpop.f32.mrb[0].mxu0
      %8208 = vmatprep.mubr.bf16.mxu0 0
      %8209 = vmatmul.mubr.bf16.gmra.mrb[0].mxu0 %v8118
      %v8210 = vpop.f32.mrb[0].mxu0
      %v8211 = vadd.f32 0.0, %v8210
      %v8212 = vpop.f32.mrb[0].mxu0
      %v8213 = vpop.f32.mrb[0].mxu0
      %v8214 = vadd.f32 0.0, %v8213
      %v8215 = vpop.f32.mrb[0].mxu0
      %8216 = vdwg.mxu0
      %v8217 = vadd.f32 %v8048, %v8155
      %v8218 = vadd.f32 %v8049, %v8158
      %v8219 = vadd.f32 %v8050, %v8163
      %v8220 = vadd.f32 %v8051, %v8166
      %v8221 = vadd.f32 %v8052, %v8171
      %v8222 = vadd.f32 %v8053, %v8174
      %v8223 = vadd.f32 %v8054, %v8179
      %v8224 = vadd.f32 %v8055, %v8182
      %v8225 = vadd.f32 %v8056, %v8187
      %v8226 = vadd.f32 %v8057, %v8190
      %v8227 = vadd.f32 %v8058, %v8195
      %v8228 = vadd.f32 %v8059, %v8198
      %v8229 = vadd.f32 %v8060, %v8203
      %v8230 = vadd.f32 %v8061, %v8206
      %v8231 = vadd.f32 %v8062, %v8211
      %v8232 = vadd.f32 %v8063, %v8214
      %v8233 = vxor.u32 %v8217, 2147483648
      %v8234 = vxor.u32 %v8218, 2147483648
      %v8235 = vxor.u32 %v8219, 2147483648
      %v8236 = vxor.u32 %v8220, 2147483648
      %v8237 = vxor.u32 %v8221, 2147483648
      %v8238 = vxor.u32 %v8222, 2147483648
      %v8239 = vxor.u32 %v8223, 2147483648
      %v8240 = vxor.u32 %v8224, 2147483648
      %v8241 = vxor.u32 %v8225, 2147483648
      %v8242 = vxor.u32 %v8226, 2147483648
      %v8243 = vxor.u32 %v8227, 2147483648
      %v8244 = vxor.u32 %v8228, 2147483648
      %v8245 = vxor.u32 %v8229, 2147483648
      %v8246 = vxor.u32 %v8230, 2147483648
      %v8247 = vxor.u32 %v8231, 2147483648
      %v8248 = vxor.u32 %v8232, 2147483648
      %v8249 = vmul.f32 %v8233, 1.442695
      %v8250 = vpow.pop %v8249
      %v8251 = vmul.f32 %v8234, 1.442695
      %v8252 = vpow.pop %v8251
      %v8253 = vmul.f32 %v8235, 1.442695
      %v8254 = vpow.pop %v8253
      %v8255 = vmul.f32 %v8236, 1.442695
      %v8256 = vpow.pop %v8255
      %v8257 = vmul.f32 %v8237, 1.442695
      %v8258 = vpow.pop %v8257
      %v8259 = vmul.f32 %v8238, 1.442695
      %v8260 = vpow.pop %v8259
      %v8261 = vmul.f32 %v8239, 1.442695
      %v8262 = vpow.pop %v8261
      %v8263 = vmul.f32 %v8240, 1.442695
      %v8264 = vpow.pop %v8263
      %v8265 = vmul.f32 %v8241, 1.442695
      %v8266 = vpow.pop %v8265
      %v8267 = vmul.f32 %v8242, 1.442695
      %v8268 = vpow.pop %v8267
      %v8269 = vmul.f32 %v8243, 1.442695
      %v8270 = vpow.pop %v8269
      %v8271 = vmul.f32 %v8244, 1.442695
      %v8272 = vpow.pop %v8271
      %v8273 = vmul.f32 %v8245, 1.442695
      %v8274 = vpow.pop %v8273
      %v8275 = vmul.f32 %v8246, 1.442695
      %v8276 = vpow.pop %v8275
      %v8277 = vmul.f32 %v8247, 1.442695
      %v8278 = vpow.pop %v8277
      %v8279 = vmul.f32 %v8248, 1.442695
      %v8280 = vpow.pop %v8279
      %v8281 = vadd.f32 %v8250, 1.0
      %v8282 = vadd.f32 %v8252, 1.0
      %v8283 = vadd.f32 %v8254, 1.0
      %v8284 = vadd.f32 %v8256, 1.0
      %v8285 = vadd.f32 %v8258, 1.0
      %v8286 = vadd.f32 %v8260, 1.0
      %v8287 = vadd.f32 %v8262, 1.0
      %v8288 = vadd.f32 %v8264, 1.0
      %v8289 = vadd.f32 %v8266, 1.0
      %v8290 = vadd.f32 %v8268, 1.0
      %v8291 = vadd.f32 %v8270, 1.0
      %v8292 = vadd.f32 %v8272, 1.0
      %v8293 = vadd.f32 %v8274, 1.0
      %v8294 = vadd.f32 %v8276, 1.0
      %v8295 = vadd.f32 %v8278, 1.0
      %v8296 = vadd.f32 %v8280, 1.0
      %v8297 = vrcp.pop %v8281
      %v8298 = vmul.f32 1.0, %v8297
      %v8299 = vrcp.pop %v8282
      %v8300 = vmul.f32 1.0, %v8299
      %v8301 = vrcp.pop %v8283
      %v8302 = vmul.f32 1.0, %v8301
      %v8303 = vrcp.pop %v8284
      %v8304 = vmul.f32 1.0, %v8303
      %v8305 = vrcp.pop %v8285
      %v8306 = vmul.f32 1.0, %v8305
      %v8307 = vrcp.pop %v8286
      %v8308 = vmul.f32 1.0, %v8307
      %v8309 = vrcp.pop %v8287
      %v8310 = vmul.f32 1.0, %v8309
      %v8311 = vrcp.pop %v8288
      %v8312 = vmul.f32 1.0, %v8311
      %v8313 = vrcp.pop %v8289
      %v8314 = vmul.f32 1.0, %v8313
      %v8315 = vrcp.pop %v8290
      %v8316 = vmul.f32 1.0, %v8315
      %v8317 = vrcp.pop %v8291
      %v8318 = vmul.f32 1.0, %v8317
      %v8319 = vrcp.pop %v8292
      %v8320 = vmul.f32 1.0, %v8319
      %v8321 = vrcp.pop %v8293
      %v8322 = vmul.f32 1.0, %v8321
      %v8323 = vrcp.pop %v8294
      %v8324 = vmul.f32 1.0, %v8323
      %v8325 = vrcp.pop %v8295
      %v8326 = vmul.f32 1.0, %v8325
      %v8327 = vrcp.pop %v8296
      %v8328 = vmul.f32 1.0, %v8327
      %v8329 = vtanh.pop %v8217
      %v8330 = vtanh.pop %v8218
      %v8331 = vtanh.pop %v8219
      %v8332 = vtanh.pop %v8220
      %v8333 = vtanh.pop %v8221
      %v8334 = vtanh.pop %v8222
      %v8335 = vtanh.pop %v8223
      %v8336 = vtanh.pop %v8224
      %v8337 = vtanh.pop %v8225
      %v8338 = vtanh.pop %v8226
      %v8339 = vtanh.pop %v8227
      %v8340 = vtanh.pop %v8228
      %v8341 = vtanh.pop %v8229
      %v8342 = vtanh.pop %v8230
      %v8343 = vtanh.pop %v8231
      %v8344 = vtanh.pop %v8232
      %v8345 = vmul.f32 %v8298, %v8030
      %v8346 = vmul.f32 %v8300, %v8031
      %v8347 = vmul.f32 %v8302, %v8032
      %v8348 = vmul.f32 %v8304, %v8033
      %v8349 = vmul.f32 %v8306, %v8034
      %v8350 = vmul.f32 %v8308, %v8035
      %v8351 = vmul.f32 %v8310, %v8036
      %v8352 = vmul.f32 %v8312, %v8037
      %v8353 = vmul.f32 %v8314, %v8038
      %v8354 = vmul.f32 %v8316, %v8039
      %v8355 = vmul.f32 %v8318, %v8040
      %v8356 = vmul.f32 %v8320, %v8041
      %v8357 = vmul.f32 %v8322, %v8042
      %v8358 = vmul.f32 %v8324, %v8043
      %v8359 = vmul.f32 %v8326, %v8044
      %v8360 = vmul.f32 %v8328, %v8045
      %8377 = vrot.lane.b32.xlu0 %v8329, 64
      %v8378 = vpop.permute.xlu0 %8377
      %8379 = vrot.lane.b32.xlu0 %v8330, 64
      %v8380 = vpop.permute.xlu0 %8379
      %8381 = vrot.lane.b32.xlu0 %v8331, 64
      %v8382 = vpop.permute.xlu0 %8381
      %8383 = vrot.lane.b32.xlu0 %v8332, 64
      %v8384 = vpop.permute.xlu0 %8383
      %8385 = vrot.lane.b32.xlu0 %v8333, 64
      %v8386 = vpop.permute.xlu0 %8385
      %8387 = vrot.lane.b32.xlu0 %v8334, 64
      %v8388 = vpop.permute.xlu0 %8387
      %8389 = vrot.lane.b32.xlu0 %v8335, 64
      %v8390 = vpop.permute.xlu0 %8389
      %8391 = vrot.lane.b32.xlu0 %v8336, 64
      %v8392 = vpop.permute.xlu0 %8391
      %8393 = vrot.lane.b32.xlu0 %v8337, 64
      %v8394 = vpop.permute.xlu0 %8393
      %8395 = vrot.lane.b32.xlu0 %v8338, 64
      %v8396 = vpop.permute.xlu0 %8395
      %8397 = vrot.lane.b32.xlu0 %v8339, 64
      %v8398 = vpop.permute.xlu0 %8397
      %8399 = vrot.lane.b32.xlu0 %v8340, 64
      %v8400 = vpop.permute.xlu0 %8399
      %8401 = vrot.lane.b32.xlu0 %v8341, 64
      %v8402 = vpop.permute.xlu0 %8401
      %8403 = vrot.lane.b32.xlu0 %v8342, 64
      %v8404 = vpop.permute.xlu0 %8403
      %8405 = vrot.lane.b32.xlu0 %v8343, 64
      %v8406 = vpop.permute.xlu0 %8405
      %8407 = vrot.lane.b32.xlu0 %v8344, 64
      %v8408 = vpop.permute.xlu0 %8407
      %v8425 = vmul.f32 %v8298, %v8378
      %v8426 = vmul.f32 %v8300, %v8380
      %v8427 = vmul.f32 %v8302, %v8382
      %v8428 = vmul.f32 %v8304, %v8384
      %v8429 = vmul.f32 %v8306, %v8386
      %v8430 = vmul.f32 %v8308, %v8388
      %v8431 = vmul.f32 %v8310, %v8390
      %v8432 = vmul.f32 %v8312, %v8392
      %v8433 = vmul.f32 %v8314, %v8394
      %v8434 = vmul.f32 %v8316, %v8396
      %v8435 = vmul.f32 %v8318, %v8398
      %v8436 = vmul.f32 %v8320, %v8400
      %v8437 = vmul.f32 %v8322, %v8402
      %v8438 = vmul.f32 %v8324, %v8404
      %v8439 = vmul.f32 %v8326, %v8406
      %v8440 = vmul.f32 %v8328, %v8408
      %8457 = vrot.lane.b32.xlu0 %v8425, 32
      %v8458 = vpop.permute.xlu0 %8457
      %8459 = vrot.lane.b32.xlu0 %v8426, 32
      %v8460 = vpop.permute.xlu0 %8459
      %8461 = vrot.lane.b32.xlu0 %v8427, 32
      %v8462 = vpop.permute.xlu0 %8461
      %8463 = vrot.lane.b32.xlu0 %v8428, 32
      %v8464 = vpop.permute.xlu0 %8463
      %8465 = vrot.lane.b32.xlu0 %v8429, 32
      %v8466 = vpop.permute.xlu0 %8465
      %8467 = vrot.lane.b32.xlu0 %v8430, 32
      %v8468 = vpop.permute.xlu0 %8467
      %8469 = vrot.lane.b32.xlu0 %v8431, 32
      %v8470 = vpop.permute.xlu0 %8469
      %8471 = vrot.lane.b32.xlu0 %v8432, 32
      %v8472 = vpop.permute.xlu0 %8471
      %8473 = vrot.lane.b32.xlu0 %v8433, 32
      %v8474 = vpop.permute.xlu0 %8473
      %8475 = vrot.lane.b32.xlu0 %v8434, 32
      %v8476 = vpop.permute.xlu0 %8475
      %8477 = vrot.lane.b32.xlu0 %v8435, 32
      %v8478 = vpop.permute.xlu0 %8477
      %8479 = vrot.lane.b32.xlu0 %v8436, 32
      %v8480 = vpop.permute.xlu0 %8479
      %8481 = vrot.lane.b32.xlu0 %v8437, 32
      %v8482 = vpop.permute.xlu0 %8481
      %8483 = vrot.lane.b32.xlu0 %v8438, 32
      %v8484 = vpop.permute.xlu0 %8483
      %8485 = vrot.lane.b32.xlu0 %v8439, 32
      %v8486 = vpop.permute.xlu0 %8485
      %8487 = vrot.lane.b32.xlu0 %v8440, 32
      %v8488 = vpop.permute.xlu0 %8487
      %v8505 = vadd.f32 %v8345, %v8458
      %v8506 = vadd.f32 %v8346, %v8460
      %v8507 = vadd.f32 %v8347, %v8462
      %v8508 = vadd.f32 %v8348, %v8464
      %v8509 = vadd.f32 %v8349, %v8466
      %v8510 = vadd.f32 %v8350, %v8468
      %v8511 = vadd.f32 %v8351, %v8470
      %v8512 = vadd.f32 %v8352, %v8472
      %v8513 = vadd.f32 %v8353, %v8474
      %v8514 = vadd.f32 %v8354, %v8476
      %v8515 = vadd.f32 %v8355, %v8478
      %v8516 = vadd.f32 %v8356, %v8480
      %v8517 = vadd.f32 %v8357, %v8482
      %v8518 = vadd.f32 %v8358, %v8484
      %v8519 = vadd.f32 %v8359, %v8486
      %v8520 = vadd.f32 %v8360, %v8488
      %v8521 = vtanh.pop %v8505
      %v8522 = vtanh.pop %v8506
      %v8523 = vtanh.pop %v8507
      %v8524 = vtanh.pop %v8508
      %v8525 = vtanh.pop %v8509
      %v8526 = vtanh.pop %v8510
      %v8527 = vtanh.pop %v8511
      %v8528 = vtanh.pop %v8512
      %v8529 = vtanh.pop %v8513
      %v8530 = vtanh.pop %v8514
      %v8531 = vtanh.pop %v8515
      %v8532 = vtanh.pop %v8516
      %v8533 = vtanh.pop %v8517
      %v8534 = vtanh.pop %v8518
      %v8535 = vtanh.pop %v8519
      %v8536 = vtanh.pop %v8520
      %8553 = vrot.lane.b32.xlu0 %v8521, 64
      %v8554 = vpop.permute.xlu0 %8553
      %8555 = vrot.lane.b32.xlu0 %v8522, 64
      %v8556 = vpop.permute.xlu0 %8555
      %8557 = vrot.lane.b32.xlu0 %v8523, 64
      %v8558 = vpop.permute.xlu0 %8557
      %8559 = vrot.lane.b32.xlu0 %v8524, 64
      %v8560 = vpop.permute.xlu0 %8559
      %8561 = vrot.lane.b32.xlu0 %v8525, 64
      %v8562 = vpop.permute.xlu0 %8561
      %8563 = vrot.lane.b32.xlu0 %v8526, 64
      %v8564 = vpop.permute.xlu0 %8563
      %8565 = vrot.lane.b32.xlu0 %v8527, 64
      %v8566 = vpop.permute.xlu0 %8565
      %8567 = vrot.lane.b32.xlu0 %v8528, 64
      %v8568 = vpop.permute.xlu0 %8567
      %8569 = vrot.lane.b32.xlu0 %v8529, 64
      %v8570 = vpop.permute.xlu0 %8569
      %8571 = vrot.lane.b32.xlu0 %v8530, 64
      %v8572 = vpop.permute.xlu0 %8571
      %8573 = vrot.lane.b32.xlu0 %v8531, 64
      %v8574 = vpop.permute.xlu0 %8573
      %8575 = vrot.lane.b32.xlu0 %v8532, 64
      %v8576 = vpop.permute.xlu0 %8575
      %8577 = vrot.lane.b32.xlu0 %v8533, 64
      %v8578 = vpop.permute.xlu0 %8577
      %8579 = vrot.lane.b32.xlu0 %v8534, 64
      %v8580 = vpop.permute.xlu0 %8579
      %8581 = vrot.lane.b32.xlu0 %v8535, 64
      %v8582 = vpop.permute.xlu0 %8581
      %8583 = vrot.lane.b32.xlu0 %v8536, 64
      %v8584 = vpop.permute.xlu0 %8583
      %v8601 = vmul.f32 %v8298, %v8554
      %v8602 = vmul.f32 %v8300, %v8556
      %v8603 = vmul.f32 %v8302, %v8558
      %v8604 = vmul.f32 %v8304, %v8560
      %v8605 = vmul.f32 %v8306, %v8562
      %v8606 = vmul.f32 %v8308, %v8564
      %v8607 = vmul.f32 %v8310, %v8566
      %v8608 = vmul.f32 %v8312, %v8568
      %v8609 = vmul.f32 %v8314, %v8570
      %v8610 = vmul.f32 %v8316, %v8572
      %v8611 = vmul.f32 %v8318, %v8574
      %v8612 = vmul.f32 %v8320, %v8576
      %v8613 = vmul.f32 %v8322, %v8578
      %v8614 = vmul.f32 %v8324, %v8580
      %v8615 = vmul.f32 %v8326, %v8582
      %v8616 = vmul.f32 %v8328, %v8584
      %s8617 = sadd.s32 %s5724, 3
      %v8618 = vstv %s8617
      %vm8619 = vcmp.lt.s32.totalorder %v8618, %v39
      %vm8620 = vcmp.lt.s32.totalorder %v8618, %v40
      %vm8621 = vcmp.lt.s32.totalorder %v8618, %v41
      %vm8622 = vcmp.lt.s32.totalorder %v8618, %v42
      %vm8623 = vcmp.lt.s32.totalorder %v8618, %v43
      %vm8624 = vcmp.lt.s32.totalorder %v8618, %v44
      %vm8625 = vcmp.lt.s32.totalorder %v8618, %v45
      %vm8626 = vcmp.lt.s32.totalorder %v8618, %v46
      %vm8627 = vcmp.lt.s32.totalorder %v8618, %v47
      %vm8628 = vcmp.lt.s32.totalorder %v8618, %v48
      %vm8629 = vcmp.lt.s32.totalorder %v8618, %v49
      %vm8630 = vcmp.lt.s32.totalorder %v8618, %v50
      %vm8631 = vcmp.lt.s32.totalorder %v8618, %v51
      %vm8632 = vcmp.lt.s32.totalorder %v8618, %v52
      %vm8633 = vcmp.lt.s32.totalorder %v8618, %v53
      %vm8634 = vcmp.lt.s32.totalorder %v8618, %v54
      %s8635 = smul.u32 %s8617, 128
      %v8636 = vsel %vm8619, 1, 0
      %v8637 = vsel %vm8620, 1, 0
      %v8638 = vsel %vm8621, 1, 0
      %v8639 = vsel %vm8622, 1, 0
      %v8640 = vsel %vm8623, 1, 0
      %v8641 = vsel %vm8624, 1, 0
      %v8642 = vsel %vm8625, 1, 0
      %v8643 = vsel %vm8626, 1, 0
      %v8644 = vsel %vm8627, 1, 0
      %v8645 = vsel %vm8628, 1, 0
      %v8646 = vsel %vm8629, 1, 0
      %v8647 = vsel %vm8630, 1, 0
      %v8648 = vsel %vm8631, 1, 0
      %v8649 = vsel %vm8632, 1, 0
      %v8650 = vsel %vm8633, 1, 0
      %v8651 = vsel %vm8634, 1, 0
      %8652 = vset.pattern.permute.xlu0 0
      %8653 = vperm.xlu0 %8652, %v8636
      %v8654 = vpop.permute.xlu0 %8653
      %8655 = vset.pattern.permute.xlu0 0
      %8656 = vperm.xlu0 %8655, %v8637
      %v8657 = vpop.permute.xlu0 %8656
      %8658 = vset.pattern.permute.xlu0 0
      %8659 = vperm.xlu0 %8658, %v8638
      %v8660 = vpop.permute.xlu0 %8659
      %8661 = vset.pattern.permute.xlu0 0
      %8662 = vperm.xlu0 %8661, %v8639
      %v8663 = vpop.permute.xlu0 %8662
      %8664 = vset.pattern.permute.xlu0 0
      %8665 = vperm.xlu0 %8664, %v8640
      %v8666 = vpop.permute.xlu0 %8665
      %8667 = vset.pattern.permute.xlu0 0
      %8668 = vperm.xlu0 %8667, %v8641
      %v8669 = vpop.permute.xlu0 %8668
      %8670 = vset.pattern.permute.xlu0 0
      %8671 = vperm.xlu0 %8670, %v8642
      %v8672 = vpop.permute.xlu0 %8671
      %8673 = vset.pattern.permute.xlu0 0
      %8674 = vperm.xlu0 %8673, %v8643
      %v8675 = vpop.permute.xlu0 %8674
      %8676 = vset.pattern.permute.xlu0 0
      %8677 = vperm.xlu0 %8676, %v8644
      %v8678 = vpop.permute.xlu0 %8677
      %8679 = vset.pattern.permute.xlu0 0
      %8680 = vperm.xlu0 %8679, %v8645
      %v8681 = vpop.permute.xlu0 %8680
      %8682 = vset.pattern.permute.xlu0 0
      %8683 = vperm.xlu0 %8682, %v8646
      %v8684 = vpop.permute.xlu0 %8683
      %8685 = vset.pattern.permute.xlu0 0
      %8686 = vperm.xlu0 %8685, %v8647
      %v8687 = vpop.permute.xlu0 %8686
      %8688 = vset.pattern.permute.xlu0 0
      %8689 = vperm.xlu0 %8688, %v8648
      %v8690 = vpop.permute.xlu0 %8689
      %8691 = vset.pattern.permute.xlu0 0
      %8692 = vperm.xlu0 %8691, %v8649
      %v8693 = vpop.permute.xlu0 %8692
      %8694 = vset.pattern.permute.xlu0 0
      %8695 = vperm.xlu0 %8694, %v8650
      %v8696 = vpop.permute.xlu0 %8695
      %8697 = vset.pattern.permute.xlu0 0
      %8698 = vperm.xlu0 %8697, %v8651
      %v8699 = vpop.permute.xlu0 %8698
      %vm8700 = vcmp.eq.s32.totalorder %v8654, 1
      %vm8701 = vcmp.eq.s32.totalorder %v8657, 1
      %vm8702 = vcmp.eq.s32.totalorder %v8660, 1
      %vm8703 = vcmp.eq.s32.totalorder %v8663, 1
      %vm8704 = vcmp.eq.s32.totalorder %v8666, 1
      %vm8705 = vcmp.eq.s32.totalorder %v8669, 1
      %vm8706 = vcmp.eq.s32.totalorder %v8672, 1
      %vm8707 = vcmp.eq.s32.totalorder %v8675, 1
      %vm8708 = vcmp.eq.s32.totalorder %v8678, 1
      %vm8709 = vcmp.eq.s32.totalorder %v8681, 1
      %vm8710 = vcmp.eq.s32.totalorder %v8684, 1
      %vm8711 = vcmp.eq.s32.totalorder %v8687, 1
      %vm8712 = vcmp.eq.s32.totalorder %v8690, 1
      %vm8713 = vcmp.eq.s32.totalorder %v8693, 1
      %vm8714 = vcmp.eq.s32.totalorder %v8696, 1
      %vm8715 = vcmp.eq.s32.totalorder %v8699, 1
      %v8716 = vsel %vm8700, %v8601, 0.0
      %v8717 = vsel %vm8701, %v8602, 0.0
      %v8718 = vsel %vm8702, %v8603, 0.0
      %v8719 = vsel %vm8703, %v8604, 0.0
      %v8720 = vsel %vm8704, %v8605, 0.0
      %v8721 = vsel %vm8705, %v8606, 0.0
      %v8722 = vsel %vm8706, %v8607, 0.0
      %v8723 = vsel %vm8707, %v8608, 0.0
      %v8724 = vsel %vm8708, %v8609, 0.0
      %v8725 = vsel %vm8709, %v8610, 0.0
      %v8726 = vsel %vm8710, %v8611, 0.0
      %v8727 = vsel %vm8711, %v8612, 0.0
      %v8728 = vsel %vm8712, %v8613, 0.0
      %v8729 = vsel %vm8713, %v8614, 0.0
      %v8730 = vsel %vm8714, %v8615, 0.0
      %v8731 = vsel %vm8715, %v8616, 0.0
      %v8732 = vpack.c.bf16 %v8717, %v8716
      %v8733 = vpack.c.bf16 %v8719, %v8718
      %v8734 = vpack.c.bf16 %v8721, %v8720
      %v8735 = vpack.c.bf16 %v8723, %v8722
      %v8736 = vpack.c.bf16 %v8725, %v8724
      %v8737 = vpack.c.bf16 %v8727, %v8726
      %v8738 = vpack.c.bf16 %v8729, %v8728
      %v8739 = vpack.c.bf16 %v8731, %v8730
      %8748 = vrot.lane.b32.xlu0 %v8732, 32
      %v8749 = vpop.permute.xlu0 %8748
      %8750 = vrot.lane.b32.xlu0 %v8733, 32
      %v8751 = vpop.permute.xlu0 %8750
      %8752 = vrot.lane.b32.xlu0 %v8734, 32
      %v8753 = vpop.permute.xlu0 %8752
      %8754 = vrot.lane.b32.xlu0 %v8735, 32
      %v8755 = vpop.permute.xlu0 %8754
      %8756 = vrot.lane.b32.xlu0 %v8736, 32
      %v8757 = vpop.permute.xlu0 %8756
      %8758 = vrot.lane.b32.xlu0 %v8737, 32
      %v8759 = vpop.permute.xlu0 %8758
      %8760 = vrot.lane.b32.xlu0 %v8738, 32
      %v8761 = vpop.permute.xlu0 %8760
      %8762 = vrot.lane.b32.xlu0 %v8739, 32
      %v8763 = vpop.permute.xlu0 %8762
      %s8772 = sshra.s32 %s8635, 4
      %s8773 = sand.u32 %s8635, 15
      %s8774 = smul.addr %s8772, 8
      %s8775 = scalar_lea.vmem [#allocation3], %s8774
      %8776 = vst.msk [vmem:[%s8775] sm:$0xff] %vm4638, %v8749
      %8777 = vst.msk [vmem:[%s8775 + $0x8] sm:$0xff] %vm4638, %v8751
      %8778 = vst.msk [vmem:[%s8775 + $0x10] sm:$0xff] %vm4638, %v8753
      %8779 = vst.msk [vmem:[%s8775 + $0x18] sm:$0xff] %vm4638, %v8755
      %8780 = vst.msk [vmem:[%s8775 + $0x20] sm:$0xff] %vm4638, %v8757
      %8781 = vst.msk [vmem:[%s8775 + $0x28] sm:$0xff] %vm4638, %v8759
      %8782 = vst.msk [vmem:[%s8775 + $0x30] sm:$0xff] %vm4638, %v8761
      %8783 = vst.msk [vmem:[%s8775 + $0x38] sm:$0xff] %vm4638, %v8763
      %v8784 = vsel %vm8700, %v8601, %v8014
      %v8785 = vsel %vm8701, %v8602, %v8015
      %v8786 = vsel %vm8702, %v8603, %v8016
      %v8787 = vsel %vm8703, %v8604, %v8017
      %v8788 = vsel %vm8704, %v8605, %v8018
      %v8789 = vsel %vm8705, %v8606, %v8019
      %v8790 = vsel %vm8706, %v8607, %v8020
      %v8791 = vsel %vm8707, %v8608, %v8021
      %v8792 = vsel %vm8708, %v8609, %v8022
      %v8793 = vsel %vm8709, %v8610, %v8023
      %v8794 = vsel %vm8710, %v8611, %v8024
      %v8795 = vsel %vm8711, %v8612, %v8025
      %v8796 = vsel %vm8712, %v8613, %v8026
      %v8797 = vsel %vm8713, %v8614, %v8027
      %v8798 = vsel %vm8714, %v8615, %v8028
      %v8799 = vsel %vm8715, %v8616, %v8029
      %v8800 = vsel %vm8700, %v8505, %v8030
      %v8801 = vsel %vm8701, %v8506, %v8031
      %v8802 = vsel %vm8702, %v8507, %v8032
      %v8803 = vsel %vm8703, %v8508, %v8033
      %v8804 = vsel %vm8704, %v8509, %v8034
      %v8805 = vsel %vm8705, %v8510, %v8035
      %v8806 = vsel %vm8706, %v8511, %v8036
      %v8807 = vsel %vm8707, %v8512, %v8037
      %v8808 = vsel %vm8708, %v8513, %v8038
      %v8809 = vsel %vm8709, %v8514, %v8039
      %v8810 = vsel %vm8710, %v8515, %v8040
      %v8811 = vsel %vm8711, %v8516, %v8041
      %v8812 = vsel %vm8712, %v8517, %v8042
      %v8813 = vsel %vm8713, %v8518, %v8043
      %v8814 = vsel %vm8714, %v8519, %v8044
      %v8815 = vsel %vm8715, %v8520, %v8045
    $region57: #{tpu_custom_call.1} parent=1 // loop_footer
      %s5185 = sadd.s32 1, %s5181
    $region58: #{tpu_custom_call.1} parent=1 // loop_footer_branch
      %5180 = sbr.rel target = $region54
    $region59: #{tpu_custom_call.1} parent=1 // loop_exit
      _
    %8832 = vrot.lane.b32.xlu0 %v5186, 32
    %v8833 = vpop.permute.xlu0 %8832
    %8834 = vrot.lane.b32.xlu0 %v5187, 32
    %v8835 = vpop.permute.xlu0 %8834
    %8836 = vrot.lane.b32.xlu0 %v5188, 32
    %v8837 = vpop.permute.xlu0 %8836
    %8838 = vrot.lane.b32.xlu0 %v5189, 32
    %v8839 = vpop.permute.xlu0 %8838
    %8840 = vrot.lane.b32.xlu0 %v5190, 32
    %v8841 = vpop.permute.xlu0 %8840
    %8842 = vrot.lane.b32.xlu0 %v5191, 32
    %v8843 = vpop.permute.xlu0 %8842
    %8844 = vrot.lane.b32.xlu0 %v5192, 32
    %v8845 = vpop.permute.xlu0 %8844
    %8846 = vrot.lane.b32.xlu0 %v5193, 32
    %v8847 = vpop.permute.xlu0 %8846
    %8848 = vrot.lane.b32.xlu0 %v5194, 32
    %v8849 = vpop.permute.xlu0 %8848
    %8850 = vrot.lane.b32.xlu0 %v5195, 32
    %v8851 = vpop.permute.xlu0 %8850
    %8852 = vrot.lane.b32.xlu0 %v5196, 32
    %v8853 = vpop.permute.xlu0 %8852
    %8854 = vrot.lane.b32.xlu0 %v5197, 32
    %v8855 = vpop.permute.xlu0 %8854
    %8856 = vrot.lane.b32.xlu0 %v5198, 32
    %v8857 = vpop.permute.xlu0 %8856
    %8858 = vrot.lane.b32.xlu0 %v5199, 32
    %v8859 = vpop.permute.xlu0 %8858
    %8860 = vrot.lane.b32.xlu0 %v5200, 32
    %v8861 = vpop.permute.xlu0 %8860
    %8862 = vrot.lane.b32.xlu0 %v5201, 32
    %v8863 = vpop.permute.xlu0 %8862
    %s8880 = scalar_lea.vmem %s11, 128
    %8881 = vst.msk [vmem:[%s8880] sm:$0xff] %vm4638, %v8833
    %8882 = vst.msk [vmem:[%s8880 + $0x8] sm:$0xff] %vm4638, %v8835
    %8883 = vst.msk [vmem:[%s8880 + $0x10] sm:$0xff] %vm4638, %v8837
    %8884 = vst.msk [vmem:[%s8880 + $0x18] sm:$0xff] %vm4638, %v8839
    %8885 = vst.msk [vmem:[%s8880 + $0x20] sm:$0xff] %vm4638, %v8841
    %8886 = vst.msk [vmem:[%s8880 + $0x28] sm:$0xff] %vm4638, %v8843
    %8887 = vst.msk [vmem:[%s8880 + $0x30] sm:$0xff] %vm4638, %v8845
    %8888 = vst.msk [vmem:[%s8880 + $0x38] sm:$0xff] %vm4638, %v8847
    %8889 = vst.msk [vmem:[%s8880 + $0x40] sm:$0xff] %vm4638, %v8849
    %8890 = vst.msk [vmem:[%s8880 + $0x48] sm:$0xff] %vm4638, %v8851
    %8891 = vst.msk [vmem:[%s8880 + $0x50] sm:$0xff] %vm4638, %v8853
    %8892 = vst.msk [vmem:[%s8880 + $0x58] sm:$0xff] %vm4638, %v8855
    %8893 = vst.msk [vmem:[%s8880 + $0x60] sm:$0xff] %vm4638, %v8857
    %8894 = vst.msk [vmem:[%s8880 + $0x68] sm:$0xff] %vm4638, %v8859
    %8895 = vst.msk [vmem:[%s8880 + $0x70] sm:$0xff] %vm4638, %v8861
    %8896 = vst.msk [vmem:[%s8880 + $0x78] sm:$0xff] %vm4638, %v8863
    %8897 = vst.msk [vmem:[%s8880] sm:$0xff] %vm4655, %v5202
    %8898 = vst.msk [vmem:[%s8880 + $0x8] sm:$0xff] %vm4655, %v5203
    %8899 = vst.msk [vmem:[%s8880 + $0x10] sm:$0xff] %vm4655, %v5204
    %8900 = vst.msk [vmem:[%s8880 + $0x18] sm:$0xff] %vm4655, %v5205
    %8901 = vst.msk [vmem:[%s8880 + $0x20] sm:$0xff] %vm4655, %v5206
    %8902 = vst.msk [vmem:[%s8880 + $0x28] sm:$0xff] %vm4655, %v5207
    %8903 = vst.msk [vmem:[%s8880 + $0x30] sm:$0xff] %vm4655, %v5208
    %8904 = vst.msk [vmem:[%s8880 + $0x38] sm:$0xff] %vm4655, %v5209
    %8905 = vst.msk [vmem:[%s8880 + $0x40] sm:$0xff] %vm4655, %v5210
    %8906 = vst.msk [vmem:[%s8880 + $0x48] sm:$0xff] %vm4655, %v5211
    %8907 = vst.msk [vmem:[%s8880 + $0x50] sm:$0xff] %vm4655, %v5212
    %8908 = vst.msk [vmem:[%s8880 + $0x58] sm:$0xff] %vm4655, %v5213
    %8909 = vst.msk [vmem:[%s8880 + $0x60] sm:$0xff] %vm4655, %v5214
    %8910 = vst.msk [vmem:[%s8880 + $0x68] sm:$0xff] %vm4655, %v5215
    %8911 = vst.msk [vmem:[%s8880 + $0x70] sm:$0xff] %vm4655, %v5216
    %8912 = vst.msk [vmem:[%s8880 + $0x78] sm:$0xff] %vm4655, %v5217
    %v8913 = vld [vmem:[%s8] sm:$0x1]
    %v8914 = vld [vmem:[%s9] sm:$0x3]
    %v8915 = vld [vmem:[#allocation3] sm:$0xff]
    %v8916 = vld [vmem:[#allocation3 + $0x8] sm:$0xff]
    %v8917 = vld [vmem:[#allocation3 + $0x10] sm:$0xff]
    %v8918 = vld [vmem:[#allocation3 + $0x18] sm:$0xff]
    %v8919 = vld [vmem:[#allocation3 + $0x20] sm:$0xff]
    %v8920 = vld [vmem:[#allocation3 + $0x28] sm:$0xff]
    %v8921 = vld [vmem:[#allocation3 + $0x30] sm:$0xff]
    %v8922 = vld [vmem:[#allocation3 + $0x38] sm:$0xff]
    %v8923 = vld [vmem:[#allocation3 + $0x40] sm:$0xff]
    %v8924 = vld [vmem:[#allocation3 + $0x48] sm:$0xff]
    %v8925 = vld [vmem:[#allocation3 + $0x50] sm:$0xff]
    %v8926 = vld [vmem:[#allocation3 + $0x58] sm:$0xff]
    %v8927 = vld [vmem:[#allocation3 + $0x60] sm:$0xff]
    %v8928 = vld [vmem:[#allocation3 + $0x68] sm:$0xff]
    %v8929 = vld [vmem:[#allocation3 + $0x70] sm:$0xff]
    %v8930 = vld [vmem:[#allocation3 + $0x78] sm:$0xff]
    %v8931 = vld [vmem:[#allocation3 + $0x80] sm:$0xff]
    %v8932 = vld [vmem:[#allocation3 + $0x88] sm:$0xff]
    %v8933 = vld [vmem:[#allocation3 + $0x90] sm:$0xff]
    %v8934 = vld [vmem:[#allocation3 + $0x98] sm:$0xff]
    %v8935 = vld [vmem:[#allocation3 + $0xa0] sm:$0xff]
    %v8936 = vld [vmem:[#allocation3 + $0xa8] sm:$0xff]
    %v8937 = vld [vmem:[#allocation3 + $0xb0] sm:$0xff]
    %v8938 = vld [vmem:[#allocation3 + $0xb8] sm:$0xff]
    %v8939 = vld [vmem:[#allocation3 + $0xc0] sm:$0xff]
    %v8940 = vld [vmem:[#allocation3 + $0xc8] sm:$0xff]
    %v8941 = vld [vmem:[#allocation3 + $0xd0] sm:$0xff]
    %v8942 = vld [vmem:[#allocation3 + $0xd8] sm:$0xff]
    %v8943 = vld [vmem:[#allocation3 + $0xe0] sm:$0xff]
    %v8944 = vld [vmem:[#allocation3 + $0xe8] sm:$0xff]
    %v8945 = vld [vmem:[#allocation3 + $0xf0] sm:$0xff]
    %v8946 = vld [vmem:[#allocation3 + $0xf8] sm:$0xff]
    %v8947 = vld [vmem:[#allocation3 + $0x100] sm:$0xff]
    %v8948 = vld [vmem:[#allocation3 + $0x108] sm:$0xff]
    %v8949 = vld [vmem:[#allocation3 + $0x110] sm:$0xff]
    %v8950 = vld [vmem:[#allocation3 + $0x118] sm:$0xff]
    %v8951 = vld [vmem:[#allocation3 + $0x120] sm:$0xff]
    %v8952 = vld [vmem:[#allocation3 + $0x128] sm:$0xff]
    %v8953 = vld [vmem:[#allocation3 + $0x130] sm:$0xff]
    %v8954 = vld [vmem:[#allocation3 + $0x138] sm:$0xff]
    %v8955 = vld [vmem:[#allocation3 + $0x140] sm:$0xff]
    %v8956 = vld [vmem:[#allocation3 + $0x148] sm:$0xff]
    %v8957 = vld [vmem:[#allocation3 + $0x150] sm:$0xff]
    %v8958 = vld [vmem:[#allocation3 + $0x158] sm:$0xff]
    %v8959 = vld [vmem:[#allocation3 + $0x160] sm:$0xff]
    %v8960 = vld [vmem:[#allocation3 + $0x168] sm:$0xff]
    %v8961 = vld [vmem:[#allocation3 + $0x170] sm:$0xff]
    %v8962 = vld [vmem:[#allocation3 + $0x178] sm:$0xff]
    %v8963 = vld [vmem:[#allocation3 + $0x180] sm:$0xff]
    %v8964 = vld [vmem:[#allocation3 + $0x188] sm:$0xff]
    %v8965 = vld [vmem:[#allocation3 + $0x190] sm:$0xff]
    %v8966 = vld [vmem:[#allocation3 + $0x198] sm:$0xff]
    %v8967 = vld [vmem:[#allocation3 + $0x1a0] sm:$0xff]
    %v8968 = vld [vmem:[#allocation3 + $0x1a8] sm:$0xff]
    %v8969 = vld [vmem:[#allocation3 + $0x1b0] sm:$0xff]
    %v8970 = vld [vmem:[#allocation3 + $0x1b8] sm:$0xff]
    %v8971 = vld [vmem:[#allocation3 + $0x1c0] sm:$0xff]
    %v8972 = vld [vmem:[#allocation3 + $0x1c8] sm:$0xff]
    %v8973 = vld [vmem:[#allocation3 + $0x1d0] sm:$0xff]
    %v8974 = vld [vmem:[#allocation3 + $0x1d8] sm:$0xff]
    %v8975 = vld [vmem:[#allocation3 + $0x1e0] sm:$0xff]
    %v8976 = vld [vmem:[#allocation3 + $0x1e8] sm:$0xff]
    %v8977 = vld [vmem:[#allocation3 + $0x1f0] sm:$0xff]
    %v8978 = vld [vmem:[#allocation3 + $0x1f8] sm:$0xff]
    %8980 = vset.pattern.permute.xlu0 0
    %8981 = vperm.xlu0 %8980, %v8914
    %v8982 = vpop.permute.xlu0 %8981
    %v8985 = vsel %vm4638, %v8913, 0
    %v8988 = vsel %vm4638, %v8915, 0
    %v8991 = vsel %vm4638, %v8916, 0
    %v8994 = vsel %vm4638, %v8917, 0
    %v8997 = vsel %vm4638, %v8918, 0
    %v9000 = vsel %vm4638, %v8919, 0
    %v9003 = vsel %vm4638, %v8920, 0
    %v9006 = vsel %vm4638, %v8921, 0
    %v9009 = vsel %vm4638, %v8922, 0
    %v9012 = vsel %vm4638, %v8923, 0
    %v9015 = vsel %vm4638, %v8924, 0
    %v9018 = vsel %vm4638, %v8925, 0
    %v9021 = vsel %vm4638, %v8926, 0
    %v9024 = vsel %vm4638, %v8927, 0
    %v9027 = vsel %vm4638, %v8928, 0
    %v9030 = vsel %vm4638, %v8929, 0
    %v9033 = vsel %vm4638, %v8930, 0
    %v9036 = vsel %vm4638, %v8931, 0
    %v9039 = vsel %vm4638, %v8932, 0
    %v9042 = vsel %vm4638, %v8933, 0
    %v9045 = vsel %vm4638, %v8934, 0
    %v9048 = vsel %vm4638, %v8935, 0
    %v9051 = vsel %vm4638, %v8936, 0
    %v9054 = vsel %vm4638, %v8937, 0
    %v9057 = vsel %vm4638, %v8938, 0
    %v9060 = vsel %vm4638, %v8939, 0
    %v9063 = vsel %vm4638, %v8940, 0
    %v9066 = vsel %vm4638, %v8941, 0
    %v9069 = vsel %vm4638, %v8942, 0
    %v9072 = vsel %vm4638, %v8943, 0
    %v9075 = vsel %vm4638, %v8944, 0
    %v9078 = vsel %vm4638, %v8945, 0
    %v9081 = vsel %vm4638, %v8946, 0
    %v9084 = vsel %vm4638, %v8947, 0
    %v9087 = vsel %vm4638, %v8948, 0
    %v9090 = vsel %vm4638, %v8949, 0
    %v9093 = vsel %vm4638, %v8950, 0
    %v9096 = vsel %vm4638, %v8951, 0
    %v9099 = vsel %vm4638, %v8952, 0
    %v9102 = vsel %vm4638, %v8953, 0
    %v9105 = vsel %vm4638, %v8954, 0
    %v9108 = vsel %vm4638, %v8955, 0
    %v9111 = vsel %vm4638, %v8956, 0
    %v9114 = vsel %vm4638, %v8957, 0
    %v9117 = vsel %vm4638, %v8958, 0
    %v9120 = vsel %vm4638, %v8959, 0
    %v9123 = vsel %vm4638, %v8960, 0
    %v9126 = vsel %vm4638, %v8961, 0
    %v9129 = vsel %vm4638, %v8962, 0
    %v9132 = vsel %vm4638, %v8963, 0
    %v9135 = vsel %vm4638, %v8964, 0
    %v9138 = vsel %vm4638, %v8965, 0
    %v9141 = vsel %vm4638, %v8966, 0
    %v9144 = vsel %vm4638, %v8967, 0
    %v9147 = vsel %vm4638, %v8968, 0
    %v9150 = vsel %vm4638, %v8969, 0
    %v9153 = vsel %vm4638, %v8970, 0
    %v9156 = vsel %vm4638, %v8971, 0
    %v9159 = vsel %vm4638, %v8972, 0
    %v9162 = vsel %vm4638, %v8973, 0
    %v9165 = vsel %vm4638, %v8974, 0
    %v9168 = vsel %vm4638, %v8975, 0
    %v9171 = vsel %vm4638, %v8976, 0
    %v9174 = vsel %vm4638, %v8977, 0
    %v9177 = vsel %vm4638, %v8978, 0
    %9179 = vmatprep.subr.bf16.mxu0 0
    %9180 = vmatpush1.bf16.xpose.msra.mxu0 %v8988
    %9181 = vmatprep.subr.bf16.mxu0 0
    %9182 = vmatpush1.bf16.xpose.msra.mxu0 %v8991
    %9183 = vmatprep.subr.bf16.mxu0 0
    %9184 = vmatpush1.bf16.xpose.msra.mxu0 %v8994
    %9185 = vmatprep.subr.bf16.mxu0 0
    %9186 = vmatpush1.bf16.xpose.msra.mxu0 %v8997
    %9187 = vmatprep.subr.bf16.mxu0 0
    %9188 = vmatpush1.bf16.xpose.msra.mxu0 %v9000
    %9189 = vmatprep.subr.bf16.mxu0 0
    %9190 = vmatpush1.bf16.xpose.msra.mxu0 %v9003
    %9191 = vmatprep.subr.bf16.mxu0 0
    %9192 = vmatpush1.bf16.xpose.msra.mxu0 %v9006
    %9193 = vmatprep.subr.bf16.mxu0 0
    %9194 = vmatpush1.bf16.xpose.msra.mxu0 %v9009
    %9195 = vmatprep.subr.bf16.mxu0 0
    %9196 = vmatpush1.bf16.xpose.msra.mxu0 %v9012
    %9197 = vmatprep.subr.bf16.mxu0 0
    %9198 = vmatpush1.bf16.xpose.msra.mxu0 %v9015
    %9199 = vmatprep.subr.bf16.mxu0 0
    %9200 = vmatpush1.bf16.xpose.msra.mxu0 %v9018
    %9201 = vmatprep.subr.bf16.mxu0 0
    %9202 = vmatpush1.bf16.xpose.msra.mxu0 %v9021
    %9203 = vmatprep.subr.bf16.mxu0 0
    %9204 = vmatpush1.bf16.xpose.msra.mxu0 %v9024
    %9205 = vmatprep.subr.bf16.mxu0 0
    %9206 = vmatpush1.bf16.xpose.msra.mxu0 %v9027
    %9207 = vmatprep.subr.bf16.mxu0 0
    %9208 = vmatpush1.bf16.xpose.msra.mxu0 %v9030
    %9209 = vmatprep.subr.bf16.mxu0 0
    %9210 = vmatpush1.bf16.xpose.msra.mxu0 %v9033
    %9211 = vmatprep.mubr.bf16.mxu0 0
    %9212 = vmatmul.mubr.bf16.gmra.mrb[0].mxu0 %v8985
    %v9213 = vpop.f32.mrb[0].mxu0
    %v9214 = vadd.f32 %v8982, %v9213
    %v9215 = vpop.f32.mrb[0].mxu0
    %v9216 = vadd.f32 %v8982, %v9215
    %v9217 = vpop.f32.mrb[0].mxu0
    %v9218 = vpop.f32.mrb[0].mxu0
    %9219 = vdwg.mxu0
    %9220 = vmatprep.subr.bf16.mxu0 0
    %9221 = vmatpush1.bf16.xpose.msra.mxu0 %v9036
    %9222 = vmatprep.subr.bf16.mxu0 0
    %9223 = vmatpush1.bf16.xpose.msra.mxu0 %v9039
    %9224 = vmatprep.subr.bf16.mxu0 0
    %9225 = vmatpush1.bf16.xpose.msra.mxu0 %v9042
    %9226 = vmatprep.subr.bf16.mxu0 0
    %9227 = vmatpush1.bf16.xpose.msra.mxu0 %v9045
    %9228 = vmatprep.subr.bf16.mxu0 0
    %9229 = vmatpush1.bf16.xpose.msra.mxu0 %v9048
    %9230 = vmatprep.subr.bf16.mxu0 0
    %9231 = vmatpush1.bf16.xpose.msra.mxu0 %v9051
    %9232 = vmatprep.subr.bf16.mxu0 0
    %9233 = vmatpush1.bf16.xpose.msra.mxu0 %v9054
    %9234 = vmatprep.subr.bf16.mxu0 0
    %9235 = vmatpush1.bf16.xpose.msra.mxu0 %v9057
    %9236 = vmatprep.subr.bf16.mxu0 0
    %9237 = vmatpush1.bf16.xpose.msra.mxu0 %v9060
    %9238 = vmatprep.subr.bf16.mxu0 0
    %9239 = vmatpush1.bf16.xpose.msra.mxu0 %v9063
    %9240 = vmatprep.subr.bf16.mxu0 0
    %9241 = vmatpush1.bf16.xpose.msra.mxu0 %v9066
    %9242 = vmatprep.subr.bf16.mxu0 0
    %9243 = vmatpush1.bf16.xpose.msra.mxu0 %v9069
    %9244 = vmatprep.subr.bf16.mxu0 0
    %9245 = vmatpush1.bf16.xpose.msra.mxu0 %v9072
    %9246 = vmatprep.subr.bf16.mxu0 0
    %9247 = vmatpush1.bf16.xpose.msra.mxu0 %v9075
    %9248 = vmatprep.subr.bf16.mxu0 0
    %9249 = vmatpush1.bf16.xpose.msra.mxu0 %v9078
    %9250 = vmatprep.subr.bf16.mxu0 0
    %9251 = vmatpush1.bf16.xpose.msra.mxu0 %v9081
    %9252 = vmatprep.mubr.bf16.mxu0 0
    %9253 = vmatmul.mubr.bf16.gmra.mrb[0].mxu0 %v8985
    %v9254 = vpop.f32.mrb[0].mxu0
    %v9255 = vadd.f32 %v8982, %v9254
    %v9256 = vpop.f32.mrb[0].mxu0
    %v9257 = vadd.f32 %v8982, %v9256
    %v9258 = vpop.f32.mrb[0].mxu0
    %v9259 = vpop.f32.mrb[0].mxu0
    %9260 = vdwg.mxu0
    %9261 = vmatprep.subr.bf16.mxu0 0
    %9262 = vmatpush1.bf16.xpose.msra.mxu0 %v9084
    %9263 = vmatprep.subr.bf16.mxu0 0
    %9264 = vmatpush1.bf16.xpose.msra.mxu0 %v9087
    %9265 = vmatprep.subr.bf16.mxu0 0
    %9266 = vmatpush1.bf16.xpose.msra.mxu0 %v9090
    %9267 = vmatprep.subr.bf16.mxu0 0
    %9268 = vmatpush1.bf16.xpose.msra.mxu0 %v9093
    %9269 = vmatprep.subr.bf16.mxu0 0
    %9270 = vmatpush1.bf16.xpose.msra.mxu0 %v9096
    %9271 = vmatprep.subr.bf16.mxu0 0
    %9272 = vmatpush1.bf16.xpose.msra.mxu0 %v9099
    %9273 = vmatprep.subr.bf16.mxu0 0
    %9274 = vmatpush1.bf16.xpose.msra.mxu0 %v9102
    %9275 = vmatprep.subr.bf16.mxu0 0
    %9276 = vmatpush1.bf16.xpose.msra.mxu0 %v9105
    %9277 = vmatprep.subr.bf16.mxu0 0
    %9278 = vmatpush1.bf16.xpose.msra.mxu0 %v9108
    %9279 = vmatprep.subr.bf16.mxu0 0
    %9280 = vmatpush1.bf16.xpose.msra.mxu0 %v9111
    %9281 = vmatprep.subr.bf16.mxu0 0
    %9282 = vmatpush1.bf16.xpose.msra.mxu0 %v9114
    %9283 = vmatprep.subr.bf16.mxu0 0
    %9284 = vmatpush1.bf16.xpose.msra.mxu0 %v9117
    %9285 = vmatprep.subr.bf16.mxu0 0
    %9286 = vmatpush1.bf16.xpose.msra.mxu0 %v9120
    %9287 = vmatprep.subr.bf16.mxu0 0
    %9288 = vmatpush1.bf16.xpose.msra.mxu0 %v9123
    %9289 = vmatprep.subr.bf16.mxu0 0
    %9290 = vmatpush1.bf16.xpose.msra.mxu0 %v9126
    %9291 = vmatprep.subr.bf16.mxu0 0
    %9292 = vmatpush1.bf16.xpose.msra.mxu0 %v9129
    %9293 = vmatprep.mubr.bf16.mxu0 0
    %9294 = vmatmul.mubr.bf16.gmra.mrb[0].mxu0 %v8985
    %v9295 = vpop.f32.mrb[0].mxu0
    %v9296 = vadd.f32 %v8982, %v9295
    %v9297 = vpop.f32.mrb[0].mxu0
    %v9298 = vadd.f32 %v8982, %v9297
    %v9299 = vpop.f32.mrb[0].mxu0
    %v9300 = vpop.f32.mrb[0].mxu0
    %9301 = vdwg.mxu0
    %9302 = vmatprep.subr.bf16.mxu0 0
    %9303 = vmatpush1.bf16.xpose.msra.mxu0 %v9132
    %9304 = vmatprep.subr.bf16.mxu0 0
    %9305 = vmatpush1.bf16.xpose.msra.mxu0 %v9135
    %9306 = vmatprep.subr.bf16.mxu0 0
    %9307 = vmatpush1.bf16.xpose.msra.mxu0 %v9138
    %9308 = vmatprep.subr.bf16.mxu0 0
    %9309 = vmatpush1.bf16.xpose.msra.mxu0 %v9141
    %9310 = vmatprep.subr.bf16.mxu0 0
    %9311 = vmatpush1.bf16.xpose.msra.mxu0 %v9144
    %9312 = vmatprep.subr.bf16.mxu0 0
    %9313 = vmatpush1.bf16.xpose.msra.mxu0 %v9147
    %9314 = vmatprep.subr.bf16.mxu0 0
    %9315 = vmatpush1.bf16.xpose.msra.mxu0 %v9150
    %9316 = vmatprep.subr.bf16.mxu0 0
    %9317 = vmatpush1.bf16.xpose.msra.mxu0 %v9153
    %9318 = vmatprep.subr.bf16.mxu0 0
    %9319 = vmatpush1.bf16.xpose.msra.mxu0 %v9156
    %9320 = vmatprep.subr.bf16.mxu0 0
    %9321 = vmatpush1.bf16.xpose.msra.mxu0 %v9159
    %9322 = vmatprep.subr.bf16.mxu0 0
    %9323 = vmatpush1.bf16.xpose.msra.mxu0 %v9162
    %9324 = vmatprep.subr.bf16.mxu0 0
    %9325 = vmatpush1.bf16.xpose.msra.mxu0 %v9165
    %9326 = vmatprep.subr.bf16.mxu0 0
    %9327 = vmatpush1.bf16.xpose.msra.mxu0 %v9168
    %9328 = vmatprep.subr.bf16.mxu0 0
    %9329 = vmatpush1.bf16.xpose.msra.mxu0 %v9171
    %9330 = vmatprep.subr.bf16.mxu0 0
    %9331 = vmatpush1.bf16.xpose.msra.mxu0 %v9174
    %9332 = vmatprep.subr.bf16.mxu0 0
    %9333 = vmatpush1.bf16.xpose.msra.mxu0 %v9177
    %9334 = vmatprep.mubr.bf16.mxu0 0
    %9335 = vmatmul.mubr.bf16.gmra.mrb[0].mxu0 %v8985
    %v9336 = vpop.f32.mrb[0].mxu0
    %v9337 = vadd.f32 %v8982, %v9336
    %v9338 = vpop.f32.mrb[0].mxu0
    %v9339 = vadd.f32 %v8982, %v9338
    %v9340 = vpop.f32.mrb[0].mxu0
    %v9341 = vpop.f32.mrb[0].mxu0
    %9342 = vdwg.mxu0
    %v9343 = vxor.u32 %v9214, 2147483648
    %v9344 = vxor.u32 %v9216, 2147483648
    %v9345 = vxor.u32 %v9255, 2147483648
    %v9346 = vxor.u32 %v9257, 2147483648
    %v9347 = vxor.u32 %v9296, 2147483648
    %v9348 = vxor.u32 %v9298, 2147483648
    %v9349 = vxor.u32 %v9337, 2147483648
    %v9350 = vxor.u32 %v9339, 2147483648
    %v9351 = vmul.f32 %v9343, 1.442695
    %v9352 = vpow.pop %v9351
    %v9353 = vmul.f32 %v9344, 1.442695
    %v9354 = vpow.pop %v9353
    %v9355 = vmul.f32 %v9345, 1.442695
    %v9356 = vpow.pop %v9355
    %v9357 = vmul.f32 %v9346, 1.442695
    %v9358 = vpow.pop %v9357
    %v9359 = vmul.f32 %v9347, 1.442695
    %v9360 = vpow.pop %v9359
    %v9361 = vmul.f32 %v9348, 1.442695
    %v9362 = vpow.pop %v9361
    %v9363 = vmul.f32 %v9349, 1.442695
    %v9364 = vpow.pop %v9363
    %v9365 = vmul.f32 %v9350, 1.442695
    %v9366 = vpow.pop %v9365
    %v9367 = vadd.f32 %v9352, 1.0
    %v9368 = vadd.f32 %v9354, 1.0
    %v9369 = vadd.f32 %v9356, 1.0
    %v9370 = vadd.f32 %v9358, 1.0
    %v9371 = vadd.f32 %v9360, 1.0
    %v9372 = vadd.f32 %v9362, 1.0
    %v9373 = vadd.f32 %v9364, 1.0
    %v9374 = vadd.f32 %v9366, 1.0
    %v9375 = vrcp.pop %v9367
    %v9376 = vmul.f32 1.0, %v9375
    %v9377 = vrcp.pop %v9368
    %v9378 = vmul.f32 1.0, %v9377
    %v9379 = vrcp.pop %v9369
    %v9380 = vmul.f32 1.0, %v9379
    %v9381 = vrcp.pop %v9370
    %v9382 = vmul.f32 1.0, %v9381
    %v9383 = vrcp.pop %v9371
    %v9384 = vmul.f32 1.0, %v9383
    %v9385 = vrcp.pop %v9372
    %v9386 = vmul.f32 1.0, %v9385
    %v9387 = vrcp.pop %v9373
    %v9388 = vmul.f32 1.0, %v9387
    %v9389 = vrcp.pop %v9374
    %v9390 = vmul.f32 1.0, %v9389
    %v9399 = vcombine.low %v9376, %v9378
    %v9400 = vcombine.low %v9380, %v9382
    %v9402 = vunpack.c.l.s4 1983009808
    %v9403 = vunpack.c.0.s8 %v9402
    %v9404 = vlaneseq
    %v9405 = vshrl.u32 %v9404, 7
    %v9406 = vsub.s32 %v9403, %v9405
    %v9407 = vrot.slane %v9399, %v9406
    %v9409 = vunpack.c.l.s4 1983009808
    %v9410 = vunpack.c.0.s8 %v9409
    %v9411 = vlaneseq
    %v9412 = vshrl.u32 %v9411, 7
    %v9413 = vsub.s32 %v9410, %v9412
    %v9414 = vrot.slane %v9400, %v9413
    %v9415 = vcombine.low %v9407, %v9414
    %v9416 = vcombine.low %v9384, %v9386
    %v9417 = vcombine.low %v9388, %v9390
    %v9419 = vunpack.c.l.s4 1983009808
    %v9420 = vunpack.c.0.s8 %v9419
    %v9421 = vlaneseq
    %v9422 = vshrl.u32 %v9421, 7
    %v9423 = vsub.s32 %v9420, %v9422
    %v9424 = vrot.slane %v9416, %v9423
    %v9426 = vunpack.c.l.s4 1983009808
    %v9427 = vunpack.c.0.s8 %v9426
    %v9428 = vlaneseq
    %v9429 = vshrl.u32 %v9428, 7
    %v9430 = vsub.s32 %v9427, %v9429
    %v9431 = vrot.slane %v9417, %v9430
    %v9432 = vcombine.low %v9424, %v9431
    %9435 = vst [vmem:[#allocation4] sm:$0xff] %v9415
    %9436 = vst [vmem:[#allocation4 + $0x8] sm:$0xff] %v9432
    // Predicated region
    $region64: #{tpu_custom_call.1} parent=1 // pred_check
      _
    $region65: #{tpu_custom_call.1} parent=1 // pred_check_branch
      %9438 = sbr.rel (0) target = $region67
    $region66: #{tpu_custom_call.1} parent=1 // pred_region
      %s9440 = ssub.s32 256, 256
      %9441 = vsyncadd [#allocation5], %s9440
      %s9443 = sshll.u32 [#allocation4], 4
      %s9444 = int_to_ptr.vmem [resolvable:$true] %s9443
      %9446 = dma.vmem_to_hbm [thread:$0]  %s9444, 256, %s10, [#allocation5]
    $region67: #{tpu_custom_call.1} parent=1 // pred_fallthru
      _
    // Predicated region
    $region68: #{tpu_custom_call.1} parent=1 // pred_check
      _
    $region69: #{tpu_custom_call.1} parent=1 // pred_check_branch
      %9448 = sbr.rel (0) target = $region71
    $region70: #{tpu_custom_call.1} parent=1 // pred_region
      _
    $region71: #{tpu_custom_call.1} parent=1 // pred_fallthru
      _
    // Predicated region
    $region72: #{tpu_custom_call.1} parent=1 // pred_check
      _
    $region73: #{tpu_custom_call.1} parent=1 // pred_check_branch
      %9450 = sbr.rel (0) target = $region75
    $region74: #{tpu_custom_call.1} parent=1 // pred_region
      %9451 = dma.done [#allocation5], 256
    $region75: #{tpu_custom_call.1} parent=1 // pred_fallthru
      _
    // Predicated region
    $region76: #{tpu_custom_call.1} parent=1 // pred_check
      _
    $region77: #{tpu_custom_call.1} parent=1 // pred_check_branch
      %9453 = sbr.rel (0) target = $region79
    $region78: #{tpu_custom_call.1} parent=1 // pred_region
      _
    $region79: #{tpu_custom_call.1} parent=1 // pred_fallthru
      _
    %9454 = vsyncpa [#allocation5], 1

</llo_original>
